<compile_context>
chip_gen: v5e
topology: v5e:2x2
jax: 0.10.0
libtpu: 0.0.40
codegen_flags: <defaults>
</compile_context>

<pallas_src>
import numpy as np
import jax
import jax.numpy as jnp
from jax.experimental import pallas as pl
from jax.experimental.pallas import tpu as pltpu


IN_CH, OUT_CH = 16, 128
H, W = 4, 4
CONV_KSIZES = [(4, 1), (1, 4), (2, 2), (3, 3), (4, 4)]
FC_DIMS = [(2816, 512), (512, 128), (128, 4)]
N_PAD = 128                 # final Linear padded from 4 -> 128 output lanes
FLAT_IN = IN_CH * H * W     # 256
MAX_BATCH_TILE = 256        # batch rows per grid step (keeps VMEM bounded)


# ----------------------------------------------------------------------------
# Fused Pallas kernel: conv-stack matmul + 3 Linear layers, ReLU after each.
# Each grid step handles one batch tile; all weights are full-array VMEM blocks
# (same block index every step -> fetched once). bf16 MXU, f32 accumulate.
# ----------------------------------------------------------------------------
def _fused_cnn_kernel(x_ref, wc_ref, bc_ref, w1_ref, b1_ref,
                      w2_ref, b2_ref, w3_ref, b3_ref, o_ref):
    x = x_ref[...].astype(jnp.bfloat16)                              # (tm, 256)
    # conv1..conv5 + ReLU, flattened/concatenated in torch order     # (tm, 2816)
    h = jnp.dot(x, wc_ref[...], preferred_element_type=jnp.float32)
    h = jnp.maximum(h + bc_ref[...], 0.0)
    # layer6: Linear(2816, 512) + ReLU
    h = jnp.dot(h.astype(jnp.bfloat16), w1_ref[...],
                preferred_element_type=jnp.float32)
    h = jnp.maximum(h + b1_ref[...], 0.0)
    # layer7: Linear(512, 128) + ReLU
    h = jnp.dot(h.astype(jnp.bfloat16), w2_ref[...],
                preferred_element_type=jnp.float32)
    h = jnp.maximum(h + b2_ref[...], 0.0)
    # layer8: Linear(128, 4) + ReLU, zero-padded to 128 output lanes
    h = jnp.dot(h.astype(jnp.bfloat16), w3_ref[...],
                preferred_element_type=jnp.float32)
    o_ref[...] = jnp.maximum(h + b3_ref[...], 0.0)                   # (tm, 128)


def _round_up(n, m):
    return ((n + m - 1) // m) * m


def cnn_forward(params, x):
    """x: (B, 16, 4, 4) float32 NCHW -> (B, 4) float32 (matches torch CNN)."""
    B = x.shape[0]
    xf = x.reshape(B, FLAT_IN)                  # (cin, ih, iw) C-order flatten
    tm = min(_round_up(B, 8), MAX_BATCH_TILE)   # sublane-aligned batch tile
    Bp = _round_up(B, tm)
    if Bp != B:
        xf = jnp.pad(xf, ((0, Bp - B), (0, 0)))
    grid = (Bp // tm,)

    w_args = (params["wc"], params["bc"], params["w1"], params["b1"],
              params["w2"], params["b2"], params["w3"], params["b3"])
    out = pl.pallas_call(
        _fused_cnn_kernel,
        out_shape=jax.ShapeDtypeStruct((Bp, N_PAD), jnp.float32),
        grid=grid,
        in_specs=[pl.BlockSpec((tm, FLAT_IN), lambda i: (i, 0))]
                 + [pl.BlockSpec(w.shape, lambda i: (0, 0)) for w in w_args],
        out_specs=pl.BlockSpec((tm, N_PAD), lambda i: (i, 0)),
        compiler_params=pltpu.CompilerParams(
            dimension_semantics=("parallel",)),
    )(xf, *w_args)
    return out[:B, :4]


# ----------------------------------------------------------------------------
# Init-time parameter preparation (all layout work happens here, once).
# ----------------------------------------------------------------------------
def _conv_as_matmul(w, kh, kw):
    """Lower a Conv2d weight (OUT, IN, kh, kw) on a 4x4 board (stride 1, no pad)
    to a dense matrix (IN*4*4, OUT*oh*ow).

    Row index   g = cin*16 + ih*4 + iw          (matches x.reshape(B, 256))
    Col index   f = cout*(oh*ow) + ph*ow + pw   (matches torch NCHW .view(B,-1))
    """
    oh, ow = H - kh + 1, W - kw + 1
    dense = np.zeros((IN_CH, H, W, OUT_CH, oh, ow), np.float32)
    for dh in range(kh):
        for dw in range(kw):
            for ph in range(oh):
                for pw in range(ow):
                    # out[co, ph, pw] += w[co, ci, dh, dw] * x[ci, ph+dh, pw+dw]
                    dense[:, ph + dh, pw + dw, :, ph, pw] = w[:, :, dh, dw].T
    return dense.reshape(IN_CH * H * W, OUT_CH * oh * ow)


def _prepare_params(raw):
    wc_blocks, bc_blocks = [], []
    for (w, b), (kh, kw) in zip(raw["convs"], CONV_KSIZES):
        oh, ow = H - kh + 1, W - kw + 1
        wc_blocks.append(_conv_as_matmul(np.asarray(w), kh, kw))
        # bias for feature f = cout*(oh*ow) + pixel -> repeat each bias oh*ow x
        bc_blocks.append(np.repeat(np.asarray(b), oh * ow))
    wc = np.concatenate(wc_blocks, axis=1)            # (256, 2816)
    bc = np.concatenate(bc_blocks)                    # (2816,)

    (w1, b1), (w2, b2), (w3, b3) = raw["fcs"]
    w1 = np.asarray(w1).T                             # (2816, 512)
    w2 = np.asarray(w2).T                             # (512, 128)
    w3p = np.zeros((FC_DIMS[2][0], N_PAD), np.float32)
    w3p[:, :FC_DIMS[2][1]] = np.asarray(w3).T         # (128, 128), cols 4.. = 0
    b3p = np.zeros((N_PAD,), np.float32)
    b3p[:FC_DIMS[2][1]] = np.asarray(b3)

    as_bias = lambda a: jnp.asarray(a, jnp.float32).reshape(1, -1)
    as_w = lambda a: jnp.asarray(a, jnp.bfloat16)     # bf16 weights, f32 accum
    return {
        "wc": as_w(wc), "bc": as_bias(bc),
        "w1": as_w(w1), "b1": as_bias(b1),
        "w2": as_w(w2), "b2": as_bias(b2),
        "w3": as_w(w3p), "b3": as_bias(b3p),
    }


def make_params(key):
    """Deterministic PyTorch-default-style init, then lowered to kernel layout."""
    raw = {"convs": [], "fcs": []}
    for (kh, kw) in CONV_KSIZES:
        key, k1, k2 = jax.random.split(key, 3)
        fan_in = IN_CH * kh * kw
        s = 1.0 / (fan_in ** 0.5)
        w = jax.random.uniform(k1, (OUT_CH, IN_CH, kh, kw), jnp.float32, -s, s)
        b = jax.random.uniform(k2, (OUT_CH,), jnp.float32, -s, s)
        raw["convs"].append((w, b))
    for (din, dout) in FC_DIMS:
        key, k1, k2 = jax.random.split(key, 3)
        s = 1.0 / (din ** 0.5)
        w = jax.random.uniform(k1, (dout, din), jnp.float32, -s, s)  # torch (out, in)
        b = jax.random.uniform(k2, (dout,), jnp.float32, -s, s)
        raw["fcs"].append((w, b))
    return _prepare_params(raw)


if __name__ == "__main__":
    key = jax.random.PRNGKey(0)
    pkey, xkey = jax.random.split(key)
    params = make_params(pkey)
    # Input implied by the module: 16 channels, 4x4 board (2048 game), batch=2.
    x = jax.random.normal(xkey, (2, IN_CH, H, W), dtype=jnp.float32)
    out = jax.jit(cnn_forward)(params, x)
    out = jax.block_until_ready(out)
    assert out.shape == (2, 4) and out.dtype == jnp.float32
    print("KERNEL_OK")
</pallas_src>

<mosaic_0001>
module attributes {stable_mosaic.version = 11 : i64} {
  func.func @_fused_cnn_kernel(%arg0: i32, %arg1: memref<8x256xf32, #tpu.memory_space<vmem>>, %arg2: memref<256x2816xbf16, #tpu.memory_space<vmem>>, %arg3: memref<1x2816xf32, #tpu.memory_space<vmem>>, %arg4: memref<2816x512xbf16, #tpu.memory_space<vmem>>, %arg5: memref<1x512xf32, #tpu.memory_space<vmem>>, %arg6: memref<512x128xbf16, #tpu.memory_space<vmem>>, %arg7: memref<1x128xf32, #tpu.memory_space<vmem>>, %arg8: memref<128x128xbf16, #tpu.memory_space<vmem>>, %arg9: memref<1x128xf32, #tpu.memory_space<vmem>>, %arg10: memref<8x128xf32, #tpu.memory_space<vmem>>) attributes {dimension_semantics = [#tpu.dimension_semantics<parallel>], iteration_bounds = array<i64: 1>, scalar_prefetch = 0 : i64, scratch_operands = 0 : i64, tpu.core_type = #tpu.core_type<tc>, window_params = [{transform_indices = @transform_0, window_bounds = array<i64: 8, 256>}, {pipeline_mode = #tpu.pipeline_mode<synchronous>, transform_indices = @transform_1, window_bounds = array<i64: 256, 2816>}, {pipeline_mode = #tpu.pipeline_mode<synchronous>, transform_indices = @transform_2, window_bounds = array<i64: 1, 2816>}, {pipeline_mode = #tpu.pipeline_mode<synchronous>, transform_indices = @transform_3, window_bounds = array<i64: 2816, 512>}, {pipeline_mode = #tpu.pipeline_mode<synchronous>, transform_indices = @transform_4, window_bounds = array<i64: 1, 512>}, {pipeline_mode = #tpu.pipeline_mode<synchronous>, transform_indices = @transform_5, window_bounds = array<i64: 512, 128>}, {pipeline_mode = #tpu.pipeline_mode<synchronous>, transform_indices = @transform_6, window_bounds = array<i64: 1, 128>}, {pipeline_mode = #tpu.pipeline_mode<synchronous>, transform_indices = @transform_7, window_bounds = array<i64: 128, 128>}, {pipeline_mode = #tpu.pipeline_mode<synchronous>, transform_indices = @transform_8, window_bounds = array<i64: 1, 128>}, {transform_indices = @transform_9, window_bounds = array<i64: 8, 128>}]} {
    %c0 = arith.constant 0 : index
    %c0_0 = arith.constant 0 : index
    %0 = vector.load %arg1[%c0, %c0_0] : memref<8x256xf32, #tpu.memory_space<vmem>>, vector<8x256xf32>
    %1 = arith.truncf %0 : vector<8x256xf32> to vector<8x256xbf16>
    %c0_1 = arith.constant 0 : index
    %c0_2 = arith.constant 0 : index
    %2 = vector.load %arg2[%c0_1, %c0_2] : memref<256x2816xbf16, #tpu.memory_space<vmem>>, vector<256x2816xbf16>
    %cst = arith.constant dense<0.000000e+00> : vector<8x2816xf32>
    %3 = tpu.matmul %1, %2, %cst {dimension_numbers = #tpu.dot_dimension_numbers<[1], [0], [0], [1], [0, 0, 1, 1], [], []>} : vector<8x256xbf16>, vector<256x2816xbf16>, vector<8x2816xf32> -> vector<8x2816xf32>
    %c0_3 = arith.constant 0 : index
    %c0_4 = arith.constant 0 : index
    %4 = vector.load %arg3[%c0_3, %c0_4] : memref<1x2816xf32, #tpu.memory_space<vmem>>, vector<1x2816xf32>
    %5 = vector.broadcast %4 : vector<1x2816xf32> to vector<8x2816xf32>
    %6 = arith.addf %3, %5 : vector<8x2816xf32>
    %cst_5 = arith.constant 0.000000e+00 : f32
    %7 = vector.broadcast %cst_5 : f32 to vector<8x2816xf32>
    %8 = arith.maximumf %6, %7 : vector<8x2816xf32>
    %9 = arith.truncf %8 : vector<8x2816xf32> to vector<8x2816xbf16>
    %c0_6 = arith.constant 0 : index
    %c0_7 = arith.constant 0 : index
    %10 = vector.load %arg4[%c0_6, %c0_7] : memref<2816x512xbf16, #tpu.memory_space<vmem>>, vector<2816x512xbf16>
    %cst_8 = arith.constant dense<0.000000e+00> : vector<8x512xf32>
    %11 = tpu.matmul %9, %10, %cst_8 {dimension_numbers = #tpu.dot_dimension_numbers<[1], [0], [0], [1], [0, 0, 1, 1], [], []>} : vector<8x2816xbf16>, vector<2816x512xbf16>, vector<8x512xf32> -> vector<8x512xf32>
    %c0_9 = arith.constant 0 : index
    %c0_10 = arith.constant 0 : index
    %12 = vector.load %arg5[%c0_9, %c0_10] : memref<1x512xf32, #tpu.memory_space<vmem>>, vector<1x512xf32>
    %13 = vector.broadcast %12 : vector<1x512xf32> to vector<8x512xf32>
    %14 = arith.addf %11, %13 : vector<8x512xf32>
    %cst_11 = arith.constant 0.000000e+00 : f32
    %15 = vector.broadcast %cst_11 : f32 to vector<8x512xf32>
    %16 = arith.maximumf %14, %15 : vector<8x512xf32>
    %17 = arith.truncf %16 : vector<8x512xf32> to vector<8x512xbf16>
    %c0_12 = arith.constant 0 : index
    %c0_13 = arith.constant 0 : index
    %18 = vector.load %arg6[%c0_12, %c0_13] : memref<512x128xbf16, #tpu.memory_space<vmem>>, vector<512x128xbf16>
    %cst_14 = arith.constant dense<0.000000e+00> : vector<8x128xf32>
    %19 = tpu.matmul %17, %18, %cst_14 {dimension_numbers = #tpu.dot_dimension_numbers<[1], [0], [0], [1], [0, 0, 1, 1], [], []>} : vector<8x512xbf16>, vector<512x128xbf16>, vector<8x128xf32> -> vector<8x128xf32>
    %c0_15 = arith.constant 0 : index
    %c0_16 = arith.constant 0 : index
    %20 = vector.load %arg7[%c0_15, %c0_16] : memref<1x128xf32, #tpu.memory_space<vmem>>, vector<1x128xf32>
    %21 = vector.broadcast %20 : vector<1x128xf32> to vector<8x128xf32>
    %22 = arith.addf %19, %21 : vector<8x128xf32>
    %cst_17 = arith.constant 0.000000e+00 : f32
    %23 = vector.broadcast %cst_17 : f32 to vector<8x128xf32>
    %24 = arith.maximumf %22, %23 : vector<8x128xf32>
    %25 = arith.truncf %24 : vector<8x128xf32> to vector<8x128xbf16>
    %c0_18 = arith.constant 0 : index
    %c0_19 = arith.constant 0 : index
    %26 = vector.load %arg8[%c0_18, %c0_19] : memref<128x128xbf16, #tpu.memory_space<vmem>>, vector<128x128xbf16>
    %cst_20 = arith.constant dense<0.000000e+00> : vector<8x128xf32>
    %27 = tpu.matmul %25, %26, %cst_20 {dimension_numbers = #tpu.dot_dimension_numbers<[1], [0], [0], [1], [0, 0, 1, 1], [], []>} : vector<8x128xbf16>, vector<128x128xbf16>, vector<8x128xf32> -> vector<8x128xf32>
    %c0_21 = arith.constant 0 : index
    %c0_22 = arith.constant 0 : index
    %28 = vector.load %arg9[%c0_21, %c0_22] : memref<1x128xf32, #tpu.memory_space<vmem>>, vector<1x128xf32>
    %29 = vector.broadcast %28 : vector<1x128xf32> to vector<8x128xf32>
    %30 = arith.addf %27, %29 : vector<8x128xf32>
    %cst_23 = arith.constant 0.000000e+00 : f32
    %31 = vector.broadcast %cst_23 : f32 to vector<8x128xf32>
    %32 = arith.maximumf %30, %31 : vector<8x128xf32>
    %c0_24 = arith.constant 0 : index
    %c0_25 = arith.constant 0 : index
    %33 = vector.load %arg10[%c0_24, %c0_25] : memref<8x128xf32, #tpu.memory_space<vmem>>, vector<8x128xf32>
    tpu.vector_store %arg10[%c0_24, %c0_25], %32 {strides = array<i32>} : memref<8x128xf32, #tpu.memory_space<vmem>>, vector<8x128xf32>,
    return
  }
  func.func @transform_0(%arg0: i32) -> (i32, i32) {
    %c0_i32 = arith.constant 0 : i32
    %c0_i32_0 = arith.constant 0 : i32
    return %arg0, %c0_i32 : i32, i32
  }
  func.func @transform_1(%arg0: i32) -> (i32, i32) {
    %c0_i32 = arith.constant 0 : i32
    %c0_i32_0 = arith.constant 0 : i32
    %c0_i32_1 = arith.constant 0 : i32
    return %c0_i32, %c0_i32_0 : i32, i32
  }
  func.func @transform_2(%arg0: i32) -> (i32, i32) {
    %c0_i32 = arith.constant 0 : i32
    %c0_i32_0 = arith.constant 0 : i32
    %c0_i32_1 = arith.constant 0 : i32
    return %c0_i32, %c0_i32_0 : i32, i32
  }
  func.func @transform_3(%arg0: i32) -> (i32, i32) {
    %c0_i32 = arith.constant 0 : i32
    %c0_i32_0 = arith.constant 0 : i32
    %c0_i32_1 = arith.constant 0 : i32
    return %c0_i32, %c0_i32_0 : i32, i32
  }
  func.func @transform_4(%arg0: i32) -> (i32, i32) {
    %c0_i32 = arith.constant 0 : i32
    %c0_i32_0 = arith.constant 0 : i32
    %c0_i32_1 = arith.constant 0 : i32
    return %c0_i32, %c0_i32_0 : i32, i32
  }
  func.func @transform_5(%arg0: i32) -> (i32, i32) {
    %c0_i32 = arith.constant 0 : i32
    %c0_i32_0 = arith.constant 0 : i32
    %c0_i32_1 = arith.constant 0 : i32
    return %c0_i32, %c0_i32_0 : i32, i32
  }
  func.func @transform_6(%arg0: i32) -> (i32, i32) {
    %c0_i32 = arith.constant 0 : i32
    %c0_i32_0 = arith.constant 0 : i32
    %c0_i32_1 = arith.constant 0 : i32
    return %c0_i32, %c0_i32_0 : i32, i32
  }
  func.func @transform_7(%arg0: i32) -> (i32, i32) {
    %c0_i32 = arith.constant 0 : i32
    %c0_i32_0 = arith.constant 0 : i32
    %c0_i32_1 = arith.constant 0 : i32
    return %c0_i32, %c0_i32_0 : i32, i32
  }
  func.func @transform_8(%arg0: i32) -> (i32, i32) {
    %c0_i32 = arith.constant 0 : i32
    %c0_i32_0 = arith.constant 0 : i32
    %c0_i32_1 = arith.constant 0 : i32
    return %c0_i32, %c0_i32_0 : i32, i32
  }
  func.func @transform_9(%arg0: i32) -> (i32, i32) {
    %c0_i32 = arith.constant 0 : i32
    %c0_i32_0 = arith.constant 0 : i32
    return %arg0, %c0_i32 : i32, i32
  }
}

</mosaic_0001>

<llo_original>
// kernel: cnn_forward.1
$region0: #{cnn_forward.1}
  #allocation0 [shape = 'u32[]', space=smem, size = 0x4, offset = 0x4, fixed_abs, tag = 'smem constant byte address 0x4 - core index']
  #allocation1 [shape = 'u32[72,128]{1,0:T(1,128)}', space=vmem, size = 0x9000, scoped, tag = 'internal scratch']
  %s0 = inlined_call_operand.vmem [shape: f32[8,256], index: 0, kind: input, shape index: {}]
  %s1 = inlined_call_operand.hbm [shape: bf16[256,2816], index: 1, kind: input, shape index: {}]
  %s2 = inlined_call_operand.hbm [shape: f32[1,2816], index: 2, kind: input, shape index: {}]
  %s3 = inlined_call_operand.hbm [shape: bf16[2816,512], index: 3, kind: input, shape index: {}]
  %s4 = inlined_call_operand.hbm [shape: f32[1,512], index: 4, kind: input, shape index: {}]
  %s5 = inlined_call_operand.hbm [shape: bf16[512,128], index: 5, kind: input, shape index: {}]
  %s6 = inlined_call_operand.hbm [shape: f32[1,128], index: 6, kind: input, shape index: {}]
  %s7 = inlined_call_operand.hbm [shape: bf16[128,128], index: 7, kind: input, shape index: {}]
  %s8 = inlined_call_operand.hbm [shape: f32[1,128], index: 8, kind: input, shape index: {}]
  %s9 = inlined_call_operand.vmem [shape: f32[8,128], index: 9, kind: output, shape index: {}]
  %s10 = sld [smem:[#allocation0]]
  $region78: #{cnn_forward.1} parent=0
    _
  %s12 = ssub.s32 1, %s10
  %s13 = scalar_select 0, %s12, %s10
  $region1: #{cnn_forward.1} parent=0
    #allocation2 [shape = 'u8[1441792]{0}', space=vmem, size = 0x160000, scoped, tag = 'input window, operand 1, single buffered']
    #allocation3 [shape = 's32[1]{0}', space=sflag, size = 0x4, scoped, tag = 'scoped memory for cnn_forward.1']
    #allocation4 [shape = 'u8[11264]{0}', space=vmem, size = 0x2c00, scoped, tag = 'input window, operand 2, single buffered']
    #allocation5 [shape = 's32[1]{0}', space=sflag, size = 0x4, scoped, tag = 'scoped memory for cnn_forward.1']
    #allocation6 [shape = 'u8[2883584]{0}', space=vmem, size = 0x2c0000, scoped, tag = 'input window, operand 3, single buffered']
    #allocation7 [shape = 'u8[2048]{0}', space=vmem, size = 0x800, scoped, tag = 'input window, operand 4, single buffered']
    #allocation8 [shape = 's32[1]{0}', space=sflag, size = 0x4, scoped, tag = 'scoped memory for cnn_forward.1']
    #allocation9 [shape = 'u8[131072]{0}', space=vmem, size = 0x20000, scoped, tag = 'input window, operand 5, single buffered']
    #allocation10 [shape = 'u8[512]{0}', space=vmem, size = 0x400, scoped, tag = 'input window, operand 6, single buffered']
    #allocation11 [shape = 's32[1]{0}', space=sflag, size = 0x4, scoped, tag = 'scoped memory for cnn_forward.1']
    #allocation12 [shape = 'u8[32768]{0}', space=vmem, size = 0x8000, scoped, tag = 'input window, operand 7, single buffered']
    #allocation13 [shape = 'u8[512]{0}', space=vmem, size = 0x400, scoped, tag = 'input window, operand 8, single buffered']
    #allocation14 [shape = 's32[1]{0}', space=sflag, size = 0x4, scoped, tag = 'scoped memory for cnn_forward.1']
    %14 = vsyncpa [#allocation3], 0
    %15 = vsyncpa [#allocation5], 0
    %16 = vsyncpa [#allocation8], 0
    %17 = vsyncpa [#allocation11], 0
    %18 = vsyncpa [#allocation14], 0
    // Predicated region
    $region2: #{cnn_forward.1} parent=1 // pred_check
      _
    $region3: #{cnn_forward.1} parent=1 // pred_check_branch
      %20 = sbr.rel (0) target = $region5
    $region4: #{cnn_forward.1} parent=1 // pred_region
      _
    $region5: #{cnn_forward.1} parent=1 // pred_fallthru
      _
    // Predicated region
    $region6: #{cnn_forward.1} parent=1 // pred_check
      _
    $region7: #{cnn_forward.1} parent=1 // pred_check_branch
      %22 = sbr.rel (0) target = $region9
    $region8: #{cnn_forward.1} parent=1 // pred_region
      %24 = vsyncadd [#allocation3], 0
      %s25 = sshll.u32 %s1, 4
      %s26 = int_to_ptr.hbm [resolvable:$true] %s25
      %s27 = sshll.u32 [#allocation2], 4
      %s28 = int_to_ptr.vmem [resolvable:$true] %s27
      %33 = dma.hbm_to_vmem [thread:$0]  %s26, 45056, %s28, [#allocation3], 1408, 1408, 88
    $region9: #{cnn_forward.1} parent=1 // pred_fallthru
      _
    // Predicated region
    $region10: #{cnn_forward.1} parent=1 // pred_check
      _
    $region11: #{cnn_forward.1} parent=1 // pred_check_branch
      %35 = sbr.rel (0) target = $region13
    $region12: #{cnn_forward.1} parent=1 // pred_region
      %37 = vsyncadd [#allocation5], 0
      %s39 = sshll.u32 %s2, 4
      %s40 = int_to_ptr.hbm [resolvable:$true] %s39
      %s41 = sshll.u32 [#allocation4], 4
      %s42 = int_to_ptr.vmem [resolvable:$true] %s41
      %44 = dma.hbm_to_vmem [thread:$0]  %s40, 352, %s42, [#allocation5]
    $region13: #{cnn_forward.1} parent=1 // pred_fallthru
      _
    // Predicated region
    $region14: #{cnn_forward.1} parent=1 // pred_check
      _
    $region15: #{cnn_forward.1} parent=1 // pred_check_branch
      %46 = sbr.rel (0) target = $region17
    $region16: #{cnn_forward.1} parent=1 // pred_region
      %48 = vsyncadd [#allocation5], 0
      %s49 = sshll.u32 %s3, 4
      %s50 = int_to_ptr.hbm [resolvable:$true] %s49
      %s51 = sshll.u32 [#allocation6], 4
      %s52 = int_to_ptr.vmem [resolvable:$true] %s51
      %57 = dma.hbm_to_vmem [thread:$0]  %s50, 90112, %s52, [#allocation5], 256, 256, 16
    $region17: #{cnn_forward.1} parent=1 // pred_fallthru
      _
    // Predicated region
    $region18: #{cnn_forward.1} parent=1 // pred_check
      _
    $region19: #{cnn_forward.1} parent=1 // pred_check_branch
      %59 = sbr.rel (0) target = $region21
    $region20: #{cnn_forward.1} parent=1 // pred_region
      %61 = vsyncadd [#allocation8], 0
      %s63 = sshll.u32 %s4, 4
      %s64 = int_to_ptr.hbm [resolvable:$true] %s63
      %s65 = sshll.u32 [#allocation7], 4
      %s66 = int_to_ptr.vmem [resolvable:$true] %s65
      %68 = dma.hbm_to_vmem [thread:$0]  %s64, 64, %s66, [#allocation8]
    $region21: #{cnn_forward.1} parent=1 // pred_fallthru
      _
    // Predicated region
    $region22: #{cnn_forward.1} parent=1 // pred_check
      _
    $region23: #{cnn_forward.1} parent=1 // pred_check_branch
      %70 = sbr.rel (0) target = $region25
    $region24: #{cnn_forward.1} parent=1 // pred_region
      %72 = vsyncadd [#allocation8], 0
      %s73 = sshll.u32 %s5, 4
      %s74 = int_to_ptr.hbm [resolvable:$true] %s73
      %s75 = sshll.u32 [#allocation9], 4
      %s76 = int_to_ptr.vmem [resolvable:$true] %s75
      %81 = dma.hbm_to_vmem [thread:$0]  %s74, 4096, %s76, [#allocation8], 64, 64, 4
    $region25: #{cnn_forward.1} parent=1 // pred_fallthru
      _
    // Predicated region
    $region26: #{cnn_forward.1} parent=1 // pred_check
      _
    $region27: #{cnn_forward.1} parent=1 // pred_check_branch
      %83 = sbr.rel (0) target = $region29
    $region28: #{cnn_forward.1} parent=1 // pred_region
      %85 = vsyncadd [#allocation11], 0
      %s87 = sshll.u32 %s6, 4
      %s88 = int_to_ptr.hbm [resolvable:$true] %s87
      %s89 = sshll.u32 [#allocation10], 4
      %s90 = int_to_ptr.vmem [resolvable:$true] %s89
      %92 = dma.hbm_to_vmem [thread:$0]  %s88, 16, %s90, [#allocation11]
    $region29: #{cnn_forward.1} parent=1 // pred_fallthru
      _
    // Predicated region
    $region30: #{cnn_forward.1} parent=1 // pred_check
      _
    $region31: #{cnn_forward.1} parent=1 // pred_check_branch
      %94 = sbr.rel (0) target = $region33
    $region32: #{cnn_forward.1} parent=1 // pred_region
      %96 = vsyncadd [#allocation11], 0
      %s97 = sshll.u32 %s7, 4
      %s98 = int_to_ptr.hbm [resolvable:$true] %s97
      %s99 = sshll.u32 [#allocation12], 4
      %s100 = int_to_ptr.vmem [resolvable:$true] %s99
      %105 = dma.hbm_to_vmem [thread:$0]  %s98, 1024, %s100, [#allocation11], 64, 64, 4
    $region33: #{cnn_forward.1} parent=1 // pred_fallthru
      _
    // Predicated region
    $region34: #{cnn_forward.1} parent=1 // pred_check
      _
    $region35: #{cnn_forward.1} parent=1 // pred_check_branch
      %107 = sbr.rel (0) target = $region37
    $region36: #{cnn_forward.1} parent=1 // pred_region
      %109 = vsyncadd [#allocation14], 0
      %s111 = sshll.u32 %s8, 4
      %s112 = int_to_ptr.hbm [resolvable:$true] %s111
      %s113 = sshll.u32 [#allocation13], 4
      %s114 = int_to_ptr.vmem [resolvable:$true] %s113
      %116 = dma.hbm_to_vmem [thread:$0]  %s112, 16, %s114, [#allocation14]
    $region37: #{cnn_forward.1} parent=1 // pred_fallthru
      _
    // Predicated region
    $region38: #{cnn_forward.1} parent=1 // pred_check
      _
    $region39: #{cnn_forward.1} parent=1 // pred_check_branch
      %118 = sbr.rel (0) target = $region41
    $region40: #{cnn_forward.1} parent=1 // pred_region
      %120 = dma.done [#allocation3], 45056
    $region41: #{cnn_forward.1} parent=1 // pred_fallthru
      _
    // Predicated region
    $region42: #{cnn_forward.1} parent=1 // pred_check
      _
    $region43: #{cnn_forward.1} parent=1 // pred_check_branch
      %122 = sbr.rel (0) target = $region45
    $region44: #{cnn_forward.1} parent=1 // pred_region
      %124 = dma.done [#allocation5], 352
    $region45: #{cnn_forward.1} parent=1 // pred_fallthru
      _
    // Predicated region
    $region46: #{cnn_forward.1} parent=1 // pred_check
      _
    $region47: #{cnn_forward.1} parent=1 // pred_check_branch
      %126 = sbr.rel (0) target = $region49
    $region48: #{cnn_forward.1} parent=1 // pred_region
      %128 = dma.done [#allocation5], 90112
    $region49: #{cnn_forward.1} parent=1 // pred_fallthru
      _
    // Predicated region
    $region50: #{cnn_forward.1} parent=1 // pred_check
      _
    $region51: #{cnn_forward.1} parent=1 // pred_check_branch
      %130 = sbr.rel (0) target = $region53
    $region52: #{cnn_forward.1} parent=1 // pred_region
      %132 = dma.done [#allocation8], 64
    $region53: #{cnn_forward.1} parent=1 // pred_fallthru
      _
    // Predicated region
    $region54: #{cnn_forward.1} parent=1 // pred_check
      _
    $region55: #{cnn_forward.1} parent=1 // pred_check_branch
      %134 = sbr.rel (0) target = $region57
    $region56: #{cnn_forward.1} parent=1 // pred_region
      %136 = dma.done [#allocation8], 4096
    $region57: #{cnn_forward.1} parent=1 // pred_fallthru
      _
    // Predicated region
    $region58: #{cnn_forward.1} parent=1 // pred_check
      _
    $region59: #{cnn_forward.1} parent=1 // pred_check_branch
      %138 = sbr.rel (0) target = $region61
    $region60: #{cnn_forward.1} parent=1 // pred_region
      %140 = dma.done [#allocation11], 16
    $region61: #{cnn_forward.1} parent=1 // pred_fallthru
      _
    // Predicated region
    $region62: #{cnn_forward.1} parent=1 // pred_check
      _
    $region63: #{cnn_forward.1} parent=1 // pred_check_branch
      %142 = sbr.rel (0) target = $region65
    $region64: #{cnn_forward.1} parent=1 // pred_region
      %144 = dma.done [#allocation11], 1024
    $region65: #{cnn_forward.1} parent=1 // pred_fallthru
      _
    // Predicated region
    $region66: #{cnn_forward.1} parent=1 // pred_check
      _
    $region67: #{cnn_forward.1} parent=1 // pred_check_branch
      %146 = sbr.rel (0) target = $region69
    $region68: #{cnn_forward.1} parent=1 // pred_region
      %148 = dma.done [#allocation14], 16
    $region69: #{cnn_forward.1} parent=1 // pred_fallthru
      _
    %v149 = vld [vmem:[%s0] sm:$0xff]
    %v150 = vld [vmem:[%s0 + $0x8] sm:$0xff]
    %v151 = vpack.c.bf16 %v149, %v149
    %v152 = vpack.c.bf16 %v150, %v150
    %v153 = vld [vmem:[#allocation2] sm:$0xff]
    %v154 = vld [vmem:[#allocation2 + $0x8] sm:$0xff]
    %v155 = vld [vmem:[#allocation2 + $0x10] sm:$0xff]
    %v156 = vld [vmem:[#allocation2 + $0x18] sm:$0xff]
    %v157 = vld [vmem:[#allocation2 + $0x20] sm:$0xff]
    %v158 = vld [vmem:[#allocation2 + $0x28] sm:$0xff]
    %v159 = vld [vmem:[#allocation2 + $0x30] sm:$0xff]
    %v160 = vld [vmem:[#allocation2 + $0x38] sm:$0xff]
    %v161 = vld [vmem:[#allocation2 + $0x40] sm:$0xff]
    %v162 = vld [vmem:[#allocation2 + $0x48] sm:$0xff]
    %v163 = vld [vmem:[#allocation2 + $0x50] sm:$0xff]
    %v164 = vld [vmem:[#allocation2 + $0x58] sm:$0xff]
    %v165 = vld [vmem:[#allocation2 + $0x60] sm:$0xff]
    %v166 = vld [vmem:[#allocation2 + $0x68] sm:$0xff]
    %v167 = vld [vmem:[#allocation2 + $0x70] sm:$0xff]
    %v168 = vld [vmem:[#allocation2 + $0x78] sm:$0xff]
    %v169 = vld [vmem:[#allocation2 + $0x80] sm:$0xff]
    %v170 = vld [vmem:[#allocation2 + $0x88] sm:$0xff]
    %v171 = vld [vmem:[#allocation2 + $0x90] sm:$0xff]
    %v172 = vld [vmem:[#allocation2 + $0x98] sm:$0xff]
    %v173 = vld [vmem:[#allocation2 + $0xa0] sm:$0xff]
    %v174 = vld [vmem:[#allocation2 + $0xa8] sm:$0xff]
    %v175 = vld [vmem:[#allocation2 + $0xb0] sm:$0xff]
    %v176 = vld [vmem:[#allocation2 + $0xb8] sm:$0xff]
    %v177 = vld [vmem:[#allocation2 + $0xc0] sm:$0xff]
    %v178 = vld [vmem:[#allocation2 + $0xc8] sm:$0xff]
    %v179 = vld [vmem:[#allocation2 + $0xd0] sm:$0xff]
    %v180 = vld [vmem:[#allocation2 + $0xd8] sm:$0xff]
    %v181 = vld [vmem:[#allocation2 + $0xe0] sm:$0xff]
    %v182 = vld [vmem:[#allocation2 + $0xe8] sm:$0xff]
    %v183 = vld [vmem:[#allocation2 + $0xf0] sm:$0xff]
    %v184 = vld [vmem:[#allocation2 + $0xf8] sm:$0xff]
    %v185 = vld [vmem:[#allocation2 + $0x100] sm:$0xff]
    %v186 = vld [vmem:[#allocation2 + $0x108] sm:$0xff]
    %v187 = vld [vmem:[#allocation2 + $0x110] sm:$0xff]
    %v188 = vld [vmem:[#allocation2 + $0x118] sm:$0xff]
    %v189 = vld [vmem:[#allocation2 + $0x120] sm:$0xff]
    %v190 = vld [vmem:[#allocation2 + $0x128] sm:$0xff]
    %v191 = vld [vmem:[#allocation2 + $0x130] sm:$0xff]
    %v192 = vld [vmem:[#allocation2 + $0x138] sm:$0xff]
    %v193 = vld [vmem:[#allocation2 + $0x140] sm:$0xff]
    %v194 = vld [vmem:[#allocation2 + $0x148] sm:$0xff]
    %v195 = vld [vmem:[#allocation2 + $0x150] sm:$0xff]
    %v196 = vld [vmem:[#allocation2 + $0x158] sm:$0xff]
    %v197 = vld [vmem:[#allocation2 + $0x160] sm:$0xff]
    %v198 = vld [vmem:[#allocation2 + $0x168] sm:$0xff]
    %v199 = vld [vmem:[#allocation2 + $0x170] sm:$0xff]
    %v200 = vld [vmem:[#allocation2 + $0x178] sm:$0xff]
    %v201 = vld [vmem:[#allocation2 + $0x180] sm:$0xff]
    %v202 = vld [vmem:[#allocation2 + $0x188] sm:$0xff]
    %v203 = vld [vmem:[#allocation2 + $0x190] sm:$0xff]
    %v204 = vld [vmem:[#allocation2 + $0x198] sm:$0xff]
    %v205 = vld [vmem:[#allocation2 + $0x1a0] sm:$0xff]
    %v206 = vld [vmem:[#allocation2 + $0x1a8] sm:$0xff]
    %v207 = vld [vmem:[#allocation2 + $0x1b0] sm:$0xff]
    %v208 = vld [vmem:[#allocation2 + $0x1b8] sm:$0xff]
    %v209 = vld [vmem:[#allocation2 + $0x1c0] sm:$0xff]
    %v210 = vld [vmem:[#allocation2 + $0x1c8] sm:$0xff]
    %v211 = vld [vmem:[#allocation2 + $0x1d0] sm:$0xff]
    %v212 = vld [vmem:[#allocation2 + $0x1d8] sm:$0xff]
    %v213 = vld [vmem:[#allocation2 + $0x1e0] sm:$0xff]
    %v214 = vld [vmem:[#allocation2 + $0x1e8] sm:$0xff]
    %v215 = vld [vmem:[#allocation2 + $0x1f0] sm:$0xff]
    %v216 = vld [vmem:[#allocation2 + $0x1f8] sm:$0xff]
    %v217 = vld [vmem:[#allocation2 + $0x200] sm:$0xff]
    %v218 = vld [vmem:[#allocation2 + $0x208] sm:$0xff]
    %v219 = vld [vmem:[#allocation2 + $0x210] sm:$0xff]
    %v220 = vld [vmem:[#allocation2 + $0x218] sm:$0xff]
    %v221 = vld [vmem:[#allocation2 + $0x220] sm:$0xff]
    %v222 = vld [vmem:[#allocation2 + $0x228] sm:$0xff]
    %v223 = vld [vmem:[#allocation2 + $0x230] sm:$0xff]
    %v224 = vld [vmem:[#allocation2 + $0x238] sm:$0xff]
    %v225 = vld [vmem:[#allocation2 + $0x240] sm:$0xff]
    %v226 = vld [vmem:[#allocation2 + $0x248] sm:$0xff]
    %v227 = vld [vmem:[#allocation2 + $0x250] sm:$0xff]
    %v228 = vld [vmem:[#allocation2 + $0x258] sm:$0xff]
    %v229 = vld [vmem:[#allocation2 + $0x260] sm:$0xff]
    %v230 = vld [vmem:[#allocation2 + $0x268] sm:$0xff]
    %v231 = vld [vmem:[#allocation2 + $0x270] sm:$0xff]
    %v232 = vld [vmem:[#allocation2 + $0x278] sm:$0xff]
    %v233 = vld [vmem:[#allocation2 + $0x280] sm:$0xff]
    %v234 = vld [vmem:[#allocation2 + $0x288] sm:$0xff]
    %v235 = vld [vmem:[#allocation2 + $0x290] sm:$0xff]
    %v236 = vld [vmem:[#allocation2 + $0x298] sm:$0xff]
    %v237 = vld [vmem:[#allocation2 + $0x2a0] sm:$0xff]
    %v238 = vld [vmem:[#allocation2 + $0x2a8] sm:$0xff]
    %v239 = vld [vmem:[#allocation2 + $0x2b0] sm:$0xff]
    %v240 = vld [vmem:[#allocation2 + $0x2b8] sm:$0xff]
    %v241 = vld [vmem:[#allocation2 + $0x2c0] sm:$0xff]
    %v242 = vld [vmem:[#allocation2 + $0x2c8] sm:$0xff]
    %v243 = vld [vmem:[#allocation2 + $0x2d0] sm:$0xff]
    %v244 = vld [vmem:[#allocation2 + $0x2d8] sm:$0xff]
    %v245 = vld [vmem:[#allocation2 + $0x2e0] sm:$0xff]
    %v246 = vld [vmem:[#allocation2 + $0x2e8] sm:$0xff]
    %v247 = vld [vmem:[#allocation2 + $0x2f0] sm:$0xff]
    %v248 = vld [vmem:[#allocation2 + $0x2f8] sm:$0xff]
    %v249 = vld [vmem:[#allocation2 + $0x300] sm:$0xff]
    %v250 = vld [vmem:[#allocation2 + $0x308] sm:$0xff]
    %v251 = vld [vmem:[#allocation2 + $0x310] sm:$0xff]
    %v252 = vld [vmem:[#allocation2 + $0x318] sm:$0xff]
    %v253 = vld [vmem:[#allocation2 + $0x320] sm:$0xff]
    %v254 = vld [vmem:[#allocation2 + $0x328] sm:$0xff]
    %v255 = vld [vmem:[#allocation2 + $0x330] sm:$0xff]
    %v256 = vld [vmem:[#allocation2 + $0x338] sm:$0xff]
    %v257 = vld [vmem:[#allocation2 + $0x340] sm:$0xff]
    %v258 = vld [vmem:[#allocation2 + $0x348] sm:$0xff]
    %v259 = vld [vmem:[#allocation2 + $0x350] sm:$0xff]
    %v260 = vld [vmem:[#allocation2 + $0x358] sm:$0xff]
    %v261 = vld [vmem:[#allocation2 + $0x360] sm:$0xff]
    %v262 = vld [vmem:[#allocation2 + $0x368] sm:$0xff]
    %v263 = vld [vmem:[#allocation2 + $0x370] sm:$0xff]
    %v264 = vld [vmem:[#allocation2 + $0x378] sm:$0xff]
    %v265 = vld [vmem:[#allocation2 + $0x380] sm:$0xff]
    %v266 = vld [vmem:[#allocation2 + $0x388] sm:$0xff]
    %v267 = vld [vmem:[#allocation2 + $0x390] sm:$0xff]
    %v268 = vld [vmem:[#allocation2 + $0x398] sm:$0xff]
    %v269 = vld [vmem:[#allocation2 + $0x3a0] sm:$0xff]
    %v270 = vld [vmem:[#allocation2 + $0x3a8] sm:$0xff]
    %v271 = vld [vmem:[#allocation2 + $0x3b0] sm:$0xff]
    %v272 = vld [vmem:[#allocation2 + $0x3b8] sm:$0xff]
    %v273 = vld [vmem:[#allocation2 + $0x3c0] sm:$0xff]
    %v274 = vld [vmem:[#allocation2 + $0x3c8] sm:$0xff]
    %v275 = vld [vmem:[#allocation2 + $0x3d0] sm:$0xff]
    %v276 = vld [vmem:[#allocation2 + $0x3d8] sm:$0xff]
    %v277 = vld [vmem:[#allocation2 + $0x3e0] sm:$0xff]
    %v278 = vld [vmem:[#allocation2 + $0x3e8] sm:$0xff]
    %v279 = vld [vmem:[#allocation2 + $0x3f0] sm:$0xff]
    %v280 = vld [vmem:[#allocation2 + $0x3f8] sm:$0xff]
    %v281 = vld [vmem:[#allocation2 + $0x400] sm:$0xff]
    %v282 = vld [vmem:[#allocation2 + $0x408] sm:$0xff]
    %v283 = vld [vmem:[#allocation2 + $0x410] sm:$0xff]
    %v284 = vld [vmem:[#allocation2 + $0x418] sm:$0xff]
    %v285 = vld [vmem:[#allocation2 + $0x420] sm:$0xff]
    %v286 = vld [vmem:[#allocation2 + $0x428] sm:$0xff]
    %v287 = vld [vmem:[#allocation2 + $0x430] sm:$0xff]
    %v288 = vld [vmem:[#allocation2 + $0x438] sm:$0xff]
    %v289 = vld [vmem:[#allocation2 + $0x440] sm:$0xff]
    %v290 = vld [vmem:[#allocation2 + $0x448] sm:$0xff]
    %v291 = vld [vmem:[#allocation2 + $0x450] sm:$0xff]
    %v292 = vld [vmem:[#allocation2 + $0x458] sm:$0xff]
    %v293 = vld [vmem:[#allocation2 + $0x460] sm:$0xff]
    %v294 = vld [vmem:[#allocation2 + $0x468] sm:$0xff]
    %v295 = vld [vmem:[#allocation2 + $0x470] sm:$0xff]
    %v296 = vld [vmem:[#allocation2 + $0x478] sm:$0xff]
    %v297 = vld [vmem:[#allocation2 + $0x480] sm:$0xff]
    %v298 = vld [vmem:[#allocation2 + $0x488] sm:$0xff]
    %v299 = vld [vmem:[#allocation2 + $0x490] sm:$0xff]
    %v300 = vld [vmem:[#allocation2 + $0x498] sm:$0xff]
    %v301 = vld [vmem:[#allocation2 + $0x4a0] sm:$0xff]
    %v302 = vld [vmem:[#allocation2 + $0x4a8] sm:$0xff]
    %v303 = vld [vmem:[#allocation2 + $0x4b0] sm:$0xff]
    %v304 = vld [vmem:[#allocation2 + $0x4b8] sm:$0xff]
    %v305 = vld [vmem:[#allocation2 + $0x4c0] sm:$0xff]
    %v306 = vld [vmem:[#allocation2 + $0x4c8] sm:$0xff]
    %v307 = vld [vmem:[#allocation2 + $0x4d0] sm:$0xff]
    %v308 = vld [vmem:[#allocation2 + $0x4d8] sm:$0xff]
    %v309 = vld [vmem:[#allocation2 + $0x4e0] sm:$0xff]
    %v310 = vld [vmem:[#allocation2 + $0x4e8] sm:$0xff]
    %v311 = vld [vmem:[#allocation2 + $0x4f0] sm:$0xff]
    %v312 = vld [vmem:[#allocation2 + $0x4f8] sm:$0xff]
    %v313 = vld [vmem:[#allocation2 + $0x500] sm:$0xff]
    %v314 = vld [vmem:[#allocation2 + $0x508] sm:$0xff]
    %v315 = vld [vmem:[#allocation2 + $0x510] sm:$0xff]
    %v316 = vld [vmem:[#allocation2 + $0x518] sm:$0xff]
    %v317 = vld [vmem:[#allocation2 + $0x520] sm:$0xff]
    %v318 = vld [vmem:[#allocation2 + $0x528] sm:$0xff]
    %v319 = vld [vmem:[#allocation2 + $0x530] sm:$0xff]
    %v320 = vld [vmem:[#allocation2 + $0x538] sm:$0xff]
    %v321 = vld [vmem:[#allocation2 + $0x540] sm:$0xff]
    %v322 = vld [vmem:[#allocation2 + $0x548] sm:$0xff]
    %v323 = vld [vmem:[#allocation2 + $0x550] sm:$0xff]
    %v324 = vld [vmem:[#allocation2 + $0x558] sm:$0xff]
    %v325 = vld [vmem:[#allocation2 + $0x560] sm:$0xff]
    %v326 = vld [vmem:[#allocation2 + $0x568] sm:$0xff]
    %v327 = vld [vmem:[#allocation2 + $0x570] sm:$0xff]
    %v328 = vld [vmem:[#allocation2 + $0x578] sm:$0xff]
    %v329 = vld [vmem:[#allocation2 + $0x580] sm:$0xff]
    %v330 = vld [vmem:[#allocation2 + $0x588] sm:$0xff]
    %v331 = vld [vmem:[#allocation2 + $0x590] sm:$0xff]
    %v332 = vld [vmem:[#allocation2 + $0x598] sm:$0xff]
    %v333 = vld [vmem:[#allocation2 + $0x5a0] sm:$0xff]
    %v334 = vld [vmem:[#allocation2 + $0x5a8] sm:$0xff]
    %v335 = vld [vmem:[#allocation2 + $0x5b0] sm:$0xff]
    %v336 = vld [vmem:[#allocation2 + $0x5b8] sm:$0xff]
    %v337 = vld [vmem:[#allocation2 + $0x5c0] sm:$0xff]
    %v338 = vld [vmem:[#allocation2 + $0x5c8] sm:$0xff]
    %v339 = vld [vmem:[#allocation2 + $0x5d0] sm:$0xff]
    %v340 = vld [vmem:[#allocation2 + $0x5d8] sm:$0xff]
    %v341 = vld [vmem:[#allocation2 + $0x5e0] sm:$0xff]
    %v342 = vld [vmem:[#allocation2 + $0x5e8] sm:$0xff]
    %v343 = vld [vmem:[#allocation2 + $0x5f0] sm:$0xff]
    %v344 = vld [vmem:[#allocation2 + $0x5f8] sm:$0xff]
    %v345 = vld [vmem:[#allocation2 + $0x600] sm:$0xff]
    %v346 = vld [vmem:[#allocation2 + $0x608] sm:$0xff]
    %v347 = vld [vmem:[#allocation2 + $0x610] sm:$0xff]
    %v348 = vld [vmem:[#allocation2 + $0x618] sm:$0xff]
    %v349 = vld [vmem:[#allocation2 + $0x620] sm:$0xff]
    %v350 = vld [vmem:[#allocation2 + $0x628] sm:$0xff]
    %v351 = vld [vmem:[#allocation2 + $0x630] sm:$0xff]
    %v352 = vld [vmem:[#allocation2 + $0x638] sm:$0xff]
    %v353 = vld [vmem:[#allocation2 + $0x640] sm:$0xff]
    %v354 = vld [vmem:[#allocation2 + $0x648] sm:$0xff]
    %v355 = vld [vmem:[#allocation2 + $0x650] sm:$0xff]
    %v356 = vld [vmem:[#allocation2 + $0x658] sm:$0xff]
    %v357 = vld [vmem:[#allocation2 + $0x660] sm:$0xff]
    %v358 = vld [vmem:[#allocation2 + $0x668] sm:$0xff]
    %v359 = vld [vmem:[#allocation2 + $0x670] sm:$0xff]
    %v360 = vld [vmem:[#allocation2 + $0x678] sm:$0xff]
    %v361 = vld [vmem:[#allocation2 + $0x680] sm:$0xff]
    %v362 = vld [vmem:[#allocation2 + $0x688] sm:$0xff]
    %v363 = vld [vmem:[#allocation2 + $0x690] sm:$0xff]
    %v364 = vld [vmem:[#allocation2 + $0x698] sm:$0xff]
    %v365 = vld [vmem:[#allocation2 + $0x6a0] sm:$0xff]
    %v366 = vld [vmem:[#allocation2 + $0x6a8] sm:$0xff]
    %v367 = vld [vmem:[#allocation2 + $0x6b0] sm:$0xff]
    %v368 = vld [vmem:[#allocation2 + $0x6b8] sm:$0xff]
    %v369 = vld [vmem:[#allocation2 + $0x6c0] sm:$0xff]
    %v370 = vld [vmem:[#allocation2 + $0x6c8] sm:$0xff]
    %v371 = vld [vmem:[#allocation2 + $0x6d0] sm:$0xff]
    %v372 = vld [vmem:[#allocation2 + $0x6d8] sm:$0xff]
    %v373 = vld [vmem:[#allocation2 + $0x6e0] sm:$0xff]
    %v374 = vld [vmem:[#allocation2 + $0x6e8] sm:$0xff]
    %v375 = vld [vmem:[#allocation2 + $0x6f0] sm:$0xff]
    %v376 = vld [vmem:[#allocation2 + $0x6f8] sm:$0xff]
    %v377 = vld [vmem:[#allocation2 + $0x700] sm:$0xff]
    %v378 = vld [vmem:[#allocation2 + $0x708] sm:$0xff]
    %v379 = vld [vmem:[#allocation2 + $0x710] sm:$0xff]
    %v380 = vld [vmem:[#allocation2 + $0x718] sm:$0xff]
    %v381 = vld [vmem:[#allocation2 + $0x720] sm:$0xff]
    %v382 = vld [vmem:[#allocation2 + $0x728] sm:$0xff]
    %v383 = vld [vmem:[#allocation2 + $0x730] sm:$0xff]
    %v384 = vld [vmem:[#allocation2 + $0x738] sm:$0xff]
    %v385 = vld [vmem:[#allocation2 + $0x740] sm:$0xff]
    %v386 = vld [vmem:[#allocation2 + $0x748] sm:$0xff]
    %v387 = vld [vmem:[#allocation2 + $0x750] sm:$0xff]
    %v388 = vld [vmem:[#allocation2 + $0x758] sm:$0xff]
    %v389 = vld [vmem:[#allocation2 + $0x760] sm:$0xff]
    %v390 = vld [vmem:[#allocation2 + $0x768] sm:$0xff]
    %v391 = vld [vmem:[#allocation2 + $0x770] sm:$0xff]
    %v392 = vld [vmem:[#allocation2 + $0x778] sm:$0xff]
    %v393 = vld [vmem:[#allocation2 + $0x780] sm:$0xff]
    %v394 = vld [vmem:[#allocation2 + $0x788] sm:$0xff]
    %v395 = vld [vmem:[#allocation2 + $0x790] sm:$0xff]
    %v396 = vld [vmem:[#allocation2 + $0x798] sm:$0xff]
    %v397 = vld [vmem:[#allocation2 + $0x7a0] sm:$0xff]
    %v398 = vld [vmem:[#allocation2 + $0x7a8] sm:$0xff]
    %v399 = vld [vmem:[#allocation2 + $0x7b0] sm:$0xff]
    %v400 = vld [vmem:[#allocation2 + $0x7b8] sm:$0xff]
    %v401 = vld [vmem:[#allocation2 + $0x7c0] sm:$0xff]
    %v402 = vld [vmem:[#allocation2 + $0x7c8] sm:$0xff]
    %v403 = vld [vmem:[#allocation2 + $0x7d0] sm:$0xff]
    %v404 = vld [vmem:[#allocation2 + $0x7d8] sm:$0xff]
    %v405 = vld [vmem:[#allocation2 + $0x7e0] sm:$0xff]
    %v406 = vld [vmem:[#allocation2 + $0x7e8] sm:$0xff]
    %v407 = vld [vmem:[#allocation2 + $0x7f0] sm:$0xff]
    %v408 = vld [vmem:[#allocation2 + $0x7f8] sm:$0xff]
    %v409 = vld [vmem:[#allocation2 + $0x800] sm:$0xff]
    %v410 = vld [vmem:[#allocation2 + $0x808] sm:$0xff]
    %v411 = vld [vmem:[#allocation2 + $0x810] sm:$0xff]
    %v412 = vld [vmem:[#allocation2 + $0x818] sm:$0xff]
    %v413 = vld [vmem:[#allocation2 + $0x820] sm:$0xff]
    %v414 = vld [vmem:[#allocation2 + $0x828] sm:$0xff]
    %v415 = vld [vmem:[#allocation2 + $0x830] sm:$0xff]
    %v416 = vld [vmem:[#allocation2 + $0x838] sm:$0xff]
    %v417 = vld [vmem:[#allocation2 + $0x840] sm:$0xff]
    %v418 = vld [vmem:[#allocation2 + $0x848] sm:$0xff]
    %v419 = vld [vmem:[#allocation2 + $0x850] sm:$0xff]
    %v420 = vld [vmem:[#allocation2 + $0x858] sm:$0xff]
    %v421 = vld [vmem:[#allocation2 + $0x860] sm:$0xff]
    %v422 = vld [vmem:[#allocation2 + $0x868] sm:$0xff]
    %v423 = vld [vmem:[#allocation2 + $0x870] sm:$0xff]
    %v424 = vld [vmem:[#allocation2 + $0x878] sm:$0xff]
    %v425 = vld [vmem:[#allocation2 + $0x880] sm:$0xff]
    %v426 = vld [vmem:[#allocation2 + $0x888] sm:$0xff]
    %v427 = vld [vmem:[#allocation2 + $0x890] sm:$0xff]
    %v428 = vld [vmem:[#allocation2 + $0x898] sm:$0xff]
    %v429 = vld [vmem:[#allocation2 + $0x8a0] sm:$0xff]
    %v430 = vld [vmem:[#allocation2 + $0x8a8] sm:$0xff]
    %v431 = vld [vmem:[#allocation2 + $0x8b0] sm:$0xff]
    %v432 = vld [vmem:[#allocation2 + $0x8b8] sm:$0xff]
    %v433 = vld [vmem:[#allocation2 + $0x8c0] sm:$0xff]
    %v434 = vld [vmem:[#allocation2 + $0x8c8] sm:$0xff]
    %v435 = vld [vmem:[#allocation2 + $0x8d0] sm:$0xff]
    %v436 = vld [vmem:[#allocation2 + $0x8d8] sm:$0xff]
    %v437 = vld [vmem:[#allocation2 + $0x8e0] sm:$0xff]
    %v438 = vld [vmem:[#allocation2 + $0x8e8] sm:$0xff]
    %v439 = vld [vmem:[#allocation2 + $0x8f0] sm:$0xff]
    %v440 = vld [vmem:[#allocation2 + $0x8f8] sm:$0xff]
    %v441 = vld [vmem:[#allocation2 + $0x900] sm:$0xff]
    %v442 = vld [vmem:[#allocation2 + $0x908] sm:$0xff]
    %v443 = vld [vmem:[#allocation2 + $0x910] sm:$0xff]
    %v444 = vld [vmem:[#allocation2 + $0x918] sm:$0xff]
    %v445 = vld [vmem:[#allocation2 + $0x920] sm:$0xff]
    %v446 = vld [vmem:[#allocation2 + $0x928] sm:$0xff]
    %v447 = vld [vmem:[#allocation2 + $0x930] sm:$0xff]
    %v448 = vld [vmem:[#allocation2 + $0x938] sm:$0xff]
    %v449 = vld [vmem:[#allocation2 + $0x940] sm:$0xff]
    %v450 = vld [vmem:[#allocation2 + $0x948] sm:$0xff]
    %v451 = vld [vmem:[#allocation2 + $0x950] sm:$0xff]
    %v452 = vld [vmem:[#allocation2 + $0x958] sm:$0xff]
    %v453 = vld [vmem:[#allocation2 + $0x960] sm:$0xff]
    %v454 = vld [vmem:[#allocation2 + $0x968] sm:$0xff]
    %v455 = vld [vmem:[#allocation2 + $0x970] sm:$0xff]
    %v456 = vld [vmem:[#allocation2 + $0x978] sm:$0xff]
    %v457 = vld [vmem:[#allocation2 + $0x980] sm:$0xff]
    %v458 = vld [vmem:[#allocation2 + $0x988] sm:$0xff]
    %v459 = vld [vmem:[#allocation2 + $0x990] sm:$0xff]
    %v460 = vld [vmem:[#allocation2 + $0x998] sm:$0xff]
    %v461 = vld [vmem:[#allocation2 + $0x9a0] sm:$0xff]
    %v462 = vld [vmem:[#allocation2 + $0x9a8] sm:$0xff]
    %v463 = vld [vmem:[#allocation2 + $0x9b0] sm:$0xff]
    %v464 = vld [vmem:[#allocation2 + $0x9b8] sm:$0xff]
    %v465 = vld [vmem:[#allocation2 + $0x9c0] sm:$0xff]
    %v466 = vld [vmem:[#allocation2 + $0x9c8] sm:$0xff]
    %v467 = vld [vmem:[#allocation2 + $0x9d0] sm:$0xff]
    %v468 = vld [vmem:[#allocation2 + $0x9d8] sm:$0xff]
    %v469 = vld [vmem:[#allocation2 + $0x9e0] sm:$0xff]
    %v470 = vld [vmem:[#allocation2 + $0x9e8] sm:$0xff]
    %v471 = vld [vmem:[#allocation2 + $0x9f0] sm:$0xff]
    %v472 = vld [vmem:[#allocation2 + $0x9f8] sm:$0xff]
    %v473 = vld [vmem:[#allocation2 + $0xa00] sm:$0xff]
    %v474 = vld [vmem:[#allocation2 + $0xa08] sm:$0xff]
    %v475 = vld [vmem:[#allocation2 + $0xa10] sm:$0xff]
    %v476 = vld [vmem:[#allocation2 + $0xa18] sm:$0xff]
    %v477 = vld [vmem:[#allocation2 + $0xa20] sm:$0xff]
    %v478 = vld [vmem:[#allocation2 + $0xa28] sm:$0xff]
    %v479 = vld [vmem:[#allocation2 + $0xa30] sm:$0xff]
    %v480 = vld [vmem:[#allocation2 + $0xa38] sm:$0xff]
    %v481 = vld [vmem:[#allocation2 + $0xa40] sm:$0xff]
    %v482 = vld [vmem:[#allocation2 + $0xa48] sm:$0xff]
    %v483 = vld [vmem:[#allocation2 + $0xa50] sm:$0xff]
    %v484 = vld [vmem:[#allocation2 + $0xa58] sm:$0xff]
    %v485 = vld [vmem:[#allocation2 + $0xa60] sm:$0xff]
    %v486 = vld [vmem:[#allocation2 + $0xa68] sm:$0xff]
    %v487 = vld [vmem:[#allocation2 + $0xa70] sm:$0xff]
    %v488 = vld [vmem:[#allocation2 + $0xa78] sm:$0xff]
    %v489 = vld [vmem:[#allocation2 + $0xa80] sm:$0xff]
    %v490 = vld [vmem:[#allocation2 + $0xa88] sm:$0xff]
    %v491 = vld [vmem:[#allocation2 + $0xa90] sm:$0xff]
    %v492 = vld [vmem:[#allocation2 + $0xa98] sm:$0xff]
    %v493 = vld [vmem:[#allocation2 + $0xaa0] sm:$0xff]
    %v494 = vld [vmem:[#allocation2 + $0xaa8] sm:$0xff]
    %v495 = vld [vmem:[#allocation2 + $0xab0] sm:$0xff]
    %v496 = vld [vmem:[#allocation2 + $0xab8] sm:$0xff]
    %v497 = vld [vmem:[#allocation2 + $0xac0] sm:$0xff]
    %v498 = vld [vmem:[#allocation2 + $0xac8] sm:$0xff]
    %v499 = vld [vmem:[#allocation2 + $0xad0] sm:$0xff]
    %v500 = vld [vmem:[#allocation2 + $0xad8] sm:$0xff]
    %v501 = vld [vmem:[#allocation2 + $0xae0] sm:$0xff]
    %v502 = vld [vmem:[#allocation2 + $0xae8] sm:$0xff]
    %v503 = vld [vmem:[#allocation2 + $0xaf0] sm:$0xff]
    %v504 = vld [vmem:[#allocation2 + $0xaf8] sm:$0xff]
    %v505 = vld [vmem:[#allocation4] sm:$0xff]
    %v506 = vld [vmem:[#allocation4 + $0x8] sm:$0xff]
    %v507 = vld [vmem:[#allocation4 + $0x10] sm:$0x3f]
    %v511 = vperm.slane %v505, 0
    %v512 = vperm.slane %v505, 1
    %v513 = vperm.slane %v505, 2
    %v514 = vperm.slane %v505, 3
    %v515 = vperm.slane %v505, 4
    %v516 = vperm.slane %v505, 5
    %v517 = vperm.slane %v505, 6
    %v518 = vperm.slane %v505, 7
    %v519 = vperm.slane %v506, 0
    %v520 = vperm.slane %v506, 1
    %v521 = vperm.slane %v506, 2
    %v522 = vperm.slane %v506, 3
    %v523 = vperm.slane %v506, 4
    %v524 = vperm.slane %v506, 5
    %v525 = vperm.slane %v506, 6
    %v526 = vperm.slane %v506, 7
    %v527 = vperm.slane %v507, 0
    %v528 = vperm.slane %v507, 1
    %v529 = vperm.slane %v507, 2
    %v530 = vperm.slane %v507, 3
    %v531 = vperm.slane %v507, 4
    %v532 = vperm.slane %v507, 5
    %v907 = vunpack.c.l.b16 %v153
    %v908 = vunpack.c.h.b16 %v153
    %v909 = vunpack.c.l.b16 %v154
    %v910 = vunpack.c.h.b16 %v154
    %v911 = vunpack.c.l.b16 %v155
    %v912 = vunpack.c.h.b16 %v155
    %v913 = vunpack.c.l.b16 %v156
    %v914 = vunpack.c.h.b16 %v156
    %v915 = vunpack.c.l.b16 %v157
    %v916 = vunpack.c.h.b16 %v157
    %v917 = vunpack.c.l.b16 %v158
    %v918 = vunpack.c.h.b16 %v158
    %v919 = vunpack.c.l.b16 %v159
    %v920 = vunpack.c.h.b16 %v159
    %v921 = vunpack.c.l.b16 %v160
    %v922 = vunpack.c.h.b16 %v160
    %v923 = vunpack.c.l.b16 %v161
    %v924 = vunpack.c.h.b16 %v161
    %v925 = vunpack.c.l.b16 %v162
    %v926 = vunpack.c.h.b16 %v162
    %v927 = vunpack.c.l.b16 %v163
    %v928 = vunpack.c.h.b16 %v163
    %v929 = vunpack.c.l.b16 %v164
    %v930 = vunpack.c.h.b16 %v164
    %v931 = vunpack.c.l.b16 %v165
    %v932 = vunpack.c.h.b16 %v165
    %v933 = vunpack.c.l.b16 %v166
    %v934 = vunpack.c.h.b16 %v166
    %v935 = vunpack.c.l.b16 %v167
    %v936 = vunpack.c.h.b16 %v167
    %v937 = vunpack.c.l.b16 %v168
    %v938 = vunpack.c.h.b16 %v168
    %v939 = vunpack.c.l.b16 %v169
    %v940 = vunpack.c.h.b16 %v169
    %v941 = vunpack.c.l.b16 %v170
    %v942 = vunpack.c.h.b16 %v170
    %v943 = vunpack.c.l.b16 %v171
    %v944 = vunpack.c.h.b16 %v171
    %v945 = vunpack.c.l.b16 %v172
    %v946 = vunpack.c.h.b16 %v172
    %v947 = vunpack.c.l.b16 %v173
    %v948 = vunpack.c.h.b16 %v173
    %v949 = vunpack.c.l.b16 %v174
    %v950 = vunpack.c.h.b16 %v174
    %v951 = vunpack.c.l.b16 %v175
    %v952 = vunpack.c.h.b16 %v175
    %v953 = vunpack.c.l.b16 %v176
    %v954 = vunpack.c.h.b16 %v176
    %v955 = vunpack.c.l.b16 %v177
    %v956 = vunpack.c.h.b16 %v177
    %v957 = vunpack.c.l.b16 %v178
    %v958 = vunpack.c.h.b16 %v178
    %v959 = vunpack.c.l.b16 %v179
    %v960 = vunpack.c.h.b16 %v179
    %v961 = vunpack.c.l.b16 %v180
    %v962 = vunpack.c.h.b16 %v180
    %v963 = vunpack.c.l.b16 %v181
    %v964 = vunpack.c.h.b16 %v181
    %v965 = vunpack.c.l.b16 %v182
    %v966 = vunpack.c.h.b16 %v182
    %v967 = vunpack.c.l.b16 %v183
    %v968 = vunpack.c.h.b16 %v183
    %v969 = vunpack.c.l.b16 %v184
    %v970 = vunpack.c.h.b16 %v184
    %v971 = vunpack.c.l.b16 %v185
    %v972 = vunpack.c.h.b16 %v185
    %v973 = vunpack.c.l.b16 %v186
    %v974 = vunpack.c.h.b16 %v186
    %v975 = vunpack.c.l.b16 %v187
    %v976 = vunpack.c.h.b16 %v187
    %v977 = vunpack.c.l.b16 %v188
    %v978 = vunpack.c.h.b16 %v188
    %v979 = vunpack.c.l.b16 %v189
    %v980 = vunpack.c.h.b16 %v189
    %v981 = vunpack.c.l.b16 %v190
    %v982 = vunpack.c.h.b16 %v190
    %v983 = vunpack.c.l.b16 %v191
    %v984 = vunpack.c.h.b16 %v191
    %v985 = vunpack.c.l.b16 %v192
    %v986 = vunpack.c.h.b16 %v192
    %v987 = vunpack.c.l.b16 %v193
    %v988 = vunpack.c.h.b16 %v193
    %v989 = vunpack.c.l.b16 %v194
    %v990 = vunpack.c.h.b16 %v194
    %v991 = vunpack.c.l.b16 %v195
    %v992 = vunpack.c.h.b16 %v195
    %v993 = vunpack.c.l.b16 %v196
    %v994 = vunpack.c.h.b16 %v196
    %v995 = vunpack.c.l.b16 %v197
    %v996 = vunpack.c.h.b16 %v197
    %v997 = vunpack.c.l.b16 %v198
    %v998 = vunpack.c.h.b16 %v198
    %v999 = vunpack.c.l.b16 %v199
    %v1000 = vunpack.c.h.b16 %v199
    %v1001 = vunpack.c.l.b16 %v200
    %v1002 = vunpack.c.h.b16 %v200
    %v1003 = vunpack.c.l.b16 %v201
    %v1004 = vunpack.c.h.b16 %v201
    %v1005 = vunpack.c.l.b16 %v202
    %v1006 = vunpack.c.h.b16 %v202
    %v1007 = vunpack.c.l.b16 %v203
    %v1008 = vunpack.c.h.b16 %v203
    %v1009 = vunpack.c.l.b16 %v204
    %v1010 = vunpack.c.h.b16 %v204
    %v1011 = vunpack.c.l.b16 %v205
    %v1012 = vunpack.c.h.b16 %v205
    %v1013 = vunpack.c.l.b16 %v206
    %v1014 = vunpack.c.h.b16 %v206
    %v1015 = vunpack.c.l.b16 %v207
    %v1016 = vunpack.c.h.b16 %v207
    %v1017 = vunpack.c.l.b16 %v208
    %v1018 = vunpack.c.h.b16 %v208
    %v1019 = vunpack.c.l.b16 %v209
    %v1020 = vunpack.c.h.b16 %v209
    %v1021 = vunpack.c.l.b16 %v210
    %v1022 = vunpack.c.h.b16 %v210
    %v1023 = vunpack.c.l.b16 %v211
    %v1024 = vunpack.c.h.b16 %v211
    %v1025 = vunpack.c.l.b16 %v212
    %v1026 = vunpack.c.h.b16 %v212
    %v1027 = vunpack.c.l.b16 %v213
    %v1028 = vunpack.c.h.b16 %v213
    %v1029 = vunpack.c.l.b16 %v214
    %v1030 = vunpack.c.h.b16 %v214
    %v1031 = vunpack.c.l.b16 %v215
    %v1032 = vunpack.c.h.b16 %v215
    %v1033 = vunpack.c.l.b16 %v216
    %v1034 = vunpack.c.h.b16 %v216
    %v1035 = vunpack.c.l.b16 %v217
    %v1036 = vunpack.c.h.b16 %v217
    %v1037 = vunpack.c.l.b16 %v218
    %v1038 = vunpack.c.h.b16 %v218
    %v1039 = vunpack.c.l.b16 %v219
    %v1040 = vunpack.c.h.b16 %v219
    %v1041 = vunpack.c.l.b16 %v220
    %v1042 = vunpack.c.h.b16 %v220
    %v1043 = vunpack.c.l.b16 %v221
    %v1044 = vunpack.c.h.b16 %v221
    %v1045 = vunpack.c.l.b16 %v222
    %v1046 = vunpack.c.h.b16 %v222
    %v1047 = vunpack.c.l.b16 %v223
    %v1048 = vunpack.c.h.b16 %v223
    %v1049 = vunpack.c.l.b16 %v224
    %v1050 = vunpack.c.h.b16 %v224
    %v1051 = vunpack.c.l.b16 %v225
    %v1052 = vunpack.c.h.b16 %v225
    %v1053 = vunpack.c.l.b16 %v226
    %v1054 = vunpack.c.h.b16 %v226
    %v1055 = vunpack.c.l.b16 %v227
    %v1056 = vunpack.c.h.b16 %v227
    %v1057 = vunpack.c.l.b16 %v228
    %v1058 = vunpack.c.h.b16 %v228
    %v1059 = vunpack.c.l.b16 %v229
    %v1060 = vunpack.c.h.b16 %v229
    %v1061 = vunpack.c.l.b16 %v230
    %v1062 = vunpack.c.h.b16 %v230
    %v1063 = vunpack.c.l.b16 %v231
    %v1064 = vunpack.c.h.b16 %v231
    %v1065 = vunpack.c.l.b16 %v232
    %v1066 = vunpack.c.h.b16 %v232
    %v1067 = vunpack.c.l.b16 %v233
    %v1068 = vunpack.c.h.b16 %v233
    %v1069 = vunpack.c.l.b16 %v234
    %v1070 = vunpack.c.h.b16 %v234
    %v1071 = vunpack.c.l.b16 %v235
    %v1072 = vunpack.c.h.b16 %v235
    %v1073 = vunpack.c.l.b16 %v236
    %v1074 = vunpack.c.h.b16 %v236
    %v1075 = vunpack.c.l.b16 %v237
    %v1076 = vunpack.c.h.b16 %v237
    %v1077 = vunpack.c.l.b16 %v238
    %v1078 = vunpack.c.h.b16 %v238
    %v1079 = vunpack.c.l.b16 %v239
    %v1080 = vunpack.c.h.b16 %v239
    %v1081 = vunpack.c.l.b16 %v240
    %v1082 = vunpack.c.h.b16 %v240
    %v1083 = vunpack.c.l.b16 %v241
    %v1084 = vunpack.c.h.b16 %v241
    %v1085 = vunpack.c.l.b16 %v242
    %v1086 = vunpack.c.h.b16 %v242
    %v1087 = vunpack.c.l.b16 %v243
    %v1088 = vunpack.c.h.b16 %v243
    %v1089 = vunpack.c.l.b16 %v244
    %v1090 = vunpack.c.h.b16 %v244
    %v1091 = vunpack.c.l.b16 %v245
    %v1092 = vunpack.c.h.b16 %v245
    %v1093 = vunpack.c.l.b16 %v246
    %v1094 = vunpack.c.h.b16 %v246
    %v1095 = vunpack.c.l.b16 %v247
    %v1096 = vunpack.c.h.b16 %v247
    %v1097 = vunpack.c.l.b16 %v248
    %v1098 = vunpack.c.h.b16 %v248
    %v1099 = vunpack.c.l.b16 %v249
    %v1100 = vunpack.c.h.b16 %v249
    %v1101 = vunpack.c.l.b16 %v250
    %v1102 = vunpack.c.h.b16 %v250
    %v1103 = vunpack.c.l.b16 %v251
    %v1104 = vunpack.c.h.b16 %v251
    %v1105 = vunpack.c.l.b16 %v252
    %v1106 = vunpack.c.h.b16 %v252
    %v1107 = vunpack.c.l.b16 %v253
    %v1108 = vunpack.c.h.b16 %v253
    %v1109 = vunpack.c.l.b16 %v254
    %v1110 = vunpack.c.h.b16 %v254
    %v1111 = vunpack.c.l.b16 %v255
    %v1112 = vunpack.c.h.b16 %v255
    %v1113 = vunpack.c.l.b16 %v256
    %v1114 = vunpack.c.h.b16 %v256
    %v1115 = vunpack.c.l.b16 %v257
    %v1116 = vunpack.c.h.b16 %v257
    %v1117 = vunpack.c.l.b16 %v258
    %v1118 = vunpack.c.h.b16 %v258
    %v1119 = vunpack.c.l.b16 %v259
    %v1120 = vunpack.c.h.b16 %v259
    %v1121 = vunpack.c.l.b16 %v260
    %v1122 = vunpack.c.h.b16 %v260
    %v1123 = vunpack.c.l.b16 %v261
    %v1124 = vunpack.c.h.b16 %v261
    %v1125 = vunpack.c.l.b16 %v262
    %v1126 = vunpack.c.h.b16 %v262
    %v1127 = vunpack.c.l.b16 %v263
    %v1128 = vunpack.c.h.b16 %v263
    %v1129 = vunpack.c.l.b16 %v264
    %v1130 = vunpack.c.h.b16 %v264
    %v1131 = vunpack.c.l.b16 %v265
    %v1132 = vunpack.c.h.b16 %v265
    %v1133 = vunpack.c.l.b16 %v266
    %v1134 = vunpack.c.h.b16 %v266
    %v1135 = vunpack.c.l.b16 %v267
    %v1136 = vunpack.c.h.b16 %v267
    %v1137 = vunpack.c.l.b16 %v268
    %v1138 = vunpack.c.h.b16 %v268
    %v1139 = vunpack.c.l.b16 %v269
    %v1140 = vunpack.c.h.b16 %v269
    %v1141 = vunpack.c.l.b16 %v270
    %v1142 = vunpack.c.h.b16 %v270
    %v1143 = vunpack.c.l.b16 %v271
    %v1144 = vunpack.c.h.b16 %v271
    %v1145 = vunpack.c.l.b16 %v272
    %v1146 = vunpack.c.h.b16 %v272
    %v1147 = vunpack.c.l.b16 %v273
    %v1148 = vunpack.c.h.b16 %v273
    %v1149 = vunpack.c.l.b16 %v274
    %v1150 = vunpack.c.h.b16 %v274
    %v1151 = vunpack.c.l.b16 %v275
    %v1152 = vunpack.c.h.b16 %v275
    %v1153 = vunpack.c.l.b16 %v276
    %v1154 = vunpack.c.h.b16 %v276
    %v1155 = vunpack.c.l.b16 %v277
    %v1156 = vunpack.c.h.b16 %v277
    %v1157 = vunpack.c.l.b16 %v278
    %v1158 = vunpack.c.h.b16 %v278
    %v1159 = vunpack.c.l.b16 %v279
    %v1160 = vunpack.c.h.b16 %v279
    %v1161 = vunpack.c.l.b16 %v280
    %v1162 = vunpack.c.h.b16 %v280
    %v1163 = vunpack.c.l.b16 %v281
    %v1164 = vunpack.c.h.b16 %v281
    %v1165 = vunpack.c.l.b16 %v282
    %v1166 = vunpack.c.h.b16 %v282
    %v1167 = vunpack.c.l.b16 %v283
    %v1168 = vunpack.c.h.b16 %v283
    %v1169 = vunpack.c.l.b16 %v284
    %v1170 = vunpack.c.h.b16 %v284
    %v1171 = vunpack.c.l.b16 %v285
    %v1172 = vunpack.c.h.b16 %v285
    %v1173 = vunpack.c.l.b16 %v286
    %v1174 = vunpack.c.h.b16 %v286
    %v1175 = vunpack.c.l.b16 %v287
    %v1176 = vunpack.c.h.b16 %v287
    %v1177 = vunpack.c.l.b16 %v288
    %v1178 = vunpack.c.h.b16 %v288
    %v1179 = vunpack.c.l.b16 %v289
    %v1180 = vunpack.c.h.b16 %v289
    %v1181 = vunpack.c.l.b16 %v290
    %v1182 = vunpack.c.h.b16 %v290
    %v1183 = vunpack.c.l.b16 %v291
    %v1184 = vunpack.c.h.b16 %v291
    %v1185 = vunpack.c.l.b16 %v292
    %v1186 = vunpack.c.h.b16 %v292
    %v1187 = vunpack.c.l.b16 %v293
    %v1188 = vunpack.c.h.b16 %v293
    %v1189 = vunpack.c.l.b16 %v294
    %v1190 = vunpack.c.h.b16 %v294
    %v1191 = vunpack.c.l.b16 %v295
    %v1192 = vunpack.c.h.b16 %v295
    %v1193 = vunpack.c.l.b16 %v296
    %v1194 = vunpack.c.h.b16 %v296
    %v1195 = vunpack.c.l.b16 %v297
    %v1196 = vunpack.c.h.b16 %v297
    %v1197 = vunpack.c.l.b16 %v298
    %v1198 = vunpack.c.h.b16 %v298
    %v1199 = vunpack.c.l.b16 %v299
    %v1200 = vunpack.c.h.b16 %v299
    %v1201 = vunpack.c.l.b16 %v300
    %v1202 = vunpack.c.h.b16 %v300
    %v1203 = vunpack.c.l.b16 %v301
    %v1204 = vunpack.c.h.b16 %v301
    %v1205 = vunpack.c.l.b16 %v302
    %v1206 = vunpack.c.h.b16 %v302
    %v1207 = vunpack.c.l.b16 %v303
    %v1208 = vunpack.c.h.b16 %v303
    %v1209 = vunpack.c.l.b16 %v304
    %v1210 = vunpack.c.h.b16 %v304
    %v1211 = vunpack.c.l.b16 %v305
    %v1212 = vunpack.c.h.b16 %v305
    %v1213 = vunpack.c.l.b16 %v306
    %v1214 = vunpack.c.h.b16 %v306
    %v1215 = vunpack.c.l.b16 %v307
    %v1216 = vunpack.c.h.b16 %v307
    %v1217 = vunpack.c.l.b16 %v308
    %v1218 = vunpack.c.h.b16 %v308
    %v1219 = vunpack.c.l.b16 %v309
    %v1220 = vunpack.c.h.b16 %v309
    %v1221 = vunpack.c.l.b16 %v310
    %v1222 = vunpack.c.h.b16 %v310
    %v1223 = vunpack.c.l.b16 %v311
    %v1224 = vunpack.c.h.b16 %v311
    %v1225 = vunpack.c.l.b16 %v312
    %v1226 = vunpack.c.h.b16 %v312
    %v1227 = vunpack.c.l.b16 %v313
    %v1228 = vunpack.c.h.b16 %v313
    %v1229 = vunpack.c.l.b16 %v314
    %v1230 = vunpack.c.h.b16 %v314
    %v1231 = vunpack.c.l.b16 %v315
    %v1232 = vunpack.c.h.b16 %v315
    %v1233 = vunpack.c.l.b16 %v316
    %v1234 = vunpack.c.h.b16 %v316
    %v1235 = vunpack.c.l.b16 %v317
    %v1236 = vunpack.c.h.b16 %v317
    %v1237 = vunpack.c.l.b16 %v318
    %v1238 = vunpack.c.h.b16 %v318
    %v1239 = vunpack.c.l.b16 %v319
    %v1240 = vunpack.c.h.b16 %v319
    %v1241 = vunpack.c.l.b16 %v320
    %v1242 = vunpack.c.h.b16 %v320
    %v1243 = vunpack.c.l.b16 %v321
    %v1244 = vunpack.c.h.b16 %v321
    %v1245 = vunpack.c.l.b16 %v322
    %v1246 = vunpack.c.h.b16 %v322
    %v1247 = vunpack.c.l.b16 %v323
    %v1248 = vunpack.c.h.b16 %v323
    %v1249 = vunpack.c.l.b16 %v324
    %v1250 = vunpack.c.h.b16 %v324
    %v1251 = vunpack.c.l.b16 %v325
    %v1252 = vunpack.c.h.b16 %v325
    %v1253 = vunpack.c.l.b16 %v326
    %v1254 = vunpack.c.h.b16 %v326
    %v1255 = vunpack.c.l.b16 %v327
    %v1256 = vunpack.c.h.b16 %v327
    %v1257 = vunpack.c.l.b16 %v328
    %v1258 = vunpack.c.h.b16 %v328
    %v1259 = vunpack.c.l.b16 %v329
    %v1260 = vunpack.c.h.b16 %v329
    %v1261 = vunpack.c.l.b16 %v330
    %v1262 = vunpack.c.h.b16 %v330
    %v1263 = vunpack.c.l.b16 %v331
    %v1264 = vunpack.c.h.b16 %v331
    %v1265 = vunpack.c.l.b16 %v332
    %v1266 = vunpack.c.h.b16 %v332
    %v1267 = vunpack.c.l.b16 %v333
    %v1268 = vunpack.c.h.b16 %v333
    %v1269 = vunpack.c.l.b16 %v334
    %v1270 = vunpack.c.h.b16 %v334
    %v1271 = vunpack.c.l.b16 %v335
    %v1272 = vunpack.c.h.b16 %v335
    %v1273 = vunpack.c.l.b16 %v336
    %v1274 = vunpack.c.h.b16 %v336
    %v1275 = vunpack.c.l.b16 %v337
    %v1276 = vunpack.c.h.b16 %v337
    %v1277 = vunpack.c.l.b16 %v338
    %v1278 = vunpack.c.h.b16 %v338
    %v1279 = vunpack.c.l.b16 %v339
    %v1280 = vunpack.c.h.b16 %v339
    %v1281 = vunpack.c.l.b16 %v340
    %v1282 = vunpack.c.h.b16 %v340
    %v1283 = vunpack.c.l.b16 %v341
    %v1284 = vunpack.c.h.b16 %v341
    %v1285 = vunpack.c.l.b16 %v342
    %v1286 = vunpack.c.h.b16 %v342
    %v1287 = vunpack.c.l.b16 %v343
    %v1288 = vunpack.c.h.b16 %v343
    %v1289 = vunpack.c.l.b16 %v344
    %v1290 = vunpack.c.h.b16 %v344
    %v1291 = vunpack.c.l.b16 %v345
    %v1292 = vunpack.c.h.b16 %v345
    %v1293 = vunpack.c.l.b16 %v346
    %v1294 = vunpack.c.h.b16 %v346
    %v1295 = vunpack.c.l.b16 %v347
    %v1296 = vunpack.c.h.b16 %v347
    %v1297 = vunpack.c.l.b16 %v348
    %v1298 = vunpack.c.h.b16 %v348
    %v1299 = vunpack.c.l.b16 %v349
    %v1300 = vunpack.c.h.b16 %v349
    %v1301 = vunpack.c.l.b16 %v350
    %v1302 = vunpack.c.h.b16 %v350
    %v1303 = vunpack.c.l.b16 %v351
    %v1304 = vunpack.c.h.b16 %v351
    %v1305 = vunpack.c.l.b16 %v352
    %v1306 = vunpack.c.h.b16 %v352
    %v1307 = vunpack.c.l.b16 %v353
    %v1308 = vunpack.c.h.b16 %v353
    %v1309 = vunpack.c.l.b16 %v354
    %v1310 = vunpack.c.h.b16 %v354
    %v1311 = vunpack.c.l.b16 %v355
    %v1312 = vunpack.c.h.b16 %v355
    %v1313 = vunpack.c.l.b16 %v356
    %v1314 = vunpack.c.h.b16 %v356
    %v1315 = vunpack.c.l.b16 %v357
    %v1316 = vunpack.c.h.b16 %v357
    %v1317 = vunpack.c.l.b16 %v358
    %v1318 = vunpack.c.h.b16 %v358
    %v1319 = vunpack.c.l.b16 %v359
    %v1320 = vunpack.c.h.b16 %v359
    %v1321 = vunpack.c.l.b16 %v360
    %v1322 = vunpack.c.h.b16 %v360
    %v1323 = vunpack.c.l.b16 %v361
    %v1324 = vunpack.c.h.b16 %v361
    %v1325 = vunpack.c.l.b16 %v362
    %v1326 = vunpack.c.h.b16 %v362
    %v1327 = vunpack.c.l.b16 %v363
    %v1328 = vunpack.c.h.b16 %v363
    %v1329 = vunpack.c.l.b16 %v364
    %v1330 = vunpack.c.h.b16 %v364
    %v1331 = vunpack.c.l.b16 %v365
    %v1332 = vunpack.c.h.b16 %v365
    %v1333 = vunpack.c.l.b16 %v366
    %v1334 = vunpack.c.h.b16 %v366
    %v1335 = vunpack.c.l.b16 %v367
    %v1336 = vunpack.c.h.b16 %v367
    %v1337 = vunpack.c.l.b16 %v368
    %v1338 = vunpack.c.h.b16 %v368
    %v1339 = vunpack.c.l.b16 %v369
    %v1340 = vunpack.c.h.b16 %v369
    %v1341 = vunpack.c.l.b16 %v370
    %v1342 = vunpack.c.h.b16 %v370
    %v1343 = vunpack.c.l.b16 %v371
    %v1344 = vunpack.c.h.b16 %v371
    %v1345 = vunpack.c.l.b16 %v372
    %v1346 = vunpack.c.h.b16 %v372
    %v1347 = vunpack.c.l.b16 %v373
    %v1348 = vunpack.c.h.b16 %v373
    %v1349 = vunpack.c.l.b16 %v374
    %v1350 = vunpack.c.h.b16 %v374
    %v1351 = vunpack.c.l.b16 %v375
    %v1352 = vunpack.c.h.b16 %v375
    %v1353 = vunpack.c.l.b16 %v376
    %v1354 = vunpack.c.h.b16 %v376
    %v1355 = vunpack.c.l.b16 %v377
    %v1356 = vunpack.c.h.b16 %v377
    %v1357 = vunpack.c.l.b16 %v378
    %v1358 = vunpack.c.h.b16 %v378
    %v1359 = vunpack.c.l.b16 %v379
    %v1360 = vunpack.c.h.b16 %v379
    %v1361 = vunpack.c.l.b16 %v380
    %v1362 = vunpack.c.h.b16 %v380
    %v1363 = vunpack.c.l.b16 %v381
    %v1364 = vunpack.c.h.b16 %v381
    %v1365 = vunpack.c.l.b16 %v382
    %v1366 = vunpack.c.h.b16 %v382
    %v1367 = vunpack.c.l.b16 %v383
    %v1368 = vunpack.c.h.b16 %v383
    %v1369 = vunpack.c.l.b16 %v384
    %v1370 = vunpack.c.h.b16 %v384
    %v1371 = vunpack.c.l.b16 %v385
    %v1372 = vunpack.c.h.b16 %v385
    %v1373 = vunpack.c.l.b16 %v386
    %v1374 = vunpack.c.h.b16 %v386
    %v1375 = vunpack.c.l.b16 %v387
    %v1376 = vunpack.c.h.b16 %v387
    %v1377 = vunpack.c.l.b16 %v388
    %v1378 = vunpack.c.h.b16 %v388
    %v1379 = vunpack.c.l.b16 %v389
    %v1380 = vunpack.c.h.b16 %v389
    %v1381 = vunpack.c.l.b16 %v390
    %v1382 = vunpack.c.h.b16 %v390
    %v1383 = vunpack.c.l.b16 %v391
    %v1384 = vunpack.c.h.b16 %v391
    %v1385 = vunpack.c.l.b16 %v392
    %v1386 = vunpack.c.h.b16 %v392
    %v1387 = vunpack.c.l.b16 %v393
    %v1388 = vunpack.c.h.b16 %v393
    %v1389 = vunpack.c.l.b16 %v394
    %v1390 = vunpack.c.h.b16 %v394
    %v1391 = vunpack.c.l.b16 %v395
    %v1392 = vunpack.c.h.b16 %v395
    %v1393 = vunpack.c.l.b16 %v396
    %v1394 = vunpack.c.h.b16 %v396
    %v1395 = vunpack.c.l.b16 %v397
    %v1396 = vunpack.c.h.b16 %v397
    %v1397 = vunpack.c.l.b16 %v398
    %v1398 = vunpack.c.h.b16 %v398
    %v1399 = vunpack.c.l.b16 %v399
    %v1400 = vunpack.c.h.b16 %v399
    %v1401 = vunpack.c.l.b16 %v400
    %v1402 = vunpack.c.h.b16 %v400
    %v1403 = vunpack.c.l.b16 %v401
    %v1404 = vunpack.c.h.b16 %v401
    %v1405 = vunpack.c.l.b16 %v402
    %v1406 = vunpack.c.h.b16 %v402
    %v1407 = vunpack.c.l.b16 %v403
    %v1408 = vunpack.c.h.b16 %v403
    %v1409 = vunpack.c.l.b16 %v404
    %v1410 = vunpack.c.h.b16 %v404
    %v1411 = vunpack.c.l.b16 %v405
    %v1412 = vunpack.c.h.b16 %v405
    %v1413 = vunpack.c.l.b16 %v406
    %v1414 = vunpack.c.h.b16 %v406
    %v1415 = vunpack.c.l.b16 %v407
    %v1416 = vunpack.c.h.b16 %v407
    %v1417 = vunpack.c.l.b16 %v408
    %v1418 = vunpack.c.h.b16 %v408
    %v1419 = vunpack.c.l.b16 %v409
    %v1420 = vunpack.c.h.b16 %v409
    %v1421 = vunpack.c.l.b16 %v410
    %v1422 = vunpack.c.h.b16 %v410
    %v1423 = vunpack.c.l.b16 %v411
    %v1424 = vunpack.c.h.b16 %v411
    %v1425 = vunpack.c.l.b16 %v412
    %v1426 = vunpack.c.h.b16 %v412
    %v1427 = vunpack.c.l.b16 %v413
    %v1428 = vunpack.c.h.b16 %v413
    %v1429 = vunpack.c.l.b16 %v414
    %v1430 = vunpack.c.h.b16 %v414
    %v1431 = vunpack.c.l.b16 %v415
    %v1432 = vunpack.c.h.b16 %v415
    %v1433 = vunpack.c.l.b16 %v416
    %v1434 = vunpack.c.h.b16 %v416
    %v1435 = vunpack.c.l.b16 %v417
    %v1436 = vunpack.c.h.b16 %v417
    %v1437 = vunpack.c.l.b16 %v418
    %v1438 = vunpack.c.h.b16 %v418
    %v1439 = vunpack.c.l.b16 %v419
    %v1440 = vunpack.c.h.b16 %v419
    %v1441 = vunpack.c.l.b16 %v420
    %v1442 = vunpack.c.h.b16 %v420
    %v1443 = vunpack.c.l.b16 %v421
    %v1444 = vunpack.c.h.b16 %v421
    %v1445 = vunpack.c.l.b16 %v422
    %v1446 = vunpack.c.h.b16 %v422
    %v1447 = vunpack.c.l.b16 %v423
    %v1448 = vunpack.c.h.b16 %v423
    %v1449 = vunpack.c.l.b16 %v424
    %v1450 = vunpack.c.h.b16 %v424
    %v1451 = vunpack.c.l.b16 %v425
    %v1452 = vunpack.c.h.b16 %v425
    %v1453 = vunpack.c.l.b16 %v426
    %v1454 = vunpack.c.h.b16 %v426
    %v1455 = vunpack.c.l.b16 %v427
    %v1456 = vunpack.c.h.b16 %v427
    %v1457 = vunpack.c.l.b16 %v428
    %v1458 = vunpack.c.h.b16 %v428
    %v1459 = vunpack.c.l.b16 %v429
    %v1460 = vunpack.c.h.b16 %v429
    %v1461 = vunpack.c.l.b16 %v430
    %v1462 = vunpack.c.h.b16 %v430
    %v1463 = vunpack.c.l.b16 %v431
    %v1464 = vunpack.c.h.b16 %v431
    %v1465 = vunpack.c.l.b16 %v432
    %v1466 = vunpack.c.h.b16 %v432
    %v1467 = vunpack.c.l.b16 %v433
    %v1468 = vunpack.c.h.b16 %v433
    %v1469 = vunpack.c.l.b16 %v434
    %v1470 = vunpack.c.h.b16 %v434
    %v1471 = vunpack.c.l.b16 %v435
    %v1472 = vunpack.c.h.b16 %v435
    %v1473 = vunpack.c.l.b16 %v436
    %v1474 = vunpack.c.h.b16 %v436
    %v1475 = vunpack.c.l.b16 %v437
    %v1476 = vunpack.c.h.b16 %v437
    %v1477 = vunpack.c.l.b16 %v438
    %v1478 = vunpack.c.h.b16 %v438
    %v1479 = vunpack.c.l.b16 %v439
    %v1480 = vunpack.c.h.b16 %v439
    %v1481 = vunpack.c.l.b16 %v440
    %v1482 = vunpack.c.h.b16 %v440
    %v1483 = vunpack.c.l.b16 %v441
    %v1484 = vunpack.c.h.b16 %v441
    %v1485 = vunpack.c.l.b16 %v442
    %v1486 = vunpack.c.h.b16 %v442
    %v1487 = vunpack.c.l.b16 %v443
    %v1488 = vunpack.c.h.b16 %v443
    %v1489 = vunpack.c.l.b16 %v444
    %v1490 = vunpack.c.h.b16 %v444
    %v1491 = vunpack.c.l.b16 %v445
    %v1492 = vunpack.c.h.b16 %v445
    %v1493 = vunpack.c.l.b16 %v446
    %v1494 = vunpack.c.h.b16 %v446
    %v1495 = vunpack.c.l.b16 %v447
    %v1496 = vunpack.c.h.b16 %v447
    %v1497 = vunpack.c.l.b16 %v448
    %v1498 = vunpack.c.h.b16 %v448
    %v1499 = vunpack.c.l.b16 %v449
    %v1500 = vunpack.c.h.b16 %v449
    %v1501 = vunpack.c.l.b16 %v450
    %v1502 = vunpack.c.h.b16 %v450
    %v1503 = vunpack.c.l.b16 %v451
    %v1504 = vunpack.c.h.b16 %v451
    %v1505 = vunpack.c.l.b16 %v452
    %v1506 = vunpack.c.h.b16 %v452
    %v1507 = vunpack.c.l.b16 %v453
    %v1508 = vunpack.c.h.b16 %v453
    %v1509 = vunpack.c.l.b16 %v454
    %v1510 = vunpack.c.h.b16 %v454
    %v1511 = vunpack.c.l.b16 %v455
    %v1512 = vunpack.c.h.b16 %v455
    %v1513 = vunpack.c.l.b16 %v456
    %v1514 = vunpack.c.h.b16 %v456
    %v1515 = vunpack.c.l.b16 %v457
    %v1516 = vunpack.c.h.b16 %v457
    %v1517 = vunpack.c.l.b16 %v458
    %v1518 = vunpack.c.h.b16 %v458
    %v1519 = vunpack.c.l.b16 %v459
    %v1520 = vunpack.c.h.b16 %v459
    %v1521 = vunpack.c.l.b16 %v460
    %v1522 = vunpack.c.h.b16 %v460
    %v1523 = vunpack.c.l.b16 %v461
    %v1524 = vunpack.c.h.b16 %v461
    %v1525 = vunpack.c.l.b16 %v462
    %v1526 = vunpack.c.h.b16 %v462
    %v1527 = vunpack.c.l.b16 %v463
    %v1528 = vunpack.c.h.b16 %v463
    %v1529 = vunpack.c.l.b16 %v464
    %v1530 = vunpack.c.h.b16 %v464
    %v1531 = vunpack.c.l.b16 %v465
    %v1532 = vunpack.c.h.b16 %v465
    %v1533 = vunpack.c.l.b16 %v466
    %v1534 = vunpack.c.h.b16 %v466
    %v1535 = vunpack.c.l.b16 %v467
    %v1536 = vunpack.c.h.b16 %v467
    %v1537 = vunpack.c.l.b16 %v468
    %v1538 = vunpack.c.h.b16 %v468
    %v1539 = vunpack.c.l.b16 %v469
    %v1540 = vunpack.c.h.b16 %v469
    %v1541 = vunpack.c.l.b16 %v470
    %v1542 = vunpack.c.h.b16 %v470
    %v1543 = vunpack.c.l.b16 %v471
    %v1544 = vunpack.c.h.b16 %v471
    %v1545 = vunpack.c.l.b16 %v472
    %v1546 = vunpack.c.h.b16 %v472
    %v1547 = vunpack.c.l.b16 %v473
    %v1548 = vunpack.c.h.b16 %v473
    %v1549 = vunpack.c.l.b16 %v474
    %v1550 = vunpack.c.h.b16 %v474
    %v1551 = vunpack.c.l.b16 %v475
    %v1552 = vunpack.c.h.b16 %v475
    %v1553 = vunpack.c.l.b16 %v476
    %v1554 = vunpack.c.h.b16 %v476
    %v1555 = vunpack.c.l.b16 %v477
    %v1556 = vunpack.c.h.b16 %v477
    %v1557 = vunpack.c.l.b16 %v478
    %v1558 = vunpack.c.h.b16 %v478
    %v1559 = vunpack.c.l.b16 %v479
    %v1560 = vunpack.c.h.b16 %v479
    %v1561 = vunpack.c.l.b16 %v480
    %v1562 = vunpack.c.h.b16 %v480
    %v1563 = vunpack.c.l.b16 %v481
    %v1564 = vunpack.c.h.b16 %v481
    %v1565 = vunpack.c.l.b16 %v482
    %v1566 = vunpack.c.h.b16 %v482
    %v1567 = vunpack.c.l.b16 %v483
    %v1568 = vunpack.c.h.b16 %v483
    %v1569 = vunpack.c.l.b16 %v484
    %v1570 = vunpack.c.h.b16 %v484
    %v1571 = vunpack.c.l.b16 %v485
    %v1572 = vunpack.c.h.b16 %v485
    %v1573 = vunpack.c.l.b16 %v486
    %v1574 = vunpack.c.h.b16 %v486
    %v1575 = vunpack.c.l.b16 %v487
    %v1576 = vunpack.c.h.b16 %v487
    %v1577 = vunpack.c.l.b16 %v488
    %v1578 = vunpack.c.h.b16 %v488
    %v1579 = vunpack.c.l.b16 %v489
    %v1580 = vunpack.c.h.b16 %v489
    %v1581 = vunpack.c.l.b16 %v490
    %v1582 = vunpack.c.h.b16 %v490
    %v1583 = vunpack.c.l.b16 %v491
    %v1584 = vunpack.c.h.b16 %v491
    %v1585 = vunpack.c.l.b16 %v492
    %v1586 = vunpack.c.h.b16 %v492
    %v1587 = vunpack.c.l.b16 %v493
    %v1588 = vunpack.c.h.b16 %v493
    %v1589 = vunpack.c.l.b16 %v494
    %v1590 = vunpack.c.h.b16 %v494
    %v1591 = vunpack.c.l.b16 %v495
    %v1592 = vunpack.c.h.b16 %v495
    %v1593 = vunpack.c.l.b16 %v496
    %v1594 = vunpack.c.h.b16 %v496
    %v1595 = vunpack.c.l.b16 %v497
    %v1596 = vunpack.c.h.b16 %v497
    %v1597 = vunpack.c.l.b16 %v498
    %v1598 = vunpack.c.h.b16 %v498
    %v1599 = vunpack.c.l.b16 %v499
    %v1600 = vunpack.c.h.b16 %v499
    %v1601 = vunpack.c.l.b16 %v500
    %v1602 = vunpack.c.h.b16 %v500
    %v1603 = vunpack.c.l.b16 %v501
    %v1604 = vunpack.c.h.b16 %v501
    %v1605 = vunpack.c.l.b16 %v502
    %v1606 = vunpack.c.h.b16 %v502
    %v1607 = vunpack.c.l.b16 %v503
    %v1608 = vunpack.c.h.b16 %v503
    %v1609 = vunpack.c.l.b16 %v504
    %v1610 = vunpack.c.h.b16 %v504
    %v1611 = vpack.c.b16 %v929, %v907
    %v1612 = vpack.c.b16 %v930, %v908
    %v1613 = vpack.c.b16 %v931, %v909
    %v1614 = vpack.c.b16 %v932, %v910
    %v1615 = vpack.c.b16 %v933, %v911
    %v1616 = vpack.c.b16 %v934, %v912
    %v1617 = vpack.c.b16 %v935, %v913
    %v1618 = vpack.c.b16 %v936, %v914
    %v1619 = vpack.c.b16 %v937, %v915
    %v1620 = vpack.c.b16 %v938, %v916
    %v1621 = vpack.c.b16 %v939, %v917
    %v1622 = vpack.c.b16 %v940, %v918
    %v1623 = vpack.c.b16 %v941, %v919
    %v1624 = vpack.c.b16 %v942, %v920
    %v1625 = vpack.c.b16 %v943, %v921
    %v1626 = vpack.c.b16 %v944, %v922
    %v1627 = vpack.c.b16 %v945, %v923
    %v1628 = vpack.c.b16 %v946, %v924
    %v1629 = vpack.c.b16 %v947, %v925
    %v1630 = vpack.c.b16 %v948, %v926
    %v1631 = vpack.c.b16 %v949, %v927
    %v1632 = vpack.c.b16 %v950, %v928
    %v1633 = vpack.c.b16 %v973, %v951
    %v1634 = vpack.c.b16 %v974, %v952
    %v1635 = vpack.c.b16 %v975, %v953
    %v1636 = vpack.c.b16 %v976, %v954
    %v1637 = vpack.c.b16 %v977, %v955
    %v1638 = vpack.c.b16 %v978, %v956
    %v1639 = vpack.c.b16 %v979, %v957
    %v1640 = vpack.c.b16 %v980, %v958
    %v1641 = vpack.c.b16 %v981, %v959
    %v1642 = vpack.c.b16 %v982, %v960
    %v1643 = vpack.c.b16 %v983, %v961
    %v1644 = vpack.c.b16 %v984, %v962
    %v1645 = vpack.c.b16 %v985, %v963
    %v1646 = vpack.c.b16 %v986, %v964
    %v1647 = vpack.c.b16 %v987, %v965
    %v1648 = vpack.c.b16 %v988, %v966
    %v1649 = vpack.c.b16 %v989, %v967
    %v1650 = vpack.c.b16 %v990, %v968
    %v1651 = vpack.c.b16 %v991, %v969
    %v1652 = vpack.c.b16 %v992, %v970
    %v1653 = vpack.c.b16 %v993, %v971
    %v1654 = vpack.c.b16 %v994, %v972
    %v1655 = vpack.c.b16 %v1017, %v995
    %v1656 = vpack.c.b16 %v1018, %v996
    %v1657 = vpack.c.b16 %v1019, %v997
    %v1658 = vpack.c.b16 %v1020, %v998
    %v1659 = vpack.c.b16 %v1021, %v999
    %v1660 = vpack.c.b16 %v1022, %v1000
    %v1661 = vpack.c.b16 %v1023, %v1001
    %v1662 = vpack.c.b16 %v1024, %v1002
    %v1663 = vpack.c.b16 %v1025, %v1003
    %v1664 = vpack.c.b16 %v1026, %v1004
    %v1665 = vpack.c.b16 %v1027, %v1005
    %v1666 = vpack.c.b16 %v1028, %v1006
    %v1667 = vpack.c.b16 %v1029, %v1007
    %v1668 = vpack.c.b16 %v1030, %v1008
    %v1669 = vpack.c.b16 %v1031, %v1009
    %v1670 = vpack.c.b16 %v1032, %v1010
    %v1671 = vpack.c.b16 %v1033, %v1011
    %v1672 = vpack.c.b16 %v1034, %v1012
    %v1673 = vpack.c.b16 %v1035, %v1013
    %v1674 = vpack.c.b16 %v1036, %v1014
    %v1675 = vpack.c.b16 %v1037, %v1015
    %v1676 = vpack.c.b16 %v1038, %v1016
    %v1677 = vpack.c.b16 %v1061, %v1039
    %v1678 = vpack.c.b16 %v1062, %v1040
    %v1679 = vpack.c.b16 %v1063, %v1041
    %v1680 = vpack.c.b16 %v1064, %v1042
    %v1681 = vpack.c.b16 %v1065, %v1043
    %v1682 = vpack.c.b16 %v1066, %v1044
    %v1683 = vpack.c.b16 %v1067, %v1045
    %v1684 = vpack.c.b16 %v1068, %v1046
    %v1685 = vpack.c.b16 %v1069, %v1047
    %v1686 = vpack.c.b16 %v1070, %v1048
    %v1687 = vpack.c.b16 %v1071, %v1049
    %v1688 = vpack.c.b16 %v1072, %v1050
    %v1689 = vpack.c.b16 %v1073, %v1051
    %v1690 = vpack.c.b16 %v1074, %v1052
    %v1691 = vpack.c.b16 %v1075, %v1053
    %v1692 = vpack.c.b16 %v1076, %v1054
    %v1693 = vpack.c.b16 %v1077, %v1055
    %v1694 = vpack.c.b16 %v1078, %v1056
    %v1695 = vpack.c.b16 %v1079, %v1057
    %v1696 = vpack.c.b16 %v1080, %v1058
    %v1697 = vpack.c.b16 %v1081, %v1059
    %v1698 = vpack.c.b16 %v1082, %v1060
    %v1699 = vpack.c.b16 %v1105, %v1083
    %v1700 = vpack.c.b16 %v1106, %v1084
    %v1701 = vpack.c.b16 %v1107, %v1085
    %v1702 = vpack.c.b16 %v1108, %v1086
    %v1703 = vpack.c.b16 %v1109, %v1087
    %v1704 = vpack.c.b16 %v1110, %v1088
    %v1705 = vpack.c.b16 %v1111, %v1089
    %v1706 = vpack.c.b16 %v1112, %v1090
    %v1707 = vpack.c.b16 %v1113, %v1091
    %v1708 = vpack.c.b16 %v1114, %v1092
    %v1709 = vpack.c.b16 %v1115, %v1093
    %v1710 = vpack.c.b16 %v1116, %v1094
    %v1711 = vpack.c.b16 %v1117, %v1095
    %v1712 = vpack.c.b16 %v1118, %v1096
    %v1713 = vpack.c.b16 %v1119, %v1097
    %v1714 = vpack.c.b16 %v1120, %v1098
    %v1715 = vpack.c.b16 %v1121, %v1099
    %v1716 = vpack.c.b16 %v1122, %v1100
    %v1717 = vpack.c.b16 %v1123, %v1101
    %v1718 = vpack.c.b16 %v1124, %v1102
    %v1719 = vpack.c.b16 %v1125, %v1103
    %v1720 = vpack.c.b16 %v1126, %v1104
    %v1721 = vpack.c.b16 %v1149, %v1127
    %v1722 = vpack.c.b16 %v1150, %v1128
    %v1723 = vpack.c.b16 %v1151, %v1129
    %v1724 = vpack.c.b16 %v1152, %v1130
    %v1725 = vpack.c.b16 %v1153, %v1131
    %v1726 = vpack.c.b16 %v1154, %v1132
    %v1727 = vpack.c.b16 %v1155, %v1133
    %v1728 = vpack.c.b16 %v1156, %v1134
    %v1729 = vpack.c.b16 %v1157, %v1135
    %v1730 = vpack.c.b16 %v1158, %v1136
    %v1731 = vpack.c.b16 %v1159, %v1137
    %v1732 = vpack.c.b16 %v1160, %v1138
    %v1733 = vpack.c.b16 %v1161, %v1139
    %v1734 = vpack.c.b16 %v1162, %v1140
    %v1735 = vpack.c.b16 %v1163, %v1141
    %v1736 = vpack.c.b16 %v1164, %v1142
    %v1737 = vpack.c.b16 %v1165, %v1143
    %v1738 = vpack.c.b16 %v1166, %v1144
    %v1739 = vpack.c.b16 %v1167, %v1145
    %v1740 = vpack.c.b16 %v1168, %v1146
    %v1741 = vpack.c.b16 %v1169, %v1147
    %v1742 = vpack.c.b16 %v1170, %v1148
    %v1743 = vpack.c.b16 %v1193, %v1171
    %v1744 = vpack.c.b16 %v1194, %v1172
    %v1745 = vpack.c.b16 %v1195, %v1173
    %v1746 = vpack.c.b16 %v1196, %v1174
    %v1747 = vpack.c.b16 %v1197, %v1175
    %v1748 = vpack.c.b16 %v1198, %v1176
    %v1749 = vpack.c.b16 %v1199, %v1177
    %v1750 = vpack.c.b16 %v1200, %v1178
    %v1751 = vpack.c.b16 %v1201, %v1179
    %v1752 = vpack.c.b16 %v1202, %v1180
    %v1753 = vpack.c.b16 %v1203, %v1181
    %v1754 = vpack.c.b16 %v1204, %v1182
    %v1755 = vpack.c.b16 %v1205, %v1183
    %v1756 = vpack.c.b16 %v1206, %v1184
    %v1757 = vpack.c.b16 %v1207, %v1185
    %v1758 = vpack.c.b16 %v1208, %v1186
    %v1759 = vpack.c.b16 %v1209, %v1187
    %v1760 = vpack.c.b16 %v1210, %v1188
    %v1761 = vpack.c.b16 %v1211, %v1189
    %v1762 = vpack.c.b16 %v1212, %v1190
    %v1763 = vpack.c.b16 %v1213, %v1191
    %v1764 = vpack.c.b16 %v1214, %v1192
    %v1765 = vpack.c.b16 %v1237, %v1215
    %v1766 = vpack.c.b16 %v1238, %v1216
    %v1767 = vpack.c.b16 %v1239, %v1217
    %v1768 = vpack.c.b16 %v1240, %v1218
    %v1769 = vpack.c.b16 %v1241, %v1219
    %v1770 = vpack.c.b16 %v1242, %v1220
    %v1771 = vpack.c.b16 %v1243, %v1221
    %v1772 = vpack.c.b16 %v1244, %v1222
    %v1773 = vpack.c.b16 %v1245, %v1223
    %v1774 = vpack.c.b16 %v1246, %v1224
    %v1775 = vpack.c.b16 %v1247, %v1225
    %v1776 = vpack.c.b16 %v1248, %v1226
    %v1777 = vpack.c.b16 %v1249, %v1227
    %v1778 = vpack.c.b16 %v1250, %v1228
    %v1779 = vpack.c.b16 %v1251, %v1229
    %v1780 = vpack.c.b16 %v1252, %v1230
    %v1781 = vpack.c.b16 %v1253, %v1231
    %v1782 = vpack.c.b16 %v1254, %v1232
    %v1783 = vpack.c.b16 %v1255, %v1233
    %v1784 = vpack.c.b16 %v1256, %v1234
    %v1785 = vpack.c.b16 %v1257, %v1235
    %v1786 = vpack.c.b16 %v1258, %v1236
    %v1787 = vpack.c.b16 %v1281, %v1259
    %v1788 = vpack.c.b16 %v1282, %v1260
    %v1789 = vpack.c.b16 %v1283, %v1261
    %v1790 = vpack.c.b16 %v1284, %v1262
    %v1791 = vpack.c.b16 %v1285, %v1263
    %v1792 = vpack.c.b16 %v1286, %v1264
    %v1793 = vpack.c.b16 %v1287, %v1265
    %v1794 = vpack.c.b16 %v1288, %v1266
    %v1795 = vpack.c.b16 %v1289, %v1267
    %v1796 = vpack.c.b16 %v1290, %v1268
    %v1797 = vpack.c.b16 %v1291, %v1269
    %v1798 = vpack.c.b16 %v1292, %v1270
    %v1799 = vpack.c.b16 %v1293, %v1271
    %v1800 = vpack.c.b16 %v1294, %v1272
    %v1801 = vpack.c.b16 %v1295, %v1273
    %v1802 = vpack.c.b16 %v1296, %v1274
    %v1803 = vpack.c.b16 %v1297, %v1275
    %v1804 = vpack.c.b16 %v1298, %v1276
    %v1805 = vpack.c.b16 %v1299, %v1277
    %v1806 = vpack.c.b16 %v1300, %v1278
    %v1807 = vpack.c.b16 %v1301, %v1279
    %v1808 = vpack.c.b16 %v1302, %v1280
    %v1809 = vpack.c.b16 %v1325, %v1303
    %v1810 = vpack.c.b16 %v1326, %v1304
    %v1811 = vpack.c.b16 %v1327, %v1305
    %v1812 = vpack.c.b16 %v1328, %v1306
    %v1813 = vpack.c.b16 %v1329, %v1307
    %v1814 = vpack.c.b16 %v1330, %v1308
    %v1815 = vpack.c.b16 %v1331, %v1309
    %v1816 = vpack.c.b16 %v1332, %v1310
    %v1817 = vpack.c.b16 %v1333, %v1311
    %v1818 = vpack.c.b16 %v1334, %v1312
    %v1819 = vpack.c.b16 %v1335, %v1313
    %v1820 = vpack.c.b16 %v1336, %v1314
    %v1821 = vpack.c.b16 %v1337, %v1315
    %v1822 = vpack.c.b16 %v1338, %v1316
    %v1823 = vpack.c.b16 %v1339, %v1317
    %v1824 = vpack.c.b16 %v1340, %v1318
    %v1825 = vpack.c.b16 %v1341, %v1319
    %v1826 = vpack.c.b16 %v1342, %v1320
    %v1827 = vpack.c.b16 %v1343, %v1321
    %v1828 = vpack.c.b16 %v1344, %v1322
    %v1829 = vpack.c.b16 %v1345, %v1323
    %v1830 = vpack.c.b16 %v1346, %v1324
    %v1831 = vpack.c.b16 %v1369, %v1347
    %v1832 = vpack.c.b16 %v1370, %v1348
    %v1833 = vpack.c.b16 %v1371, %v1349
    %v1834 = vpack.c.b16 %v1372, %v1350
    %v1835 = vpack.c.b16 %v1373, %v1351
    %v1836 = vpack.c.b16 %v1374, %v1352
    %v1837 = vpack.c.b16 %v1375, %v1353
    %v1838 = vpack.c.b16 %v1376, %v1354
    %v1839 = vpack.c.b16 %v1377, %v1355
    %v1840 = vpack.c.b16 %v1378, %v1356
    %v1841 = vpack.c.b16 %v1379, %v1357
    %v1842 = vpack.c.b16 %v1380, %v1358
    %v1843 = vpack.c.b16 %v1381, %v1359
    %v1844 = vpack.c.b16 %v1382, %v1360
    %v1845 = vpack.c.b16 %v1383, %v1361
    %v1846 = vpack.c.b16 %v1384, %v1362
    %v1847 = vpack.c.b16 %v1385, %v1363
    %v1848 = vpack.c.b16 %v1386, %v1364
    %v1849 = vpack.c.b16 %v1387, %v1365
    %v1850 = vpack.c.b16 %v1388, %v1366
    %v1851 = vpack.c.b16 %v1389, %v1367
    %v1852 = vpack.c.b16 %v1390, %v1368
    %v1853 = vpack.c.b16 %v1413, %v1391
    %v1854 = vpack.c.b16 %v1414, %v1392
    %v1855 = vpack.c.b16 %v1415, %v1393
    %v1856 = vpack.c.b16 %v1416, %v1394
    %v1857 = vpack.c.b16 %v1417, %v1395
    %v1858 = vpack.c.b16 %v1418, %v1396
    %v1859 = vpack.c.b16 %v1419, %v1397
    %v1860 = vpack.c.b16 %v1420, %v1398
    %v1861 = vpack.c.b16 %v1421, %v1399
    %v1862 = vpack.c.b16 %v1422, %v1400
    %v1863 = vpack.c.b16 %v1423, %v1401
    %v1864 = vpack.c.b16 %v1424, %v1402
    %v1865 = vpack.c.b16 %v1425, %v1403
    %v1866 = vpack.c.b16 %v1426, %v1404
    %v1867 = vpack.c.b16 %v1427, %v1405
    %v1868 = vpack.c.b16 %v1428, %v1406
    %v1869 = vpack.c.b16 %v1429, %v1407
    %v1870 = vpack.c.b16 %v1430, %v1408
    %v1871 = vpack.c.b16 %v1431, %v1409
    %v1872 = vpack.c.b16 %v1432, %v1410
    %v1873 = vpack.c.b16 %v1433, %v1411
    %v1874 = vpack.c.b16 %v1434, %v1412
    %v1875 = vpack.c.b16 %v1457, %v1435
    %v1876 = vpack.c.b16 %v1458, %v1436
    %v1877 = vpack.c.b16 %v1459, %v1437
    %v1878 = vpack.c.b16 %v1460, %v1438
    %v1879 = vpack.c.b16 %v1461, %v1439
    %v1880 = vpack.c.b16 %v1462, %v1440
    %v1881 = vpack.c.b16 %v1463, %v1441
    %v1882 = vpack.c.b16 %v1464, %v1442
    %v1883 = vpack.c.b16 %v1465, %v1443
    %v1884 = vpack.c.b16 %v1466, %v1444
    %v1885 = vpack.c.b16 %v1467, %v1445
    %v1886 = vpack.c.b16 %v1468, %v1446
    %v1887 = vpack.c.b16 %v1469, %v1447
    %v1888 = vpack.c.b16 %v1470, %v1448
    %v1889 = vpack.c.b16 %v1471, %v1449
    %v1890 = vpack.c.b16 %v1472, %v1450
    %v1891 = vpack.c.b16 %v1473, %v1451
    %v1892 = vpack.c.b16 %v1474, %v1452
    %v1893 = vpack.c.b16 %v1475, %v1453
    %v1894 = vpack.c.b16 %v1476, %v1454
    %v1895 = vpack.c.b16 %v1477, %v1455
    %v1896 = vpack.c.b16 %v1478, %v1456
    %v1897 = vpack.c.b16 %v1501, %v1479
    %v1898 = vpack.c.b16 %v1502, %v1480
    %v1899 = vpack.c.b16 %v1503, %v1481
    %v1900 = vpack.c.b16 %v1504, %v1482
    %v1901 = vpack.c.b16 %v1505, %v1483
    %v1902 = vpack.c.b16 %v1506, %v1484
    %v1903 = vpack.c.b16 %v1507, %v1485
    %v1904 = vpack.c.b16 %v1508, %v1486
    %v1905 = vpack.c.b16 %v1509, %v1487
    %v1906 = vpack.c.b16 %v1510, %v1488
    %v1907 = vpack.c.b16 %v1511, %v1489
    %v1908 = vpack.c.b16 %v1512, %v1490
    %v1909 = vpack.c.b16 %v1513, %v1491
    %v1910 = vpack.c.b16 %v1514, %v1492
    %v1911 = vpack.c.b16 %v1515, %v1493
    %v1912 = vpack.c.b16 %v1516, %v1494
    %v1913 = vpack.c.b16 %v1517, %v1495
    %v1914 = vpack.c.b16 %v1518, %v1496
    %v1915 = vpack.c.b16 %v1519, %v1497
    %v1916 = vpack.c.b16 %v1520, %v1498
    %v1917 = vpack.c.b16 %v1521, %v1499
    %v1918 = vpack.c.b16 %v1522, %v1500
    %v1919 = vpack.c.b16 %v1545, %v1523
    %v1920 = vpack.c.b16 %v1546, %v1524
    %v1921 = vpack.c.b16 %v1547, %v1525
    %v1922 = vpack.c.b16 %v1548, %v1526
    %v1923 = vpack.c.b16 %v1549, %v1527
    %v1924 = vpack.c.b16 %v1550, %v1528
    %v1925 = vpack.c.b16 %v1551, %v1529
    %v1926 = vpack.c.b16 %v1552, %v1530
    %v1927 = vpack.c.b16 %v1553, %v1531
    %v1928 = vpack.c.b16 %v1554, %v1532
    %v1929 = vpack.c.b16 %v1555, %v1533
    %v1930 = vpack.c.b16 %v1556, %v1534
    %v1931 = vpack.c.b16 %v1557, %v1535
    %v1932 = vpack.c.b16 %v1558, %v1536
    %v1933 = vpack.c.b16 %v1559, %v1537
    %v1934 = vpack.c.b16 %v1560, %v1538
    %v1935 = vpack.c.b16 %v1561, %v1539
    %v1936 = vpack.c.b16 %v1562, %v1540
    %v1937 = vpack.c.b16 %v1563, %v1541
    %v1938 = vpack.c.b16 %v1564, %v1542
    %v1939 = vpack.c.b16 %v1565, %v1543
    %v1940 = vpack.c.b16 %v1566, %v1544
    %v1941 = vpack.c.b16 %v1589, %v1567
    %v1942 = vpack.c.b16 %v1590, %v1568
    %v1943 = vpack.c.b16 %v1591, %v1569
    %v1944 = vpack.c.b16 %v1592, %v1570
    %v1945 = vpack.c.b16 %v1593, %v1571
    %v1946 = vpack.c.b16 %v1594, %v1572
    %v1947 = vpack.c.b16 %v1595, %v1573
    %v1948 = vpack.c.b16 %v1596, %v1574
    %v1949 = vpack.c.b16 %v1597, %v1575
    %v1950 = vpack.c.b16 %v1598, %v1576
    %v1951 = vpack.c.b16 %v1599, %v1577
    %v1952 = vpack.c.b16 %v1600, %v1578
    %v1953 = vpack.c.b16 %v1601, %v1579
    %v1954 = vpack.c.b16 %v1602, %v1580
    %v1955 = vpack.c.b16 %v1603, %v1581
    %v1956 = vpack.c.b16 %v1604, %v1582
    %v1957 = vpack.c.b16 %v1605, %v1583
    %v1958 = vpack.c.b16 %v1606, %v1584
    %v1959 = vpack.c.b16 %v1607, %v1585
    %v1960 = vpack.c.b16 %v1608, %v1586
    %v1961 = vpack.c.b16 %v1609, %v1587
    %v1962 = vpack.c.b16 %v1610, %v1588
    %2315 = vmatpush.bf16.msra.mxu0 %v1765
    %2316 = vmatpush.bf16.msra.mxu0 %v1743
    %2317 = vmatpush.bf16.msra.mxu0 %v1721
    %2318 = vmatpush.bf16.msra.mxu0 %v1699
    %2319 = vmatpush.bf16.msra.mxu0 %v1677
    %2320 = vmatpush.bf16.msra.mxu0 %v1655
    %2321 = vmatpush.bf16.msra.mxu0 %v1633
    %2322 = vmatpush.bf16.msra.mxu0 %v1611
    %2323 = vmatmul.bf16.gmra.mxu0 %v151
    %v2324 = vpop.f32.mrf.mxu0
    %v2325 = vadd.f32 %v511, %v2324
    %v2326 = vpop.f32.mrf.mxu0
    %2327 = vdwg.mxu0
    %2328 = vmatpush.bf16.msra.mxu0 %v1941
    %2329 = vmatpush.bf16.msra.mxu0 %v1919
    %2330 = vmatpush.bf16.msra.mxu0 %v1897
    %2331 = vmatpush.bf16.msra.mxu0 %v1875
    %2332 = vmatpush.bf16.msra.mxu0 %v1853
    %2333 = vmatpush.bf16.msra.mxu0 %v1831
    %2334 = vmatpush.bf16.msra.mxu0 %v1809
    %2335 = vmatpush.bf16.msra.mxu0 %v1787
    %2336 = vmatmul.bf16.gmra.mxu0 %v152
    %v2337 = vpop.f32.mrf.mxu0
    %v2338 = vadd.f32 %v2325, %v2337
    %v2339 = vpop.f32.mrf.mxu0
    %2340 = vdwg.mxu0
    %2341 = vmatpush.bf16.msra.mxu0 %v1766
    %2342 = vmatpush.bf16.msra.mxu0 %v1744
    %2343 = vmatpush.bf16.msra.mxu0 %v1722
    %2344 = vmatpush.bf16.msra.mxu0 %v1700
    %2345 = vmatpush.bf16.msra.mxu0 %v1678
    %2346 = vmatpush.bf16.msra.mxu0 %v1656
    %2347 = vmatpush.bf16.msra.mxu0 %v1634
    %2348 = vmatpush.bf16.msra.mxu0 %v1612
    %2349 = vmatmul.bf16.gmra.mxu0 %v151
    %v2350 = vpop.f32.mrf.mxu0
    %v2351 = vadd.f32 %v512, %v2350
    %v2352 = vpop.f32.mrf.mxu0
    %2353 = vdwg.mxu0
    %2354 = vmatpush.bf16.msra.mxu0 %v1942
    %2355 = vmatpush.bf16.msra.mxu0 %v1920
    %2356 = vmatpush.bf16.msra.mxu0 %v1898
    %2357 = vmatpush.bf16.msra.mxu0 %v1876
    %2358 = vmatpush.bf16.msra.mxu0 %v1854
    %2359 = vmatpush.bf16.msra.mxu0 %v1832
    %2360 = vmatpush.bf16.msra.mxu0 %v1810
    %2361 = vmatpush.bf16.msra.mxu0 %v1788
    %2362 = vmatmul.bf16.gmra.mxu0 %v152
    %v2363 = vpop.f32.mrf.mxu0
    %v2364 = vadd.f32 %v2351, %v2363
    %v2365 = vpop.f32.mrf.mxu0
    %2366 = vdwg.mxu0
    %2367 = vmatpush.bf16.msra.mxu0 %v1767
    %2368 = vmatpush.bf16.msra.mxu0 %v1745
    %2369 = vmatpush.bf16.msra.mxu0 %v1723
    %2370 = vmatpush.bf16.msra.mxu0 %v1701
    %2371 = vmatpush.bf16.msra.mxu0 %v1679
    %2372 = vmatpush.bf16.msra.mxu0 %v1657
    %2373 = vmatpush.bf16.msra.mxu0 %v1635
    %2374 = vmatpush.bf16.msra.mxu0 %v1613
    %2375 = vmatmul.bf16.gmra.mxu0 %v151
    %v2376 = vpop.f32.mrf.mxu0
    %v2377 = vadd.f32 %v513, %v2376
    %v2378 = vpop.f32.mrf.mxu0
    %2379 = vdwg.mxu0
    %2380 = vmatpush.bf16.msra.mxu0 %v1943
    %2381 = vmatpush.bf16.msra.mxu0 %v1921
    %2382 = vmatpush.bf16.msra.mxu0 %v1899
    %2383 = vmatpush.bf16.msra.mxu0 %v1877
    %2384 = vmatpush.bf16.msra.mxu0 %v1855
    %2385 = vmatpush.bf16.msra.mxu0 %v1833
    %2386 = vmatpush.bf16.msra.mxu0 %v1811
    %2387 = vmatpush.bf16.msra.mxu0 %v1789
    %2388 = vmatmul.bf16.gmra.mxu0 %v152
    %v2389 = vpop.f32.mrf.mxu0
    %v2390 = vadd.f32 %v2377, %v2389
    %v2391 = vpop.f32.mrf.mxu0
    %2392 = vdwg.mxu0
    %2393 = vmatpush.bf16.msra.mxu0 %v1768
    %2394 = vmatpush.bf16.msra.mxu0 %v1746
    %2395 = vmatpush.bf16.msra.mxu0 %v1724
    %2396 = vmatpush.bf16.msra.mxu0 %v1702
    %2397 = vmatpush.bf16.msra.mxu0 %v1680
    %2398 = vmatpush.bf16.msra.mxu0 %v1658
    %2399 = vmatpush.bf16.msra.mxu0 %v1636
    %2400 = vmatpush.bf16.msra.mxu0 %v1614
    %2401 = vmatmul.bf16.gmra.mxu0 %v151
    %v2402 = vpop.f32.mrf.mxu0
    %v2403 = vadd.f32 %v514, %v2402
    %v2404 = vpop.f32.mrf.mxu0
    %2405 = vdwg.mxu0
    %2406 = vmatpush.bf16.msra.mxu0 %v1944
    %2407 = vmatpush.bf16.msra.mxu0 %v1922
    %2408 = vmatpush.bf16.msra.mxu0 %v1900
    %2409 = vmatpush.bf16.msra.mxu0 %v1878
    %2410 = vmatpush.bf16.msra.mxu0 %v1856
    %2411 = vmatpush.bf16.msra.mxu0 %v1834
    %2412 = vmatpush.bf16.msra.mxu0 %v1812
    %2413 = vmatpush.bf16.msra.mxu0 %v1790
    %2414 = vmatmul.bf16.gmra.mxu0 %v152
    %v2415 = vpop.f32.mrf.mxu0
    %v2416 = vadd.f32 %v2403, %v2415
    %v2417 = vpop.f32.mrf.mxu0
    %2418 = vdwg.mxu0
    %2419 = vmatpush.bf16.msra.mxu0 %v1769
    %2420 = vmatpush.bf16.msra.mxu0 %v1747
    %2421 = vmatpush.bf16.msra.mxu0 %v1725
    %2422 = vmatpush.bf16.msra.mxu0 %v1703
    %2423 = vmatpush.bf16.msra.mxu0 %v1681
    %2424 = vmatpush.bf16.msra.mxu0 %v1659
    %2425 = vmatpush.bf16.msra.mxu0 %v1637
    %2426 = vmatpush.bf16.msra.mxu0 %v1615
    %2427 = vmatmul.bf16.gmra.mxu0 %v151
    %v2428 = vpop.f32.mrf.mxu0
    %v2429 = vadd.f32 %v515, %v2428
    %v2430 = vpop.f32.mrf.mxu0
    %2431 = vdwg.mxu0
    %2432 = vmatpush.bf16.msra.mxu0 %v1945
    %2433 = vmatpush.bf16.msra.mxu0 %v1923
    %2434 = vmatpush.bf16.msra.mxu0 %v1901
    %2435 = vmatpush.bf16.msra.mxu0 %v1879
    %2436 = vmatpush.bf16.msra.mxu0 %v1857
    %2437 = vmatpush.bf16.msra.mxu0 %v1835
    %2438 = vmatpush.bf16.msra.mxu0 %v1813
    %2439 = vmatpush.bf16.msra.mxu0 %v1791
    %2440 = vmatmul.bf16.gmra.mxu0 %v152
    %v2441 = vpop.f32.mrf.mxu0
    %v2442 = vadd.f32 %v2429, %v2441
    %v2443 = vpop.f32.mrf.mxu0
    %2444 = vdwg.mxu0
    %2445 = vmatpush.bf16.msra.mxu0 %v1770
    %2446 = vmatpush.bf16.msra.mxu0 %v1748
    %2447 = vmatpush.bf16.msra.mxu0 %v1726
    %2448 = vmatpush.bf16.msra.mxu0 %v1704
    %2449 = vmatpush.bf16.msra.mxu0 %v1682
    %2450 = vmatpush.bf16.msra.mxu0 %v1660
    %2451 = vmatpush.bf16.msra.mxu0 %v1638
    %2452 = vmatpush.bf16.msra.mxu0 %v1616
    %2453 = vmatmul.bf16.gmra.mxu0 %v151
    %v2454 = vpop.f32.mrf.mxu0
    %v2455 = vadd.f32 %v516, %v2454
    %v2456 = vpop.f32.mrf.mxu0
    %2457 = vdwg.mxu0
    %2458 = vmatpush.bf16.msra.mxu0 %v1946
    %2459 = vmatpush.bf16.msra.mxu0 %v1924
    %2460 = vmatpush.bf16.msra.mxu0 %v1902
    %2461 = vmatpush.bf16.msra.mxu0 %v1880
    %2462 = vmatpush.bf16.msra.mxu0 %v1858
    %2463 = vmatpush.bf16.msra.mxu0 %v1836
    %2464 = vmatpush.bf16.msra.mxu0 %v1814
    %2465 = vmatpush.bf16.msra.mxu0 %v1792
    %2466 = vmatmul.bf16.gmra.mxu0 %v152
    %v2467 = vpop.f32.mrf.mxu0
    %v2468 = vadd.f32 %v2455, %v2467
    %v2469 = vpop.f32.mrf.mxu0
    %2470 = vdwg.mxu0
    %2471 = vmatpush.bf16.msra.mxu0 %v1771
    %2472 = vmatpush.bf16.msra.mxu0 %v1749
    %2473 = vmatpush.bf16.msra.mxu0 %v1727
    %2474 = vmatpush.bf16.msra.mxu0 %v1705
    %2475 = vmatpush.bf16.msra.mxu0 %v1683
    %2476 = vmatpush.bf16.msra.mxu0 %v1661
    %2477 = vmatpush.bf16.msra.mxu0 %v1639
    %2478 = vmatpush.bf16.msra.mxu0 %v1617
    %2479 = vmatmul.bf16.gmra.mxu0 %v151
    %v2480 = vpop.f32.mrf.mxu0
    %v2481 = vadd.f32 %v517, %v2480
    %v2482 = vpop.f32.mrf.mxu0
    %2483 = vdwg.mxu0
    %2484 = vmatpush.bf16.msra.mxu0 %v1947
    %2485 = vmatpush.bf16.msra.mxu0 %v1925
    %2486 = vmatpush.bf16.msra.mxu0 %v1903
    %2487 = vmatpush.bf16.msra.mxu0 %v1881
    %2488 = vmatpush.bf16.msra.mxu0 %v1859
    %2489 = vmatpush.bf16.msra.mxu0 %v1837
    %2490 = vmatpush.bf16.msra.mxu0 %v1815
    %2491 = vmatpush.bf16.msra.mxu0 %v1793
    %2492 = vmatmul.bf16.gmra.mxu0 %v152
    %v2493 = vpop.f32.mrf.mxu0
    %v2494 = vadd.f32 %v2481, %v2493
    %v2495 = vpop.f32.mrf.mxu0
    %2496 = vdwg.mxu0
    %2497 = vmatpush.bf16.msra.mxu0 %v1772
    %2498 = vmatpush.bf16.msra.mxu0 %v1750
    %2499 = vmatpush.bf16.msra.mxu0 %v1728
    %2500 = vmatpush.bf16.msra.mxu0 %v1706
    %2501 = vmatpush.bf16.msra.mxu0 %v1684
    %2502 = vmatpush.bf16.msra.mxu0 %v1662
    %2503 = vmatpush.bf16.msra.mxu0 %v1640
    %2504 = vmatpush.bf16.msra.mxu0 %v1618
    %2505 = vmatmul.bf16.gmra.mxu0 %v151
    %v2506 = vpop.f32.mrf.mxu0
    %v2507 = vadd.f32 %v518, %v2506
    %v2508 = vpop.f32.mrf.mxu0
    %2509 = vdwg.mxu0
    %2510 = vmatpush.bf16.msra.mxu0 %v1948
    %2511 = vmatpush.bf16.msra.mxu0 %v1926
    %2512 = vmatpush.bf16.msra.mxu0 %v1904
    %2513 = vmatpush.bf16.msra.mxu0 %v1882
    %2514 = vmatpush.bf16.msra.mxu0 %v1860
    %2515 = vmatpush.bf16.msra.mxu0 %v1838
    %2516 = vmatpush.bf16.msra.mxu0 %v1816
    %2517 = vmatpush.bf16.msra.mxu0 %v1794
    %2518 = vmatmul.bf16.gmra.mxu0 %v152
    %v2519 = vpop.f32.mrf.mxu0
    %v2520 = vadd.f32 %v2507, %v2519
    %v2521 = vpop.f32.mrf.mxu0
    %2522 = vdwg.mxu0
    %2523 = vmatpush.bf16.msra.mxu0 %v1773
    %2524 = vmatpush.bf16.msra.mxu0 %v1751
    %2525 = vmatpush.bf16.msra.mxu0 %v1729
    %2526 = vmatpush.bf16.msra.mxu0 %v1707
    %2527 = vmatpush.bf16.msra.mxu0 %v1685
    %2528 = vmatpush.bf16.msra.mxu0 %v1663
    %2529 = vmatpush.bf16.msra.mxu0 %v1641
    %2530 = vmatpush.bf16.msra.mxu0 %v1619
    %2531 = vmatmul.bf16.gmra.mxu0 %v151
    %v2532 = vpop.f32.mrf.mxu0
    %v2533 = vadd.f32 %v519, %v2532
    %v2534 = vpop.f32.mrf.mxu0
    %2535 = vdwg.mxu0
    %2536 = vmatpush.bf16.msra.mxu0 %v1949
    %2537 = vmatpush.bf16.msra.mxu0 %v1927
    %2538 = vmatpush.bf16.msra.mxu0 %v1905
    %2539 = vmatpush.bf16.msra.mxu0 %v1883
    %2540 = vmatpush.bf16.msra.mxu0 %v1861
    %2541 = vmatpush.bf16.msra.mxu0 %v1839
    %2542 = vmatpush.bf16.msra.mxu0 %v1817
    %2543 = vmatpush.bf16.msra.mxu0 %v1795
    %2544 = vmatmul.bf16.gmra.mxu0 %v152
    %v2545 = vpop.f32.mrf.mxu0
    %v2546 = vadd.f32 %v2533, %v2545
    %v2547 = vpop.f32.mrf.mxu0
    %2548 = vdwg.mxu0
    %2549 = vmatpush.bf16.msra.mxu0 %v1774
    %2550 = vmatpush.bf16.msra.mxu0 %v1752
    %2551 = vmatpush.bf16.msra.mxu0 %v1730
    %2552 = vmatpush.bf16.msra.mxu0 %v1708
    %2553 = vmatpush.bf16.msra.mxu0 %v1686
    %2554 = vmatpush.bf16.msra.mxu0 %v1664
    %2555 = vmatpush.bf16.msra.mxu0 %v1642
    %2556 = vmatpush.bf16.msra.mxu0 %v1620
    %2557 = vmatmul.bf16.gmra.mxu0 %v151
    %v2558 = vpop.f32.mrf.mxu0
    %v2559 = vadd.f32 %v520, %v2558
    %v2560 = vpop.f32.mrf.mxu0
    %2561 = vdwg.mxu0
    %2562 = vmatpush.bf16.msra.mxu0 %v1950
    %2563 = vmatpush.bf16.msra.mxu0 %v1928
    %2564 = vmatpush.bf16.msra.mxu0 %v1906
    %2565 = vmatpush.bf16.msra.mxu0 %v1884
    %2566 = vmatpush.bf16.msra.mxu0 %v1862
    %2567 = vmatpush.bf16.msra.mxu0 %v1840
    %2568 = vmatpush.bf16.msra.mxu0 %v1818
    %2569 = vmatpush.bf16.msra.mxu0 %v1796
    %2570 = vmatmul.bf16.gmra.mxu0 %v152
    %v2571 = vpop.f32.mrf.mxu0
    %v2572 = vadd.f32 %v2559, %v2571
    %v2573 = vpop.f32.mrf.mxu0
    %2574 = vdwg.mxu0
    %2575 = vmatpush.bf16.msra.mxu0 %v1775
    %2576 = vmatpush.bf16.msra.mxu0 %v1753
    %2577 = vmatpush.bf16.msra.mxu0 %v1731
    %2578 = vmatpush.bf16.msra.mxu0 %v1709
    %2579 = vmatpush.bf16.msra.mxu0 %v1687
    %2580 = vmatpush.bf16.msra.mxu0 %v1665
    %2581 = vmatpush.bf16.msra.mxu0 %v1643
    %2582 = vmatpush.bf16.msra.mxu0 %v1621
    %2583 = vmatmul.bf16.gmra.mxu0 %v151
    %v2584 = vpop.f32.mrf.mxu0
    %v2585 = vadd.f32 %v521, %v2584
    %v2586 = vpop.f32.mrf.mxu0
    %2587 = vdwg.mxu0
    %2588 = vmatpush.bf16.msra.mxu0 %v1951
    %2589 = vmatpush.bf16.msra.mxu0 %v1929
    %2590 = vmatpush.bf16.msra.mxu0 %v1907
    %2591 = vmatpush.bf16.msra.mxu0 %v1885
    %2592 = vmatpush.bf16.msra.mxu0 %v1863
    %2593 = vmatpush.bf16.msra.mxu0 %v1841
    %2594 = vmatpush.bf16.msra.mxu0 %v1819
    %2595 = vmatpush.bf16.msra.mxu0 %v1797
    %2596 = vmatmul.bf16.gmra.mxu0 %v152
    %v2597 = vpop.f32.mrf.mxu0
    %v2598 = vadd.f32 %v2585, %v2597
    %v2599 = vpop.f32.mrf.mxu0
    %2600 = vdwg.mxu0
    %2601 = vmatpush.bf16.msra.mxu0 %v1776
    %2602 = vmatpush.bf16.msra.mxu0 %v1754
    %2603 = vmatpush.bf16.msra.mxu0 %v1732
    %2604 = vmatpush.bf16.msra.mxu0 %v1710
    %2605 = vmatpush.bf16.msra.mxu0 %v1688
    %2606 = vmatpush.bf16.msra.mxu0 %v1666
    %2607 = vmatpush.bf16.msra.mxu0 %v1644
    %2608 = vmatpush.bf16.msra.mxu0 %v1622
    %2609 = vmatmul.bf16.gmra.mxu0 %v151
    %v2610 = vpop.f32.mrf.mxu0
    %v2611 = vadd.f32 %v522, %v2610
    %v2612 = vpop.f32.mrf.mxu0
    %2613 = vdwg.mxu0
    %2614 = vmatpush.bf16.msra.mxu0 %v1952
    %2615 = vmatpush.bf16.msra.mxu0 %v1930
    %2616 = vmatpush.bf16.msra.mxu0 %v1908
    %2617 = vmatpush.bf16.msra.mxu0 %v1886
    %2618 = vmatpush.bf16.msra.mxu0 %v1864
    %2619 = vmatpush.bf16.msra.mxu0 %v1842
    %2620 = vmatpush.bf16.msra.mxu0 %v1820
    %2621 = vmatpush.bf16.msra.mxu0 %v1798
    %2622 = vmatmul.bf16.gmra.mxu0 %v152
    %v2623 = vpop.f32.mrf.mxu0
    %v2624 = vadd.f32 %v2611, %v2623
    %v2625 = vpop.f32.mrf.mxu0
    %2626 = vdwg.mxu0
    %2627 = vmatpush.bf16.msra.mxu0 %v1777
    %2628 = vmatpush.bf16.msra.mxu0 %v1755
    %2629 = vmatpush.bf16.msra.mxu0 %v1733
    %2630 = vmatpush.bf16.msra.mxu0 %v1711
    %2631 = vmatpush.bf16.msra.mxu0 %v1689
    %2632 = vmatpush.bf16.msra.mxu0 %v1667
    %2633 = vmatpush.bf16.msra.mxu0 %v1645
    %2634 = vmatpush.bf16.msra.mxu0 %v1623
    %2635 = vmatmul.bf16.gmra.mxu0 %v151
    %v2636 = vpop.f32.mrf.mxu0
    %v2637 = vadd.f32 %v523, %v2636
    %v2638 = vpop.f32.mrf.mxu0
    %2639 = vdwg.mxu0
    %2640 = vmatpush.bf16.msra.mxu0 %v1953
    %2641 = vmatpush.bf16.msra.mxu0 %v1931
    %2642 = vmatpush.bf16.msra.mxu0 %v1909
    %2643 = vmatpush.bf16.msra.mxu0 %v1887
    %2644 = vmatpush.bf16.msra.mxu0 %v1865
    %2645 = vmatpush.bf16.msra.mxu0 %v1843
    %2646 = vmatpush.bf16.msra.mxu0 %v1821
    %2647 = vmatpush.bf16.msra.mxu0 %v1799
    %2648 = vmatmul.bf16.gmra.mxu0 %v152
    %v2649 = vpop.f32.mrf.mxu0
    %v2650 = vadd.f32 %v2637, %v2649
    %v2651 = vpop.f32.mrf.mxu0
    %2652 = vdwg.mxu0
    %2653 = vmatpush.bf16.msra.mxu0 %v1778
    %2654 = vmatpush.bf16.msra.mxu0 %v1756
    %2655 = vmatpush.bf16.msra.mxu0 %v1734
    %2656 = vmatpush.bf16.msra.mxu0 %v1712
    %2657 = vmatpush.bf16.msra.mxu0 %v1690
    %2658 = vmatpush.bf16.msra.mxu0 %v1668
    %2659 = vmatpush.bf16.msra.mxu0 %v1646
    %2660 = vmatpush.bf16.msra.mxu0 %v1624
    %2661 = vmatmul.bf16.gmra.mxu0 %v151
    %v2662 = vpop.f32.mrf.mxu0
    %v2663 = vadd.f32 %v524, %v2662
    %v2664 = vpop.f32.mrf.mxu0
    %2665 = vdwg.mxu0
    %2666 = vmatpush.bf16.msra.mxu0 %v1954
    %2667 = vmatpush.bf16.msra.mxu0 %v1932
    %2668 = vmatpush.bf16.msra.mxu0 %v1910
    %2669 = vmatpush.bf16.msra.mxu0 %v1888
    %2670 = vmatpush.bf16.msra.mxu0 %v1866
    %2671 = vmatpush.bf16.msra.mxu0 %v1844
    %2672 = vmatpush.bf16.msra.mxu0 %v1822
    %2673 = vmatpush.bf16.msra.mxu0 %v1800
    %2674 = vmatmul.bf16.gmra.mxu0 %v152
    %v2675 = vpop.f32.mrf.mxu0
    %v2676 = vadd.f32 %v2663, %v2675
    %v2677 = vpop.f32.mrf.mxu0
    %2678 = vdwg.mxu0
    %2679 = vmatpush.bf16.msra.mxu0 %v1779
    %2680 = vmatpush.bf16.msra.mxu0 %v1757
    %2681 = vmatpush.bf16.msra.mxu0 %v1735
    %2682 = vmatpush.bf16.msra.mxu0 %v1713
    %2683 = vmatpush.bf16.msra.mxu0 %v1691
    %2684 = vmatpush.bf16.msra.mxu0 %v1669
    %2685 = vmatpush.bf16.msra.mxu0 %v1647
    %2686 = vmatpush.bf16.msra.mxu0 %v1625
    %2687 = vmatmul.bf16.gmra.mxu0 %v151
    %v2688 = vpop.f32.mrf.mxu0
    %v2689 = vadd.f32 %v525, %v2688
    %v2690 = vpop.f32.mrf.mxu0
    %2691 = vdwg.mxu0
    %2692 = vmatpush.bf16.msra.mxu0 %v1955
    %2693 = vmatpush.bf16.msra.mxu0 %v1933
    %2694 = vmatpush.bf16.msra.mxu0 %v1911
    %2695 = vmatpush.bf16.msra.mxu0 %v1889
    %2696 = vmatpush.bf16.msra.mxu0 %v1867
    %2697 = vmatpush.bf16.msra.mxu0 %v1845
    %2698 = vmatpush.bf16.msra.mxu0 %v1823
    %2699 = vmatpush.bf16.msra.mxu0 %v1801
    %2700 = vmatmul.bf16.gmra.mxu0 %v152
    %v2701 = vpop.f32.mrf.mxu0
    %v2702 = vadd.f32 %v2689, %v2701
    %v2703 = vpop.f32.mrf.mxu0
    %2704 = vdwg.mxu0
    %2705 = vmatpush.bf16.msra.mxu0 %v1780
    %2706 = vmatpush.bf16.msra.mxu0 %v1758
    %2707 = vmatpush.bf16.msra.mxu0 %v1736
    %2708 = vmatpush.bf16.msra.mxu0 %v1714
    %2709 = vmatpush.bf16.msra.mxu0 %v1692
    %2710 = vmatpush.bf16.msra.mxu0 %v1670
    %2711 = vmatpush.bf16.msra.mxu0 %v1648
    %2712 = vmatpush.bf16.msra.mxu0 %v1626
    %2713 = vmatmul.bf16.gmra.mxu0 %v151
    %v2714 = vpop.f32.mrf.mxu0
    %v2715 = vadd.f32 %v526, %v2714
    %v2716 = vpop.f32.mrf.mxu0
    %2717 = vdwg.mxu0
    %2718 = vmatpush.bf16.msra.mxu0 %v1956
    %2719 = vmatpush.bf16.msra.mxu0 %v1934
    %2720 = vmatpush.bf16.msra.mxu0 %v1912
    %2721 = vmatpush.bf16.msra.mxu0 %v1890
    %2722 = vmatpush.bf16.msra.mxu0 %v1868
    %2723 = vmatpush.bf16.msra.mxu0 %v1846
    %2724 = vmatpush.bf16.msra.mxu0 %v1824
    %2725 = vmatpush.bf16.msra.mxu0 %v1802
    %2726 = vmatmul.bf16.gmra.mxu0 %v152
    %v2727 = vpop.f32.mrf.mxu0
    %v2728 = vadd.f32 %v2715, %v2727
    %v2729 = vpop.f32.mrf.mxu0
    %2730 = vdwg.mxu0
    %2731 = vmatpush.bf16.msra.mxu0 %v1781
    %2732 = vmatpush.bf16.msra.mxu0 %v1759
    %2733 = vmatpush.bf16.msra.mxu0 %v1737
    %2734 = vmatpush.bf16.msra.mxu0 %v1715
    %2735 = vmatpush.bf16.msra.mxu0 %v1693
    %2736 = vmatpush.bf16.msra.mxu0 %v1671
    %2737 = vmatpush.bf16.msra.mxu0 %v1649
    %2738 = vmatpush.bf16.msra.mxu0 %v1627
    %2739 = vmatmul.bf16.gmra.mxu0 %v151
    %v2740 = vpop.f32.mrf.mxu0
    %v2741 = vadd.f32 %v527, %v2740
    %v2742 = vpop.f32.mrf.mxu0
    %2743 = vdwg.mxu0
    %2744 = vmatpush.bf16.msra.mxu0 %v1957
    %2745 = vmatpush.bf16.msra.mxu0 %v1935
    %2746 = vmatpush.bf16.msra.mxu0 %v1913
    %2747 = vmatpush.bf16.msra.mxu0 %v1891
    %2748 = vmatpush.bf16.msra.mxu0 %v1869
    %2749 = vmatpush.bf16.msra.mxu0 %v1847
    %2750 = vmatpush.bf16.msra.mxu0 %v1825
    %2751 = vmatpush.bf16.msra.mxu0 %v1803
    %2752 = vmatmul.bf16.gmra.mxu0 %v152
    %v2753 = vpop.f32.mrf.mxu0
    %v2754 = vadd.f32 %v2741, %v2753
    %v2755 = vpop.f32.mrf.mxu0
    %2756 = vdwg.mxu0
    %2757 = vmatpush.bf16.msra.mxu0 %v1782
    %2758 = vmatpush.bf16.msra.mxu0 %v1760
    %2759 = vmatpush.bf16.msra.mxu0 %v1738
    %2760 = vmatpush.bf16.msra.mxu0 %v1716
    %2761 = vmatpush.bf16.msra.mxu0 %v1694
    %2762 = vmatpush.bf16.msra.mxu0 %v1672
    %2763 = vmatpush.bf16.msra.mxu0 %v1650
    %2764 = vmatpush.bf16.msra.mxu0 %v1628
    %2765 = vmatmul.bf16.gmra.mxu0 %v151
    %v2766 = vpop.f32.mrf.mxu0
    %v2767 = vadd.f32 %v528, %v2766
    %v2768 = vpop.f32.mrf.mxu0
    %2769 = vdwg.mxu0
    %2770 = vmatpush.bf16.msra.mxu0 %v1958
    %2771 = vmatpush.bf16.msra.mxu0 %v1936
    %2772 = vmatpush.bf16.msra.mxu0 %v1914
    %2773 = vmatpush.bf16.msra.mxu0 %v1892
    %2774 = vmatpush.bf16.msra.mxu0 %v1870
    %2775 = vmatpush.bf16.msra.mxu0 %v1848
    %2776 = vmatpush.bf16.msra.mxu0 %v1826
    %2777 = vmatpush.bf16.msra.mxu0 %v1804
    %2778 = vmatmul.bf16.gmra.mxu0 %v152
    %v2779 = vpop.f32.mrf.mxu0
    %v2780 = vadd.f32 %v2767, %v2779
    %v2781 = vpop.f32.mrf.mxu0
    %2782 = vdwg.mxu0
    %2783 = vmatpush.bf16.msra.mxu0 %v1783
    %2784 = vmatpush.bf16.msra.mxu0 %v1761
    %2785 = vmatpush.bf16.msra.mxu0 %v1739
    %2786 = vmatpush.bf16.msra.mxu0 %v1717
    %2787 = vmatpush.bf16.msra.mxu0 %v1695
    %2788 = vmatpush.bf16.msra.mxu0 %v1673
    %2789 = vmatpush.bf16.msra.mxu0 %v1651
    %2790 = vmatpush.bf16.msra.mxu0 %v1629
    %2791 = vmatmul.bf16.gmra.mxu0 %v151
    %v2792 = vpop.f32.mrf.mxu0
    %v2793 = vadd.f32 %v529, %v2792
    %v2794 = vpop.f32.mrf.mxu0
    %2795 = vdwg.mxu0
    %2796 = vmatpush.bf16.msra.mxu0 %v1959
    %2797 = vmatpush.bf16.msra.mxu0 %v1937
    %2798 = vmatpush.bf16.msra.mxu0 %v1915
    %2799 = vmatpush.bf16.msra.mxu0 %v1893
    %2800 = vmatpush.bf16.msra.mxu0 %v1871
    %2801 = vmatpush.bf16.msra.mxu0 %v1849
    %2802 = vmatpush.bf16.msra.mxu0 %v1827
    %2803 = vmatpush.bf16.msra.mxu0 %v1805
    %2804 = vmatmul.bf16.gmra.mxu0 %v152
    %v2805 = vpop.f32.mrf.mxu0
    %v2806 = vadd.f32 %v2793, %v2805
    %v2807 = vpop.f32.mrf.mxu0
    %2808 = vdwg.mxu0
    %2809 = vmatpush.bf16.msra.mxu0 %v1784
    %2810 = vmatpush.bf16.msra.mxu0 %v1762
    %2811 = vmatpush.bf16.msra.mxu0 %v1740
    %2812 = vmatpush.bf16.msra.mxu0 %v1718
    %2813 = vmatpush.bf16.msra.mxu0 %v1696
    %2814 = vmatpush.bf16.msra.mxu0 %v1674
    %2815 = vmatpush.bf16.msra.mxu0 %v1652
    %2816 = vmatpush.bf16.msra.mxu0 %v1630
    %2817 = vmatmul.bf16.gmra.mxu0 %v151
    %v2818 = vpop.f32.mrf.mxu0
    %v2819 = vadd.f32 %v530, %v2818
    %v2820 = vpop.f32.mrf.mxu0
    %2821 = vdwg.mxu0
    %2822 = vmatpush.bf16.msra.mxu0 %v1960
    %2823 = vmatpush.bf16.msra.mxu0 %v1938
    %2824 = vmatpush.bf16.msra.mxu0 %v1916
    %2825 = vmatpush.bf16.msra.mxu0 %v1894
    %2826 = vmatpush.bf16.msra.mxu0 %v1872
    %2827 = vmatpush.bf16.msra.mxu0 %v1850
    %2828 = vmatpush.bf16.msra.mxu0 %v1828
    %2829 = vmatpush.bf16.msra.mxu0 %v1806
    %2830 = vmatmul.bf16.gmra.mxu0 %v152
    %v2831 = vpop.f32.mrf.mxu0
    %v2832 = vadd.f32 %v2819, %v2831
    %v2833 = vpop.f32.mrf.mxu0
    %2834 = vdwg.mxu0
    %2835 = vmatpush.bf16.msra.mxu0 %v1785
    %2836 = vmatpush.bf16.msra.mxu0 %v1763
    %2837 = vmatpush.bf16.msra.mxu0 %v1741
    %2838 = vmatpush.bf16.msra.mxu0 %v1719
    %2839 = vmatpush.bf16.msra.mxu0 %v1697
    %2840 = vmatpush.bf16.msra.mxu0 %v1675
    %2841 = vmatpush.bf16.msra.mxu0 %v1653
    %2842 = vmatpush.bf16.msra.mxu0 %v1631
    %2843 = vmatmul.bf16.gmra.mxu0 %v151
    %v2844 = vpop.f32.mrf.mxu0
    %v2845 = vadd.f32 %v531, %v2844
    %v2846 = vpop.f32.mrf.mxu0
    %2847 = vdwg.mxu0
    %2848 = vmatpush.bf16.msra.mxu0 %v1961
    %2849 = vmatpush.bf16.msra.mxu0 %v1939
    %2850 = vmatpush.bf16.msra.mxu0 %v1917
    %2851 = vmatpush.bf16.msra.mxu0 %v1895
    %2852 = vmatpush.bf16.msra.mxu0 %v1873
    %2853 = vmatpush.bf16.msra.mxu0 %v1851
    %2854 = vmatpush.bf16.msra.mxu0 %v1829
    %2855 = vmatpush.bf16.msra.mxu0 %v1807
    %2856 = vmatmul.bf16.gmra.mxu0 %v152
    %v2857 = vpop.f32.mrf.mxu0
    %v2858 = vadd.f32 %v2845, %v2857
    %v2859 = vpop.f32.mrf.mxu0
    %2860 = vdwg.mxu0
    %2861 = vmatpush.bf16.msra.mxu0 %v1786
    %2862 = vmatpush.bf16.msra.mxu0 %v1764
    %2863 = vmatpush.bf16.msra.mxu0 %v1742
    %2864 = vmatpush.bf16.msra.mxu0 %v1720
    %2865 = vmatpush.bf16.msra.mxu0 %v1698
    %2866 = vmatpush.bf16.msra.mxu0 %v1676
    %2867 = vmatpush.bf16.msra.mxu0 %v1654
    %2868 = vmatpush.bf16.msra.mxu0 %v1632
    %2869 = vmatmul.bf16.gmra.mxu0 %v151
    %v2870 = vpop.f32.mrf.mxu0
    %v2871 = vadd.f32 %v532, %v2870
    %v2872 = vpop.f32.mrf.mxu0
    %2873 = vdwg.mxu0
    %2874 = vmatpush.bf16.msra.mxu0 %v1962
    %2875 = vmatpush.bf16.msra.mxu0 %v1940
    %2876 = vmatpush.bf16.msra.mxu0 %v1918
    %2877 = vmatpush.bf16.msra.mxu0 %v1896
    %2878 = vmatpush.bf16.msra.mxu0 %v1874
    %2879 = vmatpush.bf16.msra.mxu0 %v1852
    %2880 = vmatpush.bf16.msra.mxu0 %v1830
    %2881 = vmatpush.bf16.msra.mxu0 %v1808
    %2882 = vmatmul.bf16.gmra.mxu0 %v152
    %v2883 = vpop.f32.mrf.mxu0
    %v2884 = vadd.f32 %v2871, %v2883
    %v2885 = vpop.f32.mrf.mxu0
    %2886 = vdwg.mxu0
    %v2887 = vmax.f32 %v2338, 0.0
    %v2888 = vmax.f32 %v2364, 0.0
    %v2889 = vmax.f32 %v2390, 0.0
    %v2890 = vmax.f32 %v2416, 0.0
    %v2891 = vmax.f32 %v2442, 0.0
    %v2892 = vmax.f32 %v2468, 0.0
    %v2893 = vmax.f32 %v2494, 0.0
    %v2894 = vmax.f32 %v2520, 0.0
    %v2895 = vmax.f32 %v2546, 0.0
    %v2896 = vmax.f32 %v2572, 0.0
    %v2897 = vmax.f32 %v2598, 0.0
    %v2898 = vmax.f32 %v2624, 0.0
    %v2899 = vmax.f32 %v2650, 0.0
    %v2900 = vmax.f32 %v2676, 0.0
    %v2901 = vmax.f32 %v2702, 0.0
    %v2902 = vmax.f32 %v2728, 0.0
    %v2903 = vmax.f32 %v2754, 0.0
    %v2904 = vmax.f32 %v2780, 0.0
    %v2905 = vmax.f32 %v2806, 0.0
    %v2906 = vmax.f32 %v2832, 0.0
    %v2907 = vmax.f32 %v2858, 0.0
    %v2908 = vmax.f32 %v2884, 0.0
    %v2909 = vpack.c.bf16 %v2887, %v2887
    %v2910 = vpack.c.bf16 %v2888, %v2888
    %v2911 = vpack.c.bf16 %v2889, %v2889
    %v2912 = vpack.c.bf16 %v2890, %v2890
    %v2913 = vpack.c.bf16 %v2891, %v2891
    %v2914 = vpack.c.bf16 %v2892, %v2892
    %v2915 = vpack.c.bf16 %v2893, %v2893
    %v2916 = vpack.c.bf16 %v2894, %v2894
    %v2917 = vpack.c.bf16 %v2895, %v2895
    %v2918 = vpack.c.bf16 %v2896, %v2896
    %v2919 = vpack.c.bf16 %v2897, %v2897
    %v2920 = vpack.c.bf16 %v2898, %v2898
    %v2921 = vpack.c.bf16 %v2899, %v2899
    %v2922 = vpack.c.bf16 %v2900, %v2900
    %v2923 = vpack.c.bf16 %v2901, %v2901
    %v2924 = vpack.c.bf16 %v2902, %v2902
    %v2925 = vpack.c.bf16 %v2903, %v2903
    %v2926 = vpack.c.bf16 %v2904, %v2904
    %v2927 = vpack.c.bf16 %v2905, %v2905
    %v2928 = vpack.c.bf16 %v2906, %v2906
    %v2929 = vpack.c.bf16 %v2907, %v2907
    %v2930 = vpack.c.bf16 %v2908, %v2908
    %v2931 = vld [vmem:[#allocation6] sm:$0xff]
    %v2932 = vld [vmem:[#allocation6 + $0x8] sm:$0xff]
    %v2933 = vld [vmem:[#allocation6 + $0x10] sm:$0xff]
    %v2934 = vld [vmem:[#allocation6 + $0x18] sm:$0xff]
    %v2935 = vld [vmem:[#allocation6 + $0x20] sm:$0xff]
    %v2936 = vld [vmem:[#allocation6 + $0x28] sm:$0xff]
    %v2937 = vld [vmem:[#allocation6 + $0x30] sm:$0xff]
    %v2938 = vld [vmem:[#allocation6 + $0x38] sm:$0xff]
    %v2939 = vld [vmem:[#allocation6 + $0x40] sm:$0xff]
    %v2940 = vld [vmem:[#allocation6 + $0x48] sm:$0xff]
    %v2941 = vld [vmem:[#allocation6 + $0x50] sm:$0xff]
    %v2942 = vld [vmem:[#allocation6 + $0x58] sm:$0xff]
    %v2943 = vld [vmem:[#allocation6 + $0x60] sm:$0xff]
    %v2944 = vld [vmem:[#allocation6 + $0x68] sm:$0xff]
    %v2945 = vld [vmem:[#allocation6 + $0x70] sm:$0xff]
    %v2946 = vld [vmem:[#allocation6 + $0x78] sm:$0xff]
    %v2947 = vld [vmem:[#allocation6 + $0x80] sm:$0xff]
    %v2948 = vld [vmem:[#allocation6 + $0x88] sm:$0xff]
    %v2949 = vld [vmem:[#allocation6 + $0x90] sm:$0xff]
    %v2950 = vld [vmem:[#allocation6 + $0x98] sm:$0xff]
    %v2951 = vld [vmem:[#allocation6 + $0xa0] sm:$0xff]
    %v2952 = vld [vmem:[#allocation6 + $0xa8] sm:$0xff]
    %v2953 = vld [vmem:[#allocation6 + $0xb0] sm:$0xff]
    %v2954 = vld [vmem:[#allocation6 + $0xb8] sm:$0xff]
    %v2955 = vld [vmem:[#allocation6 + $0xc0] sm:$0xff]
    %v2956 = vld [vmem:[#allocation6 + $0xc8] sm:$0xff]
    %v2957 = vld [vmem:[#allocation6 + $0xd0] sm:$0xff]
    %v2958 = vld [vmem:[#allocation6 + $0xd8] sm:$0xff]
    %v2959 = vld [vmem:[#allocation6 + $0xe0] sm:$0xff]
    %v2960 = vld [vmem:[#allocation6 + $0xe8] sm:$0xff]
    %v2961 = vld [vmem:[#allocation6 + $0xf0] sm:$0xff]
    %v2962 = vld [vmem:[#allocation6 + $0xf8] sm:$0xff]
    %v2963 = vld [vmem:[#allocation6 + $0x100] sm:$0xff]
    %v2964 = vld [vmem:[#allocation6 + $0x108] sm:$0xff]
    %v2965 = vld [vmem:[#allocation6 + $0x110] sm:$0xff]
    %v2966 = vld [vmem:[#allocation6 + $0x118] sm:$0xff]
    %v2967 = vld [vmem:[#allocation6 + $0x120] sm:$0xff]
    %v2968 = vld [vmem:[#allocation6 + $0x128] sm:$0xff]
    %v2969 = vld [vmem:[#allocation6 + $0x130] sm:$0xff]
    %v2970 = vld [vmem:[#allocation6 + $0x138] sm:$0xff]
    %v2971 = vld [vmem:[#allocation6 + $0x140] sm:$0xff]
    %v2972 = vld [vmem:[#allocation6 + $0x148] sm:$0xff]
    %v2973 = vld [vmem:[#allocation6 + $0x150] sm:$0xff]
    %v2974 = vld [vmem:[#allocation6 + $0x158] sm:$0xff]
    %v2975 = vld [vmem:[#allocation6 + $0x160] sm:$0xff]
    %v2976 = vld [vmem:[#allocation6 + $0x168] sm:$0xff]
    %v2977 = vld [vmem:[#allocation6 + $0x170] sm:$0xff]
    %v2978 = vld [vmem:[#allocation6 + $0x178] sm:$0xff]
    %v2979 = vld [vmem:[#allocation6 + $0x180] sm:$0xff]
    %v2980 = vld [vmem:[#allocation6 + $0x188] sm:$0xff]
    %v2981 = vld [vmem:[#allocation6 + $0x190] sm:$0xff]
    %v2982 = vld [vmem:[#allocation6 + $0x198] sm:$0xff]
    %v2983 = vld [vmem:[#allocation6 + $0x1a0] sm:$0xff]
    %v2984 = vld [vmem:[#allocation6 + $0x1a8] sm:$0xff]
    %v2985 = vld [vmem:[#allocation6 + $0x1b0] sm:$0xff]
    %v2986 = vld [vmem:[#allocation6 + $0x1b8] sm:$0xff]
    %v2987 = vld [vmem:[#allocation6 + $0x1c0] sm:$0xff]
    %v2988 = vld [vmem:[#allocation6 + $0x1c8] sm:$0xff]
    %v2989 = vld [vmem:[#allocation6 + $0x1d0] sm:$0xff]
    %v2990 = vld [vmem:[#allocation6 + $0x1d8] sm:$0xff]
    %v2991 = vld [vmem:[#allocation6 + $0x1e0] sm:$0xff]
    %v2992 = vld [vmem:[#allocation6 + $0x1e8] sm:$0xff]
    %v2993 = vld [vmem:[#allocation6 + $0x1f0] sm:$0xff]
    %v2994 = vld [vmem:[#allocation6 + $0x1f8] sm:$0xff]
    %v2995 = vld [vmem:[#allocation6 + $0x200] sm:$0xff]
    %v2996 = vld [vmem:[#allocation6 + $0x208] sm:$0xff]
    %v2997 = vld [vmem:[#allocation6 + $0x210] sm:$0xff]
    %v2998 = vld [vmem:[#allocation6 + $0x218] sm:$0xff]
    %v2999 = vld [vmem:[#allocation6 + $0x220] sm:$0xff]
    %v3000 = vld [vmem:[#allocation6 + $0x228] sm:$0xff]
    %v3001 = vld [vmem:[#allocation6 + $0x230] sm:$0xff]
    %v3002 = vld [vmem:[#allocation6 + $0x238] sm:$0xff]
    %v3003 = vld [vmem:[#allocation6 + $0x240] sm:$0xff]
    %v3004 = vld [vmem:[#allocation6 + $0x248] sm:$0xff]
    %v3005 = vld [vmem:[#allocation6 + $0x250] sm:$0xff]
    %v3006 = vld [vmem:[#allocation6 + $0x258] sm:$0xff]
    %v3007 = vld [vmem:[#allocation6 + $0x260] sm:$0xff]
    %v3008 = vld [vmem:[#allocation6 + $0x268] sm:$0xff]
    %v3009 = vld [vmem:[#allocation6 + $0x270] sm:$0xff]
    %v3010 = vld [vmem:[#allocation6 + $0x278] sm:$0xff]
    %v3011 = vld [vmem:[#allocation6 + $0x280] sm:$0xff]
    %v3012 = vld [vmem:[#allocation6 + $0x288] sm:$0xff]
    %v3013 = vld [vmem:[#allocation6 + $0x290] sm:$0xff]
    %v3014 = vld [vmem:[#allocation6 + $0x298] sm:$0xff]
    %v3015 = vld [vmem:[#allocation6 + $0x2a0] sm:$0xff]
    %v3016 = vld [vmem:[#allocation6 + $0x2a8] sm:$0xff]
    %v3017 = vld [vmem:[#allocation6 + $0x2b0] sm:$0xff]
    %v3018 = vld [vmem:[#allocation6 + $0x2b8] sm:$0xff]
    %v3019 = vld [vmem:[#allocation6 + $0x2c0] sm:$0xff]
    %v3020 = vld [vmem:[#allocation6 + $0x2c8] sm:$0xff]
    %v3021 = vld [vmem:[#allocation6 + $0x2d0] sm:$0xff]
    %v3022 = vld [vmem:[#allocation6 + $0x2d8] sm:$0xff]
    %v3023 = vld [vmem:[#allocation6 + $0x2e0] sm:$0xff]
    %v3024 = vld [vmem:[#allocation6 + $0x2e8] sm:$0xff]
    %v3025 = vld [vmem:[#allocation6 + $0x2f0] sm:$0xff]
    %v3026 = vld [vmem:[#allocation6 + $0x2f8] sm:$0xff]
    %v3027 = vld [vmem:[#allocation6 + $0x300] sm:$0xff]
    %v3028 = vld [vmem:[#allocation6 + $0x308] sm:$0xff]
    %v3029 = vld [vmem:[#allocation6 + $0x310] sm:$0xff]
    %v3030 = vld [vmem:[#allocation6 + $0x318] sm:$0xff]
    %v3031 = vld [vmem:[#allocation6 + $0x320] sm:$0xff]
    %v3032 = vld [vmem:[#allocation6 + $0x328] sm:$0xff]
    %v3033 = vld [vmem:[#allocation6 + $0x330] sm:$0xff]
    %v3034 = vld [vmem:[#allocation6 + $0x338] sm:$0xff]
    %v3035 = vld [vmem:[#allocation6 + $0x340] sm:$0xff]
    %v3036 = vld [vmem:[#allocation6 + $0x348] sm:$0xff]
    %v3037 = vld [vmem:[#allocation6 + $0x350] sm:$0xff]
    %v3038 = vld [vmem:[#allocation6 + $0x358] sm:$0xff]
    %v3039 = vld [vmem:[#allocation6 + $0x360] sm:$0xff]
    %v3040 = vld [vmem:[#allocation6 + $0x368] sm:$0xff]
    %v3041 = vld [vmem:[#allocation6 + $0x370] sm:$0xff]
    %v3042 = vld [vmem:[#allocation6 + $0x378] sm:$0xff]
    %v3043 = vld [vmem:[#allocation6 + $0x380] sm:$0xff]
    %v3044 = vld [vmem:[#allocation6 + $0x388] sm:$0xff]
    %v3045 = vld [vmem:[#allocation6 + $0x390] sm:$0xff]
    %v3046 = vld [vmem:[#allocation6 + $0x398] sm:$0xff]
    %v3047 = vld [vmem:[#allocation6 + $0x3a0] sm:$0xff]
    %v3048 = vld [vmem:[#allocation6 + $0x3a8] sm:$0xff]
    %v3049 = vld [vmem:[#allocation6 + $0x3b0] sm:$0xff]
    %v3050 = vld [vmem:[#allocation6 + $0x3b8] sm:$0xff]
    %v3051 = vld [vmem:[#allocation6 + $0x3c0] sm:$0xff]
    %v3052 = vld [vmem:[#allocation6 + $0x3c8] sm:$0xff]
    %v3053 = vld [vmem:[#allocation6 + $0x3d0] sm:$0xff]
    %v3054 = vld [vmem:[#allocation6 + $0x3d8] sm:$0xff]
    %v3055 = vld [vmem:[#allocation6 + $0x3e0] sm:$0xff]
    %v3056 = vld [vmem:[#allocation6 + $0x3e8] sm:$0xff]
    %v3057 = vld [vmem:[#allocation6 + $0x3f0] sm:$0xff]
    %v3058 = vld [vmem:[#allocation6 + $0x3f8] sm:$0xff]
    %v3059 = vld [vmem:[#allocation6 + $0x400] sm:$0xff]
    %v3060 = vld [vmem:[#allocation6 + $0x408] sm:$0xff]
    %v3061 = vld [vmem:[#allocation6 + $0x410] sm:$0xff]
    %v3062 = vld [vmem:[#allocation6 + $0x418] sm:$0xff]
    %v3063 = vld [vmem:[#allocation6 + $0x420] sm:$0xff]
    %v3064 = vld [vmem:[#allocation6 + $0x428] sm:$0xff]
    %v3065 = vld [vmem:[#allocation6 + $0x430] sm:$0xff]
    %v3066 = vld [vmem:[#allocation6 + $0x438] sm:$0xff]
    %v3067 = vld [vmem:[#allocation6 + $0x440] sm:$0xff]
    %v3068 = vld [vmem:[#allocation6 + $0x448] sm:$0xff]
    %v3069 = vld [vmem:[#allocation6 + $0x450] sm:$0xff]
    %v3070 = vld [vmem:[#allocation6 + $0x458] sm:$0xff]
    %v3071 = vld [vmem:[#allocation6 + $0x460] sm:$0xff]
    %v3072 = vld [vmem:[#allocation6 + $0x468] sm:$0xff]
    %v3073 = vld [vmem:[#allocation6 + $0x470] sm:$0xff]
    %v3074 = vld [vmem:[#allocation6 + $0x478] sm:$0xff]
    %v3075 = vld [vmem:[#allocation6 + $0x480] sm:$0xff]
    %v3076 = vld [vmem:[#allocation6 + $0x488] sm:$0xff]
    %v3077 = vld [vmem:[#allocation6 + $0x490] sm:$0xff]
    %v3078 = vld [vmem:[#allocation6 + $0x498] sm:$0xff]
    %v3079 = vld [vmem:[#allocation6 + $0x4a0] sm:$0xff]
    %v3080 = vld [vmem:[#allocation6 + $0x4a8] sm:$0xff]
    %v3081 = vld [vmem:[#allocation6 + $0x4b0] sm:$0xff]
    %v3082 = vld [vmem:[#allocation6 + $0x4b8] sm:$0xff]
    %v3083 = vld [vmem:[#allocation6 + $0x4c0] sm:$0xff]
    %v3084 = vld [vmem:[#allocation6 + $0x4c8] sm:$0xff]
    %v3085 = vld [vmem:[#allocation6 + $0x4d0] sm:$0xff]
    %v3086 = vld [vmem:[#allocation6 + $0x4d8] sm:$0xff]
    %v3087 = vld [vmem:[#allocation6 + $0x4e0] sm:$0xff]
    %v3088 = vld [vmem:[#allocation6 + $0x4e8] sm:$0xff]
    %v3089 = vld [vmem:[#allocation6 + $0x4f0] sm:$0xff]
    %v3090 = vld [vmem:[#allocation6 + $0x4f8] sm:$0xff]
    %v3091 = vld [vmem:[#allocation6 + $0x500] sm:$0xff]
    %v3092 = vld [vmem:[#allocation6 + $0x508] sm:$0xff]
    %v3093 = vld [vmem:[#allocation6 + $0x510] sm:$0xff]
    %v3094 = vld [vmem:[#allocation6 + $0x518] sm:$0xff]
    %v3095 = vld [vmem:[#allocation6 + $0x520] sm:$0xff]
    %v3096 = vld [vmem:[#allocation6 + $0x528] sm:$0xff]
    %v3097 = vld [vmem:[#allocation6 + $0x530] sm:$0xff]
    %v3098 = vld [vmem:[#allocation6 + $0x538] sm:$0xff]
    %v3099 = vld [vmem:[#allocation6 + $0x540] sm:$0xff]
    %v3100 = vld [vmem:[#allocation6 + $0x548] sm:$0xff]
    %v3101 = vld [vmem:[#allocation6 + $0x550] sm:$0xff]
    %v3102 = vld [vmem:[#allocation6 + $0x558] sm:$0xff]
    %v3103 = vld [vmem:[#allocation6 + $0x560] sm:$0xff]
    %v3104 = vld [vmem:[#allocation6 + $0x568] sm:$0xff]
    %v3105 = vld [vmem:[#allocation6 + $0x570] sm:$0xff]
    %v3106 = vld [vmem:[#allocation6 + $0x578] sm:$0xff]
    %v3107 = vld [vmem:[#allocation6 + $0x580] sm:$0xff]
    %v3108 = vld [vmem:[#allocation6 + $0x588] sm:$0xff]
    %v3109 = vld [vmem:[#allocation6 + $0x590] sm:$0xff]
    %v3110 = vld [vmem:[#allocation6 + $0x598] sm:$0xff]
    %v3111 = vld [vmem:[#allocation6 + $0x5a0] sm:$0xff]
    %v3112 = vld [vmem:[#allocation6 + $0x5a8] sm:$0xff]
    %v3113 = vld [vmem:[#allocation6 + $0x5b0] sm:$0xff]
    %v3114 = vld [vmem:[#allocation6 + $0x5b8] sm:$0xff]
    %v3115 = vld [vmem:[#allocation6 + $0x5c0] sm:$0xff]
    %v3116 = vld [vmem:[#allocation6 + $0x5c8] sm:$0xff]
    %v3117 = vld [vmem:[#allocation6 + $0x5d0] sm:$0xff]
    %v3118 = vld [vmem:[#allocation6 + $0x5d8] sm:$0xff]
    %v3119 = vld [vmem:[#allocation6 + $0x5e0] sm:$0xff]
    %v3120 = vld [vmem:[#allocation6 + $0x5e8] sm:$0xff]
    %v3121 = vld [vmem:[#allocation6 + $0x5f0] sm:$0xff]
    %v3122 = vld [vmem:[#allocation6 + $0x5f8] sm:$0xff]
    %v3123 = vld [vmem:[#allocation6 + $0x600] sm:$0xff]
    %v3124 = vld [vmem:[#allocation6 + $0x608] sm:$0xff]
    %v3125 = vld [vmem:[#allocation6 + $0x610] sm:$0xff]
    %v3126 = vld [vmem:[#allocation6 + $0x618] sm:$0xff]
    %v3127 = vld [vmem:[#allocation6 + $0x620] sm:$0xff]
    %v3128 = vld [vmem:[#allocation6 + $0x628] sm:$0xff]
    %v3129 = vld [vmem:[#allocation6 + $0x630] sm:$0xff]
    %v3130 = vld [vmem:[#allocation6 + $0x638] sm:$0xff]
    %v3131 = vld [vmem:[#allocation6 + $0x640] sm:$0xff]
    %v3132 = vld [vmem:[#allocation6 + $0x648] sm:$0xff]
    %v3133 = vld [vmem:[#allocation6 + $0x650] sm:$0xff]
    %v3134 = vld [vmem:[#allocation6 + $0x658] sm:$0xff]
    %v3135 = vld [vmem:[#allocation6 + $0x660] sm:$0xff]
    %v3136 = vld [vmem:[#allocation6 + $0x668] sm:$0xff]
    %v3137 = vld [vmem:[#allocation6 + $0x670] sm:$0xff]
    %v3138 = vld [vmem:[#allocation6 + $0x678] sm:$0xff]
    %v3139 = vld [vmem:[#allocation6 + $0x680] sm:$0xff]
    %v3140 = vld [vmem:[#allocation6 + $0x688] sm:$0xff]
    %v3141 = vld [vmem:[#allocation6 + $0x690] sm:$0xff]
    %v3142 = vld [vmem:[#allocation6 + $0x698] sm:$0xff]
    %v3143 = vld [vmem:[#allocation6 + $0x6a0] sm:$0xff]
    %v3144 = vld [vmem:[#allocation6 + $0x6a8] sm:$0xff]
    %v3145 = vld [vmem:[#allocation6 + $0x6b0] sm:$0xff]
    %v3146 = vld [vmem:[#allocation6 + $0x6b8] sm:$0xff]
    %v3147 = vld [vmem:[#allocation6 + $0x6c0] sm:$0xff]
    %v3148 = vld [vmem:[#allocation6 + $0x6c8] sm:$0xff]
    %v3149 = vld [vmem:[#allocation6 + $0x6d0] sm:$0xff]
    %v3150 = vld [vmem:[#allocation6 + $0x6d8] sm:$0xff]
    %v3151 = vld [vmem:[#allocation6 + $0x6e0] sm:$0xff]
    %v3152 = vld [vmem:[#allocation6 + $0x6e8] sm:$0xff]
    %v3153 = vld [vmem:[#allocation6 + $0x6f0] sm:$0xff]
    %v3154 = vld [vmem:[#allocation6 + $0x6f8] sm:$0xff]
    %v3155 = vld [vmem:[#allocation6 + $0x700] sm:$0xff]
    %v3156 = vld [vmem:[#allocation6 + $0x708] sm:$0xff]
    %v3157 = vld [vmem:[#allocation6 + $0x710] sm:$0xff]
    %v3158 = vld [vmem:[#allocation6 + $0x718] sm:$0xff]
    %v3159 = vld [vmem:[#allocation6 + $0x720] sm:$0xff]
    %v3160 = vld [vmem:[#allocation6 + $0x728] sm:$0xff]
    %v3161 = vld [vmem:[#allocation6 + $0x730] sm:$0xff]
    %v3162 = vld [vmem:[#allocation6 + $0x738] sm:$0xff]
    %v3163 = vld [vmem:[#allocation6 + $0x740] sm:$0xff]
    %v3164 = vld [vmem:[#allocation6 + $0x748] sm:$0xff]
    %v3165 = vld [vmem:[#allocation6 + $0x750] sm:$0xff]
    %v3166 = vld [vmem:[#allocation6 + $0x758] sm:$0xff]
    %v3167 = vld [vmem:[#allocation6 + $0x760] sm:$0xff]
    %v3168 = vld [vmem:[#allocation6 + $0x768] sm:$0xff]
    %v3169 = vld [vmem:[#allocation6 + $0x770] sm:$0xff]
    %v3170 = vld [vmem:[#allocation6 + $0x778] sm:$0xff]
    %v3171 = vld [vmem:[#allocation6 + $0x780] sm:$0xff]
    %v3172 = vld [vmem:[#allocation6 + $0x788] sm:$0xff]
    %v3173 = vld [vmem:[#allocation6 + $0x790] sm:$0xff]
    %v3174 = vld [vmem:[#allocation6 + $0x798] sm:$0xff]
    %v3175 = vld [vmem:[#allocation6 + $0x7a0] sm:$0xff]
    %v3176 = vld [vmem:[#allocation6 + $0x7a8] sm:$0xff]
    %v3177 = vld [vmem:[#allocation6 + $0x7b0] sm:$0xff]
    %v3178 = vld [vmem:[#allocation6 + $0x7b8] sm:$0xff]
    %v3179 = vld [vmem:[#allocation6 + $0x7c0] sm:$0xff]
    %v3180 = vld [vmem:[#allocation6 + $0x7c8] sm:$0xff]
    %v3181 = vld [vmem:[#allocation6 + $0x7d0] sm:$0xff]
    %v3182 = vld [vmem:[#allocation6 + $0x7d8] sm:$0xff]
    %v3183 = vld [vmem:[#allocation6 + $0x7e0] sm:$0xff]
    %v3184 = vld [vmem:[#allocation6 + $0x7e8] sm:$0xff]
    %v3185 = vld [vmem:[#allocation6 + $0x7f0] sm:$0xff]
    %v3186 = vld [vmem:[#allocation6 + $0x7f8] sm:$0xff]
    %v3187 = vld [vmem:[#allocation6 + $0x800] sm:$0xff]
    %v3188 = vld [vmem:[#allocation6 + $0x808] sm:$0xff]
    %v3189 = vld [vmem:[#allocation6 + $0x810] sm:$0xff]
    %v3190 = vld [vmem:[#allocation6 + $0x818] sm:$0xff]
    %v3191 = vld [vmem:[#allocation6 + $0x820] sm:$0xff]
    %v3192 = vld [vmem:[#allocation6 + $0x828] sm:$0xff]
    %v3193 = vld [vmem:[#allocation6 + $0x830] sm:$0xff]
    %v3194 = vld [vmem:[#allocation6 + $0x838] sm:$0xff]
    %v3195 = vld [vmem:[#allocation6 + $0x840] sm:$0xff]
    %v3196 = vld [vmem:[#allocation6 + $0x848] sm:$0xff]
    %v3197 = vld [vmem:[#allocation6 + $0x850] sm:$0xff]
    %v3198 = vld [vmem:[#allocation6 + $0x858] sm:$0xff]
    %v3199 = vld [vmem:[#allocation6 + $0x860] sm:$0xff]
    %v3200 = vld [vmem:[#allocation6 + $0x868] sm:$0xff]
    %v3201 = vld [vmem:[#allocation6 + $0x870] sm:$0xff]
    %v3202 = vld [vmem:[#allocation6 + $0x878] sm:$0xff]
    %v3203 = vld [vmem:[#allocation6 + $0x880] sm:$0xff]
    %v3204 = vld [vmem:[#allocation6 + $0x888] sm:$0xff]
    %v3205 = vld [vmem:[#allocation6 + $0x890] sm:$0xff]
    %v3206 = vld [vmem:[#allocation6 + $0x898] sm:$0xff]
    %v3207 = vld [vmem:[#allocation6 + $0x8a0] sm:$0xff]
    %v3208 = vld [vmem:[#allocation6 + $0x8a8] sm:$0xff]
    %v3209 = vld [vmem:[#allocation6 + $0x8b0] sm:$0xff]
    %v3210 = vld [vmem:[#allocation6 + $0x8b8] sm:$0xff]
    %v3211 = vld [vmem:[#allocation6 + $0x8c0] sm:$0xff]
    %v3212 = vld [vmem:[#allocation6 + $0x8c8] sm:$0xff]
    %v3213 = vld [vmem:[#allocation6 + $0x8d0] sm:$0xff]
    %v3214 = vld [vmem:[#allocation6 + $0x8d8] sm:$0xff]
    %v3215 = vld [vmem:[#allocation6 + $0x8e0] sm:$0xff]
    %v3216 = vld [vmem:[#allocation6 + $0x8e8] sm:$0xff]
    %v3217 = vld [vmem:[#allocation6 + $0x8f0] sm:$0xff]
    %v3218 = vld [vmem:[#allocation6 + $0x8f8] sm:$0xff]
    %v3219 = vld [vmem:[#allocation6 + $0x900] sm:$0xff]
    %v3220 = vld [vmem:[#allocation6 + $0x908] sm:$0xff]
    %v3221 = vld [vmem:[#allocation6 + $0x910] sm:$0xff]
    %v3222 = vld [vmem:[#allocation6 + $0x918] sm:$0xff]
    %v3223 = vld [vmem:[#allocation6 + $0x920] sm:$0xff]
    %v3224 = vld [vmem:[#allocation6 + $0x928] sm:$0xff]
    %v3225 = vld [vmem:[#allocation6 + $0x930] sm:$0xff]
    %v3226 = vld [vmem:[#allocation6 + $0x938] sm:$0xff]
    %v3227 = vld [vmem:[#allocation6 + $0x940] sm:$0xff]
    %v3228 = vld [vmem:[#allocation6 + $0x948] sm:$0xff]
    %v3229 = vld [vmem:[#allocation6 + $0x950] sm:$0xff]
    %v3230 = vld [vmem:[#allocation6 + $0x958] sm:$0xff]
    %v3231 = vld [vmem:[#allocation6 + $0x960] sm:$0xff]
    %v3232 = vld [vmem:[#allocation6 + $0x968] sm:$0xff]
    %v3233 = vld [vmem:[#allocation6 + $0x970] sm:$0xff]
    %v3234 = vld [vmem:[#allocation6 + $0x978] sm:$0xff]
    %v3235 = vld [vmem:[#allocation6 + $0x980] sm:$0xff]
    %v3236 = vld [vmem:[#allocation6 + $0x988] sm:$0xff]
    %v3237 = vld [vmem:[#allocation6 + $0x990] sm:$0xff]
    %v3238 = vld [vmem:[#allocation6 + $0x998] sm:$0xff]
    %v3239 = vld [vmem:[#allocation6 + $0x9a0] sm:$0xff]
    %v3240 = vld [vmem:[#allocation6 + $0x9a8] sm:$0xff]
    %v3241 = vld [vmem:[#allocation6 + $0x9b0] sm:$0xff]
    %v3242 = vld [vmem:[#allocation6 + $0x9b8] sm:$0xff]
    %v3243 = vld [vmem:[#allocation6 + $0x9c0] sm:$0xff]
    %v3244 = vld [vmem:[#allocation6 + $0x9c8] sm:$0xff]
    %v3245 = vld [vmem:[#allocation6 + $0x9d0] sm:$0xff]
    %v3246 = vld [vmem:[#allocation6 + $0x9d8] sm:$0xff]
    %v3247 = vld [vmem:[#allocation6 + $0x9e0] sm:$0xff]
    %v3248 = vld [vmem:[#allocation6 + $0x9e8] sm:$0xff]
    %v3249 = vld [vmem:[#allocation6 + $0x9f0] sm:$0xff]
    %v3250 = vld [vmem:[#allocation6 + $0x9f8] sm:$0xff]
    %v3251 = vld [vmem:[#allocation6 + $0xa00] sm:$0xff]
    %v3252 = vld [vmem:[#allocation6 + $0xa08] sm:$0xff]
    %v3253 = vld [vmem:[#allocation6 + $0xa10] sm:$0xff]
    %v3254 = vld [vmem:[#allocation6 + $0xa18] sm:$0xff]
    %v3255 = vld [vmem:[#allocation6 + $0xa20] sm:$0xff]
    %v3256 = vld [vmem:[#allocation6 + $0xa28] sm:$0xff]
    %v3257 = vld [vmem:[#allocation6 + $0xa30] sm:$0xff]
    %v3258 = vld [vmem:[#allocation6 + $0xa38] sm:$0xff]
    %v3259 = vld [vmem:[#allocation6 + $0xa40] sm:$0xff]
    %v3260 = vld [vmem:[#allocation6 + $0xa48] sm:$0xff]
    %v3261 = vld [vmem:[#allocation6 + $0xa50] sm:$0xff]
    %v3262 = vld [vmem:[#allocation6 + $0xa58] sm:$0xff]
    %v3263 = vld [vmem:[#allocation6 + $0xa60] sm:$0xff]
    %v3264 = vld [vmem:[#allocation6 + $0xa68] sm:$0xff]
    %v3265 = vld [vmem:[#allocation6 + $0xa70] sm:$0xff]
    %v3266 = vld [vmem:[#allocation6 + $0xa78] sm:$0xff]
    %v3267 = vld [vmem:[#allocation6 + $0xa80] sm:$0xff]
    %v3268 = vld [vmem:[#allocation6 + $0xa88] sm:$0xff]
    %v3269 = vld [vmem:[#allocation6 + $0xa90] sm:$0xff]
    %v3270 = vld [vmem:[#allocation6 + $0xa98] sm:$0xff]
    %v3271 = vld [vmem:[#allocation6 + $0xaa0] sm:$0xff]
    %v3272 = vld [vmem:[#allocation6 + $0xaa8] sm:$0xff]
    %v3273 = vld [vmem:[#allocation6 + $0xab0] sm:$0xff]
    %v3274 = vld [vmem:[#allocation6 + $0xab8] sm:$0xff]
    %v3275 = vld [vmem:[#allocation6 + $0xac0] sm:$0xff]
    %v3276 = vld [vmem:[#allocation6 + $0xac8] sm:$0xff]
    %v3277 = vld [vmem:[#allocation6 + $0xad0] sm:$0xff]
    %v3278 = vld [vmem:[#allocation6 + $0xad8] sm:$0xff]
    %v3279 = vld [vmem:[#allocation6 + $0xae0] sm:$0xff]
    %v3280 = vld [vmem:[#allocation6 + $0xae8] sm:$0xff]
    %v3281 = vld [vmem:[#allocation6 + $0xaf0] sm:$0xff]
    %v3282 = vld [vmem:[#allocation6 + $0xaf8] sm:$0xff]
    %v3283 = vld [vmem:[#allocation6 + $0xb00] sm:$0xff]
    %v3284 = vld [vmem:[#allocation6 + $0xb08] sm:$0xff]
    %v3285 = vld [vmem:[#allocation6 + $0xb10] sm:$0xff]
    %v3286 = vld [vmem:[#allocation6 + $0xb18] sm:$0xff]
    %v3287 = vld [vmem:[#allocation6 + $0xb20] sm:$0xff]
    %v3288 = vld [vmem:[#allocation6 + $0xb28] sm:$0xff]
    %v3289 = vld [vmem:[#allocation6 + $0xb30] sm:$0xff]
    %v3290 = vld [vmem:[#allocation6 + $0xb38] sm:$0xff]
    %v3291 = vld [vmem:[#allocation6 + $0xb40] sm:$0xff]
    %v3292 = vld [vmem:[#allocation6 + $0xb48] sm:$0xff]
    %v3293 = vld [vmem:[#allocation6 + $0xb50] sm:$0xff]
    %v3294 = vld [vmem:[#allocation6 + $0xb58] sm:$0xff]
    %v3295 = vld [vmem:[#allocation6 + $0xb60] sm:$0xff]
    %v3296 = vld [vmem:[#allocation6 + $0xb68] sm:$0xff]
    %v3297 = vld [vmem:[#allocation6 + $0xb70] sm:$0xff]
    %v3298 = vld [vmem:[#allocation6 + $0xb78] sm:$0xff]
    %v3299 = vld [vmem:[#allocation6 + $0xb80] sm:$0xff]
    %v3300 = vld [vmem:[#allocation6 + $0xb88] sm:$0xff]
    %v3301 = vld [vmem:[#allocation6 + $0xb90] sm:$0xff]
    %v3302 = vld [vmem:[#allocation6 + $0xb98] sm:$0xff]
    %v3303 = vld [vmem:[#allocation6 + $0xba0] sm:$0xff]
    %v3304 = vld [vmem:[#allocation6 + $0xba8] sm:$0xff]
    %v3305 = vld [vmem:[#allocation6 + $0xbb0] sm:$0xff]
    %v3306 = vld [vmem:[#allocation6 + $0xbb8] sm:$0xff]
    %v3307 = vld [vmem:[#allocation6 + $0xbc0] sm:$0xff]
    %v3308 = vld [vmem:[#allocation6 + $0xbc8] sm:$0xff]
    %v3309 = vld [vmem:[#allocation6 + $0xbd0] sm:$0xff]
    %v3310 = vld [vmem:[#allocation6 + $0xbd8] sm:$0xff]
    %v3311 = vld [vmem:[#allocation6 + $0xbe0] sm:$0xff]
    %v3312 = vld [vmem:[#allocation6 + $0xbe8] sm:$0xff]
    %v3313 = vld [vmem:[#allocation6 + $0xbf0] sm:$0xff]
    %v3314 = vld [vmem:[#allocation6 + $0xbf8] sm:$0xff]
    %v3315 = vld [vmem:[#allocation6 + $0xc00] sm:$0xff]
    %v3316 = vld [vmem:[#allocation6 + $0xc08] sm:$0xff]
    %v3317 = vld [vmem:[#allocation6 + $0xc10] sm:$0xff]
    %v3318 = vld [vmem:[#allocation6 + $0xc18] sm:$0xff]
    %v3319 = vld [vmem:[#allocation6 + $0xc20] sm:$0xff]
    %v3320 = vld [vmem:[#allocation6 + $0xc28] sm:$0xff]
    %v3321 = vld [vmem:[#allocation6 + $0xc30] sm:$0xff]
    %v3322 = vld [vmem:[#allocation6 + $0xc38] sm:$0xff]
    %v3323 = vld [vmem:[#allocation6 + $0xc40] sm:$0xff]
    %v3324 = vld [vmem:[#allocation6 + $0xc48] sm:$0xff]
    %v3325 = vld [vmem:[#allocation6 + $0xc50] sm:$0xff]
    %v3326 = vld [vmem:[#allocation6 + $0xc58] sm:$0xff]
    %v3327 = vld [vmem:[#allocation6 + $0xc60] sm:$0xff]
    %v3328 = vld [vmem:[#allocation6 + $0xc68] sm:$0xff]
    %v3329 = vld [vmem:[#allocation6 + $0xc70] sm:$0xff]
    %v3330 = vld [vmem:[#allocation6 + $0xc78] sm:$0xff]
    %v3331 = vld [vmem:[#allocation6 + $0xc80] sm:$0xff]
    %v3332 = vld [vmem:[#allocation6 + $0xc88] sm:$0xff]
    %v3333 = vld [vmem:[#allocation6 + $0xc90] sm:$0xff]
    %v3334 = vld [vmem:[#allocation6 + $0xc98] sm:$0xff]
    %v3335 = vld [vmem:[#allocation6 + $0xca0] sm:$0xff]
    %v3336 = vld [vmem:[#allocation6 + $0xca8] sm:$0xff]
    %v3337 = vld [vmem:[#allocation6 + $0xcb0] sm:$0xff]
    %v3338 = vld [vmem:[#allocation6 + $0xcb8] sm:$0xff]
    %v3339 = vld [vmem:[#allocation6 + $0xcc0] sm:$0xff]
    %v3340 = vld [vmem:[#allocation6 + $0xcc8] sm:$0xff]
    %v3341 = vld [vmem:[#allocation6 + $0xcd0] sm:$0xff]
    %v3342 = vld [vmem:[#allocation6 + $0xcd8] sm:$0xff]
    %v3343 = vld [vmem:[#allocation6 + $0xce0] sm:$0xff]
    %v3344 = vld [vmem:[#allocation6 + $0xce8] sm:$0xff]
    %v3345 = vld [vmem:[#allocation6 + $0xcf0] sm:$0xff]
    %v3346 = vld [vmem:[#allocation6 + $0xcf8] sm:$0xff]
    %v3347 = vld [vmem:[#allocation6 + $0xd00] sm:$0xff]
    %v3348 = vld [vmem:[#allocation6 + $0xd08] sm:$0xff]
    %v3349 = vld [vmem:[#allocation6 + $0xd10] sm:$0xff]
    %v3350 = vld [vmem:[#allocation6 + $0xd18] sm:$0xff]
    %v3351 = vld [vmem:[#allocation6 + $0xd20] sm:$0xff]
    %v3352 = vld [vmem:[#allocation6 + $0xd28] sm:$0xff]
    %v3353 = vld [vmem:[#allocation6 + $0xd30] sm:$0xff]
    %v3354 = vld [vmem:[#allocation6 + $0xd38] sm:$0xff]
    %v3355 = vld [vmem:[#allocation6 + $0xd40] sm:$0xff]
    %v3356 = vld [vmem:[#allocation6 + $0xd48] sm:$0xff]
    %v3357 = vld [vmem:[#allocation6 + $0xd50] sm:$0xff]
    %v3358 = vld [vmem:[#allocation6 + $0xd58] sm:$0xff]
    %v3359 = vld [vmem:[#allocation6 + $0xd60] sm:$0xff]
    %v3360 = vld [vmem:[#allocation6 + $0xd68] sm:$0xff]
    %v3361 = vld [vmem:[#allocation6 + $0xd70] sm:$0xff]
    %v3362 = vld [vmem:[#allocation6 + $0xd78] sm:$0xff]
    %v3363 = vld [vmem:[#allocation6 + $0xd80] sm:$0xff]
    %v3364 = vld [vmem:[#allocation6 + $0xd88] sm:$0xff]
    %v3365 = vld [vmem:[#allocation6 + $0xd90] sm:$0xff]
    %v3366 = vld [vmem:[#allocation6 + $0xd98] sm:$0xff]
    %v3367 = vld [vmem:[#allocation6 + $0xda0] sm:$0xff]
    %v3368 = vld [vmem:[#allocation6 + $0xda8] sm:$0xff]
    %v3369 = vld [vmem:[#allocation6 + $0xdb0] sm:$0xff]
    %v3370 = vld [vmem:[#allocation6 + $0xdb8] sm:$0xff]
    %v3371 = vld [vmem:[#allocation6 + $0xdc0] sm:$0xff]
    %v3372 = vld [vmem:[#allocation6 + $0xdc8] sm:$0xff]
    %v3373 = vld [vmem:[#allocation6 + $0xdd0] sm:$0xff]
    %v3374 = vld [vmem:[#allocation6 + $0xdd8] sm:$0xff]
    %v3375 = vld [vmem:[#allocation6 + $0xde0] sm:$0xff]
    %v3376 = vld [vmem:[#allocation6 + $0xde8] sm:$0xff]
    %v3377 = vld [vmem:[#allocation6 + $0xdf0] sm:$0xff]
    %v3378 = vld [vmem:[#allocation6 + $0xdf8] sm:$0xff]
    %v3379 = vld [vmem:[#allocation6 + $0xe00] sm:$0xff]
    %v3380 = vld [vmem:[#allocation6 + $0xe08] sm:$0xff]
    %v3381 = vld [vmem:[#allocation6 + $0xe10] sm:$0xff]
    %v3382 = vld [vmem:[#allocation6 + $0xe18] sm:$0xff]
    %v3383 = vld [vmem:[#allocation6 + $0xe20] sm:$0xff]
    %v3384 = vld [vmem:[#allocation6 + $0xe28] sm:$0xff]
    %v3385 = vld [vmem:[#allocation6 + $0xe30] sm:$0xff]
    %v3386 = vld [vmem:[#allocation6 + $0xe38] sm:$0xff]
    %v3387 = vld [vmem:[#allocation6 + $0xe40] sm:$0xff]
    %v3388 = vld [vmem:[#allocation6 + $0xe48] sm:$0xff]
    %v3389 = vld [vmem:[#allocation6 + $0xe50] sm:$0xff]
    %v3390 = vld [vmem:[#allocation6 + $0xe58] sm:$0xff]
    %v3391 = vld [vmem:[#allocation6 + $0xe60] sm:$0xff]
    %v3392 = vld [vmem:[#allocation6 + $0xe68] sm:$0xff]
    %v3393 = vld [vmem:[#allocation6 + $0xe70] sm:$0xff]
    %v3394 = vld [vmem:[#allocation6 + $0xe78] sm:$0xff]
    %v3395 = vld [vmem:[#allocation6 + $0xe80] sm:$0xff]
    %v3396 = vld [vmem:[#allocation6 + $0xe88] sm:$0xff]
    %v3397 = vld [vmem:[#allocation6 + $0xe90] sm:$0xff]
    %v3398 = vld [vmem:[#allocation6 + $0xe98] sm:$0xff]
    %v3399 = vld [vmem:[#allocation6 + $0xea0] sm:$0xff]
    %v3400 = vld [vmem:[#allocation6 + $0xea8] sm:$0xff]
    %v3401 = vld [vmem:[#allocation6 + $0xeb0] sm:$0xff]
    %v3402 = vld [vmem:[#allocation6 + $0xeb8] sm:$0xff]
    %v3403 = vld [vmem:[#allocation6 + $0xec0] sm:$0xff]
    %v3404 = vld [vmem:[#allocation6 + $0xec8] sm:$0xff]
    %v3405 = vld [vmem:[#allocation6 + $0xed0] sm:$0xff]
    %v3406 = vld [vmem:[#allocation6 + $0xed8] sm:$0xff]
    %v3407 = vld [vmem:[#allocation6 + $0xee0] sm:$0xff]
    %v3408 = vld [vmem:[#allocation6 + $0xee8] sm:$0xff]
    %v3409 = vld [vmem:[#allocation6 + $0xef0] sm:$0xff]
    %v3410 = vld [vmem:[#allocation6 + $0xef8] sm:$0xff]
    %v3411 = vld [vmem:[#allocation6 + $0xf00] sm:$0xff]
    %v3412 = vld [vmem:[#allocation6 + $0xf08] sm:$0xff]
    %v3413 = vld [vmem:[#allocation6 + $0xf10] sm:$0xff]
    %v3414 = vld [vmem:[#allocation6 + $0xf18] sm:$0xff]
    %v3415 = vld [vmem:[#allocation6 + $0xf20] sm:$0xff]
    %v3416 = vld [vmem:[#allocation6 + $0xf28] sm:$0xff]
    %v3417 = vld [vmem:[#allocation6 + $0xf30] sm:$0xff]
    %v3418 = vld [vmem:[#allocation6 + $0xf38] sm:$0xff]
    %v3419 = vld [vmem:[#allocation6 + $0xf40] sm:$0xff]
    %v3420 = vld [vmem:[#allocation6 + $0xf48] sm:$0xff]
    %v3421 = vld [vmem:[#allocation6 + $0xf50] sm:$0xff]
    %v3422 = vld [vmem:[#allocation6 + $0xf58] sm:$0xff]
    %v3423 = vld [vmem:[#allocation6 + $0xf60] sm:$0xff]
    %v3424 = vld [vmem:[#allocation6 + $0xf68] sm:$0xff]
    %v3425 = vld [vmem:[#allocation6 + $0xf70] sm:$0xff]
    %v3426 = vld [vmem:[#allocation6 + $0xf78] sm:$0xff]
    %v3427 = vld [vmem:[#allocation6 + $0xf80] sm:$0xff]
    %v3428 = vld [vmem:[#allocation6 + $0xf88] sm:$0xff]
    %v3429 = vld [vmem:[#allocation6 + $0xf90] sm:$0xff]
    %v3430 = vld [vmem:[#allocation6 + $0xf98] sm:$0xff]
    %v3431 = vld [vmem:[#allocation6 + $0xfa0] sm:$0xff]
    %v3432 = vld [vmem:[#allocation6 + $0xfa8] sm:$0xff]
    %v3433 = vld [vmem:[#allocation6 + $0xfb0] sm:$0xff]
    %v3434 = vld [vmem:[#allocation6 + $0xfb8] sm:$0xff]
    %v3435 = vld [vmem:[#allocation6 + $0xfc0] sm:$0xff]
    %v3436 = vld [vmem:[#allocation6 + $0xfc8] sm:$0xff]
    %v3437 = vld [vmem:[#allocation6 + $0xfd0] sm:$0xff]
    %v3438 = vld [vmem:[#allocation6 + $0xfd8] sm:$0xff]
    %v3439 = vld [vmem:[#allocation6 + $0xfe0] sm:$0xff]
    %v3440 = vld [vmem:[#allocation6 + $0xfe8] sm:$0xff]
    %v3441 = vld [vmem:[#allocation6 + $0xff0] sm:$0xff]
    %v3442 = vld [vmem:[#allocation6 + $0xff8] sm:$0xff]
    %v3443 = vld [vmem:[#allocation6 + $0x1000] sm:$0xff]
    %v3444 = vld [vmem:[#allocation6 + $0x1008] sm:$0xff]
    %v3445 = vld [vmem:[#allocation6 + $0x1010] sm:$0xff]
    %v3446 = vld [vmem:[#allocation6 + $0x1018] sm:$0xff]
    %v3447 = vld [vmem:[#allocation6 + $0x1020] sm:$0xff]
    %v3448 = vld [vmem:[#allocation6 + $0x1028] sm:$0xff]
    %v3449 = vld [vmem:[#allocation6 + $0x1030] sm:$0xff]
    %v3450 = vld [vmem:[#allocation6 + $0x1038] sm:$0xff]
    %v3451 = vld [vmem:[#allocation6 + $0x1040] sm:$0xff]
    %v3452 = vld [vmem:[#allocation6 + $0x1048] sm:$0xff]
    %v3453 = vld [vmem:[#allocation6 + $0x1050] sm:$0xff]
    %v3454 = vld [vmem:[#allocation6 + $0x1058] sm:$0xff]
    %v3455 = vld [vmem:[#allocation6 + $0x1060] sm:$0xff]
    %v3456 = vld [vmem:[#allocation6 + $0x1068] sm:$0xff]
    %v3457 = vld [vmem:[#allocation6 + $0x1070] sm:$0xff]
    %v3458 = vld [vmem:[#allocation6 + $0x1078] sm:$0xff]
    %v3459 = vld [vmem:[#allocation6 + $0x1080] sm:$0xff]
    %v3460 = vld [vmem:[#allocation6 + $0x1088] sm:$0xff]
    %v3461 = vld [vmem:[#allocation6 + $0x1090] sm:$0xff]
    %v3462 = vld [vmem:[#allocation6 + $0x1098] sm:$0xff]
    %v3463 = vld [vmem:[#allocation6 + $0x10a0] sm:$0xff]
    %v3464 = vld [vmem:[#allocation6 + $0x10a8] sm:$0xff]
    %v3465 = vld [vmem:[#allocation6 + $0x10b0] sm:$0xff]
    %v3466 = vld [vmem:[#allocation6 + $0x10b8] sm:$0xff]
    %v3467 = vld [vmem:[#allocation6 + $0x10c0] sm:$0xff]
    %v3468 = vld [vmem:[#allocation6 + $0x10c8] sm:$0xff]
    %v3469 = vld [vmem:[#allocation6 + $0x10d0] sm:$0xff]
    %v3470 = vld [vmem:[#allocation6 + $0x10d8] sm:$0xff]
    %v3471 = vld [vmem:[#allocation6 + $0x10e0] sm:$0xff]
    %v3472 = vld [vmem:[#allocation6 + $0x10e8] sm:$0xff]
    %v3473 = vld [vmem:[#allocation6 + $0x10f0] sm:$0xff]
    %v3474 = vld [vmem:[#allocation6 + $0x10f8] sm:$0xff]
    %v3475 = vld [vmem:[#allocation6 + $0x1100] sm:$0xff]
    %v3476 = vld [vmem:[#allocation6 + $0x1108] sm:$0xff]
    %v3477 = vld [vmem:[#allocation6 + $0x1110] sm:$0xff]
    %v3478 = vld [vmem:[#allocation6 + $0x1118] sm:$0xff]
    %v3479 = vld [vmem:[#allocation6 + $0x1120] sm:$0xff]
    %v3480 = vld [vmem:[#allocation6 + $0x1128] sm:$0xff]
    %v3481 = vld [vmem:[#allocation6 + $0x1130] sm:$0xff]
    %v3482 = vld [vmem:[#allocation6 + $0x1138] sm:$0xff]
    %v3483 = vld [vmem:[#allocation6 + $0x1140] sm:$0xff]
    %v3484 = vld [vmem:[#allocation6 + $0x1148] sm:$0xff]
    %v3485 = vld [vmem:[#allocation6 + $0x1150] sm:$0xff]
    %v3486 = vld [vmem:[#allocation6 + $0x1158] sm:$0xff]
    %v3487 = vld [vmem:[#allocation6 + $0x1160] sm:$0xff]
    %v3488 = vld [vmem:[#allocation6 + $0x1168] sm:$0xff]
    %v3489 = vld [vmem:[#allocation6 + $0x1170] sm:$0xff]
    %v3490 = vld [vmem:[#allocation6 + $0x1178] sm:$0xff]
    %v3491 = vld [vmem:[#allocation6 + $0x1180] sm:$0xff]
    %v3492 = vld [vmem:[#allocation6 + $0x1188] sm:$0xff]
    %v3493 = vld [vmem:[#allocation6 + $0x1190] sm:$0xff]
    %v3494 = vld [vmem:[#allocation6 + $0x1198] sm:$0xff]
    %v3495 = vld [vmem:[#allocation6 + $0x11a0] sm:$0xff]
    %v3496 = vld [vmem:[#allocation6 + $0x11a8] sm:$0xff]
    %v3497 = vld [vmem:[#allocation6 + $0x11b0] sm:$0xff]
    %v3498 = vld [vmem:[#allocation6 + $0x11b8] sm:$0xff]
    %v3499 = vld [vmem:[#allocation6 + $0x11c0] sm:$0xff]
    %v3500 = vld [vmem:[#allocation6 + $0x11c8] sm:$0xff]
    %v3501 = vld [vmem:[#allocation6 + $0x11d0] sm:$0xff]
    %v3502 = vld [vmem:[#allocation6 + $0x11d8] sm:$0xff]
    %v3503 = vld [vmem:[#allocation6 + $0x11e0] sm:$0xff]
    %v3504 = vld [vmem:[#allocation6 + $0x11e8] sm:$0xff]
    %v3505 = vld [vmem:[#allocation6 + $0x11f0] sm:$0xff]
    %v3506 = vld [vmem:[#allocation6 + $0x11f8] sm:$0xff]
    %v3507 = vld [vmem:[#allocation6 + $0x1200] sm:$0xff]
    %v3508 = vld [vmem:[#allocation6 + $0x1208] sm:$0xff]
    %v3509 = vld [vmem:[#allocation6 + $0x1210] sm:$0xff]
    %v3510 = vld [vmem:[#allocation6 + $0x1218] sm:$0xff]
    %v3511 = vld [vmem:[#allocation6 + $0x1220] sm:$0xff]
    %v3512 = vld [vmem:[#allocation6 + $0x1228] sm:$0xff]
    %v3513 = vld [vmem:[#allocation6 + $0x1230] sm:$0xff]
    %v3514 = vld [vmem:[#allocation6 + $0x1238] sm:$0xff]
    %v3515 = vld [vmem:[#allocation6 + $0x1240] sm:$0xff]
    %v3516 = vld [vmem:[#allocation6 + $0x1248] sm:$0xff]
    %v3517 = vld [vmem:[#allocation6 + $0x1250] sm:$0xff]
    %v3518 = vld [vmem:[#allocation6 + $0x1258] sm:$0xff]
    %v3519 = vld [vmem:[#allocation6 + $0x1260] sm:$0xff]
    %v3520 = vld [vmem:[#allocation6 + $0x1268] sm:$0xff]
    %v3521 = vld [vmem:[#allocation6 + $0x1270] sm:$0xff]
    %v3522 = vld [vmem:[#allocation6 + $0x1278] sm:$0xff]
    %v3523 = vld [vmem:[#allocation6 + $0x1280] sm:$0xff]
    %v3524 = vld [vmem:[#allocation6 + $0x1288] sm:$0xff]
    %v3525 = vld [vmem:[#allocation6 + $0x1290] sm:$0xff]
    %v3526 = vld [vmem:[#allocation6 + $0x1298] sm:$0xff]
    %v3527 = vld [vmem:[#allocation6 + $0x12a0] sm:$0xff]
    %v3528 = vld [vmem:[#allocation6 + $0x12a8] sm:$0xff]
    %v3529 = vld [vmem:[#allocation6 + $0x12b0] sm:$0xff]
    %v3530 = vld [vmem:[#allocation6 + $0x12b8] sm:$0xff]
    %v3531 = vld [vmem:[#allocation6 + $0x12c0] sm:$0xff]
    %v3532 = vld [vmem:[#allocation6 + $0x12c8] sm:$0xff]
    %v3533 = vld [vmem:[#allocation6 + $0x12d0] sm:$0xff]
    %v3534 = vld [vmem:[#allocation6 + $0x12d8] sm:$0xff]
    %v3535 = vld [vmem:[#allocation6 + $0x12e0] sm:$0xff]
    %v3536 = vld [vmem:[#allocation6 + $0x12e8] sm:$0xff]
    %v3537 = vld [vmem:[#allocation6 + $0x12f0] sm:$0xff]
    %v3538 = vld [vmem:[#allocation6 + $0x12f8] sm:$0xff]
    %v3539 = vld [vmem:[#allocation6 + $0x1300] sm:$0xff]
    %v3540 = vld [vmem:[#allocation6 + $0x1308] sm:$0xff]
    %v3541 = vld [vmem:[#allocation6 + $0x1310] sm:$0xff]
    %v3542 = vld [vmem:[#allocation6 + $0x1318] sm:$0xff]
    %v3543 = vld [vmem:[#allocation6 + $0x1320] sm:$0xff]
    %v3544 = vld [vmem:[#allocation6 + $0x1328] sm:$0xff]
    %v3545 = vld [vmem:[#allocation6 + $0x1330] sm:$0xff]
    %v3546 = vld [vmem:[#allocation6 + $0x1338] sm:$0xff]
    %v3547 = vld [vmem:[#allocation6 + $0x1340] sm:$0xff]
    %v3548 = vld [vmem:[#allocation6 + $0x1348] sm:$0xff]
    %v3549 = vld [vmem:[#allocation6 + $0x1350] sm:$0xff]
    %v3550 = vld [vmem:[#allocation6 + $0x1358] sm:$0xff]
    %v3551 = vld [vmem:[#allocation6 + $0x1360] sm:$0xff]
    %v3552 = vld [vmem:[#allocation6 + $0x1368] sm:$0xff]
    %v3553 = vld [vmem:[#allocation6 + $0x1370] sm:$0xff]
    %v3554 = vld [vmem:[#allocation6 + $0x1378] sm:$0xff]
    %v3555 = vld [vmem:[#allocation6 + $0x1380] sm:$0xff]
    %v3556 = vld [vmem:[#allocation6 + $0x1388] sm:$0xff]
    %v3557 = vld [vmem:[#allocation6 + $0x1390] sm:$0xff]
    %v3558 = vld [vmem:[#allocation6 + $0x1398] sm:$0xff]
    %v3559 = vld [vmem:[#allocation6 + $0x13a0] sm:$0xff]
    %v3560 = vld [vmem:[#allocation6 + $0x13a8] sm:$0xff]
    %v3561 = vld [vmem:[#allocation6 + $0x13b0] sm:$0xff]
    %v3562 = vld [vmem:[#allocation6 + $0x13b8] sm:$0xff]
    %v3563 = vld [vmem:[#allocation6 + $0x13c0] sm:$0xff]
    %v3564 = vld [vmem:[#allocation6 + $0x13c8] sm:$0xff]
    %v3565 = vld [vmem:[#allocation6 + $0x13d0] sm:$0xff]
    %v3566 = vld [vmem:[#allocation6 + $0x13d8] sm:$0xff]
    %v3567 = vld [vmem:[#allocation6 + $0x13e0] sm:$0xff]
    %v3568 = vld [vmem:[#allocation6 + $0x13e8] sm:$0xff]
    %v3569 = vld [vmem:[#allocation6 + $0x13f0] sm:$0xff]
    %v3570 = vld [vmem:[#allocation6 + $0x13f8] sm:$0xff]
    %v3571 = vld [vmem:[#allocation6 + $0x1400] sm:$0xff]
    %v3572 = vld [vmem:[#allocation6 + $0x1408] sm:$0xff]
    %v3573 = vld [vmem:[#allocation6 + $0x1410] sm:$0xff]
    %v3574 = vld [vmem:[#allocation6 + $0x1418] sm:$0xff]
    %v3575 = vld [vmem:[#allocation6 + $0x1420] sm:$0xff]
    %v3576 = vld [vmem:[#allocation6 + $0x1428] sm:$0xff]
    %v3577 = vld [vmem:[#allocation6 + $0x1430] sm:$0xff]
    %v3578 = vld [vmem:[#allocation6 + $0x1438] sm:$0xff]
    %v3579 = vld [vmem:[#allocation6 + $0x1440] sm:$0xff]
    %v3580 = vld [vmem:[#allocation6 + $0x1448] sm:$0xff]
    %v3581 = vld [vmem:[#allocation6 + $0x1450] sm:$0xff]
    %v3582 = vld [vmem:[#allocation6 + $0x1458] sm:$0xff]
    %v3583 = vld [vmem:[#allocation6 + $0x1460] sm:$0xff]
    %v3584 = vld [vmem:[#allocation6 + $0x1468] sm:$0xff]
    %v3585 = vld [vmem:[#allocation6 + $0x1470] sm:$0xff]
    %v3586 = vld [vmem:[#allocation6 + $0x1478] sm:$0xff]
    %v3587 = vld [vmem:[#allocation6 + $0x1480] sm:$0xff]
    %v3588 = vld [vmem:[#allocation6 + $0x1488] sm:$0xff]
    %v3589 = vld [vmem:[#allocation6 + $0x1490] sm:$0xff]
    %v3590 = vld [vmem:[#allocation6 + $0x1498] sm:$0xff]
    %v3591 = vld [vmem:[#allocation6 + $0x14a0] sm:$0xff]
    %v3592 = vld [vmem:[#allocation6 + $0x14a8] sm:$0xff]
    %v3593 = vld [vmem:[#allocation6 + $0x14b0] sm:$0xff]
    %v3594 = vld [vmem:[#allocation6 + $0x14b8] sm:$0xff]
    %v3595 = vld [vmem:[#allocation6 + $0x14c0] sm:$0xff]
    %v3596 = vld [vmem:[#allocation6 + $0x14c8] sm:$0xff]
    %v3597 = vld [vmem:[#allocation6 + $0x14d0] sm:$0xff]
    %v3598 = vld [vmem:[#allocation6 + $0x14d8] sm:$0xff]
    %v3599 = vld [vmem:[#allocation6 + $0x14e0] sm:$0xff]
    %v3600 = vld [vmem:[#allocation6 + $0x14e8] sm:$0xff]
    %v3601 = vld [vmem:[#allocation6 + $0x14f0] sm:$0xff]
    %v3602 = vld [vmem:[#allocation6 + $0x14f8] sm:$0xff]
    %v3603 = vld [vmem:[#allocation6 + $0x1500] sm:$0xff]
    %v3604 = vld [vmem:[#allocation6 + $0x1508] sm:$0xff]
    %v3605 = vld [vmem:[#allocation6 + $0x1510] sm:$0xff]
    %v3606 = vld [vmem:[#allocation6 + $0x1518] sm:$0xff]
    %v3607 = vld [vmem:[#allocation6 + $0x1520] sm:$0xff]
    %v3608 = vld [vmem:[#allocation6 + $0x1528] sm:$0xff]
    %v3609 = vld [vmem:[#allocation6 + $0x1530] sm:$0xff]
    %v3610 = vld [vmem:[#allocation6 + $0x1538] sm:$0xff]
    %v3611 = vld [vmem:[#allocation6 + $0x1540] sm:$0xff]
    %v3612 = vld [vmem:[#allocation6 + $0x1548] sm:$0xff]
    %v3613 = vld [vmem:[#allocation6 + $0x1550] sm:$0xff]
    %v3614 = vld [vmem:[#allocation6 + $0x1558] sm:$0xff]
    %v3615 = vld [vmem:[#allocation6 + $0x1560] sm:$0xff]
    %v3616 = vld [vmem:[#allocation6 + $0x1568] sm:$0xff]
    %v3617 = vld [vmem:[#allocation6 + $0x1570] sm:$0xff]
    %v3618 = vld [vmem:[#allocation6 + $0x1578] sm:$0xff]
    %v3619 = vld [vmem:[#allocation6 + $0x1580] sm:$0xff]
    %v3620 = vld [vmem:[#allocation6 + $0x1588] sm:$0xff]
    %v3621 = vld [vmem:[#allocation6 + $0x1590] sm:$0xff]
    %v3622 = vld [vmem:[#allocation6 + $0x1598] sm:$0xff]
    %v3623 = vld [vmem:[#allocation6 + $0x15a0] sm:$0xff]
    %v3624 = vld [vmem:[#allocation6 + $0x15a8] sm:$0xff]
    %v3625 = vld [vmem:[#allocation6 + $0x15b0] sm:$0xff]
    %v3626 = vld [vmem:[#allocation6 + $0x15b8] sm:$0xff]
    %v3627 = vld [vmem:[#allocation6 + $0x15c0] sm:$0xff]
    %v3628 = vld [vmem:[#allocation6 + $0x15c8] sm:$0xff]
    %v3629 = vld [vmem:[#allocation6 + $0x15d0] sm:$0xff]
    %v3630 = vld [vmem:[#allocation6 + $0x15d8] sm:$0xff]
    %v3631 = vld [vmem:[#allocation6 + $0x15e0] sm:$0xff]
    %v3632 = vld [vmem:[#allocation6 + $0x15e8] sm:$0xff]
    %v3633 = vld [vmem:[#allocation6 + $0x15f0] sm:$0xff]
    %v3634 = vld [vmem:[#allocation6 + $0x15f8] sm:$0xff]
    %v3635 = vld [vmem:[#allocation7] sm:$0xf]
    %v3637 = vperm.slane %v3635, 0
    %v3638 = vperm.slane %v3635, 1
    %v3639 = vperm.slane %v3635, 2
    %v3640 = vperm.slane %v3635, 3
    %v4349 = vunpack.c.l.b16 %v2931
    %v4350 = vunpack.c.h.b16 %v2931
    %v4351 = vunpack.c.l.b16 %v2932
    %v4352 = vunpack.c.h.b16 %v2932
    %v4353 = vunpack.c.l.b16 %v2933
    %v4354 = vunpack.c.h.b16 %v2933
    %v4355 = vunpack.c.l.b16 %v2934
    %v4356 = vunpack.c.h.b16 %v2934
    %v4357 = vunpack.c.l.b16 %v2935
    %v4358 = vunpack.c.h.b16 %v2935
    %v4359 = vunpack.c.l.b16 %v2936
    %v4360 = vunpack.c.h.b16 %v2936
    %v4361 = vunpack.c.l.b16 %v2937
    %v4362 = vunpack.c.h.b16 %v2937
    %v4363 = vunpack.c.l.b16 %v2938
    %v4364 = vunpack.c.h.b16 %v2938
    %v4365 = vunpack.c.l.b16 %v2939
    %v4366 = vunpack.c.h.b16 %v2939
    %v4367 = vunpack.c.l.b16 %v2940
    %v4368 = vunpack.c.h.b16 %v2940
    %v4369 = vunpack.c.l.b16 %v2941
    %v4370 = vunpack.c.h.b16 %v2941
    %v4371 = vunpack.c.l.b16 %v2942
    %v4372 = vunpack.c.h.b16 %v2942
    %v4373 = vunpack.c.l.b16 %v2943
    %v4374 = vunpack.c.h.b16 %v2943
    %v4375 = vunpack.c.l.b16 %v2944
    %v4376 = vunpack.c.h.b16 %v2944
    %v4377 = vunpack.c.l.b16 %v2945
    %v4378 = vunpack.c.h.b16 %v2945
    %v4379 = vunpack.c.l.b16 %v2946
    %v4380 = vunpack.c.h.b16 %v2946
    %v4381 = vunpack.c.l.b16 %v2947
    %v4382 = vunpack.c.h.b16 %v2947
    %v4383 = vunpack.c.l.b16 %v2948
    %v4384 = vunpack.c.h.b16 %v2948
    %v4385 = vunpack.c.l.b16 %v2949
    %v4386 = vunpack.c.h.b16 %v2949
    %v4387 = vunpack.c.l.b16 %v2950
    %v4388 = vunpack.c.h.b16 %v2950
    %v4389 = vunpack.c.l.b16 %v2951
    %v4390 = vunpack.c.h.b16 %v2951
    %v4391 = vunpack.c.l.b16 %v2952
    %v4392 = vunpack.c.h.b16 %v2952
    %v4393 = vunpack.c.l.b16 %v2953
    %v4394 = vunpack.c.h.b16 %v2953
    %v4395 = vunpack.c.l.b16 %v2954
    %v4396 = vunpack.c.h.b16 %v2954
    %v4397 = vunpack.c.l.b16 %v2955
    %v4398 = vunpack.c.h.b16 %v2955
    %v4399 = vunpack.c.l.b16 %v2956
    %v4400 = vunpack.c.h.b16 %v2956
    %v4401 = vunpack.c.l.b16 %v2957
    %v4402 = vunpack.c.h.b16 %v2957
    %v4403 = vunpack.c.l.b16 %v2958
    %v4404 = vunpack.c.h.b16 %v2958
    %v4405 = vunpack.c.l.b16 %v2959
    %v4406 = vunpack.c.h.b16 %v2959
    %v4407 = vunpack.c.l.b16 %v2960
    %v4408 = vunpack.c.h.b16 %v2960
    %v4409 = vunpack.c.l.b16 %v2961
    %v4410 = vunpack.c.h.b16 %v2961
    %v4411 = vunpack.c.l.b16 %v2962
    %v4412 = vunpack.c.h.b16 %v2962
    %v4413 = vunpack.c.l.b16 %v2963
    %v4414 = vunpack.c.h.b16 %v2963
    %v4415 = vunpack.c.l.b16 %v2964
    %v4416 = vunpack.c.h.b16 %v2964
    %v4417 = vunpack.c.l.b16 %v2965
    %v4418 = vunpack.c.h.b16 %v2965
    %v4419 = vunpack.c.l.b16 %v2966
    %v4420 = vunpack.c.h.b16 %v2966
    %v4421 = vunpack.c.l.b16 %v2967
    %v4422 = vunpack.c.h.b16 %v2967
    %v4423 = vunpack.c.l.b16 %v2968
    %v4424 = vunpack.c.h.b16 %v2968
    %v4425 = vunpack.c.l.b16 %v2969
    %v4426 = vunpack.c.h.b16 %v2969
    %v4427 = vunpack.c.l.b16 %v2970
    %v4428 = vunpack.c.h.b16 %v2970
    %v4429 = vunpack.c.l.b16 %v2971
    %v4430 = vunpack.c.h.b16 %v2971
    %v4431 = vunpack.c.l.b16 %v2972
    %v4432 = vunpack.c.h.b16 %v2972
    %v4433 = vunpack.c.l.b16 %v2973
    %v4434 = vunpack.c.h.b16 %v2973
    %v4435 = vunpack.c.l.b16 %v2974
    %v4436 = vunpack.c.h.b16 %v2974
    %v4437 = vunpack.c.l.b16 %v2975
    %v4438 = vunpack.c.h.b16 %v2975
    %v4439 = vunpack.c.l.b16 %v2976
    %v4440 = vunpack.c.h.b16 %v2976
    %v4441 = vunpack.c.l.b16 %v2977
    %v4442 = vunpack.c.h.b16 %v2977
    %v4443 = vunpack.c.l.b16 %v2978
    %v4444 = vunpack.c.h.b16 %v2978
    %v4445 = vunpack.c.l.b16 %v2979
    %v4446 = vunpack.c.h.b16 %v2979
    %v4447 = vunpack.c.l.b16 %v2980
    %v4448 = vunpack.c.h.b16 %v2980
    %v4449 = vunpack.c.l.b16 %v2981
    %v4450 = vunpack.c.h.b16 %v2981
    %v4451 = vunpack.c.l.b16 %v2982
    %v4452 = vunpack.c.h.b16 %v2982
    %v4453 = vunpack.c.l.b16 %v2983
    %v4454 = vunpack.c.h.b16 %v2983
    %v4455 = vunpack.c.l.b16 %v2984
    %v4456 = vunpack.c.h.b16 %v2984
    %v4457 = vunpack.c.l.b16 %v2985
    %v4458 = vunpack.c.h.b16 %v2985
    %v4459 = vunpack.c.l.b16 %v2986
    %v4460 = vunpack.c.h.b16 %v2986
    %v4461 = vunpack.c.l.b16 %v2987
    %v4462 = vunpack.c.h.b16 %v2987
    %v4463 = vunpack.c.l.b16 %v2988
    %v4464 = vunpack.c.h.b16 %v2988
    %v4465 = vunpack.c.l.b16 %v2989
    %v4466 = vunpack.c.h.b16 %v2989
    %v4467 = vunpack.c.l.b16 %v2990
    %v4468 = vunpack.c.h.b16 %v2990
    %v4469 = vunpack.c.l.b16 %v2991
    %v4470 = vunpack.c.h.b16 %v2991
    %v4471 = vunpack.c.l.b16 %v2992
    %v4472 = vunpack.c.h.b16 %v2992
    %v4473 = vunpack.c.l.b16 %v2993
    %v4474 = vunpack.c.h.b16 %v2993
    %v4475 = vunpack.c.l.b16 %v2994
    %v4476 = vunpack.c.h.b16 %v2994
    %v4477 = vunpack.c.l.b16 %v2995
    %v4478 = vunpack.c.h.b16 %v2995
    %v4479 = vunpack.c.l.b16 %v2996
    %v4480 = vunpack.c.h.b16 %v2996
    %v4481 = vunpack.c.l.b16 %v2997
    %v4482 = vunpack.c.h.b16 %v2997
    %v4483 = vunpack.c.l.b16 %v2998
    %v4484 = vunpack.c.h.b16 %v2998
    %v4485 = vunpack.c.l.b16 %v2999
    %v4486 = vunpack.c.h.b16 %v2999
    %v4487 = vunpack.c.l.b16 %v3000
    %v4488 = vunpack.c.h.b16 %v3000
    %v4489 = vunpack.c.l.b16 %v3001
    %v4490 = vunpack.c.h.b16 %v3001
    %v4491 = vunpack.c.l.b16 %v3002
    %v4492 = vunpack.c.h.b16 %v3002
    %v4493 = vunpack.c.l.b16 %v3003
    %v4494 = vunpack.c.h.b16 %v3003
    %v4495 = vunpack.c.l.b16 %v3004
    %v4496 = vunpack.c.h.b16 %v3004
    %v4497 = vunpack.c.l.b16 %v3005
    %v4498 = vunpack.c.h.b16 %v3005
    %v4499 = vunpack.c.l.b16 %v3006
    %v4500 = vunpack.c.h.b16 %v3006
    %v4501 = vunpack.c.l.b16 %v3007
    %v4502 = vunpack.c.h.b16 %v3007
    %v4503 = vunpack.c.l.b16 %v3008
    %v4504 = vunpack.c.h.b16 %v3008
    %v4505 = vunpack.c.l.b16 %v3009
    %v4506 = vunpack.c.h.b16 %v3009
    %v4507 = vunpack.c.l.b16 %v3010
    %v4508 = vunpack.c.h.b16 %v3010
    %v4509 = vunpack.c.l.b16 %v3011
    %v4510 = vunpack.c.h.b16 %v3011
    %v4511 = vunpack.c.l.b16 %v3012
    %v4512 = vunpack.c.h.b16 %v3012
    %v4513 = vunpack.c.l.b16 %v3013
    %v4514 = vunpack.c.h.b16 %v3013
    %v4515 = vunpack.c.l.b16 %v3014
    %v4516 = vunpack.c.h.b16 %v3014
    %v4517 = vunpack.c.l.b16 %v3015
    %v4518 = vunpack.c.h.b16 %v3015
    %v4519 = vunpack.c.l.b16 %v3016
    %v4520 = vunpack.c.h.b16 %v3016
    %v4521 = vunpack.c.l.b16 %v3017
    %v4522 = vunpack.c.h.b16 %v3017
    %v4523 = vunpack.c.l.b16 %v3018
    %v4524 = vunpack.c.h.b16 %v3018
    %v4525 = vunpack.c.l.b16 %v3019
    %v4526 = vunpack.c.h.b16 %v3019
    %v4527 = vunpack.c.l.b16 %v3020
    %v4528 = vunpack.c.h.b16 %v3020
    %v4529 = vunpack.c.l.b16 %v3021
    %v4530 = vunpack.c.h.b16 %v3021
    %v4531 = vunpack.c.l.b16 %v3022
    %v4532 = vunpack.c.h.b16 %v3022
    %v4533 = vunpack.c.l.b16 %v3023
    %v4534 = vunpack.c.h.b16 %v3023
    %v4535 = vunpack.c.l.b16 %v3024
    %v4536 = vunpack.c.h.b16 %v3024
    %v4537 = vunpack.c.l.b16 %v3025
    %v4538 = vunpack.c.h.b16 %v3025
    %v4539 = vunpack.c.l.b16 %v3026
    %v4540 = vunpack.c.h.b16 %v3026
    %v4541 = vunpack.c.l.b16 %v3027
    %v4542 = vunpack.c.h.b16 %v3027
    %v4543 = vunpack.c.l.b16 %v3028
    %v4544 = vunpack.c.h.b16 %v3028
    %v4545 = vunpack.c.l.b16 %v3029
    %v4546 = vunpack.c.h.b16 %v3029
    %v4547 = vunpack.c.l.b16 %v3030
    %v4548 = vunpack.c.h.b16 %v3030
    %v4549 = vunpack.c.l.b16 %v3031
    %v4550 = vunpack.c.h.b16 %v3031
    %v4551 = vunpack.c.l.b16 %v3032
    %v4552 = vunpack.c.h.b16 %v3032
    %v4553 = vunpack.c.l.b16 %v3033
    %v4554 = vunpack.c.h.b16 %v3033
    %v4555 = vunpack.c.l.b16 %v3034
    %v4556 = vunpack.c.h.b16 %v3034
    %v4557 = vunpack.c.l.b16 %v3035
    %v4558 = vunpack.c.h.b16 %v3035
    %v4559 = vunpack.c.l.b16 %v3036
    %v4560 = vunpack.c.h.b16 %v3036
    %v4561 = vunpack.c.l.b16 %v3037
    %v4562 = vunpack.c.h.b16 %v3037
    %v4563 = vunpack.c.l.b16 %v3038
    %v4564 = vunpack.c.h.b16 %v3038
    %v4565 = vunpack.c.l.b16 %v3039
    %v4566 = vunpack.c.h.b16 %v3039
    %v4567 = vunpack.c.l.b16 %v3040
    %v4568 = vunpack.c.h.b16 %v3040
    %v4569 = vunpack.c.l.b16 %v3041
    %v4570 = vunpack.c.h.b16 %v3041
    %v4571 = vunpack.c.l.b16 %v3042
    %v4572 = vunpack.c.h.b16 %v3042
    %v4573 = vunpack.c.l.b16 %v3043
    %v4574 = vunpack.c.h.b16 %v3043
    %v4575 = vunpack.c.l.b16 %v3044
    %v4576 = vunpack.c.h.b16 %v3044
    %v4577 = vunpack.c.l.b16 %v3045
    %v4578 = vunpack.c.h.b16 %v3045
    %v4579 = vunpack.c.l.b16 %v3046
    %v4580 = vunpack.c.h.b16 %v3046
    %v4581 = vunpack.c.l.b16 %v3047
    %v4582 = vunpack.c.h.b16 %v3047
    %v4583 = vunpack.c.l.b16 %v3048
    %v4584 = vunpack.c.h.b16 %v3048
    %v4585 = vunpack.c.l.b16 %v3049
    %v4586 = vunpack.c.h.b16 %v3049
    %v4587 = vunpack.c.l.b16 %v3050
    %v4588 = vunpack.c.h.b16 %v3050
    %v4589 = vunpack.c.l.b16 %v3051
    %v4590 = vunpack.c.h.b16 %v3051
    %v4591 = vunpack.c.l.b16 %v3052
    %v4592 = vunpack.c.h.b16 %v3052
    %v4593 = vunpack.c.l.b16 %v3053
    %v4594 = vunpack.c.h.b16 %v3053
    %v4595 = vunpack.c.l.b16 %v3054
    %v4596 = vunpack.c.h.b16 %v3054
    %v4597 = vunpack.c.l.b16 %v3055
    %v4598 = vunpack.c.h.b16 %v3055
    %v4599 = vunpack.c.l.b16 %v3056
    %v4600 = vunpack.c.h.b16 %v3056
    %v4601 = vunpack.c.l.b16 %v3057
    %v4602 = vunpack.c.h.b16 %v3057
    %v4603 = vunpack.c.l.b16 %v3058
    %v4604 = vunpack.c.h.b16 %v3058
    %v4605 = vunpack.c.l.b16 %v3059
    %v4606 = vunpack.c.h.b16 %v3059
    %v4607 = vunpack.c.l.b16 %v3060
    %v4608 = vunpack.c.h.b16 %v3060
    %v4609 = vunpack.c.l.b16 %v3061
    %v4610 = vunpack.c.h.b16 %v3061
    %v4611 = vunpack.c.l.b16 %v3062
    %v4612 = vunpack.c.h.b16 %v3062
    %v4613 = vunpack.c.l.b16 %v3063
    %v4614 = vunpack.c.h.b16 %v3063
    %v4615 = vunpack.c.l.b16 %v3064
    %v4616 = vunpack.c.h.b16 %v3064
    %v4617 = vunpack.c.l.b16 %v3065
    %v4618 = vunpack.c.h.b16 %v3065
    %v4619 = vunpack.c.l.b16 %v3066
    %v4620 = vunpack.c.h.b16 %v3066
    %v4621 = vunpack.c.l.b16 %v3067
    %v4622 = vunpack.c.h.b16 %v3067
    %v4623 = vunpack.c.l.b16 %v3068
    %v4624 = vunpack.c.h.b16 %v3068
    %v4625 = vunpack.c.l.b16 %v3069
    %v4626 = vunpack.c.h.b16 %v3069
    %v4627 = vunpack.c.l.b16 %v3070
    %v4628 = vunpack.c.h.b16 %v3070
    %v4629 = vunpack.c.l.b16 %v3071
    %v4630 = vunpack.c.h.b16 %v3071
    %v4631 = vunpack.c.l.b16 %v3072
    %v4632 = vunpack.c.h.b16 %v3072
    %v4633 = vunpack.c.l.b16 %v3073
    %v4634 = vunpack.c.h.b16 %v3073
    %v4635 = vunpack.c.l.b16 %v3074
    %v4636 = vunpack.c.h.b16 %v3074
    %v4637 = vunpack.c.l.b16 %v3075
    %v4638 = vunpack.c.h.b16 %v3075
    %v4639 = vunpack.c.l.b16 %v3076
    %v4640 = vunpack.c.h.b16 %v3076
    %v4641 = vunpack.c.l.b16 %v3077
    %v4642 = vunpack.c.h.b16 %v3077
    %v4643 = vunpack.c.l.b16 %v3078
    %v4644 = vunpack.c.h.b16 %v3078
    %v4645 = vunpack.c.l.b16 %v3079
    %v4646 = vunpack.c.h.b16 %v3079
    %v4647 = vunpack.c.l.b16 %v3080
    %v4648 = vunpack.c.h.b16 %v3080
    %v4649 = vunpack.c.l.b16 %v3081
    %v4650 = vunpack.c.h.b16 %v3081
    %v4651 = vunpack.c.l.b16 %v3082
    %v4652 = vunpack.c.h.b16 %v3082
    %v4653 = vunpack.c.l.b16 %v3083
    %v4654 = vunpack.c.h.b16 %v3083
    %v4655 = vunpack.c.l.b16 %v3084
    %v4656 = vunpack.c.h.b16 %v3084
    %v4657 = vunpack.c.l.b16 %v3085
    %v4658 = vunpack.c.h.b16 %v3085
    %v4659 = vunpack.c.l.b16 %v3086
    %v4660 = vunpack.c.h.b16 %v3086
    %v4661 = vunpack.c.l.b16 %v3087
    %v4662 = vunpack.c.h.b16 %v3087
    %v4663 = vunpack.c.l.b16 %v3088
    %v4664 = vunpack.c.h.b16 %v3088
    %v4665 = vunpack.c.l.b16 %v3089
    %v4666 = vunpack.c.h.b16 %v3089
    %v4667 = vunpack.c.l.b16 %v3090
    %v4668 = vunpack.c.h.b16 %v3090
    %v4669 = vunpack.c.l.b16 %v3091
    %v4670 = vunpack.c.h.b16 %v3091
    %v4671 = vunpack.c.l.b16 %v3092
    %v4672 = vunpack.c.h.b16 %v3092
    %v4673 = vunpack.c.l.b16 %v3093
    %v4674 = vunpack.c.h.b16 %v3093
    %v4675 = vunpack.c.l.b16 %v3094
    %v4676 = vunpack.c.h.b16 %v3094
    %v4677 = vunpack.c.l.b16 %v3095
    %v4678 = vunpack.c.h.b16 %v3095
    %v4679 = vunpack.c.l.b16 %v3096
    %v4680 = vunpack.c.h.b16 %v3096
    %v4681 = vunpack.c.l.b16 %v3097
    %v4682 = vunpack.c.h.b16 %v3097
    %v4683 = vunpack.c.l.b16 %v3098
    %v4684 = vunpack.c.h.b16 %v3098
    %v4685 = vunpack.c.l.b16 %v3099
    %v4686 = vunpack.c.h.b16 %v3099
    %v4687 = vunpack.c.l.b16 %v3100
    %v4688 = vunpack.c.h.b16 %v3100
    %v4689 = vunpack.c.l.b16 %v3101
    %v4690 = vunpack.c.h.b16 %v3101
    %v4691 = vunpack.c.l.b16 %v3102
    %v4692 = vunpack.c.h.b16 %v3102
    %v4693 = vunpack.c.l.b16 %v3103
    %v4694 = vunpack.c.h.b16 %v3103
    %v4695 = vunpack.c.l.b16 %v3104
    %v4696 = vunpack.c.h.b16 %v3104
    %v4697 = vunpack.c.l.b16 %v3105
    %v4698 = vunpack.c.h.b16 %v3105
    %v4699 = vunpack.c.l.b16 %v3106
    %v4700 = vunpack.c.h.b16 %v3106
    %v4701 = vunpack.c.l.b16 %v3107
    %v4702 = vunpack.c.h.b16 %v3107
    %v4703 = vunpack.c.l.b16 %v3108
    %v4704 = vunpack.c.h.b16 %v3108
    %v4705 = vunpack.c.l.b16 %v3109
    %v4706 = vunpack.c.h.b16 %v3109
    %v4707 = vunpack.c.l.b16 %v3110
    %v4708 = vunpack.c.h.b16 %v3110
    %v4709 = vunpack.c.l.b16 %v3111
    %v4710 = vunpack.c.h.b16 %v3111
    %v4711 = vunpack.c.l.b16 %v3112
    %v4712 = vunpack.c.h.b16 %v3112
    %v4713 = vunpack.c.l.b16 %v3113
    %v4714 = vunpack.c.h.b16 %v3113
    %v4715 = vunpack.c.l.b16 %v3114
    %v4716 = vunpack.c.h.b16 %v3114
    %v4717 = vunpack.c.l.b16 %v3115
    %v4718 = vunpack.c.h.b16 %v3115
    %v4719 = vunpack.c.l.b16 %v3116
    %v4720 = vunpack.c.h.b16 %v3116
    %v4721 = vunpack.c.l.b16 %v3117
    %v4722 = vunpack.c.h.b16 %v3117
    %v4723 = vunpack.c.l.b16 %v3118
    %v4724 = vunpack.c.h.b16 %v3118
    %v4725 = vunpack.c.l.b16 %v3119
    %v4726 = vunpack.c.h.b16 %v3119
    %v4727 = vunpack.c.l.b16 %v3120
    %v4728 = vunpack.c.h.b16 %v3120
    %v4729 = vunpack.c.l.b16 %v3121
    %v4730 = vunpack.c.h.b16 %v3121
    %v4731 = vunpack.c.l.b16 %v3122
    %v4732 = vunpack.c.h.b16 %v3122
    %v4733 = vunpack.c.l.b16 %v3123
    %v4734 = vunpack.c.h.b16 %v3123
    %v4735 = vunpack.c.l.b16 %v3124
    %v4736 = vunpack.c.h.b16 %v3124
    %v4737 = vunpack.c.l.b16 %v3125
    %v4738 = vunpack.c.h.b16 %v3125
    %v4739 = vunpack.c.l.b16 %v3126
    %v4740 = vunpack.c.h.b16 %v3126
    %v4741 = vunpack.c.l.b16 %v3127
    %v4742 = vunpack.c.h.b16 %v3127
    %v4743 = vunpack.c.l.b16 %v3128
    %v4744 = vunpack.c.h.b16 %v3128
    %v4745 = vunpack.c.l.b16 %v3129
    %v4746 = vunpack.c.h.b16 %v3129
    %v4747 = vunpack.c.l.b16 %v3130
    %v4748 = vunpack.c.h.b16 %v3130
    %v4749 = vunpack.c.l.b16 %v3131
    %v4750 = vunpack.c.h.b16 %v3131
    %v4751 = vunpack.c.l.b16 %v3132
    %v4752 = vunpack.c.h.b16 %v3132
    %v4753 = vunpack.c.l.b16 %v3133
    %v4754 = vunpack.c.h.b16 %v3133
    %v4755 = vunpack.c.l.b16 %v3134
    %v4756 = vunpack.c.h.b16 %v3134
    %v4757 = vunpack.c.l.b16 %v3135
    %v4758 = vunpack.c.h.b16 %v3135
    %v4759 = vunpack.c.l.b16 %v3136
    %v4760 = vunpack.c.h.b16 %v3136
    %v4761 = vunpack.c.l.b16 %v3137
    %v4762 = vunpack.c.h.b16 %v3137
    %v4763 = vunpack.c.l.b16 %v3138
    %v4764 = vunpack.c.h.b16 %v3138
    %v4765 = vunpack.c.l.b16 %v3139
    %v4766 = vunpack.c.h.b16 %v3139
    %v4767 = vunpack.c.l.b16 %v3140
    %v4768 = vunpack.c.h.b16 %v3140
    %v4769 = vunpack.c.l.b16 %v3141
    %v4770 = vunpack.c.h.b16 %v3141
    %v4771 = vunpack.c.l.b16 %v3142
    %v4772 = vunpack.c.h.b16 %v3142
    %v4773 = vunpack.c.l.b16 %v3143
    %v4774 = vunpack.c.h.b16 %v3143
    %v4775 = vunpack.c.l.b16 %v3144
    %v4776 = vunpack.c.h.b16 %v3144
    %v4777 = vunpack.c.l.b16 %v3145
    %v4778 = vunpack.c.h.b16 %v3145
    %v4779 = vunpack.c.l.b16 %v3146
    %v4780 = vunpack.c.h.b16 %v3146
    %v4781 = vunpack.c.l.b16 %v3147
    %v4782 = vunpack.c.h.b16 %v3147
    %v4783 = vunpack.c.l.b16 %v3148
    %v4784 = vunpack.c.h.b16 %v3148
    %v4785 = vunpack.c.l.b16 %v3149
    %v4786 = vunpack.c.h.b16 %v3149
    %v4787 = vunpack.c.l.b16 %v3150
    %v4788 = vunpack.c.h.b16 %v3150
    %v4789 = vunpack.c.l.b16 %v3151
    %v4790 = vunpack.c.h.b16 %v3151
    %v4791 = vunpack.c.l.b16 %v3152
    %v4792 = vunpack.c.h.b16 %v3152
    %v4793 = vunpack.c.l.b16 %v3153
    %v4794 = vunpack.c.h.b16 %v3153
    %v4795 = vunpack.c.l.b16 %v3154
    %v4796 = vunpack.c.h.b16 %v3154
    %v4797 = vunpack.c.l.b16 %v3155
    %v4798 = vunpack.c.h.b16 %v3155
    %v4799 = vunpack.c.l.b16 %v3156
    %v4800 = vunpack.c.h.b16 %v3156
    %v4801 = vunpack.c.l.b16 %v3157
    %v4802 = vunpack.c.h.b16 %v3157
    %v4803 = vunpack.c.l.b16 %v3158
    %v4804 = vunpack.c.h.b16 %v3158
    %v4805 = vunpack.c.l.b16 %v3159
    %v4806 = vunpack.c.h.b16 %v3159
    %v4807 = vunpack.c.l.b16 %v3160
    %v4808 = vunpack.c.h.b16 %v3160
    %v4809 = vunpack.c.l.b16 %v3161
    %v4810 = vunpack.c.h.b16 %v3161
    %v4811 = vunpack.c.l.b16 %v3162
    %v4812 = vunpack.c.h.b16 %v3162
    %v4813 = vunpack.c.l.b16 %v3163
    %v4814 = vunpack.c.h.b16 %v3163
    %v4815 = vunpack.c.l.b16 %v3164
    %v4816 = vunpack.c.h.b16 %v3164
    %v4817 = vunpack.c.l.b16 %v3165
    %v4818 = vunpack.c.h.b16 %v3165
    %v4819 = vunpack.c.l.b16 %v3166
    %v4820 = vunpack.c.h.b16 %v3166
    %v4821 = vunpack.c.l.b16 %v3167
    %v4822 = vunpack.c.h.b16 %v3167
    %v4823 = vunpack.c.l.b16 %v3168
    %v4824 = vunpack.c.h.b16 %v3168
    %v4825 = vunpack.c.l.b16 %v3169
    %v4826 = vunpack.c.h.b16 %v3169
    %v4827 = vunpack.c.l.b16 %v3170
    %v4828 = vunpack.c.h.b16 %v3170
    %v4829 = vunpack.c.l.b16 %v3171
    %v4830 = vunpack.c.h.b16 %v3171
    %v4831 = vunpack.c.l.b16 %v3172
    %v4832 = vunpack.c.h.b16 %v3172
    %v4833 = vunpack.c.l.b16 %v3173
    %v4834 = vunpack.c.h.b16 %v3173
    %v4835 = vunpack.c.l.b16 %v3174
    %v4836 = vunpack.c.h.b16 %v3174
    %v4837 = vunpack.c.l.b16 %v3175
    %v4838 = vunpack.c.h.b16 %v3175
    %v4839 = vunpack.c.l.b16 %v3176
    %v4840 = vunpack.c.h.b16 %v3176
    %v4841 = vunpack.c.l.b16 %v3177
    %v4842 = vunpack.c.h.b16 %v3177
    %v4843 = vunpack.c.l.b16 %v3178
    %v4844 = vunpack.c.h.b16 %v3178
    %v4845 = vunpack.c.l.b16 %v3179
    %v4846 = vunpack.c.h.b16 %v3179
    %v4847 = vunpack.c.l.b16 %v3180
    %v4848 = vunpack.c.h.b16 %v3180
    %v4849 = vunpack.c.l.b16 %v3181
    %v4850 = vunpack.c.h.b16 %v3181
    %v4851 = vunpack.c.l.b16 %v3182
    %v4852 = vunpack.c.h.b16 %v3182
    %v4853 = vunpack.c.l.b16 %v3183
    %v4854 = vunpack.c.h.b16 %v3183
    %v4855 = vunpack.c.l.b16 %v3184
    %v4856 = vunpack.c.h.b16 %v3184
    %v4857 = vunpack.c.l.b16 %v3185
    %v4858 = vunpack.c.h.b16 %v3185
    %v4859 = vunpack.c.l.b16 %v3186
    %v4860 = vunpack.c.h.b16 %v3186
    %v4861 = vunpack.c.l.b16 %v3187
    %v4862 = vunpack.c.h.b16 %v3187
    %v4863 = vunpack.c.l.b16 %v3188
    %v4864 = vunpack.c.h.b16 %v3188
    %v4865 = vunpack.c.l.b16 %v3189
    %v4866 = vunpack.c.h.b16 %v3189
    %v4867 = vunpack.c.l.b16 %v3190
    %v4868 = vunpack.c.h.b16 %v3190
    %v4869 = vunpack.c.l.b16 %v3191
    %v4870 = vunpack.c.h.b16 %v3191
    %v4871 = vunpack.c.l.b16 %v3192
    %v4872 = vunpack.c.h.b16 %v3192
    %v4873 = vunpack.c.l.b16 %v3193
    %v4874 = vunpack.c.h.b16 %v3193
    %v4875 = vunpack.c.l.b16 %v3194
    %v4876 = vunpack.c.h.b16 %v3194
    %v4877 = vunpack.c.l.b16 %v3195
    %v4878 = vunpack.c.h.b16 %v3195
    %v4879 = vunpack.c.l.b16 %v3196
    %v4880 = vunpack.c.h.b16 %v3196
    %v4881 = vunpack.c.l.b16 %v3197
    %v4882 = vunpack.c.h.b16 %v3197
    %v4883 = vunpack.c.l.b16 %v3198
    %v4884 = vunpack.c.h.b16 %v3198
    %v4885 = vunpack.c.l.b16 %v3199
    %v4886 = vunpack.c.h.b16 %v3199
    %v4887 = vunpack.c.l.b16 %v3200
    %v4888 = vunpack.c.h.b16 %v3200
    %v4889 = vunpack.c.l.b16 %v3201
    %v4890 = vunpack.c.h.b16 %v3201
    %v4891 = vunpack.c.l.b16 %v3202
    %v4892 = vunpack.c.h.b16 %v3202
    %v4893 = vunpack.c.l.b16 %v3203
    %v4894 = vunpack.c.h.b16 %v3203
    %v4895 = vunpack.c.l.b16 %v3204
    %v4896 = vunpack.c.h.b16 %v3204
    %v4897 = vunpack.c.l.b16 %v3205
    %v4898 = vunpack.c.h.b16 %v3205
    %v4899 = vunpack.c.l.b16 %v3206
    %v4900 = vunpack.c.h.b16 %v3206
    %v4901 = vunpack.c.l.b16 %v3207
    %v4902 = vunpack.c.h.b16 %v3207
    %v4903 = vunpack.c.l.b16 %v3208
    %v4904 = vunpack.c.h.b16 %v3208
    %v4905 = vunpack.c.l.b16 %v3209
    %v4906 = vunpack.c.h.b16 %v3209
    %v4907 = vunpack.c.l.b16 %v3210
    %v4908 = vunpack.c.h.b16 %v3210
    %v4909 = vunpack.c.l.b16 %v3211
    %v4910 = vunpack.c.h.b16 %v3211
    %v4911 = vunpack.c.l.b16 %v3212
    %v4912 = vunpack.c.h.b16 %v3212
    %v4913 = vunpack.c.l.b16 %v3213
    %v4914 = vunpack.c.h.b16 %v3213
    %v4915 = vunpack.c.l.b16 %v3214
    %v4916 = vunpack.c.h.b16 %v3214
    %v4917 = vunpack.c.l.b16 %v3215
    %v4918 = vunpack.c.h.b16 %v3215
    %v4919 = vunpack.c.l.b16 %v3216
    %v4920 = vunpack.c.h.b16 %v3216
    %v4921 = vunpack.c.l.b16 %v3217
    %v4922 = vunpack.c.h.b16 %v3217
    %v4923 = vunpack.c.l.b16 %v3218
    %v4924 = vunpack.c.h.b16 %v3218
    %v4925 = vunpack.c.l.b16 %v3219
    %v4926 = vunpack.c.h.b16 %v3219
    %v4927 = vunpack.c.l.b16 %v3220
    %v4928 = vunpack.c.h.b16 %v3220
    %v4929 = vunpack.c.l.b16 %v3221
    %v4930 = vunpack.c.h.b16 %v3221
    %v4931 = vunpack.c.l.b16 %v3222
    %v4932 = vunpack.c.h.b16 %v3222
    %v4933 = vunpack.c.l.b16 %v3223
    %v4934 = vunpack.c.h.b16 %v3223
    %v4935 = vunpack.c.l.b16 %v3224
    %v4936 = vunpack.c.h.b16 %v3224
    %v4937 = vunpack.c.l.b16 %v3225
    %v4938 = vunpack.c.h.b16 %v3225
    %v4939 = vunpack.c.l.b16 %v3226
    %v4940 = vunpack.c.h.b16 %v3226
    %v4941 = vunpack.c.l.b16 %v3227
    %v4942 = vunpack.c.h.b16 %v3227
    %v4943 = vunpack.c.l.b16 %v3228
    %v4944 = vunpack.c.h.b16 %v3228
    %v4945 = vunpack.c.l.b16 %v3229
    %v4946 = vunpack.c.h.b16 %v3229
    %v4947 = vunpack.c.l.b16 %v3230
    %v4948 = vunpack.c.h.b16 %v3230
    %v4949 = vunpack.c.l.b16 %v3231
    %v4950 = vunpack.c.h.b16 %v3231
    %v4951 = vunpack.c.l.b16 %v3232
    %v4952 = vunpack.c.h.b16 %v3232
    %v4953 = vunpack.c.l.b16 %v3233
    %v4954 = vunpack.c.h.b16 %v3233
    %v4955 = vunpack.c.l.b16 %v3234
    %v4956 = vunpack.c.h.b16 %v3234
    %v4957 = vunpack.c.l.b16 %v3235
    %v4958 = vunpack.c.h.b16 %v3235
    %v4959 = vunpack.c.l.b16 %v3236
    %v4960 = vunpack.c.h.b16 %v3236
    %v4961 = vunpack.c.l.b16 %v3237
    %v4962 = vunpack.c.h.b16 %v3237
    %v4963 = vunpack.c.l.b16 %v3238
    %v4964 = vunpack.c.h.b16 %v3238
    %v4965 = vunpack.c.l.b16 %v3239
    %v4966 = vunpack.c.h.b16 %v3239
    %v4967 = vunpack.c.l.b16 %v3240
    %v4968 = vunpack.c.h.b16 %v3240
    %v4969 = vunpack.c.l.b16 %v3241
    %v4970 = vunpack.c.h.b16 %v3241
    %v4971 = vunpack.c.l.b16 %v3242
    %v4972 = vunpack.c.h.b16 %v3242
    %v4973 = vunpack.c.l.b16 %v3243
    %v4974 = vunpack.c.h.b16 %v3243
    %v4975 = vunpack.c.l.b16 %v3244
    %v4976 = vunpack.c.h.b16 %v3244
    %v4977 = vunpack.c.l.b16 %v3245
    %v4978 = vunpack.c.h.b16 %v3245
    %v4979 = vunpack.c.l.b16 %v3246
    %v4980 = vunpack.c.h.b16 %v3246
    %v4981 = vunpack.c.l.b16 %v3247
    %v4982 = vunpack.c.h.b16 %v3247
    %v4983 = vunpack.c.l.b16 %v3248
    %v4984 = vunpack.c.h.b16 %v3248
    %v4985 = vunpack.c.l.b16 %v3249
    %v4986 = vunpack.c.h.b16 %v3249
    %v4987 = vunpack.c.l.b16 %v3250
    %v4988 = vunpack.c.h.b16 %v3250
    %v4989 = vunpack.c.l.b16 %v3251
    %v4990 = vunpack.c.h.b16 %v3251
    %v4991 = vunpack.c.l.b16 %v3252
    %v4992 = vunpack.c.h.b16 %v3252
    %v4993 = vunpack.c.l.b16 %v3253
    %v4994 = vunpack.c.h.b16 %v3253
    %v4995 = vunpack.c.l.b16 %v3254
    %v4996 = vunpack.c.h.b16 %v3254
    %v4997 = vunpack.c.l.b16 %v3255
    %v4998 = vunpack.c.h.b16 %v3255
    %v4999 = vunpack.c.l.b16 %v3256
    %v5000 = vunpack.c.h.b16 %v3256
    %v5001 = vunpack.c.l.b16 %v3257
    %v5002 = vunpack.c.h.b16 %v3257
    %v5003 = vunpack.c.l.b16 %v3258
    %v5004 = vunpack.c.h.b16 %v3258
    %v5005 = vunpack.c.l.b16 %v3259
    %v5006 = vunpack.c.h.b16 %v3259
    %v5007 = vunpack.c.l.b16 %v3260
    %v5008 = vunpack.c.h.b16 %v3260
    %v5009 = vunpack.c.l.b16 %v3261
    %v5010 = vunpack.c.h.b16 %v3261
    %v5011 = vunpack.c.l.b16 %v3262
    %v5012 = vunpack.c.h.b16 %v3262
    %v5013 = vunpack.c.l.b16 %v3263
    %v5014 = vunpack.c.h.b16 %v3263
    %v5015 = vunpack.c.l.b16 %v3264
    %v5016 = vunpack.c.h.b16 %v3264
    %v5017 = vunpack.c.l.b16 %v3265
    %v5018 = vunpack.c.h.b16 %v3265
    %v5019 = vunpack.c.l.b16 %v3266
    %v5020 = vunpack.c.h.b16 %v3266
    %v5021 = vunpack.c.l.b16 %v3267
    %v5022 = vunpack.c.h.b16 %v3267
    %v5023 = vunpack.c.l.b16 %v3268
    %v5024 = vunpack.c.h.b16 %v3268
    %v5025 = vunpack.c.l.b16 %v3269
    %v5026 = vunpack.c.h.b16 %v3269
    %v5027 = vunpack.c.l.b16 %v3270
    %v5028 = vunpack.c.h.b16 %v3270
    %v5029 = vunpack.c.l.b16 %v3271
    %v5030 = vunpack.c.h.b16 %v3271
    %v5031 = vunpack.c.l.b16 %v3272
    %v5032 = vunpack.c.h.b16 %v3272
    %v5033 = vunpack.c.l.b16 %v3273
    %v5034 = vunpack.c.h.b16 %v3273
    %v5035 = vunpack.c.l.b16 %v3274
    %v5036 = vunpack.c.h.b16 %v3274
    %v5037 = vunpack.c.l.b16 %v3275
    %v5038 = vunpack.c.h.b16 %v3275
    %v5039 = vunpack.c.l.b16 %v3276
    %v5040 = vunpack.c.h.b16 %v3276
    %v5041 = vunpack.c.l.b16 %v3277
    %v5042 = vunpack.c.h.b16 %v3277
    %v5043 = vunpack.c.l.b16 %v3278
    %v5044 = vunpack.c.h.b16 %v3278
    %v5045 = vunpack.c.l.b16 %v3279
    %v5046 = vunpack.c.h.b16 %v3279
    %v5047 = vunpack.c.l.b16 %v3280
    %v5048 = vunpack.c.h.b16 %v3280
    %v5049 = vunpack.c.l.b16 %v3281
    %v5050 = vunpack.c.h.b16 %v3281
    %v5051 = vunpack.c.l.b16 %v3282
    %v5052 = vunpack.c.h.b16 %v3282
    %v5053 = vunpack.c.l.b16 %v3283
    %v5054 = vunpack.c.h.b16 %v3283
    %v5055 = vunpack.c.l.b16 %v3284
    %v5056 = vunpack.c.h.b16 %v3284
    %v5057 = vunpack.c.l.b16 %v3285
    %v5058 = vunpack.c.h.b16 %v3285
    %v5059 = vunpack.c.l.b16 %v3286
    %v5060 = vunpack.c.h.b16 %v3286
    %v5061 = vunpack.c.l.b16 %v3287
    %v5062 = vunpack.c.h.b16 %v3287
    %v5063 = vunpack.c.l.b16 %v3288
    %v5064 = vunpack.c.h.b16 %v3288
    %v5065 = vunpack.c.l.b16 %v3289
    %v5066 = vunpack.c.h.b16 %v3289
    %v5067 = vunpack.c.l.b16 %v3290
    %v5068 = vunpack.c.h.b16 %v3290
    %v5069 = vunpack.c.l.b16 %v3291
    %v5070 = vunpack.c.h.b16 %v3291
    %v5071 = vunpack.c.l.b16 %v3292
    %v5072 = vunpack.c.h.b16 %v3292
    %v5073 = vunpack.c.l.b16 %v3293
    %v5074 = vunpack.c.h.b16 %v3293
    %v5075 = vunpack.c.l.b16 %v3294
    %v5076 = vunpack.c.h.b16 %v3294
    %v5077 = vunpack.c.l.b16 %v3295
    %v5078 = vunpack.c.h.b16 %v3295
    %v5079 = vunpack.c.l.b16 %v3296
    %v5080 = vunpack.c.h.b16 %v3296
    %v5081 = vunpack.c.l.b16 %v3297
    %v5082 = vunpack.c.h.b16 %v3297
    %v5083 = vunpack.c.l.b16 %v3298
    %v5084 = vunpack.c.h.b16 %v3298
    %v5085 = vunpack.c.l.b16 %v3299
    %v5086 = vunpack.c.h.b16 %v3299
    %v5087 = vunpack.c.l.b16 %v3300
    %v5088 = vunpack.c.h.b16 %v3300
    %v5089 = vunpack.c.l.b16 %v3301
    %v5090 = vunpack.c.h.b16 %v3301
    %v5091 = vunpack.c.l.b16 %v3302
    %v5092 = vunpack.c.h.b16 %v3302
    %v5093 = vunpack.c.l.b16 %v3303
    %v5094 = vunpack.c.h.b16 %v3303
    %v5095 = vunpack.c.l.b16 %v3304
    %v5096 = vunpack.c.h.b16 %v3304
    %v5097 = vunpack.c.l.b16 %v3305
    %v5098 = vunpack.c.h.b16 %v3305
    %v5099 = vunpack.c.l.b16 %v3306
    %v5100 = vunpack.c.h.b16 %v3306
    %v5101 = vunpack.c.l.b16 %v3307
    %v5102 = vunpack.c.h.b16 %v3307
    %v5103 = vunpack.c.l.b16 %v3308
    %v5104 = vunpack.c.h.b16 %v3308
    %v5105 = vunpack.c.l.b16 %v3309
    %v5106 = vunpack.c.h.b16 %v3309
    %v5107 = vunpack.c.l.b16 %v3310
    %v5108 = vunpack.c.h.b16 %v3310
    %v5109 = vunpack.c.l.b16 %v3311
    %v5110 = vunpack.c.h.b16 %v3311
    %v5111 = vunpack.c.l.b16 %v3312
    %v5112 = vunpack.c.h.b16 %v3312
    %v5113 = vunpack.c.l.b16 %v3313
    %v5114 = vunpack.c.h.b16 %v3313
    %v5115 = vunpack.c.l.b16 %v3314
    %v5116 = vunpack.c.h.b16 %v3314
    %v5117 = vunpack.c.l.b16 %v3315
    %v5118 = vunpack.c.h.b16 %v3315
    %v5119 = vunpack.c.l.b16 %v3316
    %v5120 = vunpack.c.h.b16 %v3316
    %v5121 = vunpack.c.l.b16 %v3317
    %v5122 = vunpack.c.h.b16 %v3317
    %v5123 = vunpack.c.l.b16 %v3318
    %v5124 = vunpack.c.h.b16 %v3318
    %v5125 = vunpack.c.l.b16 %v3319
    %v5126 = vunpack.c.h.b16 %v3319
    %v5127 = vunpack.c.l.b16 %v3320
    %v5128 = vunpack.c.h.b16 %v3320
    %v5129 = vunpack.c.l.b16 %v3321
    %v5130 = vunpack.c.h.b16 %v3321
    %v5131 = vunpack.c.l.b16 %v3322
    %v5132 = vunpack.c.h.b16 %v3322
    %v5133 = vunpack.c.l.b16 %v3323
    %v5134 = vunpack.c.h.b16 %v3323
    %v5135 = vunpack.c.l.b16 %v3324
    %v5136 = vunpack.c.h.b16 %v3324
    %v5137 = vunpack.c.l.b16 %v3325
    %v5138 = vunpack.c.h.b16 %v3325
    %v5139 = vunpack.c.l.b16 %v3326
    %v5140 = vunpack.c.h.b16 %v3326
    %v5141 = vunpack.c.l.b16 %v3327
    %v5142 = vunpack.c.h.b16 %v3327
    %v5143 = vunpack.c.l.b16 %v3328
    %v5144 = vunpack.c.h.b16 %v3328
    %v5145 = vunpack.c.l.b16 %v3329
    %v5146 = vunpack.c.h.b16 %v3329
    %v5147 = vunpack.c.l.b16 %v3330
    %v5148 = vunpack.c.h.b16 %v3330
    %v5149 = vunpack.c.l.b16 %v3331
    %v5150 = vunpack.c.h.b16 %v3331
    %v5151 = vunpack.c.l.b16 %v3332
    %v5152 = vunpack.c.h.b16 %v3332
    %v5153 = vunpack.c.l.b16 %v3333
    %v5154 = vunpack.c.h.b16 %v3333
    %v5155 = vunpack.c.l.b16 %v3334
    %v5156 = vunpack.c.h.b16 %v3334
    %v5157 = vunpack.c.l.b16 %v3335
    %v5158 = vunpack.c.h.b16 %v3335
    %v5159 = vunpack.c.l.b16 %v3336
    %v5160 = vunpack.c.h.b16 %v3336
    %v5161 = vunpack.c.l.b16 %v3337
    %v5162 = vunpack.c.h.b16 %v3337
    %v5163 = vunpack.c.l.b16 %v3338
    %v5164 = vunpack.c.h.b16 %v3338
    %v5165 = vunpack.c.l.b16 %v3339
    %v5166 = vunpack.c.h.b16 %v3339
    %v5167 = vunpack.c.l.b16 %v3340
    %v5168 = vunpack.c.h.b16 %v3340
    %v5169 = vunpack.c.l.b16 %v3341
    %v5170 = vunpack.c.h.b16 %v3341
    %v5171 = vunpack.c.l.b16 %v3342
    %v5172 = vunpack.c.h.b16 %v3342
    %v5173 = vunpack.c.l.b16 %v3343
    %v5174 = vunpack.c.h.b16 %v3343
    %v5175 = vunpack.c.l.b16 %v3344
    %v5176 = vunpack.c.h.b16 %v3344
    %v5177 = vunpack.c.l.b16 %v3345
    %v5178 = vunpack.c.h.b16 %v3345
    %v5179 = vunpack.c.l.b16 %v3346
    %v5180 = vunpack.c.h.b16 %v3346
    %v5181 = vunpack.c.l.b16 %v3347
    %v5182 = vunpack.c.h.b16 %v3347
    %v5183 = vunpack.c.l.b16 %v3348
    %v5184 = vunpack.c.h.b16 %v3348
    %v5185 = vunpack.c.l.b16 %v3349
    %v5186 = vunpack.c.h.b16 %v3349
    %v5187 = vunpack.c.l.b16 %v3350
    %v5188 = vunpack.c.h.b16 %v3350
    %v5189 = vunpack.c.l.b16 %v3351
    %v5190 = vunpack.c.h.b16 %v3351
    %v5191 = vunpack.c.l.b16 %v3352
    %v5192 = vunpack.c.h.b16 %v3352
    %v5193 = vunpack.c.l.b16 %v3353
    %v5194 = vunpack.c.h.b16 %v3353
    %v5195 = vunpack.c.l.b16 %v3354
    %v5196 = vunpack.c.h.b16 %v3354
    %v5197 = vunpack.c.l.b16 %v3355
    %v5198 = vunpack.c.h.b16 %v3355
    %v5199 = vunpack.c.l.b16 %v3356
    %v5200 = vunpack.c.h.b16 %v3356
    %v5201 = vunpack.c.l.b16 %v3357
    %v5202 = vunpack.c.h.b16 %v3357
    %v5203 = vunpack.c.l.b16 %v3358
    %v5204 = vunpack.c.h.b16 %v3358
    %v5205 = vunpack.c.l.b16 %v3359
    %v5206 = vunpack.c.h.b16 %v3359
    %v5207 = vunpack.c.l.b16 %v3360
    %v5208 = vunpack.c.h.b16 %v3360
    %v5209 = vunpack.c.l.b16 %v3361
    %v5210 = vunpack.c.h.b16 %v3361
    %v5211 = vunpack.c.l.b16 %v3362
    %v5212 = vunpack.c.h.b16 %v3362
    %v5213 = vunpack.c.l.b16 %v3363
    %v5214 = vunpack.c.h.b16 %v3363
    %v5215 = vunpack.c.l.b16 %v3364
    %v5216 = vunpack.c.h.b16 %v3364
    %v5217 = vunpack.c.l.b16 %v3365
    %v5218 = vunpack.c.h.b16 %v3365
    %v5219 = vunpack.c.l.b16 %v3366
    %v5220 = vunpack.c.h.b16 %v3366
    %v5221 = vunpack.c.l.b16 %v3367
    %v5222 = vunpack.c.h.b16 %v3367
    %v5223 = vunpack.c.l.b16 %v3368
    %v5224 = vunpack.c.h.b16 %v3368
    %v5225 = vunpack.c.l.b16 %v3369
    %v5226 = vunpack.c.h.b16 %v3369
    %v5227 = vunpack.c.l.b16 %v3370
    %v5228 = vunpack.c.h.b16 %v3370
    %v5229 = vunpack.c.l.b16 %v3371
    %v5230 = vunpack.c.h.b16 %v3371
    %v5231 = vunpack.c.l.b16 %v3372
    %v5232 = vunpack.c.h.b16 %v3372
    %v5233 = vunpack.c.l.b16 %v3373
    %v5234 = vunpack.c.h.b16 %v3373
    %v5235 = vunpack.c.l.b16 %v3374
    %v5236 = vunpack.c.h.b16 %v3374
    %v5237 = vunpack.c.l.b16 %v3375
    %v5238 = vunpack.c.h.b16 %v3375
    %v5239 = vunpack.c.l.b16 %v3376
    %v5240 = vunpack.c.h.b16 %v3376
    %v5241 = vunpack.c.l.b16 %v3377
    %v5242 = vunpack.c.h.b16 %v3377
    %v5243 = vunpack.c.l.b16 %v3378
    %v5244 = vunpack.c.h.b16 %v3378
    %v5245 = vunpack.c.l.b16 %v3379
    %v5246 = vunpack.c.h.b16 %v3379
    %v5247 = vunpack.c.l.b16 %v3380
    %v5248 = vunpack.c.h.b16 %v3380
    %v5249 = vunpack.c.l.b16 %v3381
    %v5250 = vunpack.c.h.b16 %v3381
    %v5251 = vunpack.c.l.b16 %v3382
    %v5252 = vunpack.c.h.b16 %v3382
    %v5253 = vunpack.c.l.b16 %v3383
    %v5254 = vunpack.c.h.b16 %v3383
    %v5255 = vunpack.c.l.b16 %v3384
    %v5256 = vunpack.c.h.b16 %v3384
    %v5257 = vunpack.c.l.b16 %v3385
    %v5258 = vunpack.c.h.b16 %v3385
    %v5259 = vunpack.c.l.b16 %v3386
    %v5260 = vunpack.c.h.b16 %v3386
    %v5261 = vunpack.c.l.b16 %v3387
    %v5262 = vunpack.c.h.b16 %v3387
    %v5263 = vunpack.c.l.b16 %v3388
    %v5264 = vunpack.c.h.b16 %v3388
    %v5265 = vunpack.c.l.b16 %v3389
    %v5266 = vunpack.c.h.b16 %v3389
    %v5267 = vunpack.c.l.b16 %v3390
    %v5268 = vunpack.c.h.b16 %v3390
    %v5269 = vunpack.c.l.b16 %v3391
    %v5270 = vunpack.c.h.b16 %v3391
    %v5271 = vunpack.c.l.b16 %v3392
    %v5272 = vunpack.c.h.b16 %v3392
    %v5273 = vunpack.c.l.b16 %v3393
    %v5274 = vunpack.c.h.b16 %v3393
    %v5275 = vunpack.c.l.b16 %v3394
    %v5276 = vunpack.c.h.b16 %v3394
    %v5277 = vunpack.c.l.b16 %v3395
    %v5278 = vunpack.c.h.b16 %v3395
    %v5279 = vunpack.c.l.b16 %v3396
    %v5280 = vunpack.c.h.b16 %v3396
    %v5281 = vunpack.c.l.b16 %v3397
    %v5282 = vunpack.c.h.b16 %v3397
    %v5283 = vunpack.c.l.b16 %v3398
    %v5284 = vunpack.c.h.b16 %v3398
    %v5285 = vunpack.c.l.b16 %v3399
    %v5286 = vunpack.c.h.b16 %v3399
    %v5287 = vunpack.c.l.b16 %v3400
    %v5288 = vunpack.c.h.b16 %v3400
    %v5289 = vunpack.c.l.b16 %v3401
    %v5290 = vunpack.c.h.b16 %v3401
    %v5291 = vunpack.c.l.b16 %v3402
    %v5292 = vunpack.c.h.b16 %v3402
    %v5293 = vunpack.c.l.b16 %v3403
    %v5294 = vunpack.c.h.b16 %v3403
    %v5295 = vunpack.c.l.b16 %v3404
    %v5296 = vunpack.c.h.b16 %v3404
    %v5297 = vunpack.c.l.b16 %v3405
    %v5298 = vunpack.c.h.b16 %v3405
    %v5299 = vunpack.c.l.b16 %v3406
    %v5300 = vunpack.c.h.b16 %v3406
    %v5301 = vunpack.c.l.b16 %v3407
    %v5302 = vunpack.c.h.b16 %v3407
    %v5303 = vunpack.c.l.b16 %v3408
    %v5304 = vunpack.c.h.b16 %v3408
    %v5305 = vunpack.c.l.b16 %v3409
    %v5306 = vunpack.c.h.b16 %v3409
    %v5307 = vunpack.c.l.b16 %v3410
    %v5308 = vunpack.c.h.b16 %v3410
    %v5309 = vunpack.c.l.b16 %v3411
    %v5310 = vunpack.c.h.b16 %v3411
    %v5311 = vunpack.c.l.b16 %v3412
    %v5312 = vunpack.c.h.b16 %v3412
    %v5313 = vunpack.c.l.b16 %v3413
    %v5314 = vunpack.c.h.b16 %v3413
    %v5315 = vunpack.c.l.b16 %v3414
    %v5316 = vunpack.c.h.b16 %v3414
    %v5317 = vunpack.c.l.b16 %v3415
    %v5318 = vunpack.c.h.b16 %v3415
    %v5319 = vunpack.c.l.b16 %v3416
    %v5320 = vunpack.c.h.b16 %v3416
    %v5321 = vunpack.c.l.b16 %v3417
    %v5322 = vunpack.c.h.b16 %v3417
    %v5323 = vunpack.c.l.b16 %v3418
    %v5324 = vunpack.c.h.b16 %v3418
    %v5325 = vunpack.c.l.b16 %v3419
    %v5326 = vunpack.c.h.b16 %v3419
    %v5327 = vunpack.c.l.b16 %v3420
    %v5328 = vunpack.c.h.b16 %v3420
    %v5329 = vunpack.c.l.b16 %v3421
    %v5330 = vunpack.c.h.b16 %v3421
    %v5331 = vunpack.c.l.b16 %v3422
    %v5332 = vunpack.c.h.b16 %v3422
    %v5333 = vunpack.c.l.b16 %v3423
    %v5334 = vunpack.c.h.b16 %v3423
    %v5335 = vunpack.c.l.b16 %v3424
    %v5336 = vunpack.c.h.b16 %v3424
    %v5337 = vunpack.c.l.b16 %v3425
    %v5338 = vunpack.c.h.b16 %v3425
    %v5339 = vunpack.c.l.b16 %v3426
    %v5340 = vunpack.c.h.b16 %v3426
    %v5341 = vunpack.c.l.b16 %v3427
    %v5342 = vunpack.c.h.b16 %v3427
    %v5343 = vunpack.c.l.b16 %v3428
    %v5344 = vunpack.c.h.b16 %v3428
    %v5345 = vunpack.c.l.b16 %v3429
    %v5346 = vunpack.c.h.b16 %v3429
    %v5347 = vunpack.c.l.b16 %v3430
    %v5348 = vunpack.c.h.b16 %v3430
    %v5349 = vunpack.c.l.b16 %v3431
    %v5350 = vunpack.c.h.b16 %v3431
    %v5351 = vunpack.c.l.b16 %v3432
    %v5352 = vunpack.c.h.b16 %v3432
    %v5353 = vunpack.c.l.b16 %v3433
    %v5354 = vunpack.c.h.b16 %v3433
    %v5355 = vunpack.c.l.b16 %v3434
    %v5356 = vunpack.c.h.b16 %v3434
    %v5357 = vunpack.c.l.b16 %v3435
    %v5358 = vunpack.c.h.b16 %v3435
    %v5359 = vunpack.c.l.b16 %v3436
    %v5360 = vunpack.c.h.b16 %v3436
    %v5361 = vunpack.c.l.b16 %v3437
    %v5362 = vunpack.c.h.b16 %v3437
    %v5363 = vunpack.c.l.b16 %v3438
    %v5364 = vunpack.c.h.b16 %v3438
    %v5365 = vunpack.c.l.b16 %v3439
    %v5366 = vunpack.c.h.b16 %v3439
    %v5367 = vunpack.c.l.b16 %v3440
    %v5368 = vunpack.c.h.b16 %v3440
    %v5369 = vunpack.c.l.b16 %v3441
    %v5370 = vunpack.c.h.b16 %v3441
    %v5371 = vunpack.c.l.b16 %v3442
    %v5372 = vunpack.c.h.b16 %v3442
    %v5373 = vunpack.c.l.b16 %v3443
    %v5374 = vunpack.c.h.b16 %v3443
    %v5375 = vunpack.c.l.b16 %v3444
    %v5376 = vunpack.c.h.b16 %v3444
    %v5377 = vunpack.c.l.b16 %v3445
    %v5378 = vunpack.c.h.b16 %v3445
    %v5379 = vunpack.c.l.b16 %v3446
    %v5380 = vunpack.c.h.b16 %v3446
    %v5381 = vunpack.c.l.b16 %v3447
    %v5382 = vunpack.c.h.b16 %v3447
    %v5383 = vunpack.c.l.b16 %v3448
    %v5384 = vunpack.c.h.b16 %v3448
    %v5385 = vunpack.c.l.b16 %v3449
    %v5386 = vunpack.c.h.b16 %v3449
    %v5387 = vunpack.c.l.b16 %v3450
    %v5388 = vunpack.c.h.b16 %v3450
    %v5389 = vunpack.c.l.b16 %v3451
    %v5390 = vunpack.c.h.b16 %v3451
    %v5391 = vunpack.c.l.b16 %v3452
    %v5392 = vunpack.c.h.b16 %v3452
    %v5393 = vunpack.c.l.b16 %v3453
    %v5394 = vunpack.c.h.b16 %v3453
    %v5395 = vunpack.c.l.b16 %v3454
    %v5396 = vunpack.c.h.b16 %v3454
    %v5397 = vunpack.c.l.b16 %v3455
    %v5398 = vunpack.c.h.b16 %v3455
    %v5399 = vunpack.c.l.b16 %v3456
    %v5400 = vunpack.c.h.b16 %v3456
    %v5401 = vunpack.c.l.b16 %v3457
    %v5402 = vunpack.c.h.b16 %v3457
    %v5403 = vunpack.c.l.b16 %v3458
    %v5404 = vunpack.c.h.b16 %v3458
    %v5405 = vunpack.c.l.b16 %v3459
    %v5406 = vunpack.c.h.b16 %v3459
    %v5407 = vunpack.c.l.b16 %v3460
    %v5408 = vunpack.c.h.b16 %v3460
    %v5409 = vunpack.c.l.b16 %v3461
    %v5410 = vunpack.c.h.b16 %v3461
    %v5411 = vunpack.c.l.b16 %v3462
    %v5412 = vunpack.c.h.b16 %v3462
    %v5413 = vunpack.c.l.b16 %v3463
    %v5414 = vunpack.c.h.b16 %v3463
    %v5415 = vunpack.c.l.b16 %v3464
    %v5416 = vunpack.c.h.b16 %v3464
    %v5417 = vunpack.c.l.b16 %v3465
    %v5418 = vunpack.c.h.b16 %v3465
    %v5419 = vunpack.c.l.b16 %v3466
    %v5420 = vunpack.c.h.b16 %v3466
    %v5421 = vunpack.c.l.b16 %v3467
    %v5422 = vunpack.c.h.b16 %v3467
    %v5423 = vunpack.c.l.b16 %v3468
    %v5424 = vunpack.c.h.b16 %v3468
    %v5425 = vunpack.c.l.b16 %v3469
    %v5426 = vunpack.c.h.b16 %v3469
    %v5427 = vunpack.c.l.b16 %v3470
    %v5428 = vunpack.c.h.b16 %v3470
    %v5429 = vunpack.c.l.b16 %v3471
    %v5430 = vunpack.c.h.b16 %v3471
    %v5431 = vunpack.c.l.b16 %v3472
    %v5432 = vunpack.c.h.b16 %v3472
    %v5433 = vunpack.c.l.b16 %v3473
    %v5434 = vunpack.c.h.b16 %v3473
    %v5435 = vunpack.c.l.b16 %v3474
    %v5436 = vunpack.c.h.b16 %v3474
    %v5437 = vunpack.c.l.b16 %v3475
    %v5438 = vunpack.c.h.b16 %v3475
    %v5439 = vunpack.c.l.b16 %v3476
    %v5440 = vunpack.c.h.b16 %v3476
    %v5441 = vunpack.c.l.b16 %v3477
    %v5442 = vunpack.c.h.b16 %v3477
    %v5443 = vunpack.c.l.b16 %v3478
    %v5444 = vunpack.c.h.b16 %v3478
    %v5445 = vunpack.c.l.b16 %v3479
    %v5446 = vunpack.c.h.b16 %v3479
    %v5447 = vunpack.c.l.b16 %v3480
    %v5448 = vunpack.c.h.b16 %v3480
    %v5449 = vunpack.c.l.b16 %v3481
    %v5450 = vunpack.c.h.b16 %v3481
    %v5451 = vunpack.c.l.b16 %v3482
    %v5452 = vunpack.c.h.b16 %v3482
    %v5453 = vunpack.c.l.b16 %v3483
    %v5454 = vunpack.c.h.b16 %v3483
    %v5455 = vunpack.c.l.b16 %v3484
    %v5456 = vunpack.c.h.b16 %v3484
    %v5457 = vunpack.c.l.b16 %v3485
    %v5458 = vunpack.c.h.b16 %v3485
    %v5459 = vunpack.c.l.b16 %v3486
    %v5460 = vunpack.c.h.b16 %v3486
    %v5461 = vunpack.c.l.b16 %v3487
    %v5462 = vunpack.c.h.b16 %v3487
    %v5463 = vunpack.c.l.b16 %v3488
    %v5464 = vunpack.c.h.b16 %v3488
    %v5465 = vunpack.c.l.b16 %v3489
    %v5466 = vunpack.c.h.b16 %v3489
    %v5467 = vunpack.c.l.b16 %v3490
    %v5468 = vunpack.c.h.b16 %v3490
    %v5469 = vunpack.c.l.b16 %v3491
    %v5470 = vunpack.c.h.b16 %v3491
    %v5471 = vunpack.c.l.b16 %v3492
    %v5472 = vunpack.c.h.b16 %v3492
    %v5473 = vunpack.c.l.b16 %v3493
    %v5474 = vunpack.c.h.b16 %v3493
    %v5475 = vunpack.c.l.b16 %v3494
    %v5476 = vunpack.c.h.b16 %v3494
    %v5477 = vunpack.c.l.b16 %v3495
    %v5478 = vunpack.c.h.b16 %v3495
    %v5479 = vunpack.c.l.b16 %v3496
    %v5480 = vunpack.c.h.b16 %v3496
    %v5481 = vunpack.c.l.b16 %v3497
    %v5482 = vunpack.c.h.b16 %v3497
    %v5483 = vunpack.c.l.b16 %v3498
    %v5484 = vunpack.c.h.b16 %v3498
    %v5485 = vunpack.c.l.b16 %v3499
    %v5486 = vunpack.c.h.b16 %v3499
    %v5487 = vunpack.c.l.b16 %v3500
    %v5488 = vunpack.c.h.b16 %v3500
    %v5489 = vunpack.c.l.b16 %v3501
    %v5490 = vunpack.c.h.b16 %v3501
    %v5491 = vunpack.c.l.b16 %v3502
    %v5492 = vunpack.c.h.b16 %v3502
    %v5493 = vunpack.c.l.b16 %v3503
    %v5494 = vunpack.c.h.b16 %v3503
    %v5495 = vunpack.c.l.b16 %v3504
    %v5496 = vunpack.c.h.b16 %v3504
    %v5497 = vunpack.c.l.b16 %v3505
    %v5498 = vunpack.c.h.b16 %v3505
    %v5499 = vunpack.c.l.b16 %v3506
    %v5500 = vunpack.c.h.b16 %v3506
    %v5501 = vunpack.c.l.b16 %v3507
    %v5502 = vunpack.c.h.b16 %v3507
    %v5503 = vunpack.c.l.b16 %v3508
    %v5504 = vunpack.c.h.b16 %v3508
    %v5505 = vunpack.c.l.b16 %v3509
    %v5506 = vunpack.c.h.b16 %v3509
    %v5507 = vunpack.c.l.b16 %v3510
    %v5508 = vunpack.c.h.b16 %v3510
    %v5509 = vunpack.c.l.b16 %v3511
    %v5510 = vunpack.c.h.b16 %v3511
    %v5511 = vunpack.c.l.b16 %v3512
    %v5512 = vunpack.c.h.b16 %v3512
    %v5513 = vunpack.c.l.b16 %v3513
    %v5514 = vunpack.c.h.b16 %v3513
    %v5515 = vunpack.c.l.b16 %v3514
    %v5516 = vunpack.c.h.b16 %v3514
    %v5517 = vunpack.c.l.b16 %v3515
    %v5518 = vunpack.c.h.b16 %v3515
    %v5519 = vunpack.c.l.b16 %v3516
    %v5520 = vunpack.c.h.b16 %v3516
    %v5521 = vunpack.c.l.b16 %v3517
    %v5522 = vunpack.c.h.b16 %v3517
    %v5523 = vunpack.c.l.b16 %v3518
    %v5524 = vunpack.c.h.b16 %v3518
    %v5525 = vunpack.c.l.b16 %v3519
    %v5526 = vunpack.c.h.b16 %v3519
    %v5527 = vunpack.c.l.b16 %v3520
    %v5528 = vunpack.c.h.b16 %v3520
    %v5529 = vunpack.c.l.b16 %v3521
    %v5530 = vunpack.c.h.b16 %v3521
    %v5531 = vunpack.c.l.b16 %v3522
    %v5532 = vunpack.c.h.b16 %v3522
    %v5533 = vunpack.c.l.b16 %v3523
    %v5534 = vunpack.c.h.b16 %v3523
    %v5535 = vunpack.c.l.b16 %v3524
    %v5536 = vunpack.c.h.b16 %v3524
    %v5537 = vunpack.c.l.b16 %v3525
    %v5538 = vunpack.c.h.b16 %v3525
    %v5539 = vunpack.c.l.b16 %v3526
    %v5540 = vunpack.c.h.b16 %v3526
    %v5541 = vunpack.c.l.b16 %v3527
    %v5542 = vunpack.c.h.b16 %v3527
    %v5543 = vunpack.c.l.b16 %v3528
    %v5544 = vunpack.c.h.b16 %v3528
    %v5545 = vunpack.c.l.b16 %v3529
    %v5546 = vunpack.c.h.b16 %v3529
    %v5547 = vunpack.c.l.b16 %v3530
    %v5548 = vunpack.c.h.b16 %v3530
    %v5549 = vunpack.c.l.b16 %v3531
    %v5550 = vunpack.c.h.b16 %v3531
    %v5551 = vunpack.c.l.b16 %v3532
    %v5552 = vunpack.c.h.b16 %v3532
    %v5553 = vunpack.c.l.b16 %v3533
    %v5554 = vunpack.c.h.b16 %v3533
    %v5555 = vunpack.c.l.b16 %v3534
    %v5556 = vunpack.c.h.b16 %v3534
    %v5557 = vunpack.c.l.b16 %v3535
    %v5558 = vunpack.c.h.b16 %v3535
    %v5559 = vunpack.c.l.b16 %v3536
    %v5560 = vunpack.c.h.b16 %v3536
    %v5561 = vunpack.c.l.b16 %v3537
    %v5562 = vunpack.c.h.b16 %v3537
    %v5563 = vunpack.c.l.b16 %v3538
    %v5564 = vunpack.c.h.b16 %v3538
    %v5565 = vunpack.c.l.b16 %v3539
    %v5566 = vunpack.c.h.b16 %v3539
    %v5567 = vunpack.c.l.b16 %v3540
    %v5568 = vunpack.c.h.b16 %v3540
    %v5569 = vunpack.c.l.b16 %v3541
    %v5570 = vunpack.c.h.b16 %v3541
    %v5571 = vunpack.c.l.b16 %v3542
    %v5572 = vunpack.c.h.b16 %v3542
    %v5573 = vunpack.c.l.b16 %v3543
    %v5574 = vunpack.c.h.b16 %v3543
    %v5575 = vunpack.c.l.b16 %v3544
    %v5576 = vunpack.c.h.b16 %v3544
    %v5577 = vunpack.c.l.b16 %v3545
    %v5578 = vunpack.c.h.b16 %v3545
    %v5579 = vunpack.c.l.b16 %v3546
    %v5580 = vunpack.c.h.b16 %v3546
    %v5581 = vunpack.c.l.b16 %v3547
    %v5582 = vunpack.c.h.b16 %v3547
    %v5583 = vunpack.c.l.b16 %v3548
    %v5584 = vunpack.c.h.b16 %v3548
    %v5585 = vunpack.c.l.b16 %v3549
    %v5586 = vunpack.c.h.b16 %v3549
    %v5587 = vunpack.c.l.b16 %v3550
    %v5588 = vunpack.c.h.b16 %v3550
    %v5589 = vunpack.c.l.b16 %v3551
    %v5590 = vunpack.c.h.b16 %v3551
    %v5591 = vunpack.c.l.b16 %v3552
    %v5592 = vunpack.c.h.b16 %v3552
    %v5593 = vunpack.c.l.b16 %v3553
    %v5594 = vunpack.c.h.b16 %v3553
    %v5595 = vunpack.c.l.b16 %v3554
    %v5596 = vunpack.c.h.b16 %v3554
    %v5597 = vunpack.c.l.b16 %v3555
    %v5598 = vunpack.c.h.b16 %v3555
    %v5599 = vunpack.c.l.b16 %v3556
    %v5600 = vunpack.c.h.b16 %v3556
    %v5601 = vunpack.c.l.b16 %v3557
    %v5602 = vunpack.c.h.b16 %v3557
    %v5603 = vunpack.c.l.b16 %v3558
    %v5604 = vunpack.c.h.b16 %v3558
    %v5605 = vunpack.c.l.b16 %v3559
    %v5606 = vunpack.c.h.b16 %v3559
    %v5607 = vunpack.c.l.b16 %v3560
    %v5608 = vunpack.c.h.b16 %v3560
    %v5609 = vunpack.c.l.b16 %v3561
    %v5610 = vunpack.c.h.b16 %v3561
    %v5611 = vunpack.c.l.b16 %v3562
    %v5612 = vunpack.c.h.b16 %v3562
    %v5613 = vunpack.c.l.b16 %v3563
    %v5614 = vunpack.c.h.b16 %v3563
    %v5615 = vunpack.c.l.b16 %v3564
    %v5616 = vunpack.c.h.b16 %v3564
    %v5617 = vunpack.c.l.b16 %v3565
    %v5618 = vunpack.c.h.b16 %v3565
    %v5619 = vunpack.c.l.b16 %v3566
    %v5620 = vunpack.c.h.b16 %v3566
    %v5621 = vunpack.c.l.b16 %v3567
    %v5622 = vunpack.c.h.b16 %v3567
    %v5623 = vunpack.c.l.b16 %v3568
    %v5624 = vunpack.c.h.b16 %v3568
    %v5625 = vunpack.c.l.b16 %v3569
    %v5626 = vunpack.c.h.b16 %v3569
    %v5627 = vunpack.c.l.b16 %v3570
    %v5628 = vunpack.c.h.b16 %v3570
    %v5629 = vunpack.c.l.b16 %v3571
    %v5630 = vunpack.c.h.b16 %v3571
    %v5631 = vunpack.c.l.b16 %v3572
    %v5632 = vunpack.c.h.b16 %v3572
    %v5633 = vunpack.c.l.b16 %v3573
    %v5634 = vunpack.c.h.b16 %v3573
    %v5635 = vunpack.c.l.b16 %v3574
    %v5636 = vunpack.c.h.b16 %v3574
    %v5637 = vunpack.c.l.b16 %v3575
    %v5638 = vunpack.c.h.b16 %v3575
    %v5639 = vunpack.c.l.b16 %v3576
    %v5640 = vunpack.c.h.b16 %v3576
    %v5641 = vunpack.c.l.b16 %v3577
    %v5642 = vunpack.c.h.b16 %v3577
    %v5643 = vunpack.c.l.b16 %v3578
    %v5644 = vunpack.c.h.b16 %v3578
    %v5645 = vunpack.c.l.b16 %v3579
    %v5646 = vunpack.c.h.b16 %v3579
    %v5647 = vunpack.c.l.b16 %v3580
    %v5648 = vunpack.c.h.b16 %v3580
    %v5649 = vunpack.c.l.b16 %v3581
    %v5650 = vunpack.c.h.b16 %v3581
    %v5651 = vunpack.c.l.b16 %v3582
    %v5652 = vunpack.c.h.b16 %v3582
    %v5653 = vunpack.c.l.b16 %v3583
    %v5654 = vunpack.c.h.b16 %v3583
    %v5655 = vunpack.c.l.b16 %v3584
    %v5656 = vunpack.c.h.b16 %v3584
    %v5657 = vunpack.c.l.b16 %v3585
    %v5658 = vunpack.c.h.b16 %v3585
    %v5659 = vunpack.c.l.b16 %v3586
    %v5660 = vunpack.c.h.b16 %v3586
    %v5661 = vunpack.c.l.b16 %v3587
    %v5662 = vunpack.c.h.b16 %v3587
    %v5663 = vunpack.c.l.b16 %v3588
    %v5664 = vunpack.c.h.b16 %v3588
    %v5665 = vunpack.c.l.b16 %v3589
    %v5666 = vunpack.c.h.b16 %v3589
    %v5667 = vunpack.c.l.b16 %v3590
    %v5668 = vunpack.c.h.b16 %v3590
    %v5669 = vunpack.c.l.b16 %v3591
    %v5670 = vunpack.c.h.b16 %v3591
    %v5671 = vunpack.c.l.b16 %v3592
    %v5672 = vunpack.c.h.b16 %v3592
    %v5673 = vunpack.c.l.b16 %v3593
    %v5674 = vunpack.c.h.b16 %v3593
    %v5675 = vunpack.c.l.b16 %v3594
    %v5676 = vunpack.c.h.b16 %v3594
    %v5677 = vunpack.c.l.b16 %v3595
    %v5678 = vunpack.c.h.b16 %v3595
    %v5679 = vunpack.c.l.b16 %v3596
    %v5680 = vunpack.c.h.b16 %v3596
    %v5681 = vunpack.c.l.b16 %v3597
    %v5682 = vunpack.c.h.b16 %v3597
    %v5683 = vunpack.c.l.b16 %v3598
    %v5684 = vunpack.c.h.b16 %v3598
    %v5685 = vunpack.c.l.b16 %v3599
    %v5686 = vunpack.c.h.b16 %v3599
    %v5687 = vunpack.c.l.b16 %v3600
    %v5688 = vunpack.c.h.b16 %v3600
    %v5689 = vunpack.c.l.b16 %v3601
    %v5690 = vunpack.c.h.b16 %v3601
    %v5691 = vunpack.c.l.b16 %v3602
    %v5692 = vunpack.c.h.b16 %v3602
    %v5693 = vunpack.c.l.b16 %v3603
    %v5694 = vunpack.c.h.b16 %v3603
    %v5695 = vunpack.c.l.b16 %v3604
    %v5696 = vunpack.c.h.b16 %v3604
    %v5697 = vunpack.c.l.b16 %v3605
    %v5698 = vunpack.c.h.b16 %v3605
    %v5699 = vunpack.c.l.b16 %v3606
    %v5700 = vunpack.c.h.b16 %v3606
    %v5701 = vunpack.c.l.b16 %v3607
    %v5702 = vunpack.c.h.b16 %v3607
    %v5703 = vunpack.c.l.b16 %v3608
    %v5704 = vunpack.c.h.b16 %v3608
    %v5705 = vunpack.c.l.b16 %v3609
    %v5706 = vunpack.c.h.b16 %v3609
    %v5707 = vunpack.c.l.b16 %v3610
    %v5708 = vunpack.c.h.b16 %v3610
    %v5709 = vunpack.c.l.b16 %v3611
    %v5710 = vunpack.c.h.b16 %v3611
    %v5711 = vunpack.c.l.b16 %v3612
    %v5712 = vunpack.c.h.b16 %v3612
    %v5713 = vunpack.c.l.b16 %v3613
    %v5714 = vunpack.c.h.b16 %v3613
    %v5715 = vunpack.c.l.b16 %v3614
    %v5716 = vunpack.c.h.b16 %v3614
    %v5717 = vunpack.c.l.b16 %v3615
    %v5718 = vunpack.c.h.b16 %v3615
    %v5719 = vunpack.c.l.b16 %v3616
    %v5720 = vunpack.c.h.b16 %v3616
    %v5721 = vunpack.c.l.b16 %v3617
    %v5722 = vunpack.c.h.b16 %v3617
    %v5723 = vunpack.c.l.b16 %v3618
    %v5724 = vunpack.c.h.b16 %v3618
    %v5725 = vunpack.c.l.b16 %v3619
    %v5726 = vunpack.c.h.b16 %v3619
    %v5727 = vunpack.c.l.b16 %v3620
    %v5728 = vunpack.c.h.b16 %v3620
    %v5729 = vunpack.c.l.b16 %v3621
    %v5730 = vunpack.c.h.b16 %v3621
    %v5731 = vunpack.c.l.b16 %v3622
    %v5732 = vunpack.c.h.b16 %v3622
    %v5733 = vunpack.c.l.b16 %v3623
    %v5734 = vunpack.c.h.b16 %v3623
    %v5735 = vunpack.c.l.b16 %v3624
    %v5736 = vunpack.c.h.b16 %v3624
    %v5737 = vunpack.c.l.b16 %v3625
    %v5738 = vunpack.c.h.b16 %v3625
    %v5739 = vunpack.c.l.b16 %v3626
    %v5740 = vunpack.c.h.b16 %v3626
    %v5741 = vunpack.c.l.b16 %v3627
    %v5742 = vunpack.c.h.b16 %v3627
    %v5743 = vunpack.c.l.b16 %v3628
    %v5744 = vunpack.c.h.b16 %v3628
    %v5745 = vunpack.c.l.b16 %v3629
    %v5746 = vunpack.c.h.b16 %v3629
    %v5747 = vunpack.c.l.b16 %v3630
    %v5748 = vunpack.c.h.b16 %v3630
    %v5749 = vunpack.c.l.b16 %v3631
    %v5750 = vunpack.c.h.b16 %v3631
    %v5751 = vunpack.c.l.b16 %v3632
    %v5752 = vunpack.c.h.b16 %v3632
    %v5753 = vunpack.c.l.b16 %v3633
    %v5754 = vunpack.c.h.b16 %v3633
    %v5755 = vunpack.c.l.b16 %v3634
    %v5756 = vunpack.c.h.b16 %v3634
    %v5757 = vpack.c.b16 %v4353, %v4349
    %v5758 = vpack.c.b16 %v4354, %v4350
    %v5759 = vpack.c.b16 %v4355, %v4351
    %v5760 = vpack.c.b16 %v4356, %v4352
    %v5761 = vpack.c.b16 %v4361, %v4357
    %v5762 = vpack.c.b16 %v4362, %v4358
    %v5763 = vpack.c.b16 %v4363, %v4359
    %v5764 = vpack.c.b16 %v4364, %v4360
    %v5765 = vpack.c.b16 %v4369, %v4365
    %v5766 = vpack.c.b16 %v4370, %v4366
    %v5767 = vpack.c.b16 %v4371, %v4367
    %v5768 = vpack.c.b16 %v4372, %v4368
    %v5769 = vpack.c.b16 %v4377, %v4373
    %v5770 = vpack.c.b16 %v4378, %v4374
    %v5771 = vpack.c.b16 %v4379, %v4375
    %v5772 = vpack.c.b16 %v4380, %v4376
    %v5773 = vpack.c.b16 %v4385, %v4381
    %v5774 = vpack.c.b16 %v4386, %v4382
    %v5775 = vpack.c.b16 %v4387, %v4383
    %v5776 = vpack.c.b16 %v4388, %v4384
    %v5777 = vpack.c.b16 %v4393, %v4389
    %v5778 = vpack.c.b16 %v4394, %v4390
    %v5779 = vpack.c.b16 %v4395, %v4391
    %v5780 = vpack.c.b16 %v4396, %v4392
    %v5781 = vpack.c.b16 %v4401, %v4397
    %v5782 = vpack.c.b16 %v4402, %v4398
    %v5783 = vpack.c.b16 %v4403, %v4399
    %v5784 = vpack.c.b16 %v4404, %v4400
    %v5785 = vpack.c.b16 %v4409, %v4405
    %v5786 = vpack.c.b16 %v4410, %v4406
    %v5787 = vpack.c.b16 %v4411, %v4407
    %v5788 = vpack.c.b16 %v4412, %v4408
    %v5789 = vpack.c.b16 %v4417, %v4413
    %v5790 = vpack.c.b16 %v4418, %v4414
    %v5791 = vpack.c.b16 %v4419, %v4415
    %v5792 = vpack.c.b16 %v4420, %v4416
    %v5793 = vpack.c.b16 %v4425, %v4421
    %v5794 = vpack.c.b16 %v4426, %v4422
    %v5795 = vpack.c.b16 %v4427, %v4423
    %v5796 = vpack.c.b16 %v4428, %v4424
    %v5797 = vpack.c.b16 %v4433, %v4429
    %v5798 = vpack.c.b16 %v4434, %v4430
    %v5799 = vpack.c.b16 %v4435, %v4431
    %v5800 = vpack.c.b16 %v4436, %v4432
    %v5801 = vpack.c.b16 %v4441, %v4437
    %v5802 = vpack.c.b16 %v4442, %v4438
    %v5803 = vpack.c.b16 %v4443, %v4439
    %v5804 = vpack.c.b16 %v4444, %v4440
    %v5805 = vpack.c.b16 %v4449, %v4445
    %v5806 = vpack.c.b16 %v4450, %v4446
    %v5807 = vpack.c.b16 %v4451, %v4447
    %v5808 = vpack.c.b16 %v4452, %v4448
    %v5809 = vpack.c.b16 %v4457, %v4453
    %v5810 = vpack.c.b16 %v4458, %v4454
    %v5811 = vpack.c.b16 %v4459, %v4455
    %v5812 = vpack.c.b16 %v4460, %v4456
    %v5813 = vpack.c.b16 %v4465, %v4461
    %v5814 = vpack.c.b16 %v4466, %v4462
    %v5815 = vpack.c.b16 %v4467, %v4463
    %v5816 = vpack.c.b16 %v4468, %v4464
    %v5817 = vpack.c.b16 %v4473, %v4469
    %v5818 = vpack.c.b16 %v4474, %v4470
    %v5819 = vpack.c.b16 %v4475, %v4471
    %v5820 = vpack.c.b16 %v4476, %v4472
    %v5821 = vpack.c.b16 %v4481, %v4477
    %v5822 = vpack.c.b16 %v4482, %v4478
    %v5823 = vpack.c.b16 %v4483, %v4479
    %v5824 = vpack.c.b16 %v4484, %v4480
    %v5825 = vpack.c.b16 %v4489, %v4485
    %v5826 = vpack.c.b16 %v4490, %v4486
    %v5827 = vpack.c.b16 %v4491, %v4487
    %v5828 = vpack.c.b16 %v4492, %v4488
    %v5829 = vpack.c.b16 %v4497, %v4493
    %v5830 = vpack.c.b16 %v4498, %v4494
    %v5831 = vpack.c.b16 %v4499, %v4495
    %v5832 = vpack.c.b16 %v4500, %v4496
    %v5833 = vpack.c.b16 %v4505, %v4501
    %v5834 = vpack.c.b16 %v4506, %v4502
    %v5835 = vpack.c.b16 %v4507, %v4503
    %v5836 = vpack.c.b16 %v4508, %v4504
    %v5837 = vpack.c.b16 %v4513, %v4509
    %v5838 = vpack.c.b16 %v4514, %v4510
    %v5839 = vpack.c.b16 %v4515, %v4511
    %v5840 = vpack.c.b16 %v4516, %v4512
    %v5841 = vpack.c.b16 %v4521, %v4517
    %v5842 = vpack.c.b16 %v4522, %v4518
    %v5843 = vpack.c.b16 %v4523, %v4519
    %v5844 = vpack.c.b16 %v4524, %v4520
    %v5845 = vpack.c.b16 %v4529, %v4525
    %v5846 = vpack.c.b16 %v4530, %v4526
    %v5847 = vpack.c.b16 %v4531, %v4527
    %v5848 = vpack.c.b16 %v4532, %v4528
    %v5849 = vpack.c.b16 %v4537, %v4533
    %v5850 = vpack.c.b16 %v4538, %v4534
    %v5851 = vpack.c.b16 %v4539, %v4535
    %v5852 = vpack.c.b16 %v4540, %v4536
    %v5853 = vpack.c.b16 %v4545, %v4541
    %v5854 = vpack.c.b16 %v4546, %v4542
    %v5855 = vpack.c.b16 %v4547, %v4543
    %v5856 = vpack.c.b16 %v4548, %v4544
    %v5857 = vpack.c.b16 %v4553, %v4549
    %v5858 = vpack.c.b16 %v4554, %v4550
    %v5859 = vpack.c.b16 %v4555, %v4551
    %v5860 = vpack.c.b16 %v4556, %v4552
    %v5861 = vpack.c.b16 %v4561, %v4557
    %v5862 = vpack.c.b16 %v4562, %v4558
    %v5863 = vpack.c.b16 %v4563, %v4559
    %v5864 = vpack.c.b16 %v4564, %v4560
    %v5865 = vpack.c.b16 %v4569, %v4565
    %v5866 = vpack.c.b16 %v4570, %v4566
    %v5867 = vpack.c.b16 %v4571, %v4567
    %v5868 = vpack.c.b16 %v4572, %v4568
    %v5869 = vpack.c.b16 %v4577, %v4573
    %v5870 = vpack.c.b16 %v4578, %v4574
    %v5871 = vpack.c.b16 %v4579, %v4575
    %v5872 = vpack.c.b16 %v4580, %v4576
    %v5873 = vpack.c.b16 %v4585, %v4581
    %v5874 = vpack.c.b16 %v4586, %v4582
    %v5875 = vpack.c.b16 %v4587, %v4583
    %v5876 = vpack.c.b16 %v4588, %v4584
    %v5877 = vpack.c.b16 %v4593, %v4589
    %v5878 = vpack.c.b16 %v4594, %v4590
    %v5879 = vpack.c.b16 %v4595, %v4591
    %v5880 = vpack.c.b16 %v4596, %v4592
    %v5881 = vpack.c.b16 %v4601, %v4597
    %v5882 = vpack.c.b16 %v4602, %v4598
    %v5883 = vpack.c.b16 %v4603, %v4599
    %v5884 = vpack.c.b16 %v4604, %v4600
    %v5885 = vpack.c.b16 %v4609, %v4605
    %v5886 = vpack.c.b16 %v4610, %v4606
    %v5887 = vpack.c.b16 %v4611, %v4607
    %v5888 = vpack.c.b16 %v4612, %v4608
    %v5889 = vpack.c.b16 %v4617, %v4613
    %v5890 = vpack.c.b16 %v4618, %v4614
    %v5891 = vpack.c.b16 %v4619, %v4615
    %v5892 = vpack.c.b16 %v4620, %v4616
    %v5893 = vpack.c.b16 %v4625, %v4621
    %v5894 = vpack.c.b16 %v4626, %v4622
    %v5895 = vpack.c.b16 %v4627, %v4623
    %v5896 = vpack.c.b16 %v4628, %v4624
    %v5897 = vpack.c.b16 %v4633, %v4629
    %v5898 = vpack.c.b16 %v4634, %v4630
    %v5899 = vpack.c.b16 %v4635, %v4631
    %v5900 = vpack.c.b16 %v4636, %v4632
    %v5901 = vpack.c.b16 %v4641, %v4637
    %v5902 = vpack.c.b16 %v4642, %v4638
    %v5903 = vpack.c.b16 %v4643, %v4639
    %v5904 = vpack.c.b16 %v4644, %v4640
    %v5905 = vpack.c.b16 %v4649, %v4645
    %v5906 = vpack.c.b16 %v4650, %v4646
    %v5907 = vpack.c.b16 %v4651, %v4647
    %v5908 = vpack.c.b16 %v4652, %v4648
    %v5909 = vpack.c.b16 %v4657, %v4653
    %v5910 = vpack.c.b16 %v4658, %v4654
    %v5911 = vpack.c.b16 %v4659, %v4655
    %v5912 = vpack.c.b16 %v4660, %v4656
    %v5913 = vpack.c.b16 %v4665, %v4661
    %v5914 = vpack.c.b16 %v4666, %v4662
    %v5915 = vpack.c.b16 %v4667, %v4663
    %v5916 = vpack.c.b16 %v4668, %v4664
    %v5917 = vpack.c.b16 %v4673, %v4669
    %v5918 = vpack.c.b16 %v4674, %v4670
    %v5919 = vpack.c.b16 %v4675, %v4671
    %v5920 = vpack.c.b16 %v4676, %v4672
    %v5921 = vpack.c.b16 %v4681, %v4677
    %v5922 = vpack.c.b16 %v4682, %v4678
    %v5923 = vpack.c.b16 %v4683, %v4679
    %v5924 = vpack.c.b16 %v4684, %v4680
    %v5925 = vpack.c.b16 %v4689, %v4685
    %v5926 = vpack.c.b16 %v4690, %v4686
    %v5927 = vpack.c.b16 %v4691, %v4687
    %v5928 = vpack.c.b16 %v4692, %v4688
    %v5929 = vpack.c.b16 %v4697, %v4693
    %v5930 = vpack.c.b16 %v4698, %v4694
    %v5931 = vpack.c.b16 %v4699, %v4695
    %v5932 = vpack.c.b16 %v4700, %v4696
    %v5933 = vpack.c.b16 %v4705, %v4701
    %v5934 = vpack.c.b16 %v4706, %v4702
    %v5935 = vpack.c.b16 %v4707, %v4703
    %v5936 = vpack.c.b16 %v4708, %v4704
    %v5937 = vpack.c.b16 %v4713, %v4709
    %v5938 = vpack.c.b16 %v4714, %v4710
    %v5939 = vpack.c.b16 %v4715, %v4711
    %v5940 = vpack.c.b16 %v4716, %v4712
    %v5941 = vpack.c.b16 %v4721, %v4717
    %v5942 = vpack.c.b16 %v4722, %v4718
    %v5943 = vpack.c.b16 %v4723, %v4719
    %v5944 = vpack.c.b16 %v4724, %v4720
    %v5945 = vpack.c.b16 %v4729, %v4725
    %v5946 = vpack.c.b16 %v4730, %v4726
    %v5947 = vpack.c.b16 %v4731, %v4727
    %v5948 = vpack.c.b16 %v4732, %v4728
    %v5949 = vpack.c.b16 %v4737, %v4733
    %v5950 = vpack.c.b16 %v4738, %v4734
    %v5951 = vpack.c.b16 %v4739, %v4735
    %v5952 = vpack.c.b16 %v4740, %v4736
    %v5953 = vpack.c.b16 %v4745, %v4741
    %v5954 = vpack.c.b16 %v4746, %v4742
    %v5955 = vpack.c.b16 %v4747, %v4743
    %v5956 = vpack.c.b16 %v4748, %v4744
    %v5957 = vpack.c.b16 %v4753, %v4749
    %v5958 = vpack.c.b16 %v4754, %v4750
    %v5959 = vpack.c.b16 %v4755, %v4751
    %v5960 = vpack.c.b16 %v4756, %v4752
    %v5961 = vpack.c.b16 %v4761, %v4757
    %v5962 = vpack.c.b16 %v4762, %v4758
    %v5963 = vpack.c.b16 %v4763, %v4759
    %v5964 = vpack.c.b16 %v4764, %v4760
    %v5965 = vpack.c.b16 %v4769, %v4765
    %v5966 = vpack.c.b16 %v4770, %v4766
    %v5967 = vpack.c.b16 %v4771, %v4767
    %v5968 = vpack.c.b16 %v4772, %v4768
    %v5969 = vpack.c.b16 %v4777, %v4773
    %v5970 = vpack.c.b16 %v4778, %v4774
    %v5971 = vpack.c.b16 %v4779, %v4775
    %v5972 = vpack.c.b16 %v4780, %v4776
    %v5973 = vpack.c.b16 %v4785, %v4781
    %v5974 = vpack.c.b16 %v4786, %v4782
    %v5975 = vpack.c.b16 %v4787, %v4783
    %v5976 = vpack.c.b16 %v4788, %v4784
    %v5977 = vpack.c.b16 %v4793, %v4789
    %v5978 = vpack.c.b16 %v4794, %v4790
    %v5979 = vpack.c.b16 %v4795, %v4791
    %v5980 = vpack.c.b16 %v4796, %v4792
    %v5981 = vpack.c.b16 %v4801, %v4797
    %v5982 = vpack.c.b16 %v4802, %v4798
    %v5983 = vpack.c.b16 %v4803, %v4799
    %v5984 = vpack.c.b16 %v4804, %v4800
    %v5985 = vpack.c.b16 %v4809, %v4805
    %v5986 = vpack.c.b16 %v4810, %v4806
    %v5987 = vpack.c.b16 %v4811, %v4807
    %v5988 = vpack.c.b16 %v4812, %v4808
    %v5989 = vpack.c.b16 %v4817, %v4813
    %v5990 = vpack.c.b16 %v4818, %v4814
    %v5991 = vpack.c.b16 %v4819, %v4815
    %v5992 = vpack.c.b16 %v4820, %v4816
    %v5993 = vpack.c.b16 %v4825, %v4821
    %v5994 = vpack.c.b16 %v4826, %v4822
    %v5995 = vpack.c.b16 %v4827, %v4823
    %v5996 = vpack.c.b16 %v4828, %v4824
    %v5997 = vpack.c.b16 %v4833, %v4829
    %v5998 = vpack.c.b16 %v4834, %v4830
    %v5999 = vpack.c.b16 %v4835, %v4831
    %v6000 = vpack.c.b16 %v4836, %v4832
    %v6001 = vpack.c.b16 %v4841, %v4837
    %v6002 = vpack.c.b16 %v4842, %v4838
    %v6003 = vpack.c.b16 %v4843, %v4839
    %v6004 = vpack.c.b16 %v4844, %v4840
    %v6005 = vpack.c.b16 %v4849, %v4845
    %v6006 = vpack.c.b16 %v4850, %v4846
    %v6007 = vpack.c.b16 %v4851, %v4847
    %v6008 = vpack.c.b16 %v4852, %v4848
    %v6009 = vpack.c.b16 %v4857, %v4853
    %v6010 = vpack.c.b16 %v4858, %v4854
    %v6011 = vpack.c.b16 %v4859, %v4855
    %v6012 = vpack.c.b16 %v4860, %v4856
    %v6013 = vpack.c.b16 %v4865, %v4861
    %v6014 = vpack.c.b16 %v4866, %v4862
    %v6015 = vpack.c.b16 %v4867, %v4863
    %v6016 = vpack.c.b16 %v4868, %v4864
    %v6017 = vpack.c.b16 %v4873, %v4869
    %v6018 = vpack.c.b16 %v4874, %v4870
    %v6019 = vpack.c.b16 %v4875, %v4871
    %v6020 = vpack.c.b16 %v4876, %v4872
    %v6021 = vpack.c.b16 %v4881, %v4877
    %v6022 = vpack.c.b16 %v4882, %v4878
    %v6023 = vpack.c.b16 %v4883, %v4879
    %v6024 = vpack.c.b16 %v4884, %v4880
    %v6025 = vpack.c.b16 %v4889, %v4885
    %v6026 = vpack.c.b16 %v4890, %v4886
    %v6027 = vpack.c.b16 %v4891, %v4887
    %v6028 = vpack.c.b16 %v4892, %v4888
    %v6029 = vpack.c.b16 %v4897, %v4893
    %v6030 = vpack.c.b16 %v4898, %v4894
    %v6031 = vpack.c.b16 %v4899, %v4895
    %v6032 = vpack.c.b16 %v4900, %v4896
    %v6033 = vpack.c.b16 %v4905, %v4901
    %v6034 = vpack.c.b16 %v4906, %v4902
    %v6035 = vpack.c.b16 %v4907, %v4903
    %v6036 = vpack.c.b16 %v4908, %v4904
    %v6037 = vpack.c.b16 %v4913, %v4909
    %v6038 = vpack.c.b16 %v4914, %v4910
    %v6039 = vpack.c.b16 %v4915, %v4911
    %v6040 = vpack.c.b16 %v4916, %v4912
    %v6041 = vpack.c.b16 %v4921, %v4917
    %v6042 = vpack.c.b16 %v4922, %v4918
    %v6043 = vpack.c.b16 %v4923, %v4919
    %v6044 = vpack.c.b16 %v4924, %v4920
    %v6045 = vpack.c.b16 %v4929, %v4925
    %v6046 = vpack.c.b16 %v4930, %v4926
    %v6047 = vpack.c.b16 %v4931, %v4927
    %v6048 = vpack.c.b16 %v4932, %v4928
    %v6049 = vpack.c.b16 %v4937, %v4933
    %v6050 = vpack.c.b16 %v4938, %v4934
    %v6051 = vpack.c.b16 %v4939, %v4935
    %v6052 = vpack.c.b16 %v4940, %v4936
    %v6053 = vpack.c.b16 %v4945, %v4941
    %v6054 = vpack.c.b16 %v4946, %v4942
    %v6055 = vpack.c.b16 %v4947, %v4943
    %v6056 = vpack.c.b16 %v4948, %v4944
    %v6057 = vpack.c.b16 %v4953, %v4949
    %v6058 = vpack.c.b16 %v4954, %v4950
    %v6059 = vpack.c.b16 %v4955, %v4951
    %v6060 = vpack.c.b16 %v4956, %v4952
    %v6061 = vpack.c.b16 %v4961, %v4957
    %v6062 = vpack.c.b16 %v4962, %v4958
    %v6063 = vpack.c.b16 %v4963, %v4959
    %v6064 = vpack.c.b16 %v4964, %v4960
    %v6065 = vpack.c.b16 %v4969, %v4965
    %v6066 = vpack.c.b16 %v4970, %v4966
    %v6067 = vpack.c.b16 %v4971, %v4967
    %v6068 = vpack.c.b16 %v4972, %v4968
    %v6069 = vpack.c.b16 %v4977, %v4973
    %v6070 = vpack.c.b16 %v4978, %v4974
    %v6071 = vpack.c.b16 %v4979, %v4975
    %v6072 = vpack.c.b16 %v4980, %v4976
    %v6073 = vpack.c.b16 %v4985, %v4981
    %v6074 = vpack.c.b16 %v4986, %v4982
    %v6075 = vpack.c.b16 %v4987, %v4983
    %v6076 = vpack.c.b16 %v4988, %v4984
    %v6077 = vpack.c.b16 %v4993, %v4989
    %v6078 = vpack.c.b16 %v4994, %v4990
    %v6079 = vpack.c.b16 %v4995, %v4991
    %v6080 = vpack.c.b16 %v4996, %v4992
    %v6081 = vpack.c.b16 %v5001, %v4997
    %v6082 = vpack.c.b16 %v5002, %v4998
    %v6083 = vpack.c.b16 %v5003, %v4999
    %v6084 = vpack.c.b16 %v5004, %v5000
    %v6085 = vpack.c.b16 %v5009, %v5005
    %v6086 = vpack.c.b16 %v5010, %v5006
    %v6087 = vpack.c.b16 %v5011, %v5007
    %v6088 = vpack.c.b16 %v5012, %v5008
    %v6089 = vpack.c.b16 %v5017, %v5013
    %v6090 = vpack.c.b16 %v5018, %v5014
    %v6091 = vpack.c.b16 %v5019, %v5015
    %v6092 = vpack.c.b16 %v5020, %v5016
    %v6093 = vpack.c.b16 %v5025, %v5021
    %v6094 = vpack.c.b16 %v5026, %v5022
    %v6095 = vpack.c.b16 %v5027, %v5023
    %v6096 = vpack.c.b16 %v5028, %v5024
    %v6097 = vpack.c.b16 %v5033, %v5029
    %v6098 = vpack.c.b16 %v5034, %v5030
    %v6099 = vpack.c.b16 %v5035, %v5031
    %v6100 = vpack.c.b16 %v5036, %v5032
    %v6101 = vpack.c.b16 %v5041, %v5037
    %v6102 = vpack.c.b16 %v5042, %v5038
    %v6103 = vpack.c.b16 %v5043, %v5039
    %v6104 = vpack.c.b16 %v5044, %v5040
    %v6105 = vpack.c.b16 %v5049, %v5045
    %v6106 = vpack.c.b16 %v5050, %v5046
    %v6107 = vpack.c.b16 %v5051, %v5047
    %v6108 = vpack.c.b16 %v5052, %v5048
    %v6109 = vpack.c.b16 %v5057, %v5053
    %v6110 = vpack.c.b16 %v5058, %v5054
    %v6111 = vpack.c.b16 %v5059, %v5055
    %v6112 = vpack.c.b16 %v5060, %v5056
    %v6113 = vpack.c.b16 %v5065, %v5061
    %v6114 = vpack.c.b16 %v5066, %v5062
    %v6115 = vpack.c.b16 %v5067, %v5063
    %v6116 = vpack.c.b16 %v5068, %v5064
    %v6117 = vpack.c.b16 %v5073, %v5069
    %v6118 = vpack.c.b16 %v5074, %v5070
    %v6119 = vpack.c.b16 %v5075, %v5071
    %v6120 = vpack.c.b16 %v5076, %v5072
    %v6121 = vpack.c.b16 %v5081, %v5077
    %v6122 = vpack.c.b16 %v5082, %v5078
    %v6123 = vpack.c.b16 %v5083, %v5079
    %v6124 = vpack.c.b16 %v5084, %v5080
    %v6125 = vpack.c.b16 %v5089, %v5085
    %v6126 = vpack.c.b16 %v5090, %v5086
    %v6127 = vpack.c.b16 %v5091, %v5087
    %v6128 = vpack.c.b16 %v5092, %v5088
    %v6129 = vpack.c.b16 %v5097, %v5093
    %v6130 = vpack.c.b16 %v5098, %v5094
    %v6131 = vpack.c.b16 %v5099, %v5095
    %v6132 = vpack.c.b16 %v5100, %v5096
    %v6133 = vpack.c.b16 %v5105, %v5101
    %v6134 = vpack.c.b16 %v5106, %v5102
    %v6135 = vpack.c.b16 %v5107, %v5103
    %v6136 = vpack.c.b16 %v5108, %v5104
    %v6137 = vpack.c.b16 %v5113, %v5109
    %v6138 = vpack.c.b16 %v5114, %v5110
    %v6139 = vpack.c.b16 %v5115, %v5111
    %v6140 = vpack.c.b16 %v5116, %v5112
    %v6141 = vpack.c.b16 %v5121, %v5117
    %v6142 = vpack.c.b16 %v5122, %v5118
    %v6143 = vpack.c.b16 %v5123, %v5119
    %v6144 = vpack.c.b16 %v5124, %v5120
    %v6145 = vpack.c.b16 %v5129, %v5125
    %v6146 = vpack.c.b16 %v5130, %v5126
    %v6147 = vpack.c.b16 %v5131, %v5127
    %v6148 = vpack.c.b16 %v5132, %v5128
    %v6149 = vpack.c.b16 %v5137, %v5133
    %v6150 = vpack.c.b16 %v5138, %v5134
    %v6151 = vpack.c.b16 %v5139, %v5135
    %v6152 = vpack.c.b16 %v5140, %v5136
    %v6153 = vpack.c.b16 %v5145, %v5141
    %v6154 = vpack.c.b16 %v5146, %v5142
    %v6155 = vpack.c.b16 %v5147, %v5143
    %v6156 = vpack.c.b16 %v5148, %v5144
    %v6157 = vpack.c.b16 %v5153, %v5149
    %v6158 = vpack.c.b16 %v5154, %v5150
    %v6159 = vpack.c.b16 %v5155, %v5151
    %v6160 = vpack.c.b16 %v5156, %v5152
    %v6161 = vpack.c.b16 %v5161, %v5157
    %v6162 = vpack.c.b16 %v5162, %v5158
    %v6163 = vpack.c.b16 %v5163, %v5159
    %v6164 = vpack.c.b16 %v5164, %v5160
    %v6165 = vpack.c.b16 %v5169, %v5165
    %v6166 = vpack.c.b16 %v5170, %v5166
    %v6167 = vpack.c.b16 %v5171, %v5167
    %v6168 = vpack.c.b16 %v5172, %v5168
    %v6169 = vpack.c.b16 %v5177, %v5173
    %v6170 = vpack.c.b16 %v5178, %v5174
    %v6171 = vpack.c.b16 %v5179, %v5175
    %v6172 = vpack.c.b16 %v5180, %v5176
    %v6173 = vpack.c.b16 %v5185, %v5181
    %v6174 = vpack.c.b16 %v5186, %v5182
    %v6175 = vpack.c.b16 %v5187, %v5183
    %v6176 = vpack.c.b16 %v5188, %v5184
    %v6177 = vpack.c.b16 %v5193, %v5189
    %v6178 = vpack.c.b16 %v5194, %v5190
    %v6179 = vpack.c.b16 %v5195, %v5191
    %v6180 = vpack.c.b16 %v5196, %v5192
    %v6181 = vpack.c.b16 %v5201, %v5197
    %v6182 = vpack.c.b16 %v5202, %v5198
    %v6183 = vpack.c.b16 %v5203, %v5199
    %v6184 = vpack.c.b16 %v5204, %v5200
    %v6185 = vpack.c.b16 %v5209, %v5205
    %v6186 = vpack.c.b16 %v5210, %v5206
    %v6187 = vpack.c.b16 %v5211, %v5207
    %v6188 = vpack.c.b16 %v5212, %v5208
    %v6189 = vpack.c.b16 %v5217, %v5213
    %v6190 = vpack.c.b16 %v5218, %v5214
    %v6191 = vpack.c.b16 %v5219, %v5215
    %v6192 = vpack.c.b16 %v5220, %v5216
    %v6193 = vpack.c.b16 %v5225, %v5221
    %v6194 = vpack.c.b16 %v5226, %v5222
    %v6195 = vpack.c.b16 %v5227, %v5223
    %v6196 = vpack.c.b16 %v5228, %v5224
    %v6197 = vpack.c.b16 %v5233, %v5229
    %v6198 = vpack.c.b16 %v5234, %v5230
    %v6199 = vpack.c.b16 %v5235, %v5231
    %v6200 = vpack.c.b16 %v5236, %v5232
    %v6201 = vpack.c.b16 %v5241, %v5237
    %v6202 = vpack.c.b16 %v5242, %v5238
    %v6203 = vpack.c.b16 %v5243, %v5239
    %v6204 = vpack.c.b16 %v5244, %v5240
    %v6205 = vpack.c.b16 %v5249, %v5245
    %v6206 = vpack.c.b16 %v5250, %v5246
    %v6207 = vpack.c.b16 %v5251, %v5247
    %v6208 = vpack.c.b16 %v5252, %v5248
    %v6209 = vpack.c.b16 %v5257, %v5253
    %v6210 = vpack.c.b16 %v5258, %v5254
    %v6211 = vpack.c.b16 %v5259, %v5255
    %v6212 = vpack.c.b16 %v5260, %v5256
    %v6213 = vpack.c.b16 %v5265, %v5261
    %v6214 = vpack.c.b16 %v5266, %v5262
    %v6215 = vpack.c.b16 %v5267, %v5263
    %v6216 = vpack.c.b16 %v5268, %v5264
    %v6217 = vpack.c.b16 %v5273, %v5269
    %v6218 = vpack.c.b16 %v5274, %v5270
    %v6219 = vpack.c.b16 %v5275, %v5271
    %v6220 = vpack.c.b16 %v5276, %v5272
    %v6221 = vpack.c.b16 %v5281, %v5277
    %v6222 = vpack.c.b16 %v5282, %v5278
    %v6223 = vpack.c.b16 %v5283, %v5279
    %v6224 = vpack.c.b16 %v5284, %v5280
    %v6225 = vpack.c.b16 %v5289, %v5285
    %v6226 = vpack.c.b16 %v5290, %v5286
    %v6227 = vpack.c.b16 %v5291, %v5287
    %v6228 = vpack.c.b16 %v5292, %v5288
    %v6229 = vpack.c.b16 %v5297, %v5293
    %v6230 = vpack.c.b16 %v5298, %v5294
    %v6231 = vpack.c.b16 %v5299, %v5295
    %v6232 = vpack.c.b16 %v5300, %v5296
    %v6233 = vpack.c.b16 %v5305, %v5301
    %v6234 = vpack.c.b16 %v5306, %v5302
    %v6235 = vpack.c.b16 %v5307, %v5303
    %v6236 = vpack.c.b16 %v5308, %v5304
    %v6237 = vpack.c.b16 %v5313, %v5309
    %v6238 = vpack.c.b16 %v5314, %v5310
    %v6239 = vpack.c.b16 %v5315, %v5311
    %v6240 = vpack.c.b16 %v5316, %v5312
    %v6241 = vpack.c.b16 %v5321, %v5317
    %v6242 = vpack.c.b16 %v5322, %v5318
    %v6243 = vpack.c.b16 %v5323, %v5319
    %v6244 = vpack.c.b16 %v5324, %v5320
    %v6245 = vpack.c.b16 %v5329, %v5325
    %v6246 = vpack.c.b16 %v5330, %v5326
    %v6247 = vpack.c.b16 %v5331, %v5327
    %v6248 = vpack.c.b16 %v5332, %v5328
    %v6249 = vpack.c.b16 %v5337, %v5333
    %v6250 = vpack.c.b16 %v5338, %v5334
    %v6251 = vpack.c.b16 %v5339, %v5335
    %v6252 = vpack.c.b16 %v5340, %v5336
    %v6253 = vpack.c.b16 %v5345, %v5341
    %v6254 = vpack.c.b16 %v5346, %v5342
    %v6255 = vpack.c.b16 %v5347, %v5343
    %v6256 = vpack.c.b16 %v5348, %v5344
    %v6257 = vpack.c.b16 %v5353, %v5349
    %v6258 = vpack.c.b16 %v5354, %v5350
    %v6259 = vpack.c.b16 %v5355, %v5351
    %v6260 = vpack.c.b16 %v5356, %v5352
    %v6261 = vpack.c.b16 %v5361, %v5357
    %v6262 = vpack.c.b16 %v5362, %v5358
    %v6263 = vpack.c.b16 %v5363, %v5359
    %v6264 = vpack.c.b16 %v5364, %v5360
    %v6265 = vpack.c.b16 %v5369, %v5365
    %v6266 = vpack.c.b16 %v5370, %v5366
    %v6267 = vpack.c.b16 %v5371, %v5367
    %v6268 = vpack.c.b16 %v5372, %v5368
    %v6269 = vpack.c.b16 %v5377, %v5373
    %v6270 = vpack.c.b16 %v5378, %v5374
    %v6271 = vpack.c.b16 %v5379, %v5375
    %v6272 = vpack.c.b16 %v5380, %v5376
    %v6273 = vpack.c.b16 %v5385, %v5381
    %v6274 = vpack.c.b16 %v5386, %v5382
    %v6275 = vpack.c.b16 %v5387, %v5383
    %v6276 = vpack.c.b16 %v5388, %v5384
    %v6277 = vpack.c.b16 %v5393, %v5389
    %v6278 = vpack.c.b16 %v5394, %v5390
    %v6279 = vpack.c.b16 %v5395, %v5391
    %v6280 = vpack.c.b16 %v5396, %v5392
    %v6281 = vpack.c.b16 %v5401, %v5397
    %v6282 = vpack.c.b16 %v5402, %v5398
    %v6283 = vpack.c.b16 %v5403, %v5399
    %v6284 = vpack.c.b16 %v5404, %v5400
    %v6285 = vpack.c.b16 %v5409, %v5405
    %v6286 = vpack.c.b16 %v5410, %v5406
    %v6287 = vpack.c.b16 %v5411, %v5407
    %v6288 = vpack.c.b16 %v5412, %v5408
    %v6289 = vpack.c.b16 %v5417, %v5413
    %v6290 = vpack.c.b16 %v5418, %v5414
    %v6291 = vpack.c.b16 %v5419, %v5415
    %v6292 = vpack.c.b16 %v5420, %v5416
    %v6293 = vpack.c.b16 %v5425, %v5421
    %v6294 = vpack.c.b16 %v5426, %v5422
    %v6295 = vpack.c.b16 %v5427, %v5423
    %v6296 = vpack.c.b16 %v5428, %v5424
    %v6297 = vpack.c.b16 %v5433, %v5429
    %v6298 = vpack.c.b16 %v5434, %v5430
    %v6299 = vpack.c.b16 %v5435, %v5431
    %v6300 = vpack.c.b16 %v5436, %v5432
    %v6301 = vpack.c.b16 %v5441, %v5437
    %v6302 = vpack.c.b16 %v5442, %v5438
    %v6303 = vpack.c.b16 %v5443, %v5439
    %v6304 = vpack.c.b16 %v5444, %v5440
    %v6305 = vpack.c.b16 %v5449, %v5445
    %v6306 = vpack.c.b16 %v5450, %v5446
    %v6307 = vpack.c.b16 %v5451, %v5447
    %v6308 = vpack.c.b16 %v5452, %v5448
    %v6309 = vpack.c.b16 %v5457, %v5453
    %v6310 = vpack.c.b16 %v5458, %v5454
    %v6311 = vpack.c.b16 %v5459, %v5455
    %v6312 = vpack.c.b16 %v5460, %v5456
    %v6313 = vpack.c.b16 %v5465, %v5461
    %v6314 = vpack.c.b16 %v5466, %v5462
    %v6315 = vpack.c.b16 %v5467, %v5463
    %v6316 = vpack.c.b16 %v5468, %v5464
    %v6317 = vpack.c.b16 %v5473, %v5469
    %v6318 = vpack.c.b16 %v5474, %v5470
    %v6319 = vpack.c.b16 %v5475, %v5471
    %v6320 = vpack.c.b16 %v5476, %v5472
    %v6321 = vpack.c.b16 %v5481, %v5477
    %v6322 = vpack.c.b16 %v5482, %v5478
    %v6323 = vpack.c.b16 %v5483, %v5479
    %v6324 = vpack.c.b16 %v5484, %v5480
    %v6325 = vpack.c.b16 %v5489, %v5485
    %v6326 = vpack.c.b16 %v5490, %v5486
    %v6327 = vpack.c.b16 %v5491, %v5487
    %v6328 = vpack.c.b16 %v5492, %v5488
    %v6329 = vpack.c.b16 %v5497, %v5493
    %v6330 = vpack.c.b16 %v5498, %v5494
    %v6331 = vpack.c.b16 %v5499, %v5495
    %v6332 = vpack.c.b16 %v5500, %v5496
    %v6333 = vpack.c.b16 %v5505, %v5501
    %v6334 = vpack.c.b16 %v5506, %v5502
    %v6335 = vpack.c.b16 %v5507, %v5503
    %v6336 = vpack.c.b16 %v5508, %v5504
    %v6337 = vpack.c.b16 %v5513, %v5509
    %v6338 = vpack.c.b16 %v5514, %v5510
    %v6339 = vpack.c.b16 %v5515, %v5511
    %v6340 = vpack.c.b16 %v5516, %v5512
    %v6341 = vpack.c.b16 %v5521, %v5517
    %v6342 = vpack.c.b16 %v5522, %v5518
    %v6343 = vpack.c.b16 %v5523, %v5519
    %v6344 = vpack.c.b16 %v5524, %v5520
    %v6345 = vpack.c.b16 %v5529, %v5525
    %v6346 = vpack.c.b16 %v5530, %v5526
    %v6347 = vpack.c.b16 %v5531, %v5527
    %v6348 = vpack.c.b16 %v5532, %v5528
    %v6349 = vpack.c.b16 %v5537, %v5533
    %v6350 = vpack.c.b16 %v5538, %v5534
    %v6351 = vpack.c.b16 %v5539, %v5535
    %v6352 = vpack.c.b16 %v5540, %v5536
    %v6353 = vpack.c.b16 %v5545, %v5541
    %v6354 = vpack.c.b16 %v5546, %v5542
    %v6355 = vpack.c.b16 %v5547, %v5543
    %v6356 = vpack.c.b16 %v5548, %v5544
    %v6357 = vpack.c.b16 %v5553, %v5549
    %v6358 = vpack.c.b16 %v5554, %v5550
    %v6359 = vpack.c.b16 %v5555, %v5551
    %v6360 = vpack.c.b16 %v5556, %v5552
    %v6361 = vpack.c.b16 %v5561, %v5557
    %v6362 = vpack.c.b16 %v5562, %v5558
    %v6363 = vpack.c.b16 %v5563, %v5559
    %v6364 = vpack.c.b16 %v5564, %v5560
    %v6365 = vpack.c.b16 %v5569, %v5565
    %v6366 = vpack.c.b16 %v5570, %v5566
    %v6367 = vpack.c.b16 %v5571, %v5567
    %v6368 = vpack.c.b16 %v5572, %v5568
    %v6369 = vpack.c.b16 %v5577, %v5573
    %v6370 = vpack.c.b16 %v5578, %v5574
    %v6371 = vpack.c.b16 %v5579, %v5575
    %v6372 = vpack.c.b16 %v5580, %v5576
    %v6373 = vpack.c.b16 %v5585, %v5581
    %v6374 = vpack.c.b16 %v5586, %v5582
    %v6375 = vpack.c.b16 %v5587, %v5583
    %v6376 = vpack.c.b16 %v5588, %v5584
    %v6377 = vpack.c.b16 %v5593, %v5589
    %v6378 = vpack.c.b16 %v5594, %v5590
    %v6379 = vpack.c.b16 %v5595, %v5591
    %v6380 = vpack.c.b16 %v5596, %v5592
    %v6381 = vpack.c.b16 %v5601, %v5597
    %v6382 = vpack.c.b16 %v5602, %v5598
    %v6383 = vpack.c.b16 %v5603, %v5599
    %v6384 = vpack.c.b16 %v5604, %v5600
    %v6385 = vpack.c.b16 %v5609, %v5605
    %v6386 = vpack.c.b16 %v5610, %v5606
    %v6387 = vpack.c.b16 %v5611, %v5607
    %v6388 = vpack.c.b16 %v5612, %v5608
    %v6389 = vpack.c.b16 %v5617, %v5613
    %v6390 = vpack.c.b16 %v5618, %v5614
    %v6391 = vpack.c.b16 %v5619, %v5615
    %v6392 = vpack.c.b16 %v5620, %v5616
    %v6393 = vpack.c.b16 %v5625, %v5621
    %v6394 = vpack.c.b16 %v5626, %v5622
    %v6395 = vpack.c.b16 %v5627, %v5623
    %v6396 = vpack.c.b16 %v5628, %v5624
    %v6397 = vpack.c.b16 %v5633, %v5629
    %v6398 = vpack.c.b16 %v5634, %v5630
    %v6399 = vpack.c.b16 %v5635, %v5631
    %v6400 = vpack.c.b16 %v5636, %v5632
    %v6401 = vpack.c.b16 %v5641, %v5637
    %v6402 = vpack.c.b16 %v5642, %v5638
    %v6403 = vpack.c.b16 %v5643, %v5639
    %v6404 = vpack.c.b16 %v5644, %v5640
    %v6405 = vpack.c.b16 %v5649, %v5645
    %v6406 = vpack.c.b16 %v5650, %v5646
    %v6407 = vpack.c.b16 %v5651, %v5647
    %v6408 = vpack.c.b16 %v5652, %v5648
    %v6409 = vpack.c.b16 %v5657, %v5653
    %v6410 = vpack.c.b16 %v5658, %v5654
    %v6411 = vpack.c.b16 %v5659, %v5655
    %v6412 = vpack.c.b16 %v5660, %v5656
    %v6413 = vpack.c.b16 %v5665, %v5661
    %v6414 = vpack.c.b16 %v5666, %v5662
    %v6415 = vpack.c.b16 %v5667, %v5663
    %v6416 = vpack.c.b16 %v5668, %v5664
    %v6417 = vpack.c.b16 %v5673, %v5669
    %v6418 = vpack.c.b16 %v5674, %v5670
    %v6419 = vpack.c.b16 %v5675, %v5671
    %v6420 = vpack.c.b16 %v5676, %v5672
    %v6421 = vpack.c.b16 %v5681, %v5677
    %v6422 = vpack.c.b16 %v5682, %v5678
    %v6423 = vpack.c.b16 %v5683, %v5679
    %v6424 = vpack.c.b16 %v5684, %v5680
    %v6425 = vpack.c.b16 %v5689, %v5685
    %v6426 = vpack.c.b16 %v5690, %v5686
    %v6427 = vpack.c.b16 %v5691, %v5687
    %v6428 = vpack.c.b16 %v5692, %v5688
    %v6429 = vpack.c.b16 %v5697, %v5693
    %v6430 = vpack.c.b16 %v5698, %v5694
    %v6431 = vpack.c.b16 %v5699, %v5695
    %v6432 = vpack.c.b16 %v5700, %v5696
    %v6433 = vpack.c.b16 %v5705, %v5701
    %v6434 = vpack.c.b16 %v5706, %v5702
    %v6435 = vpack.c.b16 %v5707, %v5703
    %v6436 = vpack.c.b16 %v5708, %v5704
    %v6437 = vpack.c.b16 %v5713, %v5709
    %v6438 = vpack.c.b16 %v5714, %v5710
    %v6439 = vpack.c.b16 %v5715, %v5711
    %v6440 = vpack.c.b16 %v5716, %v5712
    %v6441 = vpack.c.b16 %v5721, %v5717
    %v6442 = vpack.c.b16 %v5722, %v5718
    %v6443 = vpack.c.b16 %v5723, %v5719
    %v6444 = vpack.c.b16 %v5724, %v5720
    %v6445 = vpack.c.b16 %v5729, %v5725
    %v6446 = vpack.c.b16 %v5730, %v5726
    %v6447 = vpack.c.b16 %v5731, %v5727
    %v6448 = vpack.c.b16 %v5732, %v5728
    %v6449 = vpack.c.b16 %v5737, %v5733
    %v6450 = vpack.c.b16 %v5738, %v5734
    %v6451 = vpack.c.b16 %v5739, %v5735
    %v6452 = vpack.c.b16 %v5740, %v5736
    %v6453 = vpack.c.b16 %v5745, %v5741
    %v6454 = vpack.c.b16 %v5746, %v5742
    %v6455 = vpack.c.b16 %v5747, %v5743
    %v6456 = vpack.c.b16 %v5748, %v5744
    %v6457 = vpack.c.b16 %v5753, %v5749
    %v6458 = vpack.c.b16 %v5754, %v5750
    %v6459 = vpack.c.b16 %v5755, %v5751
    %v6460 = vpack.c.b16 %v5756, %v5752
    %7165 = vmatpush.bf16.msra.mxu0 %v5785
    %7166 = vmatpush.bf16.msra.mxu0 %v5781
    %7167 = vmatpush.bf16.msra.mxu0 %v5777
    %7168 = vmatpush.bf16.msra.mxu0 %v5773
    %7169 = vmatpush.bf16.msra.mxu0 %v5769
    %7170 = vmatpush.bf16.msra.mxu0 %v5765
    %7171 = vmatpush.bf16.msra.mxu0 %v5761
    %7172 = vmatpush.bf16.msra.mxu0 %v5757
    %7173 = vmatmul.bf16.gmra.mxu0 %v2909
    %v7174 = vpop.f32.mrf.mxu0
    %v7175 = vadd.f32 %v3637, %v7174
    %v7176 = vpop.f32.mrf.mxu0
    %7177 = vdwg.mxu0
    %7178 = vmatpush.bf16.msra.mxu0 %v5817
    %7179 = vmatpush.bf16.msra.mxu0 %v5813
    %7180 = vmatpush.bf16.msra.mxu0 %v5809
    %7181 = vmatpush.bf16.msra.mxu0 %v5805
    %7182 = vmatpush.bf16.msra.mxu0 %v5801
    %7183 = vmatpush.bf16.msra.mxu0 %v5797
    %7184 = vmatpush.bf16.msra.mxu0 %v5793
    %7185 = vmatpush.bf16.msra.mxu0 %v5789
    %7186 = vmatmul.bf16.gmra.mxu0 %v2910
    %v7187 = vpop.f32.mrf.mxu0
    %v7188 = vadd.f32 %v7175, %v7187
    %v7189 = vpop.f32.mrf.mxu0
    %7190 = vdwg.mxu0
    %7191 = vmatpush.bf16.msra.mxu0 %v5849
    %7192 = vmatpush.bf16.msra.mxu0 %v5845
    %7193 = vmatpush.bf16.msra.mxu0 %v5841
    %7194 = vmatpush.bf16.msra.mxu0 %v5837
    %7195 = vmatpush.bf16.msra.mxu0 %v5833
    %7196 = vmatpush.bf16.msra.mxu0 %v5829
    %7197 = vmatpush.bf16.msra.mxu0 %v5825
    %7198 = vmatpush.bf16.msra.mxu0 %v5821
    %7199 = vmatmul.bf16.gmra.mxu0 %v2911
    %v7200 = vpop.f32.mrf.mxu0
    %v7201 = vadd.f32 %v7188, %v7200
    %v7202 = vpop.f32.mrf.mxu0
    %7203 = vdwg.mxu0
    %7204 = vmatpush.bf16.msra.mxu0 %v5881
    %7205 = vmatpush.bf16.msra.mxu0 %v5877
    %7206 = vmatpush.bf16.msra.mxu0 %v5873
    %7207 = vmatpush.bf16.msra.mxu0 %v5869
    %7208 = vmatpush.bf16.msra.mxu0 %v5865
    %7209 = vmatpush.bf16.msra.mxu0 %v5861
    %7210 = vmatpush.bf16.msra.mxu0 %v5857
    %7211 = vmatpush.bf16.msra.mxu0 %v5853
    %7212 = vmatmul.bf16.gmra.mxu0 %v2912
    %v7213 = vpop.f32.mrf.mxu0
    %v7214 = vadd.f32 %v7201, %v7213
    %v7215 = vpop.f32.mrf.mxu0
    %7216 = vdwg.mxu0
    %7217 = vmatpush.bf16.msra.mxu0 %v5913
    %7218 = vmatpush.bf16.msra.mxu0 %v5909
    %7219 = vmatpush.bf16.msra.mxu0 %v5905
    %7220 = vmatpush.bf16.msra.mxu0 %v5901
    %7221 = vmatpush.bf16.msra.mxu0 %v5897
    %7222 = vmatpush.bf16.msra.mxu0 %v5893
    %7223 = vmatpush.bf16.msra.mxu0 %v5889
    %7224 = vmatpush.bf16.msra.mxu0 %v5885
    %7225 = vmatmul.bf16.gmra.mxu0 %v2913
    %v7226 = vpop.f32.mrf.mxu0
    %v7227 = vadd.f32 %v7214, %v7226
    %v7228 = vpop.f32.mrf.mxu0
    %7229 = vdwg.mxu0
    %7230 = vmatpush.bf16.msra.mxu0 %v5945
    %7231 = vmatpush.bf16.msra.mxu0 %v5941
    %7232 = vmatpush.bf16.msra.mxu0 %v5937
    %7233 = vmatpush.bf16.msra.mxu0 %v5933
    %7234 = vmatpush.bf16.msra.mxu0 %v5929
    %7235 = vmatpush.bf16.msra.mxu0 %v5925
    %7236 = vmatpush.bf16.msra.mxu0 %v5921
    %7237 = vmatpush.bf16.msra.mxu0 %v5917
    %7238 = vmatmul.bf16.gmra.mxu0 %v2914
    %v7239 = vpop.f32.mrf.mxu0
    %v7240 = vadd.f32 %v7227, %v7239
    %v7241 = vpop.f32.mrf.mxu0
    %7242 = vdwg.mxu0
    %7243 = vmatpush.bf16.msra.mxu0 %v5977
    %7244 = vmatpush.bf16.msra.mxu0 %v5973
    %7245 = vmatpush.bf16.msra.mxu0 %v5969
    %7246 = vmatpush.bf16.msra.mxu0 %v5965
    %7247 = vmatpush.bf16.msra.mxu0 %v5961
    %7248 = vmatpush.bf16.msra.mxu0 %v5957
    %7249 = vmatpush.bf16.msra.mxu0 %v5953
    %7250 = vmatpush.bf16.msra.mxu0 %v5949
    %7251 = vmatmul.bf16.gmra.mxu0 %v2915
    %v7252 = vpop.f32.mrf.mxu0
    %v7253 = vadd.f32 %v7240, %v7252
    %v7254 = vpop.f32.mrf.mxu0
    %7255 = vdwg.mxu0
    %7256 = vmatpush.bf16.msra.mxu0 %v6009
    %7257 = vmatpush.bf16.msra.mxu0 %v6005
    %7258 = vmatpush.bf16.msra.mxu0 %v6001
    %7259 = vmatpush.bf16.msra.mxu0 %v5997
    %7260 = vmatpush.bf16.msra.mxu0 %v5993
    %7261 = vmatpush.bf16.msra.mxu0 %v5989
    %7262 = vmatpush.bf16.msra.mxu0 %v5985
    %7263 = vmatpush.bf16.msra.mxu0 %v5981
    %7264 = vmatmul.bf16.gmra.mxu0 %v2916
    %v7265 = vpop.f32.mrf.mxu0
    %v7266 = vadd.f32 %v7253, %v7265
    %v7267 = vpop.f32.mrf.mxu0
    %7268 = vdwg.mxu0
    %7269 = vmatpush.bf16.msra.mxu0 %v6041
    %7270 = vmatpush.bf16.msra.mxu0 %v6037
    %7271 = vmatpush.bf16.msra.mxu0 %v6033
    %7272 = vmatpush.bf16.msra.mxu0 %v6029
    %7273 = vmatpush.bf16.msra.mxu0 %v6025
    %7274 = vmatpush.bf16.msra.mxu0 %v6021
    %7275 = vmatpush.bf16.msra.mxu0 %v6017
    %7276 = vmatpush.bf16.msra.mxu0 %v6013
    %7277 = vmatmul.bf16.gmra.mxu0 %v2917
    %v7278 = vpop.f32.mrf.mxu0
    %v7279 = vadd.f32 %v7266, %v7278
    %v7280 = vpop.f32.mrf.mxu0
    %7281 = vdwg.mxu0
    %7282 = vmatpush.bf16.msra.mxu0 %v6073
    %7283 = vmatpush.bf16.msra.mxu0 %v6069
    %7284 = vmatpush.bf16.msra.mxu0 %v6065
    %7285 = vmatpush.bf16.msra.mxu0 %v6061
    %7286 = vmatpush.bf16.msra.mxu0 %v6057
    %7287 = vmatpush.bf16.msra.mxu0 %v6053
    %7288 = vmatpush.bf16.msra.mxu0 %v6049
    %7289 = vmatpush.bf16.msra.mxu0 %v6045
    %7290 = vmatmul.bf16.gmra.mxu0 %v2918
    %v7291 = vpop.f32.mrf.mxu0
    %v7292 = vadd.f32 %v7279, %v7291
    %v7293 = vpop.f32.mrf.mxu0
    %7294 = vdwg.mxu0
    %7295 = vmatpush.bf16.msra.mxu0 %v6105
    %7296 = vmatpush.bf16.msra.mxu0 %v6101
    %7297 = vmatpush.bf16.msra.mxu0 %v6097
    %7298 = vmatpush.bf16.msra.mxu0 %v6093
    %7299 = vmatpush.bf16.msra.mxu0 %v6089
    %7300 = vmatpush.bf16.msra.mxu0 %v6085
    %7301 = vmatpush.bf16.msra.mxu0 %v6081
    %7302 = vmatpush.bf16.msra.mxu0 %v6077
    %7303 = vmatmul.bf16.gmra.mxu0 %v2919
    %v7304 = vpop.f32.mrf.mxu0
    %v7305 = vadd.f32 %v7292, %v7304
    %v7306 = vpop.f32.mrf.mxu0
    %7307 = vdwg.mxu0
    %7308 = vmatpush.bf16.msra.mxu0 %v6137
    %7309 = vmatpush.bf16.msra.mxu0 %v6133
    %7310 = vmatpush.bf16.msra.mxu0 %v6129
    %7311 = vmatpush.bf16.msra.mxu0 %v6125
    %7312 = vmatpush.bf16.msra.mxu0 %v6121
    %7313 = vmatpush.bf16.msra.mxu0 %v6117
    %7314 = vmatpush.bf16.msra.mxu0 %v6113
    %7315 = vmatpush.bf16.msra.mxu0 %v6109
    %7316 = vmatmul.bf16.gmra.mxu0 %v2920
    %v7317 = vpop.f32.mrf.mxu0
    %v7318 = vadd.f32 %v7305, %v7317
    %v7319 = vpop.f32.mrf.mxu0
    %7320 = vdwg.mxu0
    %7321 = vmatpush.bf16.msra.mxu0 %v6169
    %7322 = vmatpush.bf16.msra.mxu0 %v6165
    %7323 = vmatpush.bf16.msra.mxu0 %v6161
    %7324 = vmatpush.bf16.msra.mxu0 %v6157
    %7325 = vmatpush.bf16.msra.mxu0 %v6153
    %7326 = vmatpush.bf16.msra.mxu0 %v6149
    %7327 = vmatpush.bf16.msra.mxu0 %v6145
    %7328 = vmatpush.bf16.msra.mxu0 %v6141
    %7329 = vmatmul.bf16.gmra.mxu0 %v2921
    %v7330 = vpop.f32.mrf.mxu0
    %v7331 = vadd.f32 %v7318, %v7330
    %v7332 = vpop.f32.mrf.mxu0
    %7333 = vdwg.mxu0
    %7334 = vmatpush.bf16.msra.mxu0 %v6201
    %7335 = vmatpush.bf16.msra.mxu0 %v6197
    %7336 = vmatpush.bf16.msra.mxu0 %v6193
    %7337 = vmatpush.bf16.msra.mxu0 %v6189
    %7338 = vmatpush.bf16.msra.mxu0 %v6185
    %7339 = vmatpush.bf16.msra.mxu0 %v6181
    %7340 = vmatpush.bf16.msra.mxu0 %v6177
    %7341 = vmatpush.bf16.msra.mxu0 %v6173
    %7342 = vmatmul.bf16.gmra.mxu0 %v2922
    %v7343 = vpop.f32.mrf.mxu0
    %v7344 = vadd.f32 %v7331, %v7343
    %v7345 = vpop.f32.mrf.mxu0
    %7346 = vdwg.mxu0
    %7347 = vmatpush.bf16.msra.mxu0 %v6233
    %7348 = vmatpush.bf16.msra.mxu0 %v6229
    %7349 = vmatpush.bf16.msra.mxu0 %v6225
    %7350 = vmatpush.bf16.msra.mxu0 %v6221
    %7351 = vmatpush.bf16.msra.mxu0 %v6217
    %7352 = vmatpush.bf16.msra.mxu0 %v6213
    %7353 = vmatpush.bf16.msra.mxu0 %v6209
    %7354 = vmatpush.bf16.msra.mxu0 %v6205
    %7355 = vmatmul.bf16.gmra.mxu0 %v2923
    %v7356 = vpop.f32.mrf.mxu0
    %v7357 = vadd.f32 %v7344, %v7356
    %v7358 = vpop.f32.mrf.mxu0
    %7359 = vdwg.mxu0
    %7360 = vmatpush.bf16.msra.mxu0 %v6265
    %7361 = vmatpush.bf16.msra.mxu0 %v6261
    %7362 = vmatpush.bf16.msra.mxu0 %v6257
    %7363 = vmatpush.bf16.msra.mxu0 %v6253
    %7364 = vmatpush.bf16.msra.mxu0 %v6249
    %7365 = vmatpush.bf16.msra.mxu0 %v6245
    %7366 = vmatpush.bf16.msra.mxu0 %v6241
    %7367 = vmatpush.bf16.msra.mxu0 %v6237
    %7368 = vmatmul.bf16.gmra.mxu0 %v2924
    %v7369 = vpop.f32.mrf.mxu0
    %v7370 = vadd.f32 %v7357, %v7369
    %v7371 = vpop.f32.mrf.mxu0
    %7372 = vdwg.mxu0
    %7373 = vmatpush.bf16.msra.mxu0 %v6297
    %7374 = vmatpush.bf16.msra.mxu0 %v6293
    %7375 = vmatpush.bf16.msra.mxu0 %v6289
    %7376 = vmatpush.bf16.msra.mxu0 %v6285
    %7377 = vmatpush.bf16.msra.mxu0 %v6281
    %7378 = vmatpush.bf16.msra.mxu0 %v6277
    %7379 = vmatpush.bf16.msra.mxu0 %v6273
    %7380 = vmatpush.bf16.msra.mxu0 %v6269
    %7381 = vmatmul.bf16.gmra.mxu0 %v2925
    %v7382 = vpop.f32.mrf.mxu0
    %v7383 = vadd.f32 %v7370, %v7382
    %v7384 = vpop.f32.mrf.mxu0
    %7385 = vdwg.mxu0
    %7386 = vmatpush.bf16.msra.mxu0 %v6329
    %7387 = vmatpush.bf16.msra.mxu0 %v6325
    %7388 = vmatpush.bf16.msra.mxu0 %v6321
    %7389 = vmatpush.bf16.msra.mxu0 %v6317
    %7390 = vmatpush.bf16.msra.mxu0 %v6313
    %7391 = vmatpush.bf16.msra.mxu0 %v6309
    %7392 = vmatpush.bf16.msra.mxu0 %v6305
    %7393 = vmatpush.bf16.msra.mxu0 %v6301
    %7394 = vmatmul.bf16.gmra.mxu0 %v2926
    %v7395 = vpop.f32.mrf.mxu0
    %v7396 = vadd.f32 %v7383, %v7395
    %v7397 = vpop.f32.mrf.mxu0
    %7398 = vdwg.mxu0
    %7399 = vmatpush.bf16.msra.mxu0 %v6361
    %7400 = vmatpush.bf16.msra.mxu0 %v6357
    %7401 = vmatpush.bf16.msra.mxu0 %v6353
    %7402 = vmatpush.bf16.msra.mxu0 %v6349
    %7403 = vmatpush.bf16.msra.mxu0 %v6345
    %7404 = vmatpush.bf16.msra.mxu0 %v6341
    %7405 = vmatpush.bf16.msra.mxu0 %v6337
    %7406 = vmatpush.bf16.msra.mxu0 %v6333
    %7407 = vmatmul.bf16.gmra.mxu0 %v2927
    %v7408 = vpop.f32.mrf.mxu0
    %v7409 = vadd.f32 %v7396, %v7408
    %v7410 = vpop.f32.mrf.mxu0
    %7411 = vdwg.mxu0
    %7412 = vmatpush.bf16.msra.mxu0 %v6393
    %7413 = vmatpush.bf16.msra.mxu0 %v6389
    %7414 = vmatpush.bf16.msra.mxu0 %v6385
    %7415 = vmatpush.bf16.msra.mxu0 %v6381
    %7416 = vmatpush.bf16.msra.mxu0 %v6377
    %7417 = vmatpush.bf16.msra.mxu0 %v6373
    %7418 = vmatpush.bf16.msra.mxu0 %v6369
    %7419 = vmatpush.bf16.msra.mxu0 %v6365
    %7420 = vmatmul.bf16.gmra.mxu0 %v2928
    %v7421 = vpop.f32.mrf.mxu0
    %v7422 = vadd.f32 %v7409, %v7421
    %v7423 = vpop.f32.mrf.mxu0
    %7424 = vdwg.mxu0
    %7425 = vmatpush.bf16.msra.mxu0 %v6425
    %7426 = vmatpush.bf16.msra.mxu0 %v6421
    %7427 = vmatpush.bf16.msra.mxu0 %v6417
    %7428 = vmatpush.bf16.msra.mxu0 %v6413
    %7429 = vmatpush.bf16.msra.mxu0 %v6409
    %7430 = vmatpush.bf16.msra.mxu0 %v6405
    %7431 = vmatpush.bf16.msra.mxu0 %v6401
    %7432 = vmatpush.bf16.msra.mxu0 %v6397
    %7433 = vmatmul.bf16.gmra.mxu0 %v2929
    %v7434 = vpop.f32.mrf.mxu0
    %v7435 = vadd.f32 %v7422, %v7434
    %v7436 = vpop.f32.mrf.mxu0
    %7437 = vdwg.mxu0
    %7438 = vmatpush.bf16.msra.mxu0 %v6457
    %7439 = vmatpush.bf16.msra.mxu0 %v6453
    %7440 = vmatpush.bf16.msra.mxu0 %v6449
    %7441 = vmatpush.bf16.msra.mxu0 %v6445
    %7442 = vmatpush.bf16.msra.mxu0 %v6441
    %7443 = vmatpush.bf16.msra.mxu0 %v6437
    %7444 = vmatpush.bf16.msra.mxu0 %v6433
    %7445 = vmatpush.bf16.msra.mxu0 %v6429
    %7446 = vmatmul.bf16.gmra.mxu0 %v2930
    %v7447 = vpop.f32.mrf.mxu0
    %v7448 = vadd.f32 %v7435, %v7447
    %v7449 = vpop.f32.mrf.mxu0
    %7450 = vdwg.mxu0
    %7451 = vmatpush.bf16.msra.mxu0 %v5786
    %7452 = vmatpush.bf16.msra.mxu0 %v5782
    %7453 = vmatpush.bf16.msra.mxu0 %v5778
    %7454 = vmatpush.bf16.msra.mxu0 %v5774
    %7455 = vmatpush.bf16.msra.mxu0 %v5770
    %7456 = vmatpush.bf16.msra.mxu0 %v5766
    %7457 = vmatpush.bf16.msra.mxu0 %v5762
    %7458 = vmatpush.bf16.msra.mxu0 %v5758
    %7459 = vmatmul.bf16.gmra.mxu0 %v2909
    %v7460 = vpop.f32.mrf.mxu0
    %v7461 = vadd.f32 %v3638, %v7460
    %v7462 = vpop.f32.mrf.mxu0
    %7463 = vdwg.mxu0
    %7464 = vmatpush.bf16.msra.mxu0 %v5818
    %7465 = vmatpush.bf16.msra.mxu0 %v5814
    %7466 = vmatpush.bf16.msra.mxu0 %v5810
    %7467 = vmatpush.bf16.msra.mxu0 %v5806
    %7468 = vmatpush.bf16.msra.mxu0 %v5802
    %7469 = vmatpush.bf16.msra.mxu0 %v5798
    %7470 = vmatpush.bf16.msra.mxu0 %v5794
    %7471 = vmatpush.bf16.msra.mxu0 %v5790
    %7472 = vmatmul.bf16.gmra.mxu0 %v2910
    %v7473 = vpop.f32.mrf.mxu0
    %v7474 = vadd.f32 %v7461, %v7473
    %v7475 = vpop.f32.mrf.mxu0
    %7476 = vdwg.mxu0
    %7477 = vmatpush.bf16.msra.mxu0 %v5850
    %7478 = vmatpush.bf16.msra.mxu0 %v5846
    %7479 = vmatpush.bf16.msra.mxu0 %v5842
    %7480 = vmatpush.bf16.msra.mxu0 %v5838
    %7481 = vmatpush.bf16.msra.mxu0 %v5834
    %7482 = vmatpush.bf16.msra.mxu0 %v5830
    %7483 = vmatpush.bf16.msra.mxu0 %v5826
    %7484 = vmatpush.bf16.msra.mxu0 %v5822
    %7485 = vmatmul.bf16.gmra.mxu0 %v2911
    %v7486 = vpop.f32.mrf.mxu0
    %v7487 = vadd.f32 %v7474, %v7486
    %v7488 = vpop.f32.mrf.mxu0
    %7489 = vdwg.mxu0
    %7490 = vmatpush.bf16.msra.mxu0 %v5882
    %7491 = vmatpush.bf16.msra.mxu0 %v5878
    %7492 = vmatpush.bf16.msra.mxu0 %v5874
    %7493 = vmatpush.bf16.msra.mxu0 %v5870
    %7494 = vmatpush.bf16.msra.mxu0 %v5866
    %7495 = vmatpush.bf16.msra.mxu0 %v5862
    %7496 = vmatpush.bf16.msra.mxu0 %v5858
    %7497 = vmatpush.bf16.msra.mxu0 %v5854
    %7498 = vmatmul.bf16.gmra.mxu0 %v2912
    %v7499 = vpop.f32.mrf.mxu0
    %v7500 = vadd.f32 %v7487, %v7499
    %v7501 = vpop.f32.mrf.mxu0
    %7502 = vdwg.mxu0
    %7503 = vmatpush.bf16.msra.mxu0 %v5914
    %7504 = vmatpush.bf16.msra.mxu0 %v5910
    %7505 = vmatpush.bf16.msra.mxu0 %v5906
    %7506 = vmatpush.bf16.msra.mxu0 %v5902
    %7507 = vmatpush.bf16.msra.mxu0 %v5898
    %7508 = vmatpush.bf16.msra.mxu0 %v5894
    %7509 = vmatpush.bf16.msra.mxu0 %v5890
    %7510 = vmatpush.bf16.msra.mxu0 %v5886
    %7511 = vmatmul.bf16.gmra.mxu0 %v2913
    %v7512 = vpop.f32.mrf.mxu0
    %v7513 = vadd.f32 %v7500, %v7512
    %v7514 = vpop.f32.mrf.mxu0
    %7515 = vdwg.mxu0
    %7516 = vmatpush.bf16.msra.mxu0 %v5946
    %7517 = vmatpush.bf16.msra.mxu0 %v5942
    %7518 = vmatpush.bf16.msra.mxu0 %v5938
    %7519 = vmatpush.bf16.msra.mxu0 %v5934
    %7520 = vmatpush.bf16.msra.mxu0 %v5930
    %7521 = vmatpush.bf16.msra.mxu0 %v5926
    %7522 = vmatpush.bf16.msra.mxu0 %v5922
    %7523 = vmatpush.bf16.msra.mxu0 %v5918
    %7524 = vmatmul.bf16.gmra.mxu0 %v2914
    %v7525 = vpop.f32.mrf.mxu0
    %v7526 = vadd.f32 %v7513, %v7525
    %v7527 = vpop.f32.mrf.mxu0
    %7528 = vdwg.mxu0
    %7529 = vmatpush.bf16.msra.mxu0 %v5978
    %7530 = vmatpush.bf16.msra.mxu0 %v5974
    %7531 = vmatpush.bf16.msra.mxu0 %v5970
    %7532 = vmatpush.bf16.msra.mxu0 %v5966
    %7533 = vmatpush.bf16.msra.mxu0 %v5962
    %7534 = vmatpush.bf16.msra.mxu0 %v5958
    %7535 = vmatpush.bf16.msra.mxu0 %v5954
    %7536 = vmatpush.bf16.msra.mxu0 %v5950
    %7537 = vmatmul.bf16.gmra.mxu0 %v2915
    %v7538 = vpop.f32.mrf.mxu0
    %v7539 = vadd.f32 %v7526, %v7538
    %v7540 = vpop.f32.mrf.mxu0
    %7541 = vdwg.mxu0
    %7542 = vmatpush.bf16.msra.mxu0 %v6010
    %7543 = vmatpush.bf16.msra.mxu0 %v6006
    %7544 = vmatpush.bf16.msra.mxu0 %v6002
    %7545 = vmatpush.bf16.msra.mxu0 %v5998
    %7546 = vmatpush.bf16.msra.mxu0 %v5994
    %7547 = vmatpush.bf16.msra.mxu0 %v5990
    %7548 = vmatpush.bf16.msra.mxu0 %v5986
    %7549 = vmatpush.bf16.msra.mxu0 %v5982
    %7550 = vmatmul.bf16.gmra.mxu0 %v2916
    %v7551 = vpop.f32.mrf.mxu0
    %v7552 = vadd.f32 %v7539, %v7551
    %v7553 = vpop.f32.mrf.mxu0
    %7554 = vdwg.mxu0
    %7555 = vmatpush.bf16.msra.mxu0 %v6042
    %7556 = vmatpush.bf16.msra.mxu0 %v6038
    %7557 = vmatpush.bf16.msra.mxu0 %v6034
    %7558 = vmatpush.bf16.msra.mxu0 %v6030
    %7559 = vmatpush.bf16.msra.mxu0 %v6026
    %7560 = vmatpush.bf16.msra.mxu0 %v6022
    %7561 = vmatpush.bf16.msra.mxu0 %v6018
    %7562 = vmatpush.bf16.msra.mxu0 %v6014
    %7563 = vmatmul.bf16.gmra.mxu0 %v2917
    %v7564 = vpop.f32.mrf.mxu0
    %v7565 = vadd.f32 %v7552, %v7564
    %v7566 = vpop.f32.mrf.mxu0
    %7567 = vdwg.mxu0
    %7568 = vmatpush.bf16.msra.mxu0 %v6074
    %7569 = vmatpush.bf16.msra.mxu0 %v6070
    %7570 = vmatpush.bf16.msra.mxu0 %v6066
    %7571 = vmatpush.bf16.msra.mxu0 %v6062
    %7572 = vmatpush.bf16.msra.mxu0 %v6058
    %7573 = vmatpush.bf16.msra.mxu0 %v6054
    %7574 = vmatpush.bf16.msra.mxu0 %v6050
    %7575 = vmatpush.bf16.msra.mxu0 %v6046
    %7576 = vmatmul.bf16.gmra.mxu0 %v2918
    %v7577 = vpop.f32.mrf.mxu0
    %v7578 = vadd.f32 %v7565, %v7577
    %v7579 = vpop.f32.mrf.mxu0
    %7580 = vdwg.mxu0
    %7581 = vmatpush.bf16.msra.mxu0 %v6106
    %7582 = vmatpush.bf16.msra.mxu0 %v6102
    %7583 = vmatpush.bf16.msra.mxu0 %v6098
    %7584 = vmatpush.bf16.msra.mxu0 %v6094
    %7585 = vmatpush.bf16.msra.mxu0 %v6090
    %7586 = vmatpush.bf16.msra.mxu0 %v6086
    %7587 = vmatpush.bf16.msra.mxu0 %v6082
    %7588 = vmatpush.bf16.msra.mxu0 %v6078
    %7589 = vmatmul.bf16.gmra.mxu0 %v2919
    %v7590 = vpop.f32.mrf.mxu0
    %v7591 = vadd.f32 %v7578, %v7590
    %v7592 = vpop.f32.mrf.mxu0
    %7593 = vdwg.mxu0
    %7594 = vmatpush.bf16.msra.mxu0 %v6138
    %7595 = vmatpush.bf16.msra.mxu0 %v6134
    %7596 = vmatpush.bf16.msra.mxu0 %v6130
    %7597 = vmatpush.bf16.msra.mxu0 %v6126
    %7598 = vmatpush.bf16.msra.mxu0 %v6122
    %7599 = vmatpush.bf16.msra.mxu0 %v6118
    %7600 = vmatpush.bf16.msra.mxu0 %v6114
    %7601 = vmatpush.bf16.msra.mxu0 %v6110
    %7602 = vmatmul.bf16.gmra.mxu0 %v2920
    %v7603 = vpop.f32.mrf.mxu0
    %v7604 = vadd.f32 %v7591, %v7603
    %v7605 = vpop.f32.mrf.mxu0
    %7606 = vdwg.mxu0
    %7607 = vmatpush.bf16.msra.mxu0 %v6170
    %7608 = vmatpush.bf16.msra.mxu0 %v6166
    %7609 = vmatpush.bf16.msra.mxu0 %v6162
    %7610 = vmatpush.bf16.msra.mxu0 %v6158
    %7611 = vmatpush.bf16.msra.mxu0 %v6154
    %7612 = vmatpush.bf16.msra.mxu0 %v6150
    %7613 = vmatpush.bf16.msra.mxu0 %v6146
    %7614 = vmatpush.bf16.msra.mxu0 %v6142
    %7615 = vmatmul.bf16.gmra.mxu0 %v2921
    %v7616 = vpop.f32.mrf.mxu0
    %v7617 = vadd.f32 %v7604, %v7616
    %v7618 = vpop.f32.mrf.mxu0
    %7619 = vdwg.mxu0
    %7620 = vmatpush.bf16.msra.mxu0 %v6202
    %7621 = vmatpush.bf16.msra.mxu0 %v6198
    %7622 = vmatpush.bf16.msra.mxu0 %v6194
    %7623 = vmatpush.bf16.msra.mxu0 %v6190
    %7624 = vmatpush.bf16.msra.mxu0 %v6186
    %7625 = vmatpush.bf16.msra.mxu0 %v6182
    %7626 = vmatpush.bf16.msra.mxu0 %v6178
    %7627 = vmatpush.bf16.msra.mxu0 %v6174
    %7628 = vmatmul.bf16.gmra.mxu0 %v2922
    %v7629 = vpop.f32.mrf.mxu0
    %v7630 = vadd.f32 %v7617, %v7629
    %v7631 = vpop.f32.mrf.mxu0
    %7632 = vdwg.mxu0
    %7633 = vmatpush.bf16.msra.mxu0 %v6234
    %7634 = vmatpush.bf16.msra.mxu0 %v6230
    %7635 = vmatpush.bf16.msra.mxu0 %v6226
    %7636 = vmatpush.bf16.msra.mxu0 %v6222
    %7637 = vmatpush.bf16.msra.mxu0 %v6218
    %7638 = vmatpush.bf16.msra.mxu0 %v6214
    %7639 = vmatpush.bf16.msra.mxu0 %v6210
    %7640 = vmatpush.bf16.msra.mxu0 %v6206
    %7641 = vmatmul.bf16.gmra.mxu0 %v2923
    %v7642 = vpop.f32.mrf.mxu0
    %v7643 = vadd.f32 %v7630, %v7642
    %v7644 = vpop.f32.mrf.mxu0
    %7645 = vdwg.mxu0
    %7646 = vmatpush.bf16.msra.mxu0 %v6266
    %7647 = vmatpush.bf16.msra.mxu0 %v6262
    %7648 = vmatpush.bf16.msra.mxu0 %v6258
    %7649 = vmatpush.bf16.msra.mxu0 %v6254
    %7650 = vmatpush.bf16.msra.mxu0 %v6250
    %7651 = vmatpush.bf16.msra.mxu0 %v6246
    %7652 = vmatpush.bf16.msra.mxu0 %v6242
    %7653 = vmatpush.bf16.msra.mxu0 %v6238
    %7654 = vmatmul.bf16.gmra.mxu0 %v2924
    %v7655 = vpop.f32.mrf.mxu0
    %v7656 = vadd.f32 %v7643, %v7655
    %v7657 = vpop.f32.mrf.mxu0
    %7658 = vdwg.mxu0
    %7659 = vmatpush.bf16.msra.mxu0 %v6298
    %7660 = vmatpush.bf16.msra.mxu0 %v6294
    %7661 = vmatpush.bf16.msra.mxu0 %v6290
    %7662 = vmatpush.bf16.msra.mxu0 %v6286
    %7663 = vmatpush.bf16.msra.mxu0 %v6282
    %7664 = vmatpush.bf16.msra.mxu0 %v6278
    %7665 = vmatpush.bf16.msra.mxu0 %v6274
    %7666 = vmatpush.bf16.msra.mxu0 %v6270
    %7667 = vmatmul.bf16.gmra.mxu0 %v2925
    %v7668 = vpop.f32.mrf.mxu0
    %v7669 = vadd.f32 %v7656, %v7668
    %v7670 = vpop.f32.mrf.mxu0
    %7671 = vdwg.mxu0
    %7672 = vmatpush.bf16.msra.mxu0 %v6330
    %7673 = vmatpush.bf16.msra.mxu0 %v6326
    %7674 = vmatpush.bf16.msra.mxu0 %v6322
    %7675 = vmatpush.bf16.msra.mxu0 %v6318
    %7676 = vmatpush.bf16.msra.mxu0 %v6314
    %7677 = vmatpush.bf16.msra.mxu0 %v6310
    %7678 = vmatpush.bf16.msra.mxu0 %v6306
    %7679 = vmatpush.bf16.msra.mxu0 %v6302
    %7680 = vmatmul.bf16.gmra.mxu0 %v2926
    %v7681 = vpop.f32.mrf.mxu0
    %v7682 = vadd.f32 %v7669, %v7681
    %v7683 = vpop.f32.mrf.mxu0
    %7684 = vdwg.mxu0
    %7685 = vmatpush.bf16.msra.mxu0 %v6362
    %7686 = vmatpush.bf16.msra.mxu0 %v6358
    %7687 = vmatpush.bf16.msra.mxu0 %v6354
    %7688 = vmatpush.bf16.msra.mxu0 %v6350
    %7689 = vmatpush.bf16.msra.mxu0 %v6346
    %7690 = vmatpush.bf16.msra.mxu0 %v6342
    %7691 = vmatpush.bf16.msra.mxu0 %v6338
    %7692 = vmatpush.bf16.msra.mxu0 %v6334
    %7693 = vmatmul.bf16.gmra.mxu0 %v2927
    %v7694 = vpop.f32.mrf.mxu0
    %v7695 = vadd.f32 %v7682, %v7694
    %v7696 = vpop.f32.mrf.mxu0
    %7697 = vdwg.mxu0
    %7698 = vmatpush.bf16.msra.mxu0 %v6394
    %7699 = vmatpush.bf16.msra.mxu0 %v6390
    %7700 = vmatpush.bf16.msra.mxu0 %v6386
    %7701 = vmatpush.bf16.msra.mxu0 %v6382
    %7702 = vmatpush.bf16.msra.mxu0 %v6378
    %7703 = vmatpush.bf16.msra.mxu0 %v6374
    %7704 = vmatpush.bf16.msra.mxu0 %v6370
    %7705 = vmatpush.bf16.msra.mxu0 %v6366
    %7706 = vmatmul.bf16.gmra.mxu0 %v2928
    %v7707 = vpop.f32.mrf.mxu0
    %v7708 = vadd.f32 %v7695, %v7707
    %v7709 = vpop.f32.mrf.mxu0
    %7710 = vdwg.mxu0
    %7711 = vmatpush.bf16.msra.mxu0 %v6426
    %7712 = vmatpush.bf16.msra.mxu0 %v6422
    %7713 = vmatpush.bf16.msra.mxu0 %v6418
    %7714 = vmatpush.bf16.msra.mxu0 %v6414
    %7715 = vmatpush.bf16.msra.mxu0 %v6410
    %7716 = vmatpush.bf16.msra.mxu0 %v6406
    %7717 = vmatpush.bf16.msra.mxu0 %v6402
    %7718 = vmatpush.bf16.msra.mxu0 %v6398
    %7719 = vmatmul.bf16.gmra.mxu0 %v2929
    %v7720 = vpop.f32.mrf.mxu0
    %v7721 = vadd.f32 %v7708, %v7720
    %v7722 = vpop.f32.mrf.mxu0
    %7723 = vdwg.mxu0
    %7724 = vmatpush.bf16.msra.mxu0 %v6458
    %7725 = vmatpush.bf16.msra.mxu0 %v6454
    %7726 = vmatpush.bf16.msra.mxu0 %v6450
    %7727 = vmatpush.bf16.msra.mxu0 %v6446
    %7728 = vmatpush.bf16.msra.mxu0 %v6442
    %7729 = vmatpush.bf16.msra.mxu0 %v6438
    %7730 = vmatpush.bf16.msra.mxu0 %v6434
    %7731 = vmatpush.bf16.msra.mxu0 %v6430
    %7732 = vmatmul.bf16.gmra.mxu0 %v2930
    %v7733 = vpop.f32.mrf.mxu0
    %v7734 = vadd.f32 %v7721, %v7733
    %v7735 = vpop.f32.mrf.mxu0
    %7736 = vdwg.mxu0
    %7737 = vmatpush.bf16.msra.mxu0 %v5787
    %7738 = vmatpush.bf16.msra.mxu0 %v5783
    %7739 = vmatpush.bf16.msra.mxu0 %v5779
    %7740 = vmatpush.bf16.msra.mxu0 %v5775
    %7741 = vmatpush.bf16.msra.mxu0 %v5771
    %7742 = vmatpush.bf16.msra.mxu0 %v5767
    %7743 = vmatpush.bf16.msra.mxu0 %v5763
    %7744 = vmatpush.bf16.msra.mxu0 %v5759
    %7745 = vmatmul.bf16.gmra.mxu0 %v2909
    %v7746 = vpop.f32.mrf.mxu0
    %v7747 = vadd.f32 %v3639, %v7746
    %v7748 = vpop.f32.mrf.mxu0
    %7749 = vdwg.mxu0
    %7750 = vmatpush.bf16.msra.mxu0 %v5819
    %7751 = vmatpush.bf16.msra.mxu0 %v5815
    %7752 = vmatpush.bf16.msra.mxu0 %v5811
    %7753 = vmatpush.bf16.msra.mxu0 %v5807
    %7754 = vmatpush.bf16.msra.mxu0 %v5803
    %7755 = vmatpush.bf16.msra.mxu0 %v5799
    %7756 = vmatpush.bf16.msra.mxu0 %v5795
    %7757 = vmatpush.bf16.msra.mxu0 %v5791
    %7758 = vmatmul.bf16.gmra.mxu0 %v2910
    %v7759 = vpop.f32.mrf.mxu0
    %v7760 = vadd.f32 %v7747, %v7759
    %v7761 = vpop.f32.mrf.mxu0
    %7762 = vdwg.mxu0
    %7763 = vmatpush.bf16.msra.mxu0 %v5851
    %7764 = vmatpush.bf16.msra.mxu0 %v5847
    %7765 = vmatpush.bf16.msra.mxu0 %v5843
    %7766 = vmatpush.bf16.msra.mxu0 %v5839
    %7767 = vmatpush.bf16.msra.mxu0 %v5835
    %7768 = vmatpush.bf16.msra.mxu0 %v5831
    %7769 = vmatpush.bf16.msra.mxu0 %v5827
    %7770 = vmatpush.bf16.msra.mxu0 %v5823
    %7771 = vmatmul.bf16.gmra.mxu0 %v2911
    %v7772 = vpop.f32.mrf.mxu0
    %v7773 = vadd.f32 %v7760, %v7772
    %v7774 = vpop.f32.mrf.mxu0
    %7775 = vdwg.mxu0
    %7776 = vmatpush.bf16.msra.mxu0 %v5883
    %7777 = vmatpush.bf16.msra.mxu0 %v5879
    %7778 = vmatpush.bf16.msra.mxu0 %v5875
    %7779 = vmatpush.bf16.msra.mxu0 %v5871
    %7780 = vmatpush.bf16.msra.mxu0 %v5867
    %7781 = vmatpush.bf16.msra.mxu0 %v5863
    %7782 = vmatpush.bf16.msra.mxu0 %v5859
    %7783 = vmatpush.bf16.msra.mxu0 %v5855
    %7784 = vmatmul.bf16.gmra.mxu0 %v2912
    %v7785 = vpop.f32.mrf.mxu0
    %v7786 = vadd.f32 %v7773, %v7785
    %v7787 = vpop.f32.mrf.mxu0
    %7788 = vdwg.mxu0
    %7789 = vmatpush.bf16.msra.mxu0 %v5915
    %7790 = vmatpush.bf16.msra.mxu0 %v5911
    %7791 = vmatpush.bf16.msra.mxu0 %v5907
    %7792 = vmatpush.bf16.msra.mxu0 %v5903
    %7793 = vmatpush.bf16.msra.mxu0 %v5899
    %7794 = vmatpush.bf16.msra.mxu0 %v5895
    %7795 = vmatpush.bf16.msra.mxu0 %v5891
    %7796 = vmatpush.bf16.msra.mxu0 %v5887
    %7797 = vmatmul.bf16.gmra.mxu0 %v2913
    %v7798 = vpop.f32.mrf.mxu0
    %v7799 = vadd.f32 %v7786, %v7798
    %v7800 = vpop.f32.mrf.mxu0
    %7801 = vdwg.mxu0
    %7802 = vmatpush.bf16.msra.mxu0 %v5947
    %7803 = vmatpush.bf16.msra.mxu0 %v5943
    %7804 = vmatpush.bf16.msra.mxu0 %v5939
    %7805 = vmatpush.bf16.msra.mxu0 %v5935
    %7806 = vmatpush.bf16.msra.mxu0 %v5931
    %7807 = vmatpush.bf16.msra.mxu0 %v5927
    %7808 = vmatpush.bf16.msra.mxu0 %v5923
    %7809 = vmatpush.bf16.msra.mxu0 %v5919
    %7810 = vmatmul.bf16.gmra.mxu0 %v2914
    %v7811 = vpop.f32.mrf.mxu0
    %v7812 = vadd.f32 %v7799, %v7811
    %v7813 = vpop.f32.mrf.mxu0
    %7814 = vdwg.mxu0
    %7815 = vmatpush.bf16.msra.mxu0 %v5979
    %7816 = vmatpush.bf16.msra.mxu0 %v5975
    %7817 = vmatpush.bf16.msra.mxu0 %v5971
    %7818 = vmatpush.bf16.msra.mxu0 %v5967
    %7819 = vmatpush.bf16.msra.mxu0 %v5963
    %7820 = vmatpush.bf16.msra.mxu0 %v5959
    %7821 = vmatpush.bf16.msra.mxu0 %v5955
    %7822 = vmatpush.bf16.msra.mxu0 %v5951
    %7823 = vmatmul.bf16.gmra.mxu0 %v2915
    %v7824 = vpop.f32.mrf.mxu0
    %v7825 = vadd.f32 %v7812, %v7824
    %v7826 = vpop.f32.mrf.mxu0
    %7827 = vdwg.mxu0
    %7828 = vmatpush.bf16.msra.mxu0 %v6011
    %7829 = vmatpush.bf16.msra.mxu0 %v6007
    %7830 = vmatpush.bf16.msra.mxu0 %v6003
    %7831 = vmatpush.bf16.msra.mxu0 %v5999
    %7832 = vmatpush.bf16.msra.mxu0 %v5995
    %7833 = vmatpush.bf16.msra.mxu0 %v5991
    %7834 = vmatpush.bf16.msra.mxu0 %v5987
    %7835 = vmatpush.bf16.msra.mxu0 %v5983
    %7836 = vmatmul.bf16.gmra.mxu0 %v2916
    %v7837 = vpop.f32.mrf.mxu0
    %v7838 = vadd.f32 %v7825, %v7837
    %v7839 = vpop.f32.mrf.mxu0
    %7840 = vdwg.mxu0
    %7841 = vmatpush.bf16.msra.mxu0 %v6043
    %7842 = vmatpush.bf16.msra.mxu0 %v6039
    %7843 = vmatpush.bf16.msra.mxu0 %v6035
    %7844 = vmatpush.bf16.msra.mxu0 %v6031
    %7845 = vmatpush.bf16.msra.mxu0 %v6027
    %7846 = vmatpush.bf16.msra.mxu0 %v6023
    %7847 = vmatpush.bf16.msra.mxu0 %v6019
    %7848 = vmatpush.bf16.msra.mxu0 %v6015
    %7849 = vmatmul.bf16.gmra.mxu0 %v2917
    %v7850 = vpop.f32.mrf.mxu0
    %v7851 = vadd.f32 %v7838, %v7850
    %v7852 = vpop.f32.mrf.mxu0
    %7853 = vdwg.mxu0
    %7854 = vmatpush.bf16.msra.mxu0 %v6075
    %7855 = vmatpush.bf16.msra.mxu0 %v6071
    %7856 = vmatpush.bf16.msra.mxu0 %v6067
    %7857 = vmatpush.bf16.msra.mxu0 %v6063
    %7858 = vmatpush.bf16.msra.mxu0 %v6059
    %7859 = vmatpush.bf16.msra.mxu0 %v6055
    %7860 = vmatpush.bf16.msra.mxu0 %v6051
    %7861 = vmatpush.bf16.msra.mxu0 %v6047
    %7862 = vmatmul.bf16.gmra.mxu0 %v2918
    %v7863 = vpop.f32.mrf.mxu0
    %v7864 = vadd.f32 %v7851, %v7863
    %v7865 = vpop.f32.mrf.mxu0
    %7866 = vdwg.mxu0
    %7867 = vmatpush.bf16.msra.mxu0 %v6107
    %7868 = vmatpush.bf16.msra.mxu0 %v6103
    %7869 = vmatpush.bf16.msra.mxu0 %v6099
    %7870 = vmatpush.bf16.msra.mxu0 %v6095
    %7871 = vmatpush.bf16.msra.mxu0 %v6091
    %7872 = vmatpush.bf16.msra.mxu0 %v6087
    %7873 = vmatpush.bf16.msra.mxu0 %v6083
    %7874 = vmatpush.bf16.msra.mxu0 %v6079
    %7875 = vmatmul.bf16.gmra.mxu0 %v2919
    %v7876 = vpop.f32.mrf.mxu0
    %v7877 = vadd.f32 %v7864, %v7876
    %v7878 = vpop.f32.mrf.mxu0
    %7879 = vdwg.mxu0
    %7880 = vmatpush.bf16.msra.mxu0 %v6139
    %7881 = vmatpush.bf16.msra.mxu0 %v6135
    %7882 = vmatpush.bf16.msra.mxu0 %v6131
    %7883 = vmatpush.bf16.msra.mxu0 %v6127
    %7884 = vmatpush.bf16.msra.mxu0 %v6123
    %7885 = vmatpush.bf16.msra.mxu0 %v6119
    %7886 = vmatpush.bf16.msra.mxu0 %v6115
    %7887 = vmatpush.bf16.msra.mxu0 %v6111
    %7888 = vmatmul.bf16.gmra.mxu0 %v2920
    %v7889 = vpop.f32.mrf.mxu0
    %v7890 = vadd.f32 %v7877, %v7889
    %v7891 = vpop.f32.mrf.mxu0
    %7892 = vdwg.mxu0
    %7893 = vmatpush.bf16.msra.mxu0 %v6171
    %7894 = vmatpush.bf16.msra.mxu0 %v6167
    %7895 = vmatpush.bf16.msra.mxu0 %v6163
    %7896 = vmatpush.bf16.msra.mxu0 %v6159
    %7897 = vmatpush.bf16.msra.mxu0 %v6155
    %7898 = vmatpush.bf16.msra.mxu0 %v6151
    %7899 = vmatpush.bf16.msra.mxu0 %v6147
    %7900 = vmatpush.bf16.msra.mxu0 %v6143
    %7901 = vmatmul.bf16.gmra.mxu0 %v2921
    %v7902 = vpop.f32.mrf.mxu0
    %v7903 = vadd.f32 %v7890, %v7902
    %v7904 = vpop.f32.mrf.mxu0
    %7905 = vdwg.mxu0
    %7906 = vmatpush.bf16.msra.mxu0 %v6203
    %7907 = vmatpush.bf16.msra.mxu0 %v6199
    %7908 = vmatpush.bf16.msra.mxu0 %v6195
    %7909 = vmatpush.bf16.msra.mxu0 %v6191
    %7910 = vmatpush.bf16.msra.mxu0 %v6187
    %7911 = vmatpush.bf16.msra.mxu0 %v6183
    %7912 = vmatpush.bf16.msra.mxu0 %v6179
    %7913 = vmatpush.bf16.msra.mxu0 %v6175
    %7914 = vmatmul.bf16.gmra.mxu0 %v2922
    %v7915 = vpop.f32.mrf.mxu0
    %v7916 = vadd.f32 %v7903, %v7915
    %v7917 = vpop.f32.mrf.mxu0
    %7918 = vdwg.mxu0
    %7919 = vmatpush.bf16.msra.mxu0 %v6235
    %7920 = vmatpush.bf16.msra.mxu0 %v6231
    %7921 = vmatpush.bf16.msra.mxu0 %v6227
    %7922 = vmatpush.bf16.msra.mxu0 %v6223
    %7923 = vmatpush.bf16.msra.mxu0 %v6219
    %7924 = vmatpush.bf16.msra.mxu0 %v6215
    %7925 = vmatpush.bf16.msra.mxu0 %v6211
    %7926 = vmatpush.bf16.msra.mxu0 %v6207
    %7927 = vmatmul.bf16.gmra.mxu0 %v2923
    %v7928 = vpop.f32.mrf.mxu0
    %v7929 = vadd.f32 %v7916, %v7928
    %v7930 = vpop.f32.mrf.mxu0
    %7931 = vdwg.mxu0
    %7932 = vmatpush.bf16.msra.mxu0 %v6267
    %7933 = vmatpush.bf16.msra.mxu0 %v6263
    %7934 = vmatpush.bf16.msra.mxu0 %v6259
    %7935 = vmatpush.bf16.msra.mxu0 %v6255
    %7936 = vmatpush.bf16.msra.mxu0 %v6251
    %7937 = vmatpush.bf16.msra.mxu0 %v6247
    %7938 = vmatpush.bf16.msra.mxu0 %v6243
    %7939 = vmatpush.bf16.msra.mxu0 %v6239
    %7940 = vmatmul.bf16.gmra.mxu0 %v2924
    %v7941 = vpop.f32.mrf.mxu0
    %v7942 = vadd.f32 %v7929, %v7941
    %v7943 = vpop.f32.mrf.mxu0
    %7944 = vdwg.mxu0
    %7945 = vmatpush.bf16.msra.mxu0 %v6299
    %7946 = vmatpush.bf16.msra.mxu0 %v6295
    %7947 = vmatpush.bf16.msra.mxu0 %v6291
    %7948 = vmatpush.bf16.msra.mxu0 %v6287
    %7949 = vmatpush.bf16.msra.mxu0 %v6283
    %7950 = vmatpush.bf16.msra.mxu0 %v6279
    %7951 = vmatpush.bf16.msra.mxu0 %v6275
    %7952 = vmatpush.bf16.msra.mxu0 %v6271
    %7953 = vmatmul.bf16.gmra.mxu0 %v2925
    %v7954 = vpop.f32.mrf.mxu0
    %v7955 = vadd.f32 %v7942, %v7954
    %v7956 = vpop.f32.mrf.mxu0
    %7957 = vdwg.mxu0
    %7958 = vmatpush.bf16.msra.mxu0 %v6331
    %7959 = vmatpush.bf16.msra.mxu0 %v6327
    %7960 = vmatpush.bf16.msra.mxu0 %v6323
    %7961 = vmatpush.bf16.msra.mxu0 %v6319
    %7962 = vmatpush.bf16.msra.mxu0 %v6315
    %7963 = vmatpush.bf16.msra.mxu0 %v6311
    %7964 = vmatpush.bf16.msra.mxu0 %v6307
    %7965 = vmatpush.bf16.msra.mxu0 %v6303
    %7966 = vmatmul.bf16.gmra.mxu0 %v2926
    %v7967 = vpop.f32.mrf.mxu0
    %v7968 = vadd.f32 %v7955, %v7967
    %v7969 = vpop.f32.mrf.mxu0
    %7970 = vdwg.mxu0
    %7971 = vmatpush.bf16.msra.mxu0 %v6363
    %7972 = vmatpush.bf16.msra.mxu0 %v6359
    %7973 = vmatpush.bf16.msra.mxu0 %v6355
    %7974 = vmatpush.bf16.msra.mxu0 %v6351
    %7975 = vmatpush.bf16.msra.mxu0 %v6347
    %7976 = vmatpush.bf16.msra.mxu0 %v6343
    %7977 = vmatpush.bf16.msra.mxu0 %v6339
    %7978 = vmatpush.bf16.msra.mxu0 %v6335
    %7979 = vmatmul.bf16.gmra.mxu0 %v2927
    %v7980 = vpop.f32.mrf.mxu0
    %v7981 = vadd.f32 %v7968, %v7980
    %v7982 = vpop.f32.mrf.mxu0
    %7983 = vdwg.mxu0
    %7984 = vmatpush.bf16.msra.mxu0 %v6395
    %7985 = vmatpush.bf16.msra.mxu0 %v6391
    %7986 = vmatpush.bf16.msra.mxu0 %v6387
    %7987 = vmatpush.bf16.msra.mxu0 %v6383
    %7988 = vmatpush.bf16.msra.mxu0 %v6379
    %7989 = vmatpush.bf16.msra.mxu0 %v6375
    %7990 = vmatpush.bf16.msra.mxu0 %v6371
    %7991 = vmatpush.bf16.msra.mxu0 %v6367
    %7992 = vmatmul.bf16.gmra.mxu0 %v2928
    %v7993 = vpop.f32.mrf.mxu0
    %v7994 = vadd.f32 %v7981, %v7993
    %v7995 = vpop.f32.mrf.mxu0
    %7996 = vdwg.mxu0
    %7997 = vmatpush.bf16.msra.mxu0 %v6427
    %7998 = vmatpush.bf16.msra.mxu0 %v6423
    %7999 = vmatpush.bf16.msra.mxu0 %v6419
    %8000 = vmatpush.bf16.msra.mxu0 %v6415
    %8001 = vmatpush.bf16.msra.mxu0 %v6411
    %8002 = vmatpush.bf16.msra.mxu0 %v6407
    %8003 = vmatpush.bf16.msra.mxu0 %v6403
    %8004 = vmatpush.bf16.msra.mxu0 %v6399
    %8005 = vmatmul.bf16.gmra.mxu0 %v2929
    %v8006 = vpop.f32.mrf.mxu0
    %v8007 = vadd.f32 %v7994, %v8006
    %v8008 = vpop.f32.mrf.mxu0
    %8009 = vdwg.mxu0
    %8010 = vmatpush.bf16.msra.mxu0 %v6459
    %8011 = vmatpush.bf16.msra.mxu0 %v6455
    %8012 = vmatpush.bf16.msra.mxu0 %v6451
    %8013 = vmatpush.bf16.msra.mxu0 %v6447
    %8014 = vmatpush.bf16.msra.mxu0 %v6443
    %8015 = vmatpush.bf16.msra.mxu0 %v6439
    %8016 = vmatpush.bf16.msra.mxu0 %v6435
    %8017 = vmatpush.bf16.msra.mxu0 %v6431
    %8018 = vmatmul.bf16.gmra.mxu0 %v2930
    %v8019 = vpop.f32.mrf.mxu0
    %v8020 = vadd.f32 %v8007, %v8019
    %v8021 = vpop.f32.mrf.mxu0
    %8022 = vdwg.mxu0
    %8023 = vmatpush.bf16.msra.mxu0 %v5788
    %8024 = vmatpush.bf16.msra.mxu0 %v5784
    %8025 = vmatpush.bf16.msra.mxu0 %v5780
    %8026 = vmatpush.bf16.msra.mxu0 %v5776
    %8027 = vmatpush.bf16.msra.mxu0 %v5772
    %8028 = vmatpush.bf16.msra.mxu0 %v5768
    %8029 = vmatpush.bf16.msra.mxu0 %v5764
    %8030 = vmatpush.bf16.msra.mxu0 %v5760
    %8031 = vmatmul.bf16.gmra.mxu0 %v2909
    %v8032 = vpop.f32.mrf.mxu0
    %v8033 = vadd.f32 %v3640, %v8032
    %v8034 = vpop.f32.mrf.mxu0
    %8035 = vdwg.mxu0
    %8036 = vmatpush.bf16.msra.mxu0 %v5820
    %8037 = vmatpush.bf16.msra.mxu0 %v5816
    %8038 = vmatpush.bf16.msra.mxu0 %v5812
    %8039 = vmatpush.bf16.msra.mxu0 %v5808
    %8040 = vmatpush.bf16.msra.mxu0 %v5804
    %8041 = vmatpush.bf16.msra.mxu0 %v5800
    %8042 = vmatpush.bf16.msra.mxu0 %v5796
    %8043 = vmatpush.bf16.msra.mxu0 %v5792
    %8044 = vmatmul.bf16.gmra.mxu0 %v2910
    %v8045 = vpop.f32.mrf.mxu0
    %v8046 = vadd.f32 %v8033, %v8045
    %v8047 = vpop.f32.mrf.mxu0
    %8048 = vdwg.mxu0
    %8049 = vmatpush.bf16.msra.mxu0 %v5852
    %8050 = vmatpush.bf16.msra.mxu0 %v5848
    %8051 = vmatpush.bf16.msra.mxu0 %v5844
    %8052 = vmatpush.bf16.msra.mxu0 %v5840
    %8053 = vmatpush.bf16.msra.mxu0 %v5836
    %8054 = vmatpush.bf16.msra.mxu0 %v5832
    %8055 = vmatpush.bf16.msra.mxu0 %v5828
    %8056 = vmatpush.bf16.msra.mxu0 %v5824
    %8057 = vmatmul.bf16.gmra.mxu0 %v2911
    %v8058 = vpop.f32.mrf.mxu0
    %v8059 = vadd.f32 %v8046, %v8058
    %v8060 = vpop.f32.mrf.mxu0
    %8061 = vdwg.mxu0
    %8062 = vmatpush.bf16.msra.mxu0 %v5884
    %8063 = vmatpush.bf16.msra.mxu0 %v5880
    %8064 = vmatpush.bf16.msra.mxu0 %v5876
    %8065 = vmatpush.bf16.msra.mxu0 %v5872
    %8066 = vmatpush.bf16.msra.mxu0 %v5868
    %8067 = vmatpush.bf16.msra.mxu0 %v5864
    %8068 = vmatpush.bf16.msra.mxu0 %v5860
    %8069 = vmatpush.bf16.msra.mxu0 %v5856
    %8070 = vmatmul.bf16.gmra.mxu0 %v2912
    %v8071 = vpop.f32.mrf.mxu0
    %v8072 = vadd.f32 %v8059, %v8071
    %v8073 = vpop.f32.mrf.mxu0
    %8074 = vdwg.mxu0
    %8075 = vmatpush.bf16.msra.mxu0 %v5916
    %8076 = vmatpush.bf16.msra.mxu0 %v5912
    %8077 = vmatpush.bf16.msra.mxu0 %v5908
    %8078 = vmatpush.bf16.msra.mxu0 %v5904
    %8079 = vmatpush.bf16.msra.mxu0 %v5900
    %8080 = vmatpush.bf16.msra.mxu0 %v5896
    %8081 = vmatpush.bf16.msra.mxu0 %v5892
    %8082 = vmatpush.bf16.msra.mxu0 %v5888
    %8083 = vmatmul.bf16.gmra.mxu0 %v2913
    %v8084 = vpop.f32.mrf.mxu0
    %v8085 = vadd.f32 %v8072, %v8084
    %v8086 = vpop.f32.mrf.mxu0
    %8087 = vdwg.mxu0
    %8088 = vmatpush.bf16.msra.mxu0 %v5948
    %8089 = vmatpush.bf16.msra.mxu0 %v5944
    %8090 = vmatpush.bf16.msra.mxu0 %v5940
    %8091 = vmatpush.bf16.msra.mxu0 %v5936
    %8092 = vmatpush.bf16.msra.mxu0 %v5932
    %8093 = vmatpush.bf16.msra.mxu0 %v5928
    %8094 = vmatpush.bf16.msra.mxu0 %v5924
    %8095 = vmatpush.bf16.msra.mxu0 %v5920
    %8096 = vmatmul.bf16.gmra.mxu0 %v2914
    %v8097 = vpop.f32.mrf.mxu0
    %v8098 = vadd.f32 %v8085, %v8097
    %v8099 = vpop.f32.mrf.mxu0
    %8100 = vdwg.mxu0
    %8101 = vmatpush.bf16.msra.mxu0 %v5980
    %8102 = vmatpush.bf16.msra.mxu0 %v5976
    %8103 = vmatpush.bf16.msra.mxu0 %v5972
    %8104 = vmatpush.bf16.msra.mxu0 %v5968
    %8105 = vmatpush.bf16.msra.mxu0 %v5964
    %8106 = vmatpush.bf16.msra.mxu0 %v5960
    %8107 = vmatpush.bf16.msra.mxu0 %v5956
    %8108 = vmatpush.bf16.msra.mxu0 %v5952
    %8109 = vmatmul.bf16.gmra.mxu0 %v2915
    %v8110 = vpop.f32.mrf.mxu0
    %v8111 = vadd.f32 %v8098, %v8110
    %v8112 = vpop.f32.mrf.mxu0
    %8113 = vdwg.mxu0
    %8114 = vmatpush.bf16.msra.mxu0 %v6012
    %8115 = vmatpush.bf16.msra.mxu0 %v6008
    %8116 = vmatpush.bf16.msra.mxu0 %v6004
    %8117 = vmatpush.bf16.msra.mxu0 %v6000
    %8118 = vmatpush.bf16.msra.mxu0 %v5996
    %8119 = vmatpush.bf16.msra.mxu0 %v5992
    %8120 = vmatpush.bf16.msra.mxu0 %v5988
    %8121 = vmatpush.bf16.msra.mxu0 %v5984
    %8122 = vmatmul.bf16.gmra.mxu0 %v2916
    %v8123 = vpop.f32.mrf.mxu0
    %v8124 = vadd.f32 %v8111, %v8123
    %v8125 = vpop.f32.mrf.mxu0
    %8126 = vdwg.mxu0
    %8127 = vmatpush.bf16.msra.mxu0 %v6044
    %8128 = vmatpush.bf16.msra.mxu0 %v6040
    %8129 = vmatpush.bf16.msra.mxu0 %v6036
    %8130 = vmatpush.bf16.msra.mxu0 %v6032
    %8131 = vmatpush.bf16.msra.mxu0 %v6028
    %8132 = vmatpush.bf16.msra.mxu0 %v6024
    %8133 = vmatpush.bf16.msra.mxu0 %v6020
    %8134 = vmatpush.bf16.msra.mxu0 %v6016
    %8135 = vmatmul.bf16.gmra.mxu0 %v2917
    %v8136 = vpop.f32.mrf.mxu0
    %v8137 = vadd.f32 %v8124, %v8136
    %v8138 = vpop.f32.mrf.mxu0
    %8139 = vdwg.mxu0
    %8140 = vmatpush.bf16.msra.mxu0 %v6076
    %8141 = vmatpush.bf16.msra.mxu0 %v6072
    %8142 = vmatpush.bf16.msra.mxu0 %v6068
    %8143 = vmatpush.bf16.msra.mxu0 %v6064
    %8144 = vmatpush.bf16.msra.mxu0 %v6060
    %8145 = vmatpush.bf16.msra.mxu0 %v6056
    %8146 = vmatpush.bf16.msra.mxu0 %v6052
    %8147 = vmatpush.bf16.msra.mxu0 %v6048
    %8148 = vmatmul.bf16.gmra.mxu0 %v2918
    %v8149 = vpop.f32.mrf.mxu0
    %v8150 = vadd.f32 %v8137, %v8149
    %v8151 = vpop.f32.mrf.mxu0
    %8152 = vdwg.mxu0
    %8153 = vmatpush.bf16.msra.mxu0 %v6108
    %8154 = vmatpush.bf16.msra.mxu0 %v6104
    %8155 = vmatpush.bf16.msra.mxu0 %v6100
    %8156 = vmatpush.bf16.msra.mxu0 %v6096
    %8157 = vmatpush.bf16.msra.mxu0 %v6092
    %8158 = vmatpush.bf16.msra.mxu0 %v6088
    %8159 = vmatpush.bf16.msra.mxu0 %v6084
    %8160 = vmatpush.bf16.msra.mxu0 %v6080
    %8161 = vmatmul.bf16.gmra.mxu0 %v2919
    %v8162 = vpop.f32.mrf.mxu0
    %v8163 = vadd.f32 %v8150, %v8162
    %v8164 = vpop.f32.mrf.mxu0
    %8165 = vdwg.mxu0
    %8166 = vmatpush.bf16.msra.mxu0 %v6140
    %8167 = vmatpush.bf16.msra.mxu0 %v6136
    %8168 = vmatpush.bf16.msra.mxu0 %v6132
    %8169 = vmatpush.bf16.msra.mxu0 %v6128
    %8170 = vmatpush.bf16.msra.mxu0 %v6124
    %8171 = vmatpush.bf16.msra.mxu0 %v6120
    %8172 = vmatpush.bf16.msra.mxu0 %v6116
    %8173 = vmatpush.bf16.msra.mxu0 %v6112
    %8174 = vmatmul.bf16.gmra.mxu0 %v2920
    %v8175 = vpop.f32.mrf.mxu0
    %v8176 = vadd.f32 %v8163, %v8175
    %v8177 = vpop.f32.mrf.mxu0
    %8178 = vdwg.mxu0
    %8179 = vmatpush.bf16.msra.mxu0 %v6172
    %8180 = vmatpush.bf16.msra.mxu0 %v6168
    %8181 = vmatpush.bf16.msra.mxu0 %v6164
    %8182 = vmatpush.bf16.msra.mxu0 %v6160
    %8183 = vmatpush.bf16.msra.mxu0 %v6156
    %8184 = vmatpush.bf16.msra.mxu0 %v6152
    %8185 = vmatpush.bf16.msra.mxu0 %v6148
    %8186 = vmatpush.bf16.msra.mxu0 %v6144
    %8187 = vmatmul.bf16.gmra.mxu0 %v2921
    %v8188 = vpop.f32.mrf.mxu0
    %v8189 = vadd.f32 %v8176, %v8188
    %v8190 = vpop.f32.mrf.mxu0
    %8191 = vdwg.mxu0
    %8192 = vmatpush.bf16.msra.mxu0 %v6204
    %8193 = vmatpush.bf16.msra.mxu0 %v6200
    %8194 = vmatpush.bf16.msra.mxu0 %v6196
    %8195 = vmatpush.bf16.msra.mxu0 %v6192
    %8196 = vmatpush.bf16.msra.mxu0 %v6188
    %8197 = vmatpush.bf16.msra.mxu0 %v6184
    %8198 = vmatpush.bf16.msra.mxu0 %v6180
    %8199 = vmatpush.bf16.msra.mxu0 %v6176
    %8200 = vmatmul.bf16.gmra.mxu0 %v2922
    %v8201 = vpop.f32.mrf.mxu0
    %v8202 = vadd.f32 %v8189, %v8201
    %v8203 = vpop.f32.mrf.mxu0
    %8204 = vdwg.mxu0
    %8205 = vmatpush.bf16.msra.mxu0 %v6236
    %8206 = vmatpush.bf16.msra.mxu0 %v6232
    %8207 = vmatpush.bf16.msra.mxu0 %v6228
    %8208 = vmatpush.bf16.msra.mxu0 %v6224
    %8209 = vmatpush.bf16.msra.mxu0 %v6220
    %8210 = vmatpush.bf16.msra.mxu0 %v6216
    %8211 = vmatpush.bf16.msra.mxu0 %v6212
    %8212 = vmatpush.bf16.msra.mxu0 %v6208
    %8213 = vmatmul.bf16.gmra.mxu0 %v2923
    %v8214 = vpop.f32.mrf.mxu0
    %v8215 = vadd.f32 %v8202, %v8214
    %v8216 = vpop.f32.mrf.mxu0
    %8217 = vdwg.mxu0
    %8218 = vmatpush.bf16.msra.mxu0 %v6268
    %8219 = vmatpush.bf16.msra.mxu0 %v6264
    %8220 = vmatpush.bf16.msra.mxu0 %v6260
    %8221 = vmatpush.bf16.msra.mxu0 %v6256
    %8222 = vmatpush.bf16.msra.mxu0 %v6252
    %8223 = vmatpush.bf16.msra.mxu0 %v6248
    %8224 = vmatpush.bf16.msra.mxu0 %v6244
    %8225 = vmatpush.bf16.msra.mxu0 %v6240
    %8226 = vmatmul.bf16.gmra.mxu0 %v2924
    %v8227 = vpop.f32.mrf.mxu0
    %v8228 = vadd.f32 %v8215, %v8227
    %v8229 = vpop.f32.mrf.mxu0
    %8230 = vdwg.mxu0
    %8231 = vmatpush.bf16.msra.mxu0 %v6300
    %8232 = vmatpush.bf16.msra.mxu0 %v6296
    %8233 = vmatpush.bf16.msra.mxu0 %v6292
    %8234 = vmatpush.bf16.msra.mxu0 %v6288
    %8235 = vmatpush.bf16.msra.mxu0 %v6284
    %8236 = vmatpush.bf16.msra.mxu0 %v6280
    %8237 = vmatpush.bf16.msra.mxu0 %v6276
    %8238 = vmatpush.bf16.msra.mxu0 %v6272
    %8239 = vmatmul.bf16.gmra.mxu0 %v2925
    %v8240 = vpop.f32.mrf.mxu0
    %v8241 = vadd.f32 %v8228, %v8240
    %v8242 = vpop.f32.mrf.mxu0
    %8243 = vdwg.mxu0
    %8244 = vmatpush.bf16.msra.mxu0 %v6332
    %8245 = vmatpush.bf16.msra.mxu0 %v6328
    %8246 = vmatpush.bf16.msra.mxu0 %v6324
    %8247 = vmatpush.bf16.msra.mxu0 %v6320
    %8248 = vmatpush.bf16.msra.mxu0 %v6316
    %8249 = vmatpush.bf16.msra.mxu0 %v6312
    %8250 = vmatpush.bf16.msra.mxu0 %v6308
    %8251 = vmatpush.bf16.msra.mxu0 %v6304
    %8252 = vmatmul.bf16.gmra.mxu0 %v2926
    %v8253 = vpop.f32.mrf.mxu0
    %v8254 = vadd.f32 %v8241, %v8253
    %v8255 = vpop.f32.mrf.mxu0
    %8256 = vdwg.mxu0
    %8257 = vmatpush.bf16.msra.mxu0 %v6364
    %8258 = vmatpush.bf16.msra.mxu0 %v6360
    %8259 = vmatpush.bf16.msra.mxu0 %v6356
    %8260 = vmatpush.bf16.msra.mxu0 %v6352
    %8261 = vmatpush.bf16.msra.mxu0 %v6348
    %8262 = vmatpush.bf16.msra.mxu0 %v6344
    %8263 = vmatpush.bf16.msra.mxu0 %v6340
    %8264 = vmatpush.bf16.msra.mxu0 %v6336
    %8265 = vmatmul.bf16.gmra.mxu0 %v2927
    %v8266 = vpop.f32.mrf.mxu0
    %v8267 = vadd.f32 %v8254, %v8266
    %v8268 = vpop.f32.mrf.mxu0
    %8269 = vdwg.mxu0
    %8270 = vmatpush.bf16.msra.mxu0 %v6396
    %8271 = vmatpush.bf16.msra.mxu0 %v6392
    %8272 = vmatpush.bf16.msra.mxu0 %v6388
    %8273 = vmatpush.bf16.msra.mxu0 %v6384
    %8274 = vmatpush.bf16.msra.mxu0 %v6380
    %8275 = vmatpush.bf16.msra.mxu0 %v6376
    %8276 = vmatpush.bf16.msra.mxu0 %v6372
    %8277 = vmatpush.bf16.msra.mxu0 %v6368
    %8278 = vmatmul.bf16.gmra.mxu0 %v2928
    %v8279 = vpop.f32.mrf.mxu0
    %v8280 = vadd.f32 %v8267, %v8279
    %v8281 = vpop.f32.mrf.mxu0
    %8282 = vdwg.mxu0
    %8283 = vmatpush.bf16.msra.mxu0 %v6428
    %8284 = vmatpush.bf16.msra.mxu0 %v6424
    %8285 = vmatpush.bf16.msra.mxu0 %v6420
    %8286 = vmatpush.bf16.msra.mxu0 %v6416
    %8287 = vmatpush.bf16.msra.mxu0 %v6412
    %8288 = vmatpush.bf16.msra.mxu0 %v6408
    %8289 = vmatpush.bf16.msra.mxu0 %v6404
    %8290 = vmatpush.bf16.msra.mxu0 %v6400
    %8291 = vmatmul.bf16.gmra.mxu0 %v2929
    %v8292 = vpop.f32.mrf.mxu0
    %v8293 = vadd.f32 %v8280, %v8292
    %v8294 = vpop.f32.mrf.mxu0
    %8295 = vdwg.mxu0
    %8296 = vmatpush.bf16.msra.mxu0 %v6460
    %8297 = vmatpush.bf16.msra.mxu0 %v6456
    %8298 = vmatpush.bf16.msra.mxu0 %v6452
    %8299 = vmatpush.bf16.msra.mxu0 %v6448
    %8300 = vmatpush.bf16.msra.mxu0 %v6444
    %8301 = vmatpush.bf16.msra.mxu0 %v6440
    %8302 = vmatpush.bf16.msra.mxu0 %v6436
    %8303 = vmatpush.bf16.msra.mxu0 %v6432
    %8304 = vmatmul.bf16.gmra.mxu0 %v2930
    %v8305 = vpop.f32.mrf.mxu0
    %v8306 = vadd.f32 %v8293, %v8305
    %v8307 = vpop.f32.mrf.mxu0
    %8308 = vdwg.mxu0
    %v8309 = vmax.f32 %v7448, 0.0
    %v8310 = vmax.f32 %v7734, 0.0
    %v8311 = vmax.f32 %v8020, 0.0
    %v8312 = vmax.f32 %v8306, 0.0
    %v8313 = vpack.c.bf16 %v8309, %v8309
    %v8314 = vpack.c.bf16 %v8310, %v8310
    %v8315 = vpack.c.bf16 %v8311, %v8311
    %v8316 = vpack.c.bf16 %v8312, %v8312
    %v8317 = vld [vmem:[#allocation9] sm:$0xf]
    %v8318 = vld [vmem:[#allocation9 + $0x4] sm:$0xf]
    %v8319 = vld [vmem:[#allocation9 + $0x8] sm:$0xf]
    %v8320 = vld [vmem:[#allocation9 + $0xc] sm:$0xf]
    %v8321 = vld [vmem:[#allocation9 + $0x10] sm:$0xf]
    %v8322 = vld [vmem:[#allocation9 + $0x14] sm:$0xf]
    %v8323 = vld [vmem:[#allocation9 + $0x18] sm:$0xf]
    %v8324 = vld [vmem:[#allocation9 + $0x1c] sm:$0xf]
    %v8325 = vld [vmem:[#allocation9 + $0x20] sm:$0xf]
    %v8326 = vld [vmem:[#allocation9 + $0x24] sm:$0xf]
    %v8327 = vld [vmem:[#allocation9 + $0x28] sm:$0xf]
    %v8328 = vld [vmem:[#allocation9 + $0x2c] sm:$0xf]
    %v8329 = vld [vmem:[#allocation9 + $0x30] sm:$0xf]
    %v8330 = vld [vmem:[#allocation9 + $0x34] sm:$0xf]
    %v8331 = vld [vmem:[#allocation9 + $0x38] sm:$0xf]
    %v8332 = vld [vmem:[#allocation9 + $0x3c] sm:$0xf]
    %v8333 = vld [vmem:[#allocation9 + $0x40] sm:$0xf]
    %v8334 = vld [vmem:[#allocation9 + $0x44] sm:$0xf]
    %v8335 = vld [vmem:[#allocation9 + $0x48] sm:$0xf]
    %v8336 = vld [vmem:[#allocation9 + $0x4c] sm:$0xf]
    %v8337 = vld [vmem:[#allocation9 + $0x50] sm:$0xf]
    %v8338 = vld [vmem:[#allocation9 + $0x54] sm:$0xf]
    %v8339 = vld [vmem:[#allocation9 + $0x58] sm:$0xf]
    %v8340 = vld [vmem:[#allocation9 + $0x5c] sm:$0xf]
    %v8341 = vld [vmem:[#allocation9 + $0x60] sm:$0xf]
    %v8342 = vld [vmem:[#allocation9 + $0x64] sm:$0xf]
    %v8343 = vld [vmem:[#allocation9 + $0x68] sm:$0xf]
    %v8344 = vld [vmem:[#allocation9 + $0x6c] sm:$0xf]
    %v8345 = vld [vmem:[#allocation9 + $0x70] sm:$0xf]
    %v8346 = vld [vmem:[#allocation9 + $0x74] sm:$0xf]
    %v8347 = vld [vmem:[#allocation9 + $0x78] sm:$0xf]
    %v8348 = vld [vmem:[#allocation9 + $0x7c] sm:$0xf]
    %v8349 = vld [vmem:[#allocation9 + $0x80] sm:$0xf]
    %v8350 = vld [vmem:[#allocation9 + $0x84] sm:$0xf]
    %v8351 = vld [vmem:[#allocation9 + $0x88] sm:$0xf]
    %v8352 = vld [vmem:[#allocation9 + $0x8c] sm:$0xf]
    %v8353 = vld [vmem:[#allocation9 + $0x90] sm:$0xf]
    %v8354 = vld [vmem:[#allocation9 + $0x94] sm:$0xf]
    %v8355 = vld [vmem:[#allocation9 + $0x98] sm:$0xf]
    %v8356 = vld [vmem:[#allocation9 + $0x9c] sm:$0xf]
    %v8357 = vld [vmem:[#allocation9 + $0xa0] sm:$0xf]
    %v8358 = vld [vmem:[#allocation9 + $0xa4] sm:$0xf]
    %v8359 = vld [vmem:[#allocation9 + $0xa8] sm:$0xf]
    %v8360 = vld [vmem:[#allocation9 + $0xac] sm:$0xf]
    %v8361 = vld [vmem:[#allocation9 + $0xb0] sm:$0xf]
    %v8362 = vld [vmem:[#allocation9 + $0xb4] sm:$0xf]
    %v8363 = vld [vmem:[#allocation9 + $0xb8] sm:$0xf]
    %v8364 = vld [vmem:[#allocation9 + $0xbc] sm:$0xf]
    %v8365 = vld [vmem:[#allocation9 + $0xc0] sm:$0xf]
    %v8366 = vld [vmem:[#allocation9 + $0xc4] sm:$0xf]
    %v8367 = vld [vmem:[#allocation9 + $0xc8] sm:$0xf]
    %v8368 = vld [vmem:[#allocation9 + $0xcc] sm:$0xf]
    %v8369 = vld [vmem:[#allocation9 + $0xd0] sm:$0xf]
    %v8370 = vld [vmem:[#allocation9 + $0xd4] sm:$0xf]
    %v8371 = vld [vmem:[#allocation9 + $0xd8] sm:$0xf]
    %v8372 = vld [vmem:[#allocation9 + $0xdc] sm:$0xf]
    %v8373 = vld [vmem:[#allocation9 + $0xe0] sm:$0xf]
    %v8374 = vld [vmem:[#allocation9 + $0xe4] sm:$0xf]
    %v8375 = vld [vmem:[#allocation9 + $0xe8] sm:$0xf]
    %v8376 = vld [vmem:[#allocation9 + $0xec] sm:$0xf]
    %v8377 = vld [vmem:[#allocation9 + $0xf0] sm:$0xf]
    %v8378 = vld [vmem:[#allocation9 + $0xf4] sm:$0xf]
    %v8379 = vld [vmem:[#allocation9 + $0xf8] sm:$0xf]
    %v8380 = vld [vmem:[#allocation9 + $0xfc] sm:$0xf]
    %v8381 = vld [vmem:[#allocation10] sm:$0x1]
    %v8383 = vperm.slane %v8381, 0
    %v8449 = vunpack.c.l.b16 %v8317
    %v8450 = vunpack.c.l.b16 %v8318
    %v8451 = vunpack.c.l.b16 %v8319
    %v8452 = vunpack.c.l.b16 %v8320
    %v8453 = vunpack.c.l.b16 %v8321
    %v8454 = vunpack.c.l.b16 %v8322
    %v8455 = vunpack.c.l.b16 %v8323
    %v8456 = vunpack.c.l.b16 %v8324
    %v8457 = vunpack.c.l.b16 %v8325
    %v8458 = vunpack.c.l.b16 %v8326
    %v8459 = vunpack.c.l.b16 %v8327
    %v8460 = vunpack.c.l.b16 %v8328
    %v8461 = vunpack.c.l.b16 %v8329
    %v8462 = vunpack.c.l.b16 %v8330
    %v8463 = vunpack.c.l.b16 %v8331
    %v8464 = vunpack.c.l.b16 %v8332
    %v8465 = vunpack.c.l.b16 %v8333
    %v8466 = vunpack.c.l.b16 %v8334
    %v8467 = vunpack.c.l.b16 %v8335
    %v8468 = vunpack.c.l.b16 %v8336
    %v8469 = vunpack.c.l.b16 %v8337
    %v8470 = vunpack.c.l.b16 %v8338
    %v8471 = vunpack.c.l.b16 %v8339
    %v8472 = vunpack.c.l.b16 %v8340
    %v8473 = vunpack.c.l.b16 %v8341
    %v8474 = vunpack.c.l.b16 %v8342
    %v8475 = vunpack.c.l.b16 %v8343
    %v8476 = vunpack.c.l.b16 %v8344
    %v8477 = vunpack.c.l.b16 %v8345
    %v8478 = vunpack.c.l.b16 %v8346
    %v8479 = vunpack.c.l.b16 %v8347
    %v8480 = vunpack.c.l.b16 %v8348
    %v8481 = vunpack.c.l.b16 %v8349
    %v8482 = vunpack.c.l.b16 %v8350
    %v8483 = vunpack.c.l.b16 %v8351
    %v8484 = vunpack.c.l.b16 %v8352
    %v8485 = vunpack.c.l.b16 %v8353
    %v8486 = vunpack.c.l.b16 %v8354
    %v8487 = vunpack.c.l.b16 %v8355
    %v8488 = vunpack.c.l.b16 %v8356
    %v8489 = vunpack.c.l.b16 %v8357
    %v8490 = vunpack.c.l.b16 %v8358
    %v8491 = vunpack.c.l.b16 %v8359
    %v8492 = vunpack.c.l.b16 %v8360
    %v8493 = vunpack.c.l.b16 %v8361
    %v8494 = vunpack.c.l.b16 %v8362
    %v8495 = vunpack.c.l.b16 %v8363
    %v8496 = vunpack.c.l.b16 %v8364
    %v8497 = vunpack.c.l.b16 %v8365
    %v8498 = vunpack.c.l.b16 %v8366
    %v8499 = vunpack.c.l.b16 %v8367
    %v8500 = vunpack.c.l.b16 %v8368
    %v8501 = vunpack.c.l.b16 %v8369
    %v8502 = vunpack.c.l.b16 %v8370
    %v8503 = vunpack.c.l.b16 %v8371
    %v8504 = vunpack.c.l.b16 %v8372
    %v8505 = vunpack.c.l.b16 %v8373
    %v8506 = vunpack.c.l.b16 %v8374
    %v8507 = vunpack.c.l.b16 %v8375
    %v8508 = vunpack.c.l.b16 %v8376
    %v8509 = vunpack.c.l.b16 %v8377
    %v8510 = vunpack.c.l.b16 %v8378
    %v8511 = vunpack.c.l.b16 %v8379
    %v8512 = vunpack.c.l.b16 %v8380
    %v8513 = vpack.c.b16 %v8450, %v8449
    %v8514 = vpack.c.b16 %v8452, %v8451
    %v8515 = vpack.c.b16 %v8454, %v8453
    %v8516 = vpack.c.b16 %v8456, %v8455
    %v8517 = vpack.c.b16 %v8458, %v8457
    %v8518 = vpack.c.b16 %v8460, %v8459
    %v8519 = vpack.c.b16 %v8462, %v8461
    %v8520 = vpack.c.b16 %v8464, %v8463
    %v8521 = vpack.c.b16 %v8466, %v8465
    %v8522 = vpack.c.b16 %v8468, %v8467
    %v8523 = vpack.c.b16 %v8470, %v8469
    %v8524 = vpack.c.b16 %v8472, %v8471
    %v8525 = vpack.c.b16 %v8474, %v8473
    %v8526 = vpack.c.b16 %v8476, %v8475
    %v8527 = vpack.c.b16 %v8478, %v8477
    %v8528 = vpack.c.b16 %v8480, %v8479
    %v8529 = vpack.c.b16 %v8482, %v8481
    %v8530 = vpack.c.b16 %v8484, %v8483
    %v8531 = vpack.c.b16 %v8486, %v8485
    %v8532 = vpack.c.b16 %v8488, %v8487
    %v8533 = vpack.c.b16 %v8490, %v8489
    %v8534 = vpack.c.b16 %v8492, %v8491
    %v8535 = vpack.c.b16 %v8494, %v8493
    %v8536 = vpack.c.b16 %v8496, %v8495
    %v8537 = vpack.c.b16 %v8498, %v8497
    %v8538 = vpack.c.b16 %v8500, %v8499
    %v8539 = vpack.c.b16 %v8502, %v8501
    %v8540 = vpack.c.b16 %v8504, %v8503
    %v8541 = vpack.c.b16 %v8506, %v8505
    %v8542 = vpack.c.b16 %v8508, %v8507
    %v8543 = vpack.c.b16 %v8510, %v8509
    %v8544 = vpack.c.b16 %v8512, %v8511
    %8577 = vmatpush.bf16.msra.mxu0 %v8520
    %8578 = vmatpush.bf16.msra.mxu0 %v8519
    %8579 = vmatpush.bf16.msra.mxu0 %v8518
    %8580 = vmatpush.bf16.msra.mxu0 %v8517
    %8581 = vmatpush.bf16.msra.mxu0 %v8516
    %8582 = vmatpush.bf16.msra.mxu0 %v8515
    %8583 = vmatpush.bf16.msra.mxu0 %v8514
    %8584 = vmatpush.bf16.msra.mxu0 %v8513
    %8585 = vmatmul.bf16.gmra.mxu0 %v8313
    %v8586 = vpop.f32.mrf.mxu0
    %v8587 = vadd.f32 %v8383, %v8586
    %v8588 = vpop.f32.mrf.mxu0
    %8589 = vdwg.mxu0
    %8590 = vmatpush.bf16.msra.mxu0 %v8528
    %8591 = vmatpush.bf16.msra.mxu0 %v8527
    %8592 = vmatpush.bf16.msra.mxu0 %v8526
    %8593 = vmatpush.bf16.msra.mxu0 %v8525
    %8594 = vmatpush.bf16.msra.mxu0 %v8524
    %8595 = vmatpush.bf16.msra.mxu0 %v8523
    %8596 = vmatpush.bf16.msra.mxu0 %v8522
    %8597 = vmatpush.bf16.msra.mxu0 %v8521
    %8598 = vmatmul.bf16.gmra.mxu0 %v8314
    %v8599 = vpop.f32.mrf.mxu0
    %v8600 = vadd.f32 %v8587, %v8599
    %v8601 = vpop.f32.mrf.mxu0
    %8602 = vdwg.mxu0
    %8603 = vmatpush.bf16.msra.mxu0 %v8536
    %8604 = vmatpush.bf16.msra.mxu0 %v8535
    %8605 = vmatpush.bf16.msra.mxu0 %v8534
    %8606 = vmatpush.bf16.msra.mxu0 %v8533
    %8607 = vmatpush.bf16.msra.mxu0 %v8532
    %8608 = vmatpush.bf16.msra.mxu0 %v8531
    %8609 = vmatpush.bf16.msra.mxu0 %v8530
    %8610 = vmatpush.bf16.msra.mxu0 %v8529
    %8611 = vmatmul.bf16.gmra.mxu0 %v8315
    %v8612 = vpop.f32.mrf.mxu0
    %v8613 = vadd.f32 %v8600, %v8612
    %v8614 = vpop.f32.mrf.mxu0
    %8615 = vdwg.mxu0
    %8616 = vmatpush.bf16.msra.mxu0 %v8544
    %8617 = vmatpush.bf16.msra.mxu0 %v8543
    %8618 = vmatpush.bf16.msra.mxu0 %v8542
    %8619 = vmatpush.bf16.msra.mxu0 %v8541
    %8620 = vmatpush.bf16.msra.mxu0 %v8540
    %8621 = vmatpush.bf16.msra.mxu0 %v8539
    %8622 = vmatpush.bf16.msra.mxu0 %v8538
    %8623 = vmatpush.bf16.msra.mxu0 %v8537
    %8624 = vmatmul.bf16.gmra.mxu0 %v8316
    %v8625 = vpop.f32.mrf.mxu0
    %v8626 = vadd.f32 %v8613, %v8625
    %v8627 = vpop.f32.mrf.mxu0
    %8628 = vdwg.mxu0
    %v8629 = vmax.f32 %v8626, 0.0
    %v8630 = vpack.c.bf16 %v8629, %v8629
    %v8631 = vld [vmem:[#allocation12] sm:$0xf]
    %v8632 = vld [vmem:[#allocation12 + $0x4] sm:$0xf]
    %v8633 = vld [vmem:[#allocation12 + $0x8] sm:$0xf]
    %v8634 = vld [vmem:[#allocation12 + $0xc] sm:$0xf]
    %v8635 = vld [vmem:[#allocation12 + $0x10] sm:$0xf]
    %v8636 = vld [vmem:[#allocation12 + $0x14] sm:$0xf]
    %v8637 = vld [vmem:[#allocation12 + $0x18] sm:$0xf]
    %v8638 = vld [vmem:[#allocation12 + $0x1c] sm:$0xf]
    %v8639 = vld [vmem:[#allocation12 + $0x20] sm:$0xf]
    %v8640 = vld [vmem:[#allocation12 + $0x24] sm:$0xf]
    %v8641 = vld [vmem:[#allocation12 + $0x28] sm:$0xf]
    %v8642 = vld [vmem:[#allocation12 + $0x2c] sm:$0xf]
    %v8643 = vld [vmem:[#allocation12 + $0x30] sm:$0xf]
    %v8644 = vld [vmem:[#allocation12 + $0x34] sm:$0xf]
    %v8645 = vld [vmem:[#allocation12 + $0x38] sm:$0xf]
    %v8646 = vld [vmem:[#allocation12 + $0x3c] sm:$0xf]
    %v8647 = vld [vmem:[#allocation13] sm:$0x1]
    %v8649 = vperm.slane %v8647, 0
    %v8667 = vunpack.c.l.b16 %v8631
    %v8668 = vunpack.c.l.b16 %v8632
    %v8669 = vunpack.c.l.b16 %v8633
    %v8670 = vunpack.c.l.b16 %v8634
    %v8671 = vunpack.c.l.b16 %v8635
    %v8672 = vunpack.c.l.b16 %v8636
    %v8673 = vunpack.c.l.b16 %v8637
    %v8674 = vunpack.c.l.b16 %v8638
    %v8675 = vunpack.c.l.b16 %v8639
    %v8676 = vunpack.c.l.b16 %v8640
    %v8677 = vunpack.c.l.b16 %v8641
    %v8678 = vunpack.c.l.b16 %v8642
    %v8679 = vunpack.c.l.b16 %v8643
    %v8680 = vunpack.c.l.b16 %v8644
    %v8681 = vunpack.c.l.b16 %v8645
    %v8682 = vunpack.c.l.b16 %v8646
    %v8683 = vpack.c.b16 %v8668, %v8667
    %v8684 = vpack.c.b16 %v8670, %v8669
    %v8685 = vpack.c.b16 %v8672, %v8671
    %v8686 = vpack.c.b16 %v8674, %v8673
    %v8687 = vpack.c.b16 %v8676, %v8675
    %v8688 = vpack.c.b16 %v8678, %v8677
    %v8689 = vpack.c.b16 %v8680, %v8679
    %v8690 = vpack.c.b16 %v8682, %v8681
    %8699 = vmatpush.bf16.msra.mxu0 %v8690
    %8700 = vmatpush.bf16.msra.mxu0 %v8689
    %8701 = vmatpush.bf16.msra.mxu0 %v8688
    %8702 = vmatpush.bf16.msra.mxu0 %v8687
    %8703 = vmatpush.bf16.msra.mxu0 %v8686
    %8704 = vmatpush.bf16.msra.mxu0 %v8685
    %8705 = vmatpush.bf16.msra.mxu0 %v8684
    %8706 = vmatpush.bf16.msra.mxu0 %v8683
    %8707 = vmatmul.bf16.gmra.mxu0 %v8630
    %v8708 = vpop.f32.mrf.mxu0
    %v8709 = vadd.f32 %v8649, %v8708
    %v8710 = vpop.f32.mrf.mxu0
    %8711 = vdwg.mxu0
    %v8712 = vmax.f32 %v8709, 0.0
    %8713 = vst [vmem:[%s9] sm:$0xff] %v8712
    // Predicated region
    $region70: #{cnn_forward.1} parent=1 // pred_check
      _
    $region71: #{cnn_forward.1} parent=1 // pred_check_branch
      %8715 = sbr.rel (0) target = $region73
    $region72: #{cnn_forward.1} parent=1 // pred_region
      _
    $region73: #{cnn_forward.1} parent=1 // pred_fallthru
      _
    // Predicated region
    $region74: #{cnn_forward.1} parent=1 // pred_check
      _
    $region75: #{cnn_forward.1} parent=1 // pred_check_branch
      %8717 = sbr.rel (0) target = $region77
    $region76: #{cnn_forward.1} parent=1 // pred_region
      _
    $region77: #{cnn_forward.1} parent=1 // pred_fallthru
      _
    %8718 = vsyncpa [#allocation3], 1
    %8719 = vsyncpa [#allocation5], 1
    %8720 = vsyncpa [#allocation8], 1
    %8721 = vsyncpa [#allocation11], 1
    %8722 = vsyncpa [#allocation14], 1

</llo_original>
